<compile_context>
chip_gen: v7x
topology: tpu7x:2x2x1
jax: 0.10.0
libtpu: 0.0.40
codegen_flags: <defaults>
</compile_context>

<pallas_src>
import functools

import numpy as np
import jax
import jax.numpy as jnp
from jax import lax
from jax.experimental import pallas as pl
from jax.experimental.pallas import tpu as pltpu

# ----------------------------- problem sizes --------------------------------
D = 12                  # num_in_channels (number of grammar rules)
SEQ = 100               # Linear(740, 435) => 10*(SEQ-8-8-10) = 740 => SEQ = 100
K1, C1 = 9, 9
K2, C2 = 9, 9
K3, C3 = 11, 10
L1 = SEQ - K1 + 1       # 92
L2 = L1 - K2 + 1        # 84
L3 = L2 - K3 + 1        # 74
FLAT = L3 * C3          # 740  (Linear in_features)
HID = 435               # Linear out_features
LATENT = 8              # hyper_params['latent_dim']
NEG_SLOPE = 0.01        # nn.LeakyReLU() default


def _round_up(x, m):
    return -(-x // m) * m


IN_W = D * SEQ                       # 1200 : channel-major flat input width
OUT1_PAD = _round_up(L1 * C1, 128)   # 828 -> 896
OUT2_PAD = _round_up(L2 * C2, 128)   # 756 -> 768
OUT3_PAD = _round_up(L3 * C3, 128)   # 740 -> 768
HID_PAD = _round_up(HID, 128)        # 435 -> 512
HEAD_W = 2 * LATENT                  # 16  : fused mu|sigma output


# --------------------------- static band planning ----------------------------
def _band_plan(l_out, cout, cin, k, in_pad, out_pad, tile=128):
    """Per-128-lane output tile band windows of a block-Toeplitz conv matrix.

    Output column j = l*cout + co only touches input rows
    [(j//cout)*cin, (j//cout + k - 1)*cin + cin - 1].  For each 128-lane output
    tile pick a 128-aligned row start (clamped in-bounds) and a uniform slab
    length (multiple of 8) covering every tile's band.
    """
    out_true = l_out * cout
    assert out_pad - out_true < tile
    n_tiles = out_pad // tile
    starts, r_maxs = [], []
    for t in range(n_tiles):
        c0 = t * tile
        c1 = min(c0 + tile, out_true) - 1
        l_min, l_max = c0 // cout, c1 // cout
        starts.append((l_min * cin // tile) * tile)          # 128-aligned
        r_maxs.append((l_max + k - 1) * cin + cin - 1)
    slab = _round_up(max(r - s + 1 for s, r in zip(starts, r_maxs)), 8)
    assert slab <= in_pad
    starts = tuple(min(s, in_pad - slab) for s in starts)    # keep in-bounds
    for s, r in zip(starts, r_maxs):
        assert 0 <= s and s + slab > r                        # band covered
    return starts, slab


BAND2_STARTS, BAND2_SLAB = _band_plan(L2, C2, C1, K2, OUT1_PAD, OUT2_PAD)  # slab=336
BAND3_STARTS, BAND3_SLAB = _band_plan(L3, C3, C2, K3, OUT2_PAD, OUT3_PAD)  # slab=328


# ------------------------------ kernel body ----------------------------------
def encoder_kernel(x_ref, w1_ref, b1_ref, w2_ref, b2_ref, w3_ref, b3_ref,
                   wl_ref, bl_ref, wh_ref, bh_ref, out_ref):
    """conv1 (dense channel-major Toeplitz) -> conv2/conv3 (band-blocked
    Toeplitz) -> linear -> fused mu|sigma head.  f32 accumulation; operands
    feeding the MXU are cast to the weight dtype (bf16 by default)."""
    mxu = w1_ref.dtype

    def lrelu(y):                                    # LeakyReLU, one VPU op
        return jnp.maximum(y, NEG_SLOPE * y)

    # conv1: channel-major rows -> input is a pure reshape of the NCL tensor.
    h = lrelu(jnp.dot(x_ref[...].astype(mxu), w1_ref[...],
                      preferred_element_type=jnp.float32) + b1_ref[...])      # (TB, 896)

    # conv2 / conv3: one 128-lane output tile per dot, contracting only the
    # band of input rows that tile touches (static, mostly 128-aligned slices).
    def banded_conv(h_f32, w_ref, b_ref, starts, slab):
        hb = h_f32.astype(mxu)
        cols = [jnp.dot(hb[:, s:s + slab], w_ref[t],
                        preferred_element_type=jnp.float32)
                for t, s in enumerate(starts)]
        return lrelu(jnp.concatenate(cols, axis=1) + b_ref[...])

    h = banded_conv(h, w2_ref, b2_ref, BAND2_STARTS, BAND2_SLAB)              # (TB, 768)
    h = banded_conv(h, w3_ref, b3_ref, BAND3_STARTS, BAND3_SLAB)              # (TB, 768)

    # conv3's length-major flat output IS the row the Linear expects, so
    # PyTorch's transpose(1,2)+view flatten is a no-op here.
    h = lrelu(jnp.dot(h.astype(mxu), wl_ref[...],
                      preferred_element_type=jnp.float32) + bl_ref[...])      # (TB, 512)
    out_ref[...] = (jnp.dot(h.astype(mxu), wh_ref[...],
                            preferred_element_type=jnp.float32)
                    + bh_ref[...])                                            # (TB, 16)


# --------------------------- parameter preparation ---------------------------
def _conv_dense_lm(w, l_in, in_pad, out_pad):
    """Valid stride-1 Conv1d as a dense Toeplitz matrix, length-major rows.

    w: (K, Cin, Cout); row index = pos*Cin + ci, col index = l*Cout + co.
    """
    k_sz, cin, cout = w.shape
    l_out = l_in - k_sz + 1
    big = jnp.zeros((l_in, cin, l_out, cout), w.dtype)
    rows = jnp.arange(l_out)
    for k in range(k_sz):
        big = big.at[rows + k, :, rows, :].set(w[k])
    dense = big.reshape(l_in * cin, l_out * cout)
    return jnp.pad(dense, ((0, in_pad - l_in * cin), (0, out_pad - l_out * cout)))


def _conv1_dense_cm(w, seq, out_pad):
    """conv1 Toeplitz matrix with CHANNEL-major rows (row = c*SEQ + s), so the
    kernel input is a plain reshape of the PyTorch NCL tensor (no transpose)."""
    k_sz, cin, cout = w.shape
    l_out = seq - k_sz + 1
    big = jnp.zeros((cin, seq, l_out, cout), w.dtype)
    rows = jnp.arange(l_out)
    for k in range(k_sz):
        big = big.at[:, rows + k, rows, :].set(w[k][:, None, :])
    dense = big.reshape(cin * seq, l_out * cout)
    return jnp.pad(dense, ((0, 0), (0, out_pad - l_out * cout)))


def _band_slabs(dense, starts, slab, dtype):
    tiles = [dense[s:s + slab, t * 128:(t + 1) * 128] for t, s in enumerate(starts)]
    return jnp.stack(tiles, axis=0).astype(dtype)


def _tile_bias(b, l_out, out_pad):
    cout = b.shape[-1]
    bb = jnp.tile(b.reshape(1, cout).astype(jnp.float32), (1, l_out))
    return jnp.pad(bb, ((0, 0), (0, out_pad - l_out * cout)))


def prepare_params(params, mxu_dtype):
    """Fused / padded / band-sliced weight set consumed by the kernel.
    (In a real model this would be computed once, outside the step.)"""
    f32 = jnp.float32
    w1 = _conv1_dense_cm(params["w1"], SEQ, OUT1_PAD).astype(mxu_dtype)   # (1200, 896)
    b1 = _tile_bias(params["b1"], L1, OUT1_PAD)                           # (1, 896)
    w2d = _conv_dense_lm(params["w2"], L1, OUT1_PAD, OUT2_PAD)            # (896, 768)
    w2 = _band_slabs(w2d, BAND2_STARTS, BAND2_SLAB, mxu_dtype)            # (6, 336, 128)
    b2 = _tile_bias(params["b2"], L2, OUT2_PAD)                           # (1, 768)
    w3d = _conv_dense_lm(params["w3"], L2, OUT2_PAD, OUT3_PAD)            # (768, 768)
    w3 = _band_slabs(w3d, BAND3_STARTS, BAND3_SLAB, mxu_dtype)            # (6, 328, 128)
    b3 = _tile_bias(params["b3"], L3, OUT3_PAD)                           # (1, 768)
    wl = jnp.pad(params["wl"], ((0, OUT3_PAD - FLAT), (0, HID_PAD - HID))
                 ).astype(mxu_dtype)                                      # (768, 512)
    bl = jnp.pad(params["bl"].astype(f32), ((0, 0), (0, HID_PAD - HID)))  # (1, 512)
    wh = jnp.pad(jnp.concatenate([params["wmu"], params["wsg"]], axis=1),
                 ((0, HID_PAD - HID), (0, 0))).astype(mxu_dtype)          # (512, 16)
    bh = jnp.concatenate([params["bmu"], params["bsg"]], axis=1).astype(f32)  # (1, 16)
    return (w1, b1, w2, b2, w3, b3, wl, bl, wh, bh)


# ------------------------------ tiling policy ---------------------------------
def _tile_defaults():
    """Derive batch-tile cap and vmem_limit from the local chip's VMEM."""
    try:
        cap = int(pltpu.get_tpu_info().vmem_capacity_bytes)
    except Exception:                       # unknown chip: assume v7x (64 MiB)
        cap = 64 * 1024 * 1024
    vmem_limit = int(min(cap * 3 // 4, 100 * 1024 * 1024))
    tb_cap = 1024 if cap > 96 * 1024 * 1024 else 512
    return tb_cap, vmem_limit


def _choose_tb(batch, tb_cap):
    """Batch tile: multiple of 8, <= cap, and >=2 grid steps whenever possible
    so both v7x TensorCores get work ("parallel" grid axis)."""
    if batch <= 8:
        return 8
    half = _round_up(_round_up(batch, 2) // 2, 8)
    tb = min(tb_cap, half, batch)
    return max(8, (tb // 8) * 8)


# ------------------------------ wrapper ---------------------------------------
@functools.partial(jax.jit, static_argnames=("tb", "vmem_limit", "mxu_dtype"))
def _encoder_forward_impl(x_ncl, params, *, tb, vmem_limit, mxu_dtype):
    batch = x_ncl.shape[0]
    # Pure row-major reshape of the NCL input (no transpose, no extra HBM pass);
    # conv1's Toeplitz rows are channel-major to match.
    x_flat = x_ncl.astype(jnp.float32).reshape(batch, IN_W)
    pad = (-batch) % tb
    if pad:
        x_flat = jnp.pad(x_flat, ((0, pad), (0, 0)))
    bp = batch + pad

    weights = prepare_params(params, mxu_dtype)

    def const_spec(arr):      # full-array block, constant index -> VMEM resident
        nd = arr.ndim
        return pl.BlockSpec(arr.shape, lambda b: (0,) * nd)

    out = pl.pallas_call(
        encoder_kernel,
        grid=(bp // tb,),
        in_specs=[pl.BlockSpec((tb, IN_W), lambda b: (b, 0))]
                 + [const_spec(w) for w in weights],
        out_specs=pl.BlockSpec((tb, HEAD_W), lambda b: (b, 0)),
        out_shape=jax.ShapeDtypeStruct((bp, HEAD_W), jnp.float32),
        compiler_params=pltpu.CompilerParams(
            dimension_semantics=("parallel",),        # 2 TCs on v7x
            vmem_limit_bytes=vmem_limit),
    )(x_flat, *weights)

    out = out[:batch]
    return out[:, :LATENT], out[:, LATENT:]           # mu, sigma


def encoder_forward(x_ncl, params, *, tb=None, mxu_dtype=jnp.bfloat16):
    """x_ncl: (B, D, SEQ) float — same NCL layout PyTorch's Encoder expects."""
    tb_cap, vmem_limit = _tile_defaults()
    if tb is not None:
        tb_cap = tb
    tb = _choose_tb(x_ncl.shape[0], tb_cap)
    return _encoder_forward_impl(x_ncl, params, tb=tb, vmem_limit=vmem_limit,
                                 mxu_dtype=mxu_dtype)


# --------------------------- deterministic params ----------------------------
def init_params(key):
    ks = jax.random.split(key, 12)

    def u(k, shape, fan_in):
        bound = 1.0 / float(np.sqrt(fan_in))
        return jax.random.uniform(k, shape, jnp.float32, -bound, bound)

    return {
        "w1": u(ks[0], (K1, D, C1), D * K1),          # (K, Cin, Cout)
        "b1": u(ks[1], (1, C1), D * K1),
        "w2": u(ks[2], (K2, C1, C2), C1 * K2),
        "b2": u(ks[3], (1, C2), C1 * K2),
        "w3": u(ks[4], (K3, C2, C3), C2 * K3),
        "b3": u(ks[5], (1, C3), C2 * K3),
        "wl": u(ks[6], (FLAT, HID), FLAT),            # (In, Out)
        "bl": u(ks[7], (1, HID), FLAT),
        "wmu": u(ks[8], (HID, LATENT), HID),
        "bmu": u(ks[9], (1, LATENT), HID),
        "wsg": u(ks[10], (HID, LATENT), HID),
        "bsg": u(ks[11], (1, LATENT), HID),
    }


# ------------------------- pure-JAX reference (PyTorch semantics) ------------
def encoder_reference(x_ncl, params):
    def conv1d_ncl(x, w_kio, b):
        w_oik = jnp.transpose(w_kio, (2, 1, 0))   # -> PyTorch (Cout, Cin, K)
        y = lax.conv_general_dilated(
            x, w_oik, window_strides=(1,), padding="VALID",
            dimension_numbers=("NCH", "OIH", "NCH"),
            precision=lax.Precision.HIGHEST)
        return y + b.reshape(1, -1, 1)

    lrelu = lambda v: jnp.where(v > 0, v, NEG_SLOPE * v)
    h = lrelu(conv1d_ncl(x_ncl, params["w1"], params["b1"]))
    h = lrelu(conv1d_ncl(h, params["w2"], params["b2"]))
    h = lrelu(conv1d_ncl(h, params["w3"], params["b3"]))
    h = jnp.transpose(h, (0, 2, 1)).reshape(h.shape[0], -1)        # (B, 740)
    h = lrelu(h @ params["wl"] + params["bl"])
    mu = h @ params["wmu"] + params["bmu"]
    sigma = h @ params["wsg"] + params["bsg"]
    return mu, sigma


# ----------------------------------- main -------------------------------------
if __name__ == "__main__":
    key = jax.random.PRNGKey(0)
    kx1, kx2, kp = jax.random.split(key, 3)
    params = init_params(kp)

    # 1) Default path (bf16 MXU operands, f32 accumulation), tiny batch.
    #    bf16 tolerance reflects operand rounding only; accumulation stays f32.
    B1 = 2
    x1 = jax.random.normal(kx1, (B1, D, SEQ), jnp.float32)          # PyTorch NCL
    mu, sigma = jax.block_until_ready(encoder_forward(x1, params))
    mu_r, sg_r = encoder_reference(x1, params)
    np.testing.assert_allclose(np.asarray(mu), np.asarray(mu_r), rtol=5e-2, atol=5e-2)
    np.testing.assert_allclose(np.asarray(sigma), np.asarray(sg_r), rtol=5e-2, atol=5e-2)
    assert mu.shape == (B1, LATENT) and sigma.shape == (B1, LATENT)

    # 2) Multi-step batch grid with padding (B=20, TB=8 -> grid of 3, 4 pad rows).
    B2 = 20
    x2 = jax.random.normal(kx2, (B2, D, SEQ), jnp.float32)
    mu2, sg2 = jax.block_until_ready(encoder_forward(x2, params, tb=8))
    mu2_r, sg2_r = encoder_reference(x2, params)
    np.testing.assert_allclose(np.asarray(mu2), np.asarray(mu2_r), rtol=5e-2, atol=5e-2)
    np.testing.assert_allclose(np.asarray(sg2), np.asarray(sg2_r), rtol=5e-2, atol=5e-2)
    assert mu2.shape == (B2, LATENT) and sg2.shape == (B2, LATENT)

    # 3) f32 MXU-operand path (tight tolerance): validates the band-blocked
    #    Toeplitz decomposition + padding tricks numerically.
    mu3, sg3 = jax.block_until_ready(
        encoder_forward(x2, params, mxu_dtype=jnp.float32))
    np.testing.assert_allclose(np.asarray(mu3), np.asarray(mu2_r), rtol=1e-2, atol=1e-2)
    np.testing.assert_allclose(np.asarray(sg3), np.asarray(sg2_r), rtol=1e-2, atol=1e-2)

    print("KERNEL_OK")
</pallas_src>

<mosaic_0001>
module attributes {stable_mosaic.version = 11 : i64} {
  func.func @encoder_kernel(%arg0: i32, %arg1: memref<8x1200xf32, #tpu.memory_space<vmem>>, %arg2: memref<1200x896xbf16, #tpu.memory_space<vmem>>, %arg3: memref<1x896xf32, #tpu.memory_space<vmem>>, %arg4: memref<6x336x128xbf16, #tpu.memory_space<vmem>>, %arg5: memref<1x768xf32, #tpu.memory_space<vmem>>, %arg6: memref<6x328x128xbf16, #tpu.memory_space<vmem>>, %arg7: memref<1x768xf32, #tpu.memory_space<vmem>>, %arg8: memref<768x512xbf16, #tpu.memory_space<vmem>>, %arg9: memref<1x512xf32, #tpu.memory_space<vmem>>, %arg10: memref<512x16xbf16, #tpu.memory_space<vmem>>, %arg11: memref<1x16xf32, #tpu.memory_space<vmem>>, %arg12: memref<8x16xf32, #tpu.memory_space<vmem>>) attributes {dimension_semantics = [#tpu.dimension_semantics<parallel>], iteration_bounds = array<i64: 1>, scalar_prefetch = 0 : i64, scratch_operands = 0 : i64, tpu.core_type = #tpu.core_type<tc>, window_params = [{transform_indices = @transform_0, window_bounds = array<i64: 8, 1200>}, {pipeline_mode = #tpu.pipeline_mode<synchronous>, transform_indices = @transform_1, window_bounds = array<i64: 1200, 896>}, {pipeline_mode = #tpu.pipeline_mode<synchronous>, transform_indices = @transform_2, window_bounds = array<i64: 1, 896>}, {pipeline_mode = #tpu.pipeline_mode<synchronous>, transform_indices = @transform_3, window_bounds = array<i64: 6, 336, 128>}, {pipeline_mode = #tpu.pipeline_mode<synchronous>, transform_indices = @transform_4, window_bounds = array<i64: 1, 768>}, {pipeline_mode = #tpu.pipeline_mode<synchronous>, transform_indices = @transform_5, window_bounds = array<i64: 6, 328, 128>}, {pipeline_mode = #tpu.pipeline_mode<synchronous>, transform_indices = @transform_6, window_bounds = array<i64: 1, 768>}, {pipeline_mode = #tpu.pipeline_mode<synchronous>, transform_indices = @transform_7, window_bounds = array<i64: 768, 512>}, {pipeline_mode = #tpu.pipeline_mode<synchronous>, transform_indices = @transform_8, window_bounds = array<i64: 1, 512>}, {pipeline_mode = #tpu.pipeline_mode<synchronous>, transform_indices = @transform_9, window_bounds = array<i64: 512, 16>}, {pipeline_mode = #tpu.pipeline_mode<synchronous>, transform_indices = @transform_10, window_bounds = array<i64: 1, 16>}, {transform_indices = @transform_11, window_bounds = array<i64: 8, 16>}]} {
    %c0 = arith.constant 0 : index
    %c0_0 = arith.constant 0 : index
    %0 = vector.load %arg1[%c0, %c0_0] : memref<8x1200xf32, #tpu.memory_space<vmem>>, vector<8x1200xf32>
    %1 = arith.truncf %0 : vector<8x1200xf32> to vector<8x1200xbf16>
    %c0_1 = arith.constant 0 : index
    %c0_2 = arith.constant 0 : index
    %2 = vector.load %arg2[%c0_1, %c0_2] : memref<1200x896xbf16, #tpu.memory_space<vmem>>, vector<1200x896xbf16>
    %cst = arith.constant dense<0.000000e+00> : vector<8x896xf32>
    %3 = tpu.matmul %1, %2, %cst {dimension_numbers = #tpu.dot_dimension_numbers<[1], [0], [0], [1], [0, 0, 1, 1], [], []>} : vector<8x1200xbf16>, vector<1200x896xbf16>, vector<8x896xf32> -> vector<8x896xf32>
    %c0_3 = arith.constant 0 : index
    %c0_4 = arith.constant 0 : index
    %4 = vector.load %arg3[%c0_3, %c0_4] : memref<1x896xf32, #tpu.memory_space<vmem>>, vector<1x896xf32>
    %5 = vector.broadcast %4 : vector<1x896xf32> to vector<8x896xf32>
    %6 = arith.addf %3, %5 : vector<8x896xf32>
    %cst_5 = arith.constant 0.00999999977 : f32
    %7 = vector.broadcast %cst_5 : f32 to vector<8x896xf32>
    %8 = arith.mulf %7, %6 : vector<8x896xf32>
    %9 = arith.maximumf %6, %8 : vector<8x896xf32>
    %10 = arith.truncf %9 : vector<8x896xf32> to vector<8x896xbf16>
    %11 = vector.extract_strided_slice %10 {offsets = [0, 0], sizes = [8, 336], strides = [1, 1]} : vector<8x896xbf16> to vector<8x336xbf16>
    %c0_6 = arith.constant 0 : index
    %c0_7 = arith.constant 0 : index
    %c0_8 = arith.constant 0 : index
    %12 = vector.load %arg4[%c0_6, %c0_7, %c0_8] : memref<6x336x128xbf16, #tpu.memory_space<vmem>>, vector<1x336x128xbf16>
    %13 = vector.shape_cast %12 : vector<1x336x128xbf16> to vector<336x128xbf16>
    %cst_9 = arith.constant dense<0.000000e+00> : vector<8x128xf32>
    %14 = tpu.matmul %11, %13, %cst_9 {dimension_numbers = #tpu.dot_dimension_numbers<[1], [0], [0], [1], [0, 0, 1, 1], [], []>} : vector<8x336xbf16>, vector<336x128xbf16>, vector<8x128xf32> -> vector<8x128xf32>
    %15 = vector.extract_strided_slice %10 {offsets = [0, 0], sizes = [8, 336], strides = [1, 1]} : vector<8x896xbf16> to vector<8x336xbf16>
    %c1 = arith.constant 1 : index
    %c0_10 = arith.constant 0 : index
    %c0_11 = arith.constant 0 : index
    %16 = vector.load %arg4[%c1, %c0_10, %c0_11] : memref<6x336x128xbf16, #tpu.memory_space<vmem>>, vector<1x336x128xbf16>
    %17 = vector.shape_cast %16 : vector<1x336x128xbf16> to vector<336x128xbf16>
    %cst_12 = arith.constant dense<0.000000e+00> : vector<8x128xf32>
    %18 = tpu.matmul %15, %17, %cst_12 {dimension_numbers = #tpu.dot_dimension_numbers<[1], [0], [0], [1], [0, 0, 1, 1], [], []>} : vector<8x336xbf16>, vector<336x128xbf16>, vector<8x128xf32> -> vector<8x128xf32>
    %19 = vector.extract_strided_slice %10 {offsets = [0, 128], sizes = [8, 336], strides = [1, 1]} : vector<8x896xbf16> to vector<8x336xbf16>
    %c2 = arith.constant 2 : index
    %c0_13 = arith.constant 0 : index
    %c0_14 = arith.constant 0 : index
    %20 = vector.load %arg4[%c2, %c0_13, %c0_14] : memref<6x336x128xbf16, #tpu.memory_space<vmem>>, vector<1x336x128xbf16>
    %21 = vector.shape_cast %20 : vector<1x336x128xbf16> to vector<336x128xbf16>
    %cst_15 = arith.constant dense<0.000000e+00> : vector<8x128xf32>
    %22 = tpu.matmul %19, %21, %cst_15 {dimension_numbers = #tpu.dot_dimension_numbers<[1], [0], [0], [1], [0, 0, 1, 1], [], []>} : vector<8x336xbf16>, vector<336x128xbf16>, vector<8x128xf32> -> vector<8x128xf32>
    %23 = vector.extract_strided_slice %10 {offsets = [0, 256], sizes = [8, 336], strides = [1, 1]} : vector<8x896xbf16> to vector<8x336xbf16>
    %c3 = arith.constant 3 : index
    %c0_16 = arith.constant 0 : index
    %c0_17 = arith.constant 0 : index
    %24 = vector.load %arg4[%c3, %c0_16, %c0_17] : memref<6x336x128xbf16, #tpu.memory_space<vmem>>, vector<1x336x128xbf16>
    %25 = vector.shape_cast %24 : vector<1x336x128xbf16> to vector<336x128xbf16>
    %cst_18 = arith.constant dense<0.000000e+00> : vector<8x128xf32>
    %26 = tpu.matmul %23, %25, %cst_18 {dimension_numbers = #tpu.dot_dimension_numbers<[1], [0], [0], [1], [0, 0, 1, 1], [], []>} : vector<8x336xbf16>, vector<336x128xbf16>, vector<8x128xf32> -> vector<8x128xf32>
    %27 = vector.extract_strided_slice %10 {offsets = [0, 384], sizes = [8, 336], strides = [1, 1]} : vector<8x896xbf16> to vector<8x336xbf16>
    %c4 = arith.constant 4 : index
    %c0_19 = arith.constant 0 : index
    %c0_20 = arith.constant 0 : index
    %28 = vector.load %arg4[%c4, %c0_19, %c0_20] : memref<6x336x128xbf16, #tpu.memory_space<vmem>>, vector<1x336x128xbf16>
    %29 = vector.shape_cast %28 : vector<1x336x128xbf16> to vector<336x128xbf16>
    %cst_21 = arith.constant dense<0.000000e+00> : vector<8x128xf32>
    %30 = tpu.matmul %27, %29, %cst_21 {dimension_numbers = #tpu.dot_dimension_numbers<[1], [0], [0], [1], [0, 0, 1, 1], [], []>} : vector<8x336xbf16>, vector<336x128xbf16>, vector<8x128xf32> -> vector<8x128xf32>
    %31 = vector.extract_strided_slice %10 {offsets = [0, 512], sizes = [8, 336], strides = [1, 1]} : vector<8x896xbf16> to vector<8x336xbf16>
    %c5 = arith.constant 5 : index
    %c0_22 = arith.constant 0 : index
    %c0_23 = arith.constant 0 : index
    %32 = vector.load %arg4[%c5, %c0_22, %c0_23] : memref<6x336x128xbf16, #tpu.memory_space<vmem>>, vector<1x336x128xbf16>
    %33 = vector.shape_cast %32 : vector<1x336x128xbf16> to vector<336x128xbf16>
    %cst_24 = arith.constant dense<0.000000e+00> : vector<8x128xf32>
    %34 = tpu.matmul %31, %33, %cst_24 {dimension_numbers = #tpu.dot_dimension_numbers<[1], [0], [0], [1], [0, 0, 1, 1], [], []>} : vector<8x336xbf16>, vector<336x128xbf16>, vector<8x128xf32> -> vector<8x128xf32>
    %35 = tpu.concatenate %14, %18, %22, %26, %30, %34 in 1 : vector<8x128xf32>, vector<8x128xf32>, vector<8x128xf32>, vector<8x128xf32>, vector<8x128xf32>, vector<8x128xf32> -> vector<8x768xf32>
    %c0_25 = arith.constant 0 : index
    %c0_26 = arith.constant 0 : index
    %36 = vector.load %arg5[%c0_25, %c0_26] : memref<1x768xf32, #tpu.memory_space<vmem>>, vector<1x768xf32>
    %37 = vector.broadcast %36 : vector<1x768xf32> to vector<8x768xf32>
    %38 = arith.addf %35, %37 : vector<8x768xf32>
    %cst_27 = arith.constant 0.00999999977 : f32
    %39 = vector.broadcast %cst_27 : f32 to vector<8x768xf32>
    %40 = arith.mulf %39, %38 : vector<8x768xf32>
    %41 = arith.maximumf %38, %40 : vector<8x768xf32>
    %42 = arith.truncf %41 : vector<8x768xf32> to vector<8x768xbf16>
    %43 = vector.extract_strided_slice %42 {offsets = [0, 0], sizes = [8, 328], strides = [1, 1]} : vector<8x768xbf16> to vector<8x328xbf16>
    %c0_28 = arith.constant 0 : index
    %c0_29 = arith.constant 0 : index
    %c0_30 = arith.constant 0 : index
    %44 = vector.load %arg6[%c0_28, %c0_29, %c0_30] : memref<6x328x128xbf16, #tpu.memory_space<vmem>>, vector<1x328x128xbf16>
    %45 = vector.shape_cast %44 : vector<1x328x128xbf16> to vector<328x128xbf16>
    %cst_31 = arith.constant dense<0.000000e+00> : vector<8x128xf32>
    %46 = tpu.matmul %43, %45, %cst_31 {dimension_numbers = #tpu.dot_dimension_numbers<[1], [0], [0], [1], [0, 0, 1, 1], [], []>} : vector<8x328xbf16>, vector<328x128xbf16>, vector<8x128xf32> -> vector<8x128xf32>
    %47 = vector.extract_strided_slice %42 {offsets = [0, 0], sizes = [8, 328], strides = [1, 1]} : vector<8x768xbf16> to vector<8x328xbf16>
    %c1_32 = arith.constant 1 : index
    %c0_33 = arith.constant 0 : index
    %c0_34 = arith.constant 0 : index
    %48 = vector.load %arg6[%c1_32, %c0_33, %c0_34] : memref<6x328x128xbf16, #tpu.memory_space<vmem>>, vector<1x328x128xbf16>
    %49 = vector.shape_cast %48 : vector<1x328x128xbf16> to vector<328x128xbf16>
    %cst_35 = arith.constant dense<0.000000e+00> : vector<8x128xf32>
    %50 = tpu.matmul %47, %49, %cst_35 {dimension_numbers = #tpu.dot_dimension_numbers<[1], [0], [0], [1], [0, 0, 1, 1], [], []>} : vector<8x328xbf16>, vector<328x128xbf16>, vector<8x128xf32> -> vector<8x128xf32>
    %51 = vector.extract_strided_slice %42 {offsets = [0, 128], sizes = [8, 328], strides = [1, 1]} : vector<8x768xbf16> to vector<8x328xbf16>
    %c2_36 = arith.constant 2 : index
    %c0_37 = arith.constant 0 : index
    %c0_38 = arith.constant 0 : index
    %52 = vector.load %arg6[%c2_36, %c0_37, %c0_38] : memref<6x328x128xbf16, #tpu.memory_space<vmem>>, vector<1x328x128xbf16>
    %53 = vector.shape_cast %52 : vector<1x328x128xbf16> to vector<328x128xbf16>
    %cst_39 = arith.constant dense<0.000000e+00> : vector<8x128xf32>
    %54 = tpu.matmul %51, %53, %cst_39 {dimension_numbers = #tpu.dot_dimension_numbers<[1], [0], [0], [1], [0, 0, 1, 1], [], []>} : vector<8x328xbf16>, vector<328x128xbf16>, vector<8x128xf32> -> vector<8x128xf32>
    %55 = vector.extract_strided_slice %42 {offsets = [0, 256], sizes = [8, 328], strides = [1, 1]} : vector<8x768xbf16> to vector<8x328xbf16>
    %c3_40 = arith.constant 3 : index
    %c0_41 = arith.constant 0 : index
    %c0_42 = arith.constant 0 : index
    %56 = vector.load %arg6[%c3_40, %c0_41, %c0_42] : memref<6x328x128xbf16, #tpu.memory_space<vmem>>, vector<1x328x128xbf16>
    %57 = vector.shape_cast %56 : vector<1x328x128xbf16> to vector<328x128xbf16>
    %cst_43 = arith.constant dense<0.000000e+00> : vector<8x128xf32>
    %58 = tpu.matmul %55, %57, %cst_43 {dimension_numbers = #tpu.dot_dimension_numbers<[1], [0], [0], [1], [0, 0, 1, 1], [], []>} : vector<8x328xbf16>, vector<328x128xbf16>, vector<8x128xf32> -> vector<8x128xf32>
    %59 = vector.extract_strided_slice %42 {offsets = [0, 384], sizes = [8, 328], strides = [1, 1]} : vector<8x768xbf16> to vector<8x328xbf16>
    %c4_44 = arith.constant 4 : index
    %c0_45 = arith.constant 0 : index
    %c0_46 = arith.constant 0 : index
    %60 = vector.load %arg6[%c4_44, %c0_45, %c0_46] : memref<6x328x128xbf16, #tpu.memory_space<vmem>>, vector<1x328x128xbf16>
    %61 = vector.shape_cast %60 : vector<1x328x128xbf16> to vector<328x128xbf16>
    %cst_47 = arith.constant dense<0.000000e+00> : vector<8x128xf32>
    %62 = tpu.matmul %59, %61, %cst_47 {dimension_numbers = #tpu.dot_dimension_numbers<[1], [0], [0], [1], [0, 0, 1, 1], [], []>} : vector<8x328xbf16>, vector<328x128xbf16>, vector<8x128xf32> -> vector<8x128xf32>
    %63 = vector.extract_strided_slice %42 {offsets = [0, 440], sizes = [8, 328], strides = [1, 1]} : vector<8x768xbf16> to vector<8x328xbf16>
    %c5_48 = arith.constant 5 : index
    %c0_49 = arith.constant 0 : index
    %c0_50 = arith.constant 0 : index
    %64 = vector.load %arg6[%c5_48, %c0_49, %c0_50] : memref<6x328x128xbf16, #tpu.memory_space<vmem>>, vector<1x328x128xbf16>
    %65 = vector.shape_cast %64 : vector<1x328x128xbf16> to vector<328x128xbf16>
    %cst_51 = arith.constant dense<0.000000e+00> : vector<8x128xf32>
    %66 = tpu.matmul %63, %65, %cst_51 {dimension_numbers = #tpu.dot_dimension_numbers<[1], [0], [0], [1], [0, 0, 1, 1], [], []>} : vector<8x328xbf16>, vector<328x128xbf16>, vector<8x128xf32> -> vector<8x128xf32>
    %67 = tpu.concatenate %46, %50, %54, %58, %62, %66 in 1 : vector<8x128xf32>, vector<8x128xf32>, vector<8x128xf32>, vector<8x128xf32>, vector<8x128xf32>, vector<8x128xf32> -> vector<8x768xf32>
    %c0_52 = arith.constant 0 : index
    %c0_53 = arith.constant 0 : index
    %68 = vector.load %arg7[%c0_52, %c0_53] : memref<1x768xf32, #tpu.memory_space<vmem>>, vector<1x768xf32>
    %69 = vector.broadcast %68 : vector<1x768xf32> to vector<8x768xf32>
    %70 = arith.addf %67, %69 : vector<8x768xf32>
    %cst_54 = arith.constant 0.00999999977 : f32
    %71 = vector.broadcast %cst_54 : f32 to vector<8x768xf32>
    %72 = arith.mulf %71, %70 : vector<8x768xf32>
    %73 = arith.maximumf %70, %72 : vector<8x768xf32>
    %74 = arith.truncf %73 : vector<8x768xf32> to vector<8x768xbf16>
    %c0_55 = arith.constant 0 : index
    %c0_56 = arith.constant 0 : index
    %75 = vector.load %arg8[%c0_55, %c0_56] : memref<768x512xbf16, #tpu.memory_space<vmem>>, vector<768x512xbf16>
    %cst_57 = arith.constant dense<0.000000e+00> : vector<8x512xf32>
    %76 = tpu.matmul %74, %75, %cst_57 {dimension_numbers = #tpu.dot_dimension_numbers<[1], [0], [0], [1], [0, 0, 1, 1], [], []>} : vector<8x768xbf16>, vector<768x512xbf16>, vector<8x512xf32> -> vector<8x512xf32>
    %c0_58 = arith.constant 0 : index
    %c0_59 = arith.constant 0 : index
    %77 = vector.load %arg9[%c0_58, %c0_59] : memref<1x512xf32, #tpu.memory_space<vmem>>, vector<1x512xf32>
    %78 = vector.broadcast %77 : vector<1x512xf32> to vector<8x512xf32>
    %79 = arith.addf %76, %78 : vector<8x512xf32>
    %cst_60 = arith.constant 0.00999999977 : f32
    %80 = vector.broadcast %cst_60 : f32 to vector<8x512xf32>
    %81 = arith.mulf %80, %79 : vector<8x512xf32>
    %82 = arith.maximumf %79, %81 : vector<8x512xf32>
    %83 = arith.truncf %82 : vector<8x512xf32> to vector<8x512xbf16>
    %c0_61 = arith.constant 0 : index
    %c0_62 = arith.constant 0 : index
    %84 = vector.load %arg10[%c0_61, %c0_62] : memref<512x16xbf16, #tpu.memory_space<vmem>>, vector<512x16xbf16>
    %cst_63 = arith.constant dense<0.000000e+00> : vector<8x16xf32>
    %85 = tpu.matmul %83, %84, %cst_63 {dimension_numbers = #tpu.dot_dimension_numbers<[1], [0], [0], [1], [0, 0, 1, 1], [], []>} : vector<8x512xbf16>, vector<512x16xbf16>, vector<8x16xf32> -> vector<8x16xf32>
    %c0_64 = arith.constant 0 : index
    %c0_65 = arith.constant 0 : index
    %86 = vector.load %arg11[%c0_64, %c0_65] : memref<1x16xf32, #tpu.memory_space<vmem>>, vector<1x16xf32>
    %87 = vector.broadcast %86 : vector<1x16xf32> to vector<8x16xf32>
    %88 = arith.addf %85, %87 : vector<8x16xf32>
    %c0_66 = arith.constant 0 : index
    %c0_67 = arith.constant 0 : index
    %89 = vector.load %arg12[%c0_66, %c0_67] : memref<8x16xf32, #tpu.memory_space<vmem>>, vector<8x16xf32>
    tpu.vector_store %arg12[%c0_66, %c0_67], %88 {strides = array<i32>} : memref<8x16xf32, #tpu.memory_space<vmem>>, vector<8x16xf32>,
    return
  }
  func.func @transform_0(%arg0: i32) -> (i32, i32) {
    %c0_i32 = arith.constant 0 : i32
    %c0_i32_0 = arith.constant 0 : i32
    return %arg0, %c0_i32 : i32, i32
  }
  func.func @transform_1(%arg0: i32) -> (i32, i32) {
    %c0_i32 = arith.constant 0 : i32
    %c0_i32_0 = arith.constant 0 : i32
    %c0_i32_1 = arith.constant 0 : i32
    return %c0_i32, %c0_i32_0 : i32, i32
  }
  func.func @transform_2(%arg0: i32) -> (i32, i32) {
    %c0_i32 = arith.constant 0 : i32
    %c0_i32_0 = arith.constant 0 : i32
    %c0_i32_1 = arith.constant 0 : i32
    return %c0_i32, %c0_i32_0 : i32, i32
  }
  func.func @transform_3(%arg0: i32) -> (i32, i32, i32) {
    %c0_i32 = arith.constant 0 : i32
    %c0_i32_0 = arith.constant 0 : i32
    %c0_i32_1 = arith.constant 0 : i32
    %c0_i32_2 = arith.constant 0 : i32
    return %c0_i32, %c0_i32_0, %c0_i32_1 : i32, i32, i32
  }
  func.func @transform_4(%arg0: i32) -> (i32, i32) {
    %c0_i32 = arith.constant 0 : i32
    %c0_i32_0 = arith.constant 0 : i32
    %c0_i32_1 = arith.constant 0 : i32
    return %c0_i32, %c0_i32_0 : i32, i32
  }
  func.func @transform_5(%arg0: i32) -> (i32, i32, i32) {
    %c0_i32 = arith.constant 0 : i32
    %c0_i32_0 = arith.constant 0 : i32
    %c0_i32_1 = arith.constant 0 : i32
    %c0_i32_2 = arith.constant 0 : i32
    return %c0_i32, %c0_i32_0, %c0_i32_1 : i32, i32, i32
  }
  func.func @transform_6(%arg0: i32) -> (i32, i32) {
    %c0_i32 = arith.constant 0 : i32
    %c0_i32_0 = arith.constant 0 : i32
    %c0_i32_1 = arith.constant 0 : i32
    return %c0_i32, %c0_i32_0 : i32, i32
  }
  func.func @transform_7(%arg0: i32) -> (i32, i32) {
    %c0_i32 = arith.constant 0 : i32
    %c0_i32_0 = arith.constant 0 : i32
    %c0_i32_1 = arith.constant 0 : i32
    return %c0_i32, %c0_i32_0 : i32, i32
  }
  func.func @transform_8(%arg0: i32) -> (i32, i32) {
    %c0_i32 = arith.constant 0 : i32
    %c0_i32_0 = arith.constant 0 : i32
    %c0_i32_1 = arith.constant 0 : i32
    return %c0_i32, %c0_i32_0 : i32, i32
  }
  func.func @transform_9(%arg0: i32) -> (i32, i32) {
    %c0_i32 = arith.constant 0 : i32
    %c0_i32_0 = arith.constant 0 : i32
    %c0_i32_1 = arith.constant 0 : i32
    return %c0_i32, %c0_i32_0 : i32, i32
  }
  func.func @transform_10(%arg0: i32) -> (i32, i32) {
    %c0_i32 = arith.constant 0 : i32
    %c0_i32_0 = arith.constant 0 : i32
    %c0_i32_1 = arith.constant 0 : i32
    return %c0_i32, %c0_i32_0 : i32, i32
  }
  func.func @transform_11(%arg0: i32) -> (i32, i32) {
    %c0_i32 = arith.constant 0 : i32
    %c0_i32_0 = arith.constant 0 : i32
    return %arg0, %c0_i32 : i32, i32
  }
}

</mosaic_0001>

<llo_original>
// kernel: _encoder_forward_impl.1
$region0: #{_encoder_forward_impl.1}
  #allocation0 [shape = 'u32[]', space=smem, size = 0x4, offset = 0x4, fixed_abs, tag = 'smem constant byte address 0x4 - core index']
  #allocation1 [shape = 'u32[144,128]{1,0:T(1,128)}', space=vmem, size = 0x12000, scoped, tag = 'internal scratch']
  %s0 = inlined_call_operand.vmem [shape: f32[8,1200], index: 0, kind: input, shape index: {}]
  %s1 = inlined_call_operand.vmem [shape: bf16[1200,896], index: 1, kind: input, shape index: {}]
  %s2 = inlined_call_operand.vmem [shape: f32[1,896], index: 2, kind: input, shape index: {}]
  %s3 = inlined_call_operand.vmem [shape: bf16[6,336,128], index: 3, kind: input, shape index: {}]
  %s4 = inlined_call_operand.vmem [shape: f32[1,768], index: 4, kind: input, shape index: {}]
  %s5 = inlined_call_operand.vmem [shape: bf16[6,328,128], index: 5, kind: input, shape index: {}]
  %s6 = inlined_call_operand.vmem [shape: f32[1,768], index: 6, kind: input, shape index: {}]
  %s7 = inlined_call_operand.vmem [shape: bf16[768,512], index: 7, kind: input, shape index: {}]
  %s8 = inlined_call_operand.vmem [shape: f32[1,512], index: 8, kind: input, shape index: {}]
  %s9 = inlined_call_operand.vmem [shape: bf16[512,16], index: 9, kind: input, shape index: {}]
  %s10 = inlined_call_operand.vmem [shape: f32[1,16], index: 10, kind: input, shape index: {}]
  %s11 = inlined_call_operand.vmem [shape: f32[8,16], index: 11, kind: output, shape index: {}]
  %s12 = sld [smem:[#allocation0]]
  $region54: #{_encoder_forward_impl.1} parent=0
    _
  %s14 = ssub.s32 1, %s12
  %s15 = scalar_select 0, %s14, %s12
  // Predicated region
  $region2: #{_encoder_forward_impl.1} parent=0 // pred_check
    _
  $region3: #{_encoder_forward_impl.1} parent=0 // pred_check_branch
    %17 = sbr.rel (0) target = $region5
  $region4: #{_encoder_forward_impl.1} parent=0 // pred_region
    _
  $region5: #{_encoder_forward_impl.1} parent=0 // pred_fallthru
    _
  // Predicated region
  $region6: #{_encoder_forward_impl.1} parent=0 // pred_check
    _
  $region7: #{_encoder_forward_impl.1} parent=0 // pred_check_branch
    %19 = sbr.rel (0) target = $region9
  $region8: #{_encoder_forward_impl.1} parent=0 // pred_region
    _
  $region9: #{_encoder_forward_impl.1} parent=0 // pred_fallthru
    _
  // Predicated region
  $region10: #{_encoder_forward_impl.1} parent=0 // pred_check
    _
  $region11: #{_encoder_forward_impl.1} parent=0 // pred_check_branch
    %21 = sbr.rel (0) target = $region13
  $region12: #{_encoder_forward_impl.1} parent=0 // pred_region
    _
  $region13: #{_encoder_forward_impl.1} parent=0 // pred_fallthru
    _
  // Predicated region
  $region14: #{_encoder_forward_impl.1} parent=0 // pred_check
    _
  $region15: #{_encoder_forward_impl.1} parent=0 // pred_check_branch
    %23 = sbr.rel (0) target = $region17
  $region16: #{_encoder_forward_impl.1} parent=0 // pred_region
    _
  $region17: #{_encoder_forward_impl.1} parent=0 // pred_fallthru
    _
  // Predicated region
  $region18: #{_encoder_forward_impl.1} parent=0 // pred_check
    _
  $region19: #{_encoder_forward_impl.1} parent=0 // pred_check_branch
    %25 = sbr.rel (0) target = $region21
  $region20: #{_encoder_forward_impl.1} parent=0 // pred_region
    _
  $region21: #{_encoder_forward_impl.1} parent=0 // pred_fallthru
    _
  // Predicated region
  $region22: #{_encoder_forward_impl.1} parent=0 // pred_check
    _
  $region23: #{_encoder_forward_impl.1} parent=0 // pred_check_branch
    %27 = sbr.rel (0) target = $region25
  $region24: #{_encoder_forward_impl.1} parent=0 // pred_region
    _
  $region25: #{_encoder_forward_impl.1} parent=0 // pred_fallthru
    _
  // Predicated region
  $region26: #{_encoder_forward_impl.1} parent=0 // pred_check
    _
  $region27: #{_encoder_forward_impl.1} parent=0 // pred_check_branch
    %29 = sbr.rel (0) target = $region29
  $region28: #{_encoder_forward_impl.1} parent=0 // pred_region
    _
  $region29: #{_encoder_forward_impl.1} parent=0 // pred_fallthru
    _
  // Predicated region
  $region30: #{_encoder_forward_impl.1} parent=0 // pred_check
    _
  $region31: #{_encoder_forward_impl.1} parent=0 // pred_check_branch
    %31 = sbr.rel (0) target = $region33
  $region32: #{_encoder_forward_impl.1} parent=0 // pred_region
    _
  $region33: #{_encoder_forward_impl.1} parent=0 // pred_fallthru
    _
  // Predicated region
  $region34: #{_encoder_forward_impl.1} parent=0 // pred_check
    _
  $region35: #{_encoder_forward_impl.1} parent=0 // pred_check_branch
    %33 = sbr.rel (0) target = $region37
  $region36: #{_encoder_forward_impl.1} parent=0 // pred_region
    _
  $region37: #{_encoder_forward_impl.1} parent=0 // pred_fallthru
    _
  // Predicated region
  $region38: #{_encoder_forward_impl.1} parent=0 // pred_check
    _
  $region39: #{_encoder_forward_impl.1} parent=0 // pred_check_branch
    %35 = sbr.rel (0) target = $region41
  $region40: #{_encoder_forward_impl.1} parent=0 // pred_region
    _
  $region41: #{_encoder_forward_impl.1} parent=0 // pred_fallthru
    _
  // Predicated region
  $region42: #{_encoder_forward_impl.1} parent=0 // pred_check
    _
  $region43: #{_encoder_forward_impl.1} parent=0 // pred_check_branch
    %37 = sbr.rel (0) target = $region45
  $region44: #{_encoder_forward_impl.1} parent=0 // pred_region
    _
  $region45: #{_encoder_forward_impl.1} parent=0 // pred_fallthru
    _
  %v39 = vld [vmem:[%s0] sm:$0xff]
  %v40 = vld [vmem:[%s0 + $0x8] sm:$0xff]
  %v41 = vld [vmem:[%s0 + $0x10] sm:$0xff]
  %v42 = vld [vmem:[%s0 + $0x18] sm:$0xff]
  %v43 = vld [vmem:[%s0 + $0x20] sm:$0xff]
  %v44 = vld [vmem:[%s0 + $0x28] sm:$0xff]
  %v45 = vld [vmem:[%s0 + $0x30] sm:$0xff]
  %v46 = vld [vmem:[%s0 + $0x38] sm:$0xff]
  %v47 = vld [vmem:[%s0 + $0x40] sm:$0xff]
  %v48 = vld [vmem:[%s0 + $0x48] sm:$0xff]
  %v49 = vpack.c.bf16 %v39, %v39
  %v50 = vpack.c.bf16 %v40, %v40
  %v51 = vpack.c.bf16 %v41, %v41
  %v52 = vpack.c.bf16 %v42, %v42
  %v53 = vpack.c.bf16 %v43, %v43
  %v54 = vpack.c.bf16 %v44, %v44
  %v55 = vpack.c.bf16 %v45, %v45
  %v56 = vpack.c.bf16 %v46, %v46
  %v57 = vpack.c.bf16 %v47, %v47
  %v58 = vpack.c.bf16 %v48, %v48
  %v59 = vld [vmem:[%s1] sm:$0xff]
  %v60 = vld [vmem:[%s1 + $0x8] sm:$0xff]
  %v61 = vld [vmem:[%s1 + $0x10] sm:$0xff]
  %v62 = vld [vmem:[%s1 + $0x18] sm:$0xf]
  %v63 = vld [vmem:[%s1 + $0x1c] sm:$0xff]
  %v64 = vld [vmem:[%s1 + $0x24] sm:$0xff]
  %v65 = vld [vmem:[%s1 + $0x2c] sm:$0xff]
  %v66 = vld [vmem:[%s1 + $0x34] sm:$0xf]
  %v67 = vld [vmem:[%s1 + $0x38] sm:$0xff]
  %v68 = vld [vmem:[%s1 + $0x40] sm:$0xff]
  %v69 = vld [vmem:[%s1 + $0x48] sm:$0xff]
  %v70 = vld [vmem:[%s1 + $0x50] sm:$0xf]
  %v71 = vld [vmem:[%s1 + $0x54] sm:$0xff]
  %v72 = vld [vmem:[%s1 + $0x5c] sm:$0xff]
  %v73 = vld [vmem:[%s1 + $0x64] sm:$0xff]
  %v74 = vld [vmem:[%s1 + $0x6c] sm:$0xf]
  %v75 = vld [vmem:[%s1 + $0x70] sm:$0xff]
  %v76 = vld [vmem:[%s1 + $0x78] sm:$0xff]
  %v77 = vld [vmem:[%s1 + $0x80] sm:$0xff]
  %v78 = vld [vmem:[%s1 + $0x88] sm:$0xf]
  %v79 = vld [vmem:[%s1 + $0x8c] sm:$0xff]
  %v80 = vld [vmem:[%s1 + $0x94] sm:$0xff]
  %v81 = vld [vmem:[%s1 + $0x9c] sm:$0xff]
  %v82 = vld [vmem:[%s1 + $0xa4] sm:$0xf]
  %v83 = vld [vmem:[%s1 + $0xa8] sm:$0xff]
  %v84 = vld [vmem:[%s1 + $0xb0] sm:$0xff]
  %v85 = vld [vmem:[%s1 + $0xb8] sm:$0xff]
  %v86 = vld [vmem:[%s1 + $0xc0] sm:$0xf]
  %v87 = vld [vmem:[%s1 + $0xc4] sm:$0xff]
  %v88 = vld [vmem:[%s1 + $0xcc] sm:$0xff]
  %v89 = vld [vmem:[%s1 + $0xd4] sm:$0xff]
  %v90 = vld [vmem:[%s1 + $0xdc] sm:$0xf]
  %v91 = vld [vmem:[%s1 + $0xe0] sm:$0xff]
  %v92 = vld [vmem:[%s1 + $0xe8] sm:$0xff]
  %v93 = vld [vmem:[%s1 + $0xf0] sm:$0xff]
  %v94 = vld [vmem:[%s1 + $0xf8] sm:$0xf]
  %v95 = vld [vmem:[%s1 + $0xfc] sm:$0xff]
  %v96 = vld [vmem:[%s1 + $0x104] sm:$0xff]
  %v97 = vld [vmem:[%s1 + $0x10c] sm:$0xff]
  %v98 = vld [vmem:[%s1 + $0x114] sm:$0xf]
  %v99 = vld [vmem:[%s1 + $0x118] sm:$0xff]
  %v100 = vld [vmem:[%s1 + $0x120] sm:$0xff]
  %v101 = vld [vmem:[%s1 + $0x128] sm:$0xff]
  %v102 = vld [vmem:[%s1 + $0x130] sm:$0xf]
  %v103 = vld [vmem:[%s1 + $0x134] sm:$0xff]
  %v104 = vld [vmem:[%s1 + $0x13c] sm:$0xff]
  %v105 = vld [vmem:[%s1 + $0x144] sm:$0xff]
  %v106 = vld [vmem:[%s1 + $0x14c] sm:$0xf]
  %v107 = vld [vmem:[%s1 + $0x150] sm:$0xff]
  %v108 = vld [vmem:[%s1 + $0x158] sm:$0xff]
  %v109 = vld [vmem:[%s1 + $0x160] sm:$0xff]
  %v110 = vld [vmem:[%s1 + $0x168] sm:$0xf]
  %v111 = vld [vmem:[%s1 + $0x16c] sm:$0xff]
  %v112 = vld [vmem:[%s1 + $0x174] sm:$0xff]
  %v113 = vld [vmem:[%s1 + $0x17c] sm:$0xff]
  %v114 = vld [vmem:[%s1 + $0x184] sm:$0xf]
  %v115 = vld [vmem:[%s1 + $0x188] sm:$0xff]
  %v116 = vld [vmem:[%s1 + $0x190] sm:$0xff]
  %v117 = vld [vmem:[%s1 + $0x198] sm:$0xff]
  %v118 = vld [vmem:[%s1 + $0x1a0] sm:$0xf]
  %v119 = vld [vmem:[%s1 + $0x1a4] sm:$0xff]
  %v120 = vld [vmem:[%s1 + $0x1ac] sm:$0xff]
  %v121 = vld [vmem:[%s1 + $0x1b4] sm:$0xff]
  %v122 = vld [vmem:[%s1 + $0x1bc] sm:$0xf]
  %v123 = vld [vmem:[%s1 + $0x1c0] sm:$0xff]
  %v124 = vld [vmem:[%s1 + $0x1c8] sm:$0xff]
  %v125 = vld [vmem:[%s1 + $0x1d0] sm:$0xff]
  %v126 = vld [vmem:[%s1 + $0x1d8] sm:$0xf]
  %v127 = vld [vmem:[%s1 + $0x1dc] sm:$0xff]
  %v128 = vld [vmem:[%s1 + $0x1e4] sm:$0xff]
  %v129 = vld [vmem:[%s1 + $0x1ec] sm:$0xff]
  %v130 = vld [vmem:[%s1 + $0x1f4] sm:$0xf]
  %v131 = vld [vmem:[%s1 + $0x1f8] sm:$0xff]
  %v132 = vld [vmem:[%s1 + $0x200] sm:$0xff]
  %v133 = vld [vmem:[%s1 + $0x208] sm:$0xff]
  %v134 = vld [vmem:[%s1 + $0x210] sm:$0xf]
  %v135 = vld [vmem:[%s1 + $0x214] sm:$0xff]
  %v136 = vld [vmem:[%s1 + $0x21c] sm:$0xff]
  %v137 = vld [vmem:[%s1 + $0x224] sm:$0xff]
  %v138 = vld [vmem:[%s1 + $0x22c] sm:$0xf]
  %v139 = vld [vmem:[%s1 + $0x230] sm:$0xff]
  %v140 = vld [vmem:[%s1 + $0x238] sm:$0xff]
  %v141 = vld [vmem:[%s1 + $0x240] sm:$0xff]
  %v142 = vld [vmem:[%s1 + $0x248] sm:$0xf]
  %v143 = vld [vmem:[%s1 + $0x24c] sm:$0xff]
  %v144 = vld [vmem:[%s1 + $0x254] sm:$0xff]
  %v145 = vld [vmem:[%s1 + $0x25c] sm:$0xff]
  %v146 = vld [vmem:[%s1 + $0x264] sm:$0xf]
  %v147 = vld [vmem:[%s1 + $0x268] sm:$0xff]
  %v148 = vld [vmem:[%s1 + $0x270] sm:$0xff]
  %v149 = vld [vmem:[%s1 + $0x278] sm:$0xff]
  %v150 = vld [vmem:[%s1 + $0x280] sm:$0xf]
  %v151 = vld [vmem:[%s1 + $0x284] sm:$0xff]
  %v152 = vld [vmem:[%s1 + $0x28c] sm:$0xff]
  %v153 = vld [vmem:[%s1 + $0x294] sm:$0xff]
  %v154 = vld [vmem:[%s1 + $0x29c] sm:$0xf]
  %v155 = vld [vmem:[%s1 + $0x2a0] sm:$0xff]
  %v156 = vld [vmem:[%s1 + $0x2a8] sm:$0xff]
  %v157 = vld [vmem:[%s1 + $0x2b0] sm:$0xff]
  %v158 = vld [vmem:[%s1 + $0x2b8] sm:$0xf]
  %v159 = vld [vmem:[%s1 + $0x2bc] sm:$0xff]
  %v160 = vld [vmem:[%s1 + $0x2c4] sm:$0xff]
  %v161 = vld [vmem:[%s1 + $0x2cc] sm:$0xff]
  %v162 = vld [vmem:[%s1 + $0x2d4] sm:$0xf]
  %v163 = vld [vmem:[%s1 + $0x2d8] sm:$0xff]
  %v164 = vld [vmem:[%s1 + $0x2e0] sm:$0xff]
  %v165 = vld [vmem:[%s1 + $0x2e8] sm:$0xff]
  %v166 = vld [vmem:[%s1 + $0x2f0] sm:$0xf]
  %v167 = vld [vmem:[%s1 + $0x2f4] sm:$0xff]
  %v168 = vld [vmem:[%s1 + $0x2fc] sm:$0xff]
  %v169 = vld [vmem:[%s1 + $0x304] sm:$0xff]
  %v170 = vld [vmem:[%s1 + $0x30c] sm:$0xf]
  %v171 = vld [vmem:[%s1 + $0x310] sm:$0xff]
  %v172 = vld [vmem:[%s1 + $0x318] sm:$0xff]
  %v173 = vld [vmem:[%s1 + $0x320] sm:$0xff]
  %v174 = vld [vmem:[%s1 + $0x328] sm:$0xf]
  %v175 = vld [vmem:[%s1 + $0x32c] sm:$0xff]
  %v176 = vld [vmem:[%s1 + $0x334] sm:$0xff]
  %v177 = vld [vmem:[%s1 + $0x33c] sm:$0xff]
  %v178 = vld [vmem:[%s1 + $0x344] sm:$0xf]
  %v179 = vld [vmem:[%s1 + $0x348] sm:$0xff]
  %v180 = vld [vmem:[%s1 + $0x350] sm:$0xff]
  %v181 = vld [vmem:[%s1 + $0x358] sm:$0xff]
  %v182 = vld [vmem:[%s1 + $0x360] sm:$0xf]
  %v183 = vld [vmem:[%s1 + $0x364] sm:$0xff]
  %v184 = vld [vmem:[%s1 + $0x36c] sm:$0xff]
  %v185 = vld [vmem:[%s1 + $0x374] sm:$0xff]
  %v186 = vld [vmem:[%s1 + $0x37c] sm:$0xf]
  %v187 = vld [vmem:[%s1 + $0x380] sm:$0xff]
  %v188 = vld [vmem:[%s1 + $0x388] sm:$0xff]
  %v189 = vld [vmem:[%s1 + $0x390] sm:$0xff]
  %v190 = vld [vmem:[%s1 + $0x398] sm:$0xf]
  %v191 = vld [vmem:[%s1 + $0x39c] sm:$0xff]
  %v192 = vld [vmem:[%s1 + $0x3a4] sm:$0xff]
  %v193 = vld [vmem:[%s1 + $0x3ac] sm:$0xff]
  %v194 = vld [vmem:[%s1 + $0x3b4] sm:$0xf]
  %v195 = vld [vmem:[%s1 + $0x3b8] sm:$0xff]
  %v196 = vld [vmem:[%s1 + $0x3c0] sm:$0xff]
  %v197 = vld [vmem:[%s1 + $0x3c8] sm:$0xff]
  %v198 = vld [vmem:[%s1 + $0x3d0] sm:$0xf]
  %v199 = vld [vmem:[%s1 + $0x3d4] sm:$0xff]
  %v200 = vld [vmem:[%s1 + $0x3dc] sm:$0xff]
  %v201 = vld [vmem:[%s1 + $0x3e4] sm:$0xff]
  %v202 = vld [vmem:[%s1 + $0x3ec] sm:$0xf]
  %v203 = vld [vmem:[%s1 + $0x3f0] sm:$0xff]
  %v204 = vld [vmem:[%s1 + $0x3f8] sm:$0xff]
  %v205 = vld [vmem:[%s1 + $0x400] sm:$0xff]
  %v206 = vld [vmem:[%s1 + $0x408] sm:$0xf]
  %v207 = vld [vmem:[%s1 + $0x40c] sm:$0xff]
  %v208 = vld [vmem:[%s1 + $0x414] sm:$0xff]
  %v209 = vld [vmem:[%s1 + $0x41c] sm:$0xff]
  %v210 = vld [vmem:[%s1 + $0x424] sm:$0xf]
  %v211 = vld [vmem:[%s1 + $0x428] sm:$0xff]
  %v212 = vld [vmem:[%s1 + $0x430] sm:$0xff]
  %v213 = vld [vmem:[%s1 + $0x438] sm:$0xff]
  %v214 = vld [vmem:[%s1 + $0x440] sm:$0xf]
  %v215 = vld [vmem:[%s1 + $0x444] sm:$0xff]
  %v216 = vld [vmem:[%s1 + $0x44c] sm:$0xff]
  %v217 = vld [vmem:[%s1 + $0x454] sm:$0xff]
  %v218 = vld [vmem:[%s1 + $0x45c] sm:$0xf]
  %v219 = vld [vmem:[%s1 + $0x460] sm:$0xff]
  %v220 = vld [vmem:[%s1 + $0x468] sm:$0xff]
  %v221 = vld [vmem:[%s1 + $0x470] sm:$0xff]
  %v222 = vld [vmem:[%s1 + $0x478] sm:$0xf]
  %v223 = vld [vmem:[%s1 + $0x47c] sm:$0xff]
  %v224 = vld [vmem:[%s1 + $0x484] sm:$0xff]
  %v225 = vld [vmem:[%s1 + $0x48c] sm:$0xff]
  %v226 = vld [vmem:[%s1 + $0x494] sm:$0xf]
  %v227 = vld [vmem:[%s1 + $0x498] sm:$0xff]
  %v228 = vld [vmem:[%s1 + $0x4a0] sm:$0xff]
  %v229 = vld [vmem:[%s1 + $0x4a8] sm:$0xff]
  %v230 = vld [vmem:[%s1 + $0x4b0] sm:$0xf]
  %v231 = vld [vmem:[%s1 + $0x4b4] sm:$0xff]
  %v232 = vld [vmem:[%s1 + $0x4bc] sm:$0xff]
  %v233 = vld [vmem:[%s1 + $0x4c4] sm:$0xff]
  %v234 = vld [vmem:[%s1 + $0x4cc] sm:$0xf]
  %v235 = vld [vmem:[%s1 + $0x4d0] sm:$0xff]
  %v236 = vld [vmem:[%s1 + $0x4d8] sm:$0xff]
  %v237 = vld [vmem:[%s1 + $0x4e0] sm:$0xff]
  %v238 = vld [vmem:[%s1 + $0x4e8] sm:$0xf]
  %v239 = vld [vmem:[%s1 + $0x4ec] sm:$0xff]
  %v240 = vld [vmem:[%s1 + $0x4f4] sm:$0xff]
  %v241 = vld [vmem:[%s1 + $0x4fc] sm:$0xff]
  %v242 = vld [vmem:[%s1 + $0x504] sm:$0xf]
  %v243 = vld [vmem:[%s1 + $0x508] sm:$0xff]
  %v244 = vld [vmem:[%s1 + $0x510] sm:$0xff]
  %v245 = vld [vmem:[%s1 + $0x518] sm:$0xff]
  %v246 = vld [vmem:[%s1 + $0x520] sm:$0xf]
  %v247 = vld [vmem:[%s1 + $0x524] sm:$0xff]
  %v248 = vld [vmem:[%s1 + $0x52c] sm:$0xff]
  %v249 = vld [vmem:[%s1 + $0x534] sm:$0xff]
  %v250 = vld [vmem:[%s1 + $0x53c] sm:$0xf]
  %v251 = vld [vmem:[%s1 + $0x540] sm:$0xff]
  %v252 = vld [vmem:[%s1 + $0x548] sm:$0xff]
  %v253 = vld [vmem:[%s1 + $0x550] sm:$0xff]
  %v254 = vld [vmem:[%s1 + $0x558] sm:$0xf]
  %v255 = vld [vmem:[%s1 + $0x55c] sm:$0xff]
  %v256 = vld [vmem:[%s1 + $0x564] sm:$0xff]
  %v257 = vld [vmem:[%s1 + $0x56c] sm:$0xff]
  %v258 = vld [vmem:[%s1 + $0x574] sm:$0xf]
  %v259 = vld [vmem:[%s1 + $0x578] sm:$0xff]
  %v260 = vld [vmem:[%s1 + $0x580] sm:$0xff]
  %v261 = vld [vmem:[%s1 + $0x588] sm:$0xff]
  %v262 = vld [vmem:[%s1 + $0x590] sm:$0xf]
  %v263 = vld [vmem:[%s1 + $0x594] sm:$0xff]
  %v264 = vld [vmem:[%s1 + $0x59c] sm:$0xff]
  %v265 = vld [vmem:[%s1 + $0x5a4] sm:$0xff]
  %v266 = vld [vmem:[%s1 + $0x5ac] sm:$0xf]
  %v267 = vld [vmem:[%s1 + $0x5b0] sm:$0xff]
  %v268 = vld [vmem:[%s1 + $0x5b8] sm:$0xff]
  %v269 = vld [vmem:[%s1 + $0x5c0] sm:$0xff]
  %v270 = vld [vmem:[%s1 + $0x5c8] sm:$0xf]
  %v271 = vld [vmem:[%s1 + $0x5cc] sm:$0xff]
  %v272 = vld [vmem:[%s1 + $0x5d4] sm:$0xff]
  %v273 = vld [vmem:[%s1 + $0x5dc] sm:$0xff]
  %v274 = vld [vmem:[%s1 + $0x5e4] sm:$0xf]
  %v275 = vld [vmem:[%s1 + $0x5e8] sm:$0xff]
  %v276 = vld [vmem:[%s1 + $0x5f0] sm:$0xff]
  %v277 = vld [vmem:[%s1 + $0x5f8] sm:$0xff]
  %v278 = vld [vmem:[%s1 + $0x600] sm:$0xf]
  %v279 = vld [vmem:[%s1 + $0x604] sm:$0xff]
  %v280 = vld [vmem:[%s1 + $0x60c] sm:$0xff]
  %v281 = vld [vmem:[%s1 + $0x614] sm:$0xff]
  %v282 = vld [vmem:[%s1 + $0x61c] sm:$0xf]
  %v283 = vld [vmem:[%s1 + $0x620] sm:$0xff]
  %v284 = vld [vmem:[%s1 + $0x628] sm:$0xff]
  %v285 = vld [vmem:[%s1 + $0x630] sm:$0xff]
  %v286 = vld [vmem:[%s1 + $0x638] sm:$0xf]
  %v287 = vld [vmem:[%s1 + $0x63c] sm:$0xff]
  %v288 = vld [vmem:[%s1 + $0x644] sm:$0xff]
  %v289 = vld [vmem:[%s1 + $0x64c] sm:$0xff]
  %v290 = vld [vmem:[%s1 + $0x654] sm:$0xf]
  %v291 = vld [vmem:[%s1 + $0x658] sm:$0xff]
  %v292 = vld [vmem:[%s1 + $0x660] sm:$0xff]
  %v293 = vld [vmem:[%s1 + $0x668] sm:$0xff]
  %v294 = vld [vmem:[%s1 + $0x670] sm:$0xf]
  %v295 = vld [vmem:[%s1 + $0x674] sm:$0xff]
  %v296 = vld [vmem:[%s1 + $0x67c] sm:$0xff]
  %v297 = vld [vmem:[%s1 + $0x684] sm:$0xff]
  %v298 = vld [vmem:[%s1 + $0x68c] sm:$0xf]
  %v299 = vld [vmem:[%s1 + $0x690] sm:$0xff]
  %v300 = vld [vmem:[%s1 + $0x698] sm:$0xff]
  %v301 = vld [vmem:[%s1 + $0x6a0] sm:$0xff]
  %v302 = vld [vmem:[%s1 + $0x6a8] sm:$0xf]
  %v303 = vld [vmem:[%s1 + $0x6ac] sm:$0xff]
  %v304 = vld [vmem:[%s1 + $0x6b4] sm:$0xff]
  %v305 = vld [vmem:[%s1 + $0x6bc] sm:$0xff]
  %v306 = vld [vmem:[%s1 + $0x6c4] sm:$0xf]
  %v307 = vld [vmem:[%s1 + $0x6c8] sm:$0xff]
  %v308 = vld [vmem:[%s1 + $0x6d0] sm:$0xff]
  %v309 = vld [vmem:[%s1 + $0x6d8] sm:$0xff]
  %v310 = vld [vmem:[%s1 + $0x6e0] sm:$0xf]
  %v311 = vld [vmem:[%s1 + $0x6e4] sm:$0xff]
  %v312 = vld [vmem:[%s1 + $0x6ec] sm:$0xff]
  %v313 = vld [vmem:[%s1 + $0x6f4] sm:$0xff]
  %v314 = vld [vmem:[%s1 + $0x6fc] sm:$0xf]
  %v315 = vld [vmem:[%s1 + $0x700] sm:$0xff]
  %v316 = vld [vmem:[%s1 + $0x708] sm:$0xff]
  %v317 = vld [vmem:[%s1 + $0x710] sm:$0xff]
  %v318 = vld [vmem:[%s1 + $0x718] sm:$0xf]
  %v319 = vld [vmem:[%s1 + $0x71c] sm:$0xff]
  %v320 = vld [vmem:[%s1 + $0x724] sm:$0xff]
  %v321 = vld [vmem:[%s1 + $0x72c] sm:$0xff]
  %v322 = vld [vmem:[%s1 + $0x734] sm:$0xf]
  %v323 = vld [vmem:[%s1 + $0x738] sm:$0xff]
  %v324 = vld [vmem:[%s1 + $0x740] sm:$0xff]
  %v325 = vld [vmem:[%s1 + $0x748] sm:$0xff]
  %v326 = vld [vmem:[%s1 + $0x750] sm:$0xf]
  %v327 = vld [vmem:[%s1 + $0x754] sm:$0xff]
  %v328 = vld [vmem:[%s1 + $0x75c] sm:$0xff]
  %v329 = vld [vmem:[%s1 + $0x764] sm:$0xff]
  %v330 = vld [vmem:[%s1 + $0x76c] sm:$0xf]
  %v331 = vld [vmem:[%s1 + $0x770] sm:$0xff]
  %v332 = vld [vmem:[%s1 + $0x778] sm:$0xff]
  %v333 = vld [vmem:[%s1 + $0x780] sm:$0xff]
  %v334 = vld [vmem:[%s1 + $0x788] sm:$0xf]
  %v335 = vld [vmem:[%s1 + $0x78c] sm:$0xff]
  %v336 = vld [vmem:[%s1 + $0x794] sm:$0xff]
  %v337 = vld [vmem:[%s1 + $0x79c] sm:$0xff]
  %v338 = vld [vmem:[%s1 + $0x7a4] sm:$0xf]
  %v339 = vld [vmem:[%s1 + $0x7a8] sm:$0xff]
  %v340 = vld [vmem:[%s1 + $0x7b0] sm:$0xff]
  %v341 = vld [vmem:[%s1 + $0x7b8] sm:$0xff]
  %v342 = vld [vmem:[%s1 + $0x7c0] sm:$0xf]
  %v343 = vld [vmem:[%s1 + $0x7c4] sm:$0xff]
  %v344 = vld [vmem:[%s1 + $0x7cc] sm:$0xff]
  %v345 = vld [vmem:[%s1 + $0x7d4] sm:$0xff]
  %v346 = vld [vmem:[%s1 + $0x7dc] sm:$0xf]
  %v347 = vld [vmem:[%s1 + $0x7e0] sm:$0xff]
  %v348 = vld [vmem:[%s1 + $0x7e8] sm:$0xff]
  %v349 = vld [vmem:[%s1 + $0x7f0] sm:$0xff]
  %v350 = vld [vmem:[%s1 + $0x7f8] sm:$0xf]
  %v351 = vld [vmem:[%s1 + $0x7fc] sm:$0xff]
  %v352 = vld [vmem:[%s1 + $0x804] sm:$0xff]
  %v353 = vld [vmem:[%s1 + $0x80c] sm:$0xff]
  %v354 = vld [vmem:[%s1 + $0x814] sm:$0xf]
  %v355 = vld [vmem:[%s1 + $0x818] sm:$0xff]
  %v356 = vld [vmem:[%s1 + $0x820] sm:$0xff]
  %v357 = vld [vmem:[%s1 + $0x828] sm:$0xff]
  %v358 = vld [vmem:[%s1 + $0x830] sm:$0xf]
  %v359 = vld [vmem:[%s1 + $0x834] sm:$0xff]
  %v360 = vld [vmem:[%s1 + $0x83c] sm:$0xff]
  %v361 = vld [vmem:[%s1 + $0x844] sm:$0xff]
  %v362 = vld [vmem:[%s1 + $0x84c] sm:$0xf]
  %v363 = vld [vmem:[%s1 + $0x850] sm:$0xff]
  %v364 = vld [vmem:[%s1 + $0x858] sm:$0xff]
  %v365 = vld [vmem:[%s1 + $0x860] sm:$0xff]
  %v366 = vld [vmem:[%s1 + $0x868] sm:$0xf]
  %v367 = vld [vmem:[%s1 + $0x86c] sm:$0xff]
  %v368 = vld [vmem:[%s1 + $0x874] sm:$0xff]
  %v369 = vld [vmem:[%s1 + $0x87c] sm:$0xff]
  %v370 = vld [vmem:[%s1 + $0x884] sm:$0xf]
  %v371 = vld [vmem:[%s1 + $0x888] sm:$0xff]
  %v372 = vld [vmem:[%s1 + $0x890] sm:$0xff]
  %v373 = vld [vmem:[%s1 + $0x898] sm:$0xff]
  %v374 = vld [vmem:[%s1 + $0x8a0] sm:$0xf]
  %v375 = vld [vmem:[%s1 + $0x8a4] sm:$0xff]
  %v376 = vld [vmem:[%s1 + $0x8ac] sm:$0xff]
  %v377 = vld [vmem:[%s1 + $0x8b4] sm:$0xff]
  %v378 = vld [vmem:[%s1 + $0x8bc] sm:$0xf]
  %v379 = vld [vmem:[%s1 + $0x8c0] sm:$0xff]
  %v380 = vld [vmem:[%s1 + $0x8c8] sm:$0xff]
  %v381 = vld [vmem:[%s1 + $0x8d0] sm:$0xff]
  %v382 = vld [vmem:[%s1 + $0x8d8] sm:$0xf]
  %v383 = vld [vmem:[%s1 + $0x8dc] sm:$0xff]
  %v384 = vld [vmem:[%s1 + $0x8e4] sm:$0xff]
  %v385 = vld [vmem:[%s1 + $0x8ec] sm:$0xff]
  %v386 = vld [vmem:[%s1 + $0x8f4] sm:$0xf]
  %v387 = vld [vmem:[%s1 + $0x8f8] sm:$0xff]
  %v388 = vld [vmem:[%s1 + $0x900] sm:$0xff]
  %v389 = vld [vmem:[%s1 + $0x908] sm:$0xff]
  %v390 = vld [vmem:[%s1 + $0x910] sm:$0xf]
  %v391 = vld [vmem:[%s1 + $0x914] sm:$0xff]
  %v392 = vld [vmem:[%s1 + $0x91c] sm:$0xff]
  %v393 = vld [vmem:[%s1 + $0x924] sm:$0xff]
  %v394 = vld [vmem:[%s1 + $0x92c] sm:$0xf]
  %v395 = vld [vmem:[%s1 + $0x930] sm:$0xff]
  %v396 = vld [vmem:[%s1 + $0x938] sm:$0xff]
  %v397 = vld [vmem:[%s1 + $0x940] sm:$0xff]
  %v398 = vld [vmem:[%s1 + $0x948] sm:$0xf]
  %v399 = vld [vmem:[%s1 + $0x94c] sm:$0xff]
  %v400 = vld [vmem:[%s1 + $0x954] sm:$0xff]
  %v401 = vld [vmem:[%s1 + $0x95c] sm:$0xff]
  %v402 = vld [vmem:[%s1 + $0x964] sm:$0xf]
  %v403 = vld [vmem:[%s1 + $0x968] sm:$0xff]
  %v404 = vld [vmem:[%s1 + $0x970] sm:$0xff]
  %v405 = vld [vmem:[%s1 + $0x978] sm:$0xff]
  %v406 = vld [vmem:[%s1 + $0x980] sm:$0xf]
  %v407 = vld [vmem:[%s1 + $0x984] sm:$0xff]
  %v408 = vld [vmem:[%s1 + $0x98c] sm:$0xff]
  %v409 = vld [vmem:[%s1 + $0x994] sm:$0xff]
  %v410 = vld [vmem:[%s1 + $0x99c] sm:$0xf]
  %v411 = vld [vmem:[%s1 + $0x9a0] sm:$0xff]
  %v412 = vld [vmem:[%s1 + $0x9a8] sm:$0xff]
  %v413 = vld [vmem:[%s1 + $0x9b0] sm:$0xff]
  %v414 = vld [vmem:[%s1 + $0x9b8] sm:$0xf]
  %v415 = vld [vmem:[%s1 + $0x9bc] sm:$0xff]
  %v416 = vld [vmem:[%s1 + $0x9c4] sm:$0xff]
  %v417 = vld [vmem:[%s1 + $0x9cc] sm:$0xff]
  %v418 = vld [vmem:[%s1 + $0x9d4] sm:$0xf]
  %v419 = vld [vmem:[%s1 + $0x9d8] sm:$0xff]
  %v420 = vld [vmem:[%s1 + $0x9e0] sm:$0xff]
  %v421 = vld [vmem:[%s1 + $0x9e8] sm:$0xff]
  %v422 = vld [vmem:[%s1 + $0x9f0] sm:$0xf]
  %v423 = vld [vmem:[%s1 + $0x9f4] sm:$0xff]
  %v424 = vld [vmem:[%s1 + $0x9fc] sm:$0xff]
  %v425 = vld [vmem:[%s1 + $0xa04] sm:$0xff]
  %v426 = vld [vmem:[%s1 + $0xa0c] sm:$0xf]
  %v427 = vld [vmem:[%s1 + $0xa10] sm:$0xff]
  %v428 = vld [vmem:[%s1 + $0xa18] sm:$0xff]
  %v429 = vld [vmem:[%s1 + $0xa20] sm:$0xff]
  %v430 = vld [vmem:[%s1 + $0xa28] sm:$0xf]
  %v431 = vld [vmem:[%s1 + $0xa2c] sm:$0xff]
  %v432 = vld [vmem:[%s1 + $0xa34] sm:$0xff]
  %v433 = vld [vmem:[%s1 + $0xa3c] sm:$0xff]
  %v434 = vld [vmem:[%s1 + $0xa44] sm:$0xf]
  %v435 = vld [vmem:[%s1 + $0xa48] sm:$0xff]
  %v436 = vld [vmem:[%s1 + $0xa50] sm:$0xff]
  %v437 = vld [vmem:[%s1 + $0xa58] sm:$0xff]
  %v438 = vld [vmem:[%s1 + $0xa60] sm:$0xf]
  %v439 = vld [vmem:[%s1 + $0xa64] sm:$0xff]
  %v440 = vld [vmem:[%s1 + $0xa6c] sm:$0xff]
  %v441 = vld [vmem:[%s1 + $0xa74] sm:$0xff]
  %v442 = vld [vmem:[%s1 + $0xa7c] sm:$0xf]
  %v443 = vld [vmem:[%s1 + $0xa80] sm:$0xff]
  %v444 = vld [vmem:[%s1 + $0xa88] sm:$0xff]
  %v445 = vld [vmem:[%s1 + $0xa90] sm:$0xff]
  %v446 = vld [vmem:[%s1 + $0xa98] sm:$0xf]
  %v447 = vld [vmem:[%s1 + $0xa9c] sm:$0xff]
  %v448 = vld [vmem:[%s1 + $0xaa4] sm:$0xff]
  %v449 = vld [vmem:[%s1 + $0xaac] sm:$0xff]
  %v450 = vld [vmem:[%s1 + $0xab4] sm:$0xf]
  %v451 = vld [vmem:[%s1 + $0xab8] sm:$0xff]
  %v452 = vld [vmem:[%s1 + $0xac0] sm:$0xff]
  %v453 = vld [vmem:[%s1 + $0xac8] sm:$0xff]
  %v454 = vld [vmem:[%s1 + $0xad0] sm:$0xf]
  %v455 = vld [vmem:[%s1 + $0xad4] sm:$0xff]
  %v456 = vld [vmem:[%s1 + $0xadc] sm:$0xff]
  %v457 = vld [vmem:[%s1 + $0xae4] sm:$0xff]
  %v458 = vld [vmem:[%s1 + $0xaec] sm:$0xf]
  %v459 = vld [vmem:[%s1 + $0xaf0] sm:$0xff]
  %v460 = vld [vmem:[%s1 + $0xaf8] sm:$0xff]
  %v461 = vld [vmem:[%s1 + $0xb00] sm:$0xff]
  %v462 = vld [vmem:[%s1 + $0xb08] sm:$0xf]
  %v463 = vld [vmem:[%s1 + $0xb0c] sm:$0xff]
  %v464 = vld [vmem:[%s1 + $0xb14] sm:$0xff]
  %v465 = vld [vmem:[%s1 + $0xb1c] sm:$0xff]
  %v466 = vld [vmem:[%s1 + $0xb24] sm:$0xf]
  %v467 = vld [vmem:[%s1 + $0xb28] sm:$0xff]
  %v468 = vld [vmem:[%s1 + $0xb30] sm:$0xff]
  %v469 = vld [vmem:[%s1 + $0xb38] sm:$0xff]
  %v470 = vld [vmem:[%s1 + $0xb40] sm:$0xf]
  %v471 = vld [vmem:[%s1 + $0xb44] sm:$0xff]
  %v472 = vld [vmem:[%s1 + $0xb4c] sm:$0xff]
  %v473 = vld [vmem:[%s1 + $0xb54] sm:$0xff]
  %v474 = vld [vmem:[%s1 + $0xb5c] sm:$0xf]
  %v475 = vld [vmem:[%s1 + $0xb60] sm:$0xff]
  %v476 = vld [vmem:[%s1 + $0xb68] sm:$0xff]
  %v477 = vld [vmem:[%s1 + $0xb70] sm:$0xff]
  %v478 = vld [vmem:[%s1 + $0xb78] sm:$0xf]
  %v479 = vld [vmem:[%s1 + $0xb7c] sm:$0xff]
  %v480 = vld [vmem:[%s1 + $0xb84] sm:$0xff]
  %v481 = vld [vmem:[%s1 + $0xb8c] sm:$0xff]
  %v482 = vld [vmem:[%s1 + $0xb94] sm:$0xf]
  %v483 = vld [vmem:[%s1 + $0xb98] sm:$0xff]
  %v484 = vld [vmem:[%s1 + $0xba0] sm:$0xff]
  %v485 = vld [vmem:[%s1 + $0xba8] sm:$0xff]
  %v486 = vld [vmem:[%s1 + $0xbb0] sm:$0xf]
  %v487 = vld [vmem:[%s1 + $0xbb4] sm:$0xff]
  %v488 = vld [vmem:[%s1 + $0xbbc] sm:$0xff]
  %v489 = vld [vmem:[%s1 + $0xbc4] sm:$0xff]
  %v490 = vld [vmem:[%s1 + $0xbcc] sm:$0xf]
  %v491 = vld [vmem:[%s1 + $0xbd0] sm:$0xff]
  %v492 = vld [vmem:[%s1 + $0xbd8] sm:$0xff]
  %v493 = vld [vmem:[%s1 + $0xbe0] sm:$0xff]
  %v494 = vld [vmem:[%s1 + $0xbe8] sm:$0xf]
  %v495 = vld [vmem:[%s1 + $0xbec] sm:$0xff]
  %v496 = vld [vmem:[%s1 + $0xbf4] sm:$0xff]
  %v497 = vld [vmem:[%s1 + $0xbfc] sm:$0xff]
  %v498 = vld [vmem:[%s1 + $0xc04] sm:$0xf]
  %v499 = vld [vmem:[%s1 + $0xc08] sm:$0xff]
  %v500 = vld [vmem:[%s1 + $0xc10] sm:$0xff]
  %v501 = vld [vmem:[%s1 + $0xc18] sm:$0xff]
  %v502 = vld [vmem:[%s1 + $0xc20] sm:$0xf]
  %v503 = vld [vmem:[%s1 + $0xc24] sm:$0xff]
  %v504 = vld [vmem:[%s1 + $0xc2c] sm:$0xff]
  %v505 = vld [vmem:[%s1 + $0xc34] sm:$0xff]
  %v506 = vld [vmem:[%s1 + $0xc3c] sm:$0xf]
  %v507 = vld [vmem:[%s1 + $0xc40] sm:$0xff]
  %v508 = vld [vmem:[%s1 + $0xc48] sm:$0xff]
  %v509 = vld [vmem:[%s1 + $0xc50] sm:$0xff]
  %v510 = vld [vmem:[%s1 + $0xc58] sm:$0xf]
  %v511 = vld [vmem:[%s1 + $0xc5c] sm:$0xff]
  %v512 = vld [vmem:[%s1 + $0xc64] sm:$0xff]
  %v513 = vld [vmem:[%s1 + $0xc6c] sm:$0xff]
  %v514 = vld [vmem:[%s1 + $0xc74] sm:$0xf]
  %v515 = vld [vmem:[%s1 + $0xc78] sm:$0xff]
  %v516 = vld [vmem:[%s1 + $0xc80] sm:$0xff]
  %v517 = vld [vmem:[%s1 + $0xc88] sm:$0xff]
  %v518 = vld [vmem:[%s1 + $0xc90] sm:$0xf]
  %v519 = vld [vmem:[%s1 + $0xc94] sm:$0xff]
  %v520 = vld [vmem:[%s1 + $0xc9c] sm:$0xff]
  %v521 = vld [vmem:[%s1 + $0xca4] sm:$0xff]
  %v522 = vld [vmem:[%s1 + $0xcac] sm:$0xf]
  %v523 = vld [vmem:[%s1 + $0xcb0] sm:$0xff]
  %v524 = vld [vmem:[%s1 + $0xcb8] sm:$0xff]
  %v525 = vld [vmem:[%s1 + $0xcc0] sm:$0xff]
  %v526 = vld [vmem:[%s1 + $0xcc8] sm:$0xf]
  %v527 = vld [vmem:[%s1 + $0xccc] sm:$0xff]
  %v528 = vld [vmem:[%s1 + $0xcd4] sm:$0xff]
  %v529 = vld [vmem:[%s1 + $0xcdc] sm:$0xff]
  %v530 = vld [vmem:[%s1 + $0xce4] sm:$0xf]
  %v531 = vld [vmem:[%s1 + $0xce8] sm:$0xff]
  %v532 = vld [vmem:[%s1 + $0xcf0] sm:$0xff]
  %v533 = vld [vmem:[%s1 + $0xcf8] sm:$0xff]
  %v534 = vld [vmem:[%s1 + $0xd00] sm:$0xf]
  %v535 = vld [vmem:[%s1 + $0xd04] sm:$0xff]
  %v536 = vld [vmem:[%s1 + $0xd0c] sm:$0xff]
  %v537 = vld [vmem:[%s1 + $0xd14] sm:$0xff]
  %v538 = vld [vmem:[%s1 + $0xd1c] sm:$0xf]
  %v539 = vld [vmem:[%s1 + $0xd20] sm:$0xff]
  %v540 = vld [vmem:[%s1 + $0xd28] sm:$0xff]
  %v541 = vld [vmem:[%s1 + $0xd30] sm:$0xff]
  %v542 = vld [vmem:[%s1 + $0xd38] sm:$0xf]
  %v543 = vld [vmem:[%s1 + $0xd3c] sm:$0xff]
  %v544 = vld [vmem:[%s1 + $0xd44] sm:$0xff]
  %v545 = vld [vmem:[%s1 + $0xd4c] sm:$0xff]
  %v546 = vld [vmem:[%s1 + $0xd54] sm:$0xf]
  %v547 = vld [vmem:[%s1 + $0xd58] sm:$0xff]
  %v548 = vld [vmem:[%s1 + $0xd60] sm:$0xff]
  %v549 = vld [vmem:[%s1 + $0xd68] sm:$0xff]
  %v550 = vld [vmem:[%s1 + $0xd70] sm:$0xf]
  %v551 = vld [vmem:[%s1 + $0xd74] sm:$0xff]
  %v552 = vld [vmem:[%s1 + $0xd7c] sm:$0xff]
  %v553 = vld [vmem:[%s1 + $0xd84] sm:$0xff]
  %v554 = vld [vmem:[%s1 + $0xd8c] sm:$0xf]
  %v555 = vld [vmem:[%s1 + $0xd90] sm:$0xff]
  %v556 = vld [vmem:[%s1 + $0xd98] sm:$0xff]
  %v557 = vld [vmem:[%s1 + $0xda0] sm:$0xff]
  %v558 = vld [vmem:[%s1 + $0xda8] sm:$0xf]
  %v559 = vld [vmem:[%s1 + $0xdac] sm:$0xff]
  %v560 = vld [vmem:[%s1 + $0xdb4] sm:$0xff]
  %v561 = vld [vmem:[%s1 + $0xdbc] sm:$0xff]
  %v562 = vld [vmem:[%s1 + $0xdc4] sm:$0xf]
  %v563 = vld [vmem:[%s1 + $0xdc8] sm:$0xff]
  %v564 = vld [vmem:[%s1 + $0xdd0] sm:$0xff]
  %v565 = vld [vmem:[%s1 + $0xdd8] sm:$0xff]
  %v566 = vld [vmem:[%s1 + $0xde0] sm:$0xf]
  %v567 = vld [vmem:[%s1 + $0xde4] sm:$0xff]
  %v568 = vld [vmem:[%s1 + $0xdec] sm:$0xff]
  %v569 = vld [vmem:[%s1 + $0xdf4] sm:$0xff]
  %v570 = vld [vmem:[%s1 + $0xdfc] sm:$0xf]
  %v571 = vld [vmem:[%s1 + $0xe00] sm:$0xff]
  %v572 = vld [vmem:[%s1 + $0xe08] sm:$0xff]
  %v573 = vld [vmem:[%s1 + $0xe10] sm:$0xff]
  %v574 = vld [vmem:[%s1 + $0xe18] sm:$0xf]
  %v575 = vld [vmem:[%s1 + $0xe1c] sm:$0xff]
  %v576 = vld [vmem:[%s1 + $0xe24] sm:$0xff]
  %v577 = vld [vmem:[%s1 + $0xe2c] sm:$0xff]
  %v578 = vld [vmem:[%s1 + $0xe34] sm:$0xf]
  %v579 = vld [vmem:[%s1 + $0xe38] sm:$0xff]
  %v580 = vld [vmem:[%s1 + $0xe40] sm:$0xff]
  %v581 = vld [vmem:[%s1 + $0xe48] sm:$0xff]
  %v582 = vld [vmem:[%s1 + $0xe50] sm:$0xf]
  %v583 = vld [vmem:[%s1 + $0xe54] sm:$0xff]
  %v584 = vld [vmem:[%s1 + $0xe5c] sm:$0xff]
  %v585 = vld [vmem:[%s1 + $0xe64] sm:$0xff]
  %v586 = vld [vmem:[%s1 + $0xe6c] sm:$0xf]
  %v587 = vld [vmem:[%s1 + $0xe70] sm:$0xff]
  %v588 = vld [vmem:[%s1 + $0xe78] sm:$0xff]
  %v589 = vld [vmem:[%s1 + $0xe80] sm:$0xff]
  %v590 = vld [vmem:[%s1 + $0xe88] sm:$0xf]
  %v591 = vld [vmem:[%s1 + $0xe8c] sm:$0xff]
  %v592 = vld [vmem:[%s1 + $0xe94] sm:$0xff]
  %v593 = vld [vmem:[%s1 + $0xe9c] sm:$0xff]
  %v594 = vld [vmem:[%s1 + $0xea4] sm:$0xf]
  %v595 = vld [vmem:[%s1 + $0xea8] sm:$0xff]
  %v596 = vld [vmem:[%s1 + $0xeb0] sm:$0xff]
  %v597 = vld [vmem:[%s1 + $0xeb8] sm:$0xff]
  %v598 = vld [vmem:[%s1 + $0xec0] sm:$0xf]
  %v599 = vld [vmem:[%s1 + $0xec4] sm:$0xff]
  %v600 = vld [vmem:[%s1 + $0xecc] sm:$0xff]
  %v601 = vld [vmem:[%s1 + $0xed4] sm:$0xff]
  %v602 = vld [vmem:[%s1 + $0xedc] sm:$0xf]
  %v603 = vld [vmem:[%s1 + $0xee0] sm:$0xff]
  %v604 = vld [vmem:[%s1 + $0xee8] sm:$0xff]
  %v605 = vld [vmem:[%s1 + $0xef0] sm:$0xff]
  %v606 = vld [vmem:[%s1 + $0xef8] sm:$0xf]
  %v607 = vld [vmem:[%s1 + $0xefc] sm:$0xff]
  %v608 = vld [vmem:[%s1 + $0xf04] sm:$0xff]
  %v609 = vld [vmem:[%s1 + $0xf0c] sm:$0xff]
  %v610 = vld [vmem:[%s1 + $0xf14] sm:$0xf]
  %v611 = vld [vmem:[%s1 + $0xf18] sm:$0xff]
  %v612 = vld [vmem:[%s1 + $0xf20] sm:$0xff]
  %v613 = vld [vmem:[%s1 + $0xf28] sm:$0xff]
  %v614 = vld [vmem:[%s1 + $0xf30] sm:$0xf]
  %v615 = vld [vmem:[%s1 + $0xf34] sm:$0xff]
  %v616 = vld [vmem:[%s1 + $0xf3c] sm:$0xff]
  %v617 = vld [vmem:[%s1 + $0xf44] sm:$0xff]
  %v618 = vld [vmem:[%s1 + $0xf4c] sm:$0xf]
  %v619 = vld [vmem:[%s1 + $0xf50] sm:$0xff]
  %v620 = vld [vmem:[%s1 + $0xf58] sm:$0xff]
  %v621 = vld [vmem:[%s1 + $0xf60] sm:$0xff]
  %v622 = vld [vmem:[%s1 + $0xf68] sm:$0xf]
  %v623 = vld [vmem:[%s1 + $0xf6c] sm:$0xff]
  %v624 = vld [vmem:[%s1 + $0xf74] sm:$0xff]
  %v625 = vld [vmem:[%s1 + $0xf7c] sm:$0xff]
  %v626 = vld [vmem:[%s1 + $0xf84] sm:$0xf]
  %v627 = vld [vmem:[%s1 + $0xf88] sm:$0xff]
  %v628 = vld [vmem:[%s1 + $0xf90] sm:$0xff]
  %v629 = vld [vmem:[%s1 + $0xf98] sm:$0xff]
  %v630 = vld [vmem:[%s1 + $0xfa0] sm:$0xf]
  %v631 = vld [vmem:[%s1 + $0xfa4] sm:$0xff]
  %v632 = vld [vmem:[%s1 + $0xfac] sm:$0xff]
  %v633 = vld [vmem:[%s1 + $0xfb4] sm:$0xff]
  %v634 = vld [vmem:[%s1 + $0xfbc] sm:$0xf]
  %v635 = vld [vmem:[%s1 + $0xfc0] sm:$0xff]
  %v636 = vld [vmem:[%s1 + $0xfc8] sm:$0xff]
  %v637 = vld [vmem:[%s1 + $0xfd0] sm:$0xff]
  %v638 = vld [vmem:[%s1 + $0xfd8] sm:$0xf]
  %v639 = vld [vmem:[%s1 + $0xfdc] sm:$0xff]
  %v640 = vld [vmem:[%s1 + $0xfe4] sm:$0xff]
  %v641 = vld [vmem:[%s1 + $0xfec] sm:$0xff]
  %v642 = vld [vmem:[%s1 + $0xff4] sm:$0xf]
  %v643 = vld [vmem:[%s1 + $0xff8] sm:$0xff]
  %v644 = vld [vmem:[%s1 + $0x1000] sm:$0xff]
  %v645 = vld [vmem:[%s1 + $0x1008] sm:$0xff]
  %v646 = vld [vmem:[%s1 + $0x1010] sm:$0xf]
  %v647 = vld [vmem:[%s1 + $0x1014] sm:$0xff]
  %v648 = vld [vmem:[%s1 + $0x101c] sm:$0xff]
  %v649 = vld [vmem:[%s1 + $0x1024] sm:$0xff]
  %v650 = vld [vmem:[%s1 + $0x102c] sm:$0xf]
  %v651 = vld [vmem:[%s1 + $0x1030] sm:$0xff]
  %v652 = vld [vmem:[%s1 + $0x1038] sm:$0xff]
  %v653 = vld [vmem:[%s1 + $0x1040] sm:$0xff]
  %v654 = vld [vmem:[%s1 + $0x1048] sm:$0xf]
  %v655 = vld [vmem:[%s1 + $0x104c] sm:$0xff]
  %v656 = vld [vmem:[%s1 + $0x1054] sm:$0xff]
  %v657 = vld [vmem:[%s1 + $0x105c] sm:$0xff]
  %v658 = vld [vmem:[%s1 + $0x1064] sm:$0xf]
  %v659 = vld [vmem:[%s2] sm:$0xff]
  %v661 = vlaneseq
  %v662 = vshrl.u32 %v661, 7
  %v663 = vsub.s32 0, %v662
  %v664 = vrot.slane %v659, %v663
  %v665 = vlaneseq
  %v666 = vshrl.u32 %v665, 7
  %v667 = vsub.s32 1, %v666
  %v668 = vrot.slane %v659, %v667
  %v669 = vlaneseq
  %v670 = vshrl.u32 %v669, 7
  %v671 = vsub.s32 2, %v670
  %v672 = vrot.slane %v659, %v671
  %v673 = vlaneseq
  %v674 = vshrl.u32 %v673, 7
  %v675 = vsub.s32 3, %v674
  %v676 = vrot.slane %v659, %v675
  %v677 = vlaneseq
  %v678 = vshrl.u32 %v677, 7
  %v679 = vsub.s32 4, %v678
  %v680 = vrot.slane %v659, %v679
  %v681 = vlaneseq
  %v682 = vshrl.u32 %v681, 7
  %v683 = vsub.s32 5, %v682
  %v684 = vrot.slane %v659, %v683
  %v685 = vlaneseq
  %v686 = vshrl.u32 %v685, 7
  %v687 = vsub.s32 6, %v686
  %v688 = vrot.slane %v659, %v687
  %v1296 = vunpack.c.l.b16 %v59
  %v1297 = vunpack.c.h.b16 %v59
  %v1298 = vunpack.c.l.b16 %v60
  %v1299 = vunpack.c.h.b16 %v60
  %v1300 = vunpack.c.l.b16 %v61
  %v1301 = vunpack.c.h.b16 %v61
  %v1302 = vunpack.c.l.b16 %v62
  %v1303 = vunpack.c.l.b16 %v63
  %v1304 = vunpack.c.h.b16 %v63
  %v1305 = vunpack.c.l.b16 %v64
  %v1306 = vunpack.c.h.b16 %v64
  %v1307 = vunpack.c.l.b16 %v65
  %v1308 = vunpack.c.h.b16 %v65
  %v1309 = vunpack.c.l.b16 %v66
  %v1310 = vunpack.c.l.b16 %v67
  %v1311 = vunpack.c.h.b16 %v67
  %v1312 = vunpack.c.l.b16 %v68
  %v1313 = vunpack.c.h.b16 %v68
  %v1314 = vunpack.c.l.b16 %v69
  %v1315 = vunpack.c.h.b16 %v69
  %v1316 = vunpack.c.l.b16 %v70
  %v1317 = vunpack.c.l.b16 %v71
  %v1318 = vunpack.c.h.b16 %v71
  %v1319 = vunpack.c.l.b16 %v72
  %v1320 = vunpack.c.h.b16 %v72
  %v1321 = vunpack.c.l.b16 %v73
  %v1322 = vunpack.c.h.b16 %v73
  %v1323 = vunpack.c.l.b16 %v74
  %v1324 = vunpack.c.l.b16 %v75
  %v1325 = vunpack.c.h.b16 %v75
  %v1326 = vunpack.c.l.b16 %v76
  %v1327 = vunpack.c.h.b16 %v76
  %v1328 = vunpack.c.l.b16 %v77
  %v1329 = vunpack.c.h.b16 %v77
  %v1330 = vunpack.c.l.b16 %v78
  %v1331 = vunpack.c.l.b16 %v79
  %v1332 = vunpack.c.h.b16 %v79
  %v1333 = vunpack.c.l.b16 %v80
  %v1334 = vunpack.c.h.b16 %v80
  %v1335 = vunpack.c.l.b16 %v81
  %v1336 = vunpack.c.h.b16 %v81
  %v1337 = vunpack.c.l.b16 %v82
  %v1338 = vunpack.c.l.b16 %v83
  %v1339 = vunpack.c.h.b16 %v83
  %v1340 = vunpack.c.l.b16 %v84
  %v1341 = vunpack.c.h.b16 %v84
  %v1342 = vunpack.c.l.b16 %v85
  %v1343 = vunpack.c.h.b16 %v85
  %v1344 = vunpack.c.l.b16 %v86
  %v1345 = vunpack.c.l.b16 %v87
  %v1346 = vunpack.c.h.b16 %v87
  %v1347 = vunpack.c.l.b16 %v88
  %v1348 = vunpack.c.h.b16 %v88
  %v1349 = vunpack.c.l.b16 %v89
  %v1350 = vunpack.c.h.b16 %v89
  %v1351 = vunpack.c.l.b16 %v90
  %v1352 = vunpack.c.l.b16 %v91
  %v1353 = vunpack.c.h.b16 %v91
  %v1354 = vunpack.c.l.b16 %v92
  %v1355 = vunpack.c.h.b16 %v92
  %v1356 = vunpack.c.l.b16 %v93
  %v1357 = vunpack.c.h.b16 %v93
  %v1358 = vunpack.c.l.b16 %v94
  %v1359 = vunpack.c.l.b16 %v95
  %v1360 = vunpack.c.h.b16 %v95
  %v1361 = vunpack.c.l.b16 %v96
  %v1362 = vunpack.c.h.b16 %v96
  %v1363 = vunpack.c.l.b16 %v97
  %v1364 = vunpack.c.h.b16 %v97
  %v1365 = vunpack.c.l.b16 %v98
  %v1366 = vunpack.c.l.b16 %v99
  %v1367 = vunpack.c.h.b16 %v99
  %v1368 = vunpack.c.l.b16 %v100
  %v1369 = vunpack.c.h.b16 %v100
  %v1370 = vunpack.c.l.b16 %v101
  %v1371 = vunpack.c.h.b16 %v101
  %v1372 = vunpack.c.l.b16 %v102
  %v1373 = vunpack.c.l.b16 %v103
  %v1374 = vunpack.c.h.b16 %v103
  %v1375 = vunpack.c.l.b16 %v104
  %v1376 = vunpack.c.h.b16 %v104
  %v1377 = vunpack.c.l.b16 %v105
  %v1378 = vunpack.c.h.b16 %v105
  %v1379 = vunpack.c.l.b16 %v106
  %v1380 = vunpack.c.l.b16 %v107
  %v1381 = vunpack.c.h.b16 %v107
  %v1382 = vunpack.c.l.b16 %v108
  %v1383 = vunpack.c.h.b16 %v108
  %v1384 = vunpack.c.l.b16 %v109
  %v1385 = vunpack.c.h.b16 %v109
  %v1386 = vunpack.c.l.b16 %v110
  %v1387 = vunpack.c.l.b16 %v111
  %v1388 = vunpack.c.h.b16 %v111
  %v1389 = vunpack.c.l.b16 %v112
  %v1390 = vunpack.c.h.b16 %v112
  %v1391 = vunpack.c.l.b16 %v113
  %v1392 = vunpack.c.h.b16 %v113
  %v1393 = vunpack.c.l.b16 %v114
  %v1394 = vunpack.c.l.b16 %v115
  %v1395 = vunpack.c.h.b16 %v115
  %v1396 = vunpack.c.l.b16 %v116
  %v1397 = vunpack.c.h.b16 %v116
  %v1398 = vunpack.c.l.b16 %v117
  %v1399 = vunpack.c.h.b16 %v117
  %v1400 = vunpack.c.l.b16 %v118
  %v1401 = vunpack.c.l.b16 %v119
  %v1402 = vunpack.c.h.b16 %v119
  %v1403 = vunpack.c.l.b16 %v120
  %v1404 = vunpack.c.h.b16 %v120
  %v1405 = vunpack.c.l.b16 %v121
  %v1406 = vunpack.c.h.b16 %v121
  %v1407 = vunpack.c.l.b16 %v122
  %v1408 = vunpack.c.l.b16 %v123
  %v1409 = vunpack.c.h.b16 %v123
  %v1410 = vunpack.c.l.b16 %v124
  %v1411 = vunpack.c.h.b16 %v124
  %v1412 = vunpack.c.l.b16 %v125
  %v1413 = vunpack.c.h.b16 %v125
  %v1414 = vunpack.c.l.b16 %v126
  %v1415 = vunpack.c.l.b16 %v127
  %v1416 = vunpack.c.h.b16 %v127
  %v1417 = vunpack.c.l.b16 %v128
  %v1418 = vunpack.c.h.b16 %v128
  %v1419 = vunpack.c.l.b16 %v129
  %v1420 = vunpack.c.h.b16 %v129
  %v1421 = vunpack.c.l.b16 %v130
  %v1422 = vunpack.c.l.b16 %v131
  %v1423 = vunpack.c.h.b16 %v131
  %v1424 = vunpack.c.l.b16 %v132
  %v1425 = vunpack.c.h.b16 %v132
  %v1426 = vunpack.c.l.b16 %v133
  %v1427 = vunpack.c.h.b16 %v133
  %v1428 = vunpack.c.l.b16 %v134
  %v1429 = vunpack.c.l.b16 %v135
  %v1430 = vunpack.c.h.b16 %v135
  %v1431 = vunpack.c.l.b16 %v136
  %v1432 = vunpack.c.h.b16 %v136
  %v1433 = vunpack.c.l.b16 %v137
  %v1434 = vunpack.c.h.b16 %v137
  %v1435 = vunpack.c.l.b16 %v138
  %v1436 = vunpack.c.l.b16 %v139
  %v1437 = vunpack.c.h.b16 %v139
  %v1438 = vunpack.c.l.b16 %v140
  %v1439 = vunpack.c.h.b16 %v140
  %v1440 = vunpack.c.l.b16 %v141
  %v1441 = vunpack.c.h.b16 %v141
  %v1442 = vunpack.c.l.b16 %v142
  %v1443 = vunpack.c.l.b16 %v143
  %v1444 = vunpack.c.h.b16 %v143
  %v1445 = vunpack.c.l.b16 %v144
  %v1446 = vunpack.c.h.b16 %v144
  %v1447 = vunpack.c.l.b16 %v145
  %v1448 = vunpack.c.h.b16 %v145
  %v1449 = vunpack.c.l.b16 %v146
  %v1450 = vunpack.c.l.b16 %v147
  %v1451 = vunpack.c.h.b16 %v147
  %v1452 = vunpack.c.l.b16 %v148
  %v1453 = vunpack.c.h.b16 %v148
  %v1454 = vunpack.c.l.b16 %v149
  %v1455 = vunpack.c.h.b16 %v149
  %v1456 = vunpack.c.l.b16 %v150
  %v1457 = vunpack.c.l.b16 %v151
  %v1458 = vunpack.c.h.b16 %v151
  %v1459 = vunpack.c.l.b16 %v152
  %v1460 = vunpack.c.h.b16 %v152
  %v1461 = vunpack.c.l.b16 %v153
  %v1462 = vunpack.c.h.b16 %v153
  %v1463 = vunpack.c.l.b16 %v154
  %v1464 = vunpack.c.l.b16 %v155
  %v1465 = vunpack.c.h.b16 %v155
  %v1466 = vunpack.c.l.b16 %v156
  %v1467 = vunpack.c.h.b16 %v156
  %v1468 = vunpack.c.l.b16 %v157
  %v1469 = vunpack.c.h.b16 %v157
  %v1470 = vunpack.c.l.b16 %v158
  %v1471 = vunpack.c.l.b16 %v159
  %v1472 = vunpack.c.h.b16 %v159
  %v1473 = vunpack.c.l.b16 %v160
  %v1474 = vunpack.c.h.b16 %v160
  %v1475 = vunpack.c.l.b16 %v161
  %v1476 = vunpack.c.h.b16 %v161
  %v1477 = vunpack.c.l.b16 %v162
  %v1478 = vunpack.c.l.b16 %v163
  %v1479 = vunpack.c.h.b16 %v163
  %v1480 = vunpack.c.l.b16 %v164
  %v1481 = vunpack.c.h.b16 %v164
  %v1482 = vunpack.c.l.b16 %v165
  %v1483 = vunpack.c.h.b16 %v165
  %v1484 = vunpack.c.l.b16 %v166
  %v1485 = vunpack.c.l.b16 %v167
  %v1486 = vunpack.c.h.b16 %v167
  %v1487 = vunpack.c.l.b16 %v168
  %v1488 = vunpack.c.h.b16 %v168
  %v1489 = vunpack.c.l.b16 %v169
  %v1490 = vunpack.c.h.b16 %v169
  %v1491 = vunpack.c.l.b16 %v170
  %v1492 = vunpack.c.l.b16 %v171
  %v1493 = vunpack.c.h.b16 %v171
  %v1494 = vunpack.c.l.b16 %v172
  %v1495 = vunpack.c.h.b16 %v172
  %v1496 = vunpack.c.l.b16 %v173
  %v1497 = vunpack.c.h.b16 %v173
  %v1498 = vunpack.c.l.b16 %v174
  %v1499 = vunpack.c.l.b16 %v175
  %v1500 = vunpack.c.h.b16 %v175
  %v1501 = vunpack.c.l.b16 %v176
  %v1502 = vunpack.c.h.b16 %v176
  %v1503 = vunpack.c.l.b16 %v177
  %v1504 = vunpack.c.h.b16 %v177
  %v1505 = vunpack.c.l.b16 %v178
  %v1506 = vunpack.c.l.b16 %v179
  %v1507 = vunpack.c.h.b16 %v179
  %v1508 = vunpack.c.l.b16 %v180
  %v1509 = vunpack.c.h.b16 %v180
  %v1510 = vunpack.c.l.b16 %v181
  %v1511 = vunpack.c.h.b16 %v181
  %v1512 = vunpack.c.l.b16 %v182
  %v1513 = vunpack.c.l.b16 %v183
  %v1514 = vunpack.c.h.b16 %v183
  %v1515 = vunpack.c.l.b16 %v184
  %v1516 = vunpack.c.h.b16 %v184
  %v1517 = vunpack.c.l.b16 %v185
  %v1518 = vunpack.c.h.b16 %v185
  %v1519 = vunpack.c.l.b16 %v186
  %v1520 = vunpack.c.l.b16 %v187
  %v1521 = vunpack.c.h.b16 %v187
  %v1522 = vunpack.c.l.b16 %v188
  %v1523 = vunpack.c.h.b16 %v188
  %v1524 = vunpack.c.l.b16 %v189
  %v1525 = vunpack.c.h.b16 %v189
  %v1526 = vunpack.c.l.b16 %v190
  %v1527 = vunpack.c.l.b16 %v191
  %v1528 = vunpack.c.h.b16 %v191
  %v1529 = vunpack.c.l.b16 %v192
  %v1530 = vunpack.c.h.b16 %v192
  %v1531 = vunpack.c.l.b16 %v193
  %v1532 = vunpack.c.h.b16 %v193
  %v1533 = vunpack.c.l.b16 %v194
  %v1534 = vunpack.c.l.b16 %v195
  %v1535 = vunpack.c.h.b16 %v195
  %v1536 = vunpack.c.l.b16 %v196
  %v1537 = vunpack.c.h.b16 %v196
  %v1538 = vunpack.c.l.b16 %v197
  %v1539 = vunpack.c.h.b16 %v197
  %v1540 = vunpack.c.l.b16 %v198
  %v1541 = vunpack.c.l.b16 %v199
  %v1542 = vunpack.c.h.b16 %v199
  %v1543 = vunpack.c.l.b16 %v200
  %v1544 = vunpack.c.h.b16 %v200
  %v1545 = vunpack.c.l.b16 %v201
  %v1546 = vunpack.c.h.b16 %v201
  %v1547 = vunpack.c.l.b16 %v202
  %v1548 = vunpack.c.l.b16 %v203
  %v1549 = vunpack.c.h.b16 %v203
  %v1550 = vunpack.c.l.b16 %v204
  %v1551 = vunpack.c.h.b16 %v204
  %v1552 = vunpack.c.l.b16 %v205
  %v1553 = vunpack.c.h.b16 %v205
  %v1554 = vunpack.c.l.b16 %v206
  %v1555 = vunpack.c.l.b16 %v207
  %v1556 = vunpack.c.h.b16 %v207
  %v1557 = vunpack.c.l.b16 %v208
  %v1558 = vunpack.c.h.b16 %v208
  %v1559 = vunpack.c.l.b16 %v209
  %v1560 = vunpack.c.h.b16 %v209
  %v1561 = vunpack.c.l.b16 %v210
  %v1562 = vunpack.c.l.b16 %v211
  %v1563 = vunpack.c.h.b16 %v211
  %v1564 = vunpack.c.l.b16 %v212
  %v1565 = vunpack.c.h.b16 %v212
  %v1566 = vunpack.c.l.b16 %v213
  %v1567 = vunpack.c.h.b16 %v213
  %v1568 = vunpack.c.l.b16 %v214
  %v1569 = vunpack.c.l.b16 %v215
  %v1570 = vunpack.c.h.b16 %v215
  %v1571 = vunpack.c.l.b16 %v216
  %v1572 = vunpack.c.h.b16 %v216
  %v1573 = vunpack.c.l.b16 %v217
  %v1574 = vunpack.c.h.b16 %v217
  %v1575 = vunpack.c.l.b16 %v218
  %v1576 = vunpack.c.l.b16 %v219
  %v1577 = vunpack.c.h.b16 %v219
  %v1578 = vunpack.c.l.b16 %v220
  %v1579 = vunpack.c.h.b16 %v220
  %v1580 = vunpack.c.l.b16 %v221
  %v1581 = vunpack.c.h.b16 %v221
  %v1582 = vunpack.c.l.b16 %v222
  %v1583 = vunpack.c.l.b16 %v223
  %v1584 = vunpack.c.h.b16 %v223
  %v1585 = vunpack.c.l.b16 %v224
  %v1586 = vunpack.c.h.b16 %v224
  %v1587 = vunpack.c.l.b16 %v225
  %v1588 = vunpack.c.h.b16 %v225
  %v1589 = vunpack.c.l.b16 %v226
  %v1590 = vunpack.c.l.b16 %v227
  %v1591 = vunpack.c.h.b16 %v227
  %v1592 = vunpack.c.l.b16 %v228
  %v1593 = vunpack.c.h.b16 %v228
  %v1594 = vunpack.c.l.b16 %v229
  %v1595 = vunpack.c.h.b16 %v229
  %v1596 = vunpack.c.l.b16 %v230
  %v1597 = vunpack.c.l.b16 %v231
  %v1598 = vunpack.c.h.b16 %v231
  %v1599 = vunpack.c.l.b16 %v232
  %v1600 = vunpack.c.h.b16 %v232
  %v1601 = vunpack.c.l.b16 %v233
  %v1602 = vunpack.c.h.b16 %v233
  %v1603 = vunpack.c.l.b16 %v234
  %v1604 = vunpack.c.l.b16 %v235
  %v1605 = vunpack.c.h.b16 %v235
  %v1606 = vunpack.c.l.b16 %v236
  %v1607 = vunpack.c.h.b16 %v236
  %v1608 = vunpack.c.l.b16 %v237
  %v1609 = vunpack.c.h.b16 %v237
  %v1610 = vunpack.c.l.b16 %v238
  %v1611 = vunpack.c.l.b16 %v239
  %v1612 = vunpack.c.h.b16 %v239
  %v1613 = vunpack.c.l.b16 %v240
  %v1614 = vunpack.c.h.b16 %v240
  %v1615 = vunpack.c.l.b16 %v241
  %v1616 = vunpack.c.h.b16 %v241
  %v1617 = vunpack.c.l.b16 %v242
  %v1618 = vunpack.c.l.b16 %v243
  %v1619 = vunpack.c.h.b16 %v243
  %v1620 = vunpack.c.l.b16 %v244
  %v1621 = vunpack.c.h.b16 %v244
  %v1622 = vunpack.c.l.b16 %v245
  %v1623 = vunpack.c.h.b16 %v245
  %v1624 = vunpack.c.l.b16 %v246
  %v1625 = vunpack.c.l.b16 %v247
  %v1626 = vunpack.c.h.b16 %v247
  %v1627 = vunpack.c.l.b16 %v248
  %v1628 = vunpack.c.h.b16 %v248
  %v1629 = vunpack.c.l.b16 %v249
  %v1630 = vunpack.c.h.b16 %v249
  %v1631 = vunpack.c.l.b16 %v250
  %v1632 = vunpack.c.l.b16 %v251
  %v1633 = vunpack.c.h.b16 %v251
  %v1634 = vunpack.c.l.b16 %v252
  %v1635 = vunpack.c.h.b16 %v252
  %v1636 = vunpack.c.l.b16 %v253
  %v1637 = vunpack.c.h.b16 %v253
  %v1638 = vunpack.c.l.b16 %v254
  %v1639 = vunpack.c.l.b16 %v255
  %v1640 = vunpack.c.h.b16 %v255
  %v1641 = vunpack.c.l.b16 %v256
  %v1642 = vunpack.c.h.b16 %v256
  %v1643 = vunpack.c.l.b16 %v257
  %v1644 = vunpack.c.h.b16 %v257
  %v1645 = vunpack.c.l.b16 %v258
  %v1646 = vunpack.c.l.b16 %v259
  %v1647 = vunpack.c.h.b16 %v259
  %v1648 = vunpack.c.l.b16 %v260
  %v1649 = vunpack.c.h.b16 %v260
  %v1650 = vunpack.c.l.b16 %v261
  %v1651 = vunpack.c.h.b16 %v261
  %v1652 = vunpack.c.l.b16 %v262
  %v1653 = vunpack.c.l.b16 %v263
  %v1654 = vunpack.c.h.b16 %v263
  %v1655 = vunpack.c.l.b16 %v264
  %v1656 = vunpack.c.h.b16 %v264
  %v1657 = vunpack.c.l.b16 %v265
  %v1658 = vunpack.c.h.b16 %v265
  %v1659 = vunpack.c.l.b16 %v266
  %v1660 = vunpack.c.l.b16 %v267
  %v1661 = vunpack.c.h.b16 %v267
  %v1662 = vunpack.c.l.b16 %v268
  %v1663 = vunpack.c.h.b16 %v268
  %v1664 = vunpack.c.l.b16 %v269
  %v1665 = vunpack.c.h.b16 %v269
  %v1666 = vunpack.c.l.b16 %v270
  %v1667 = vunpack.c.l.b16 %v271
  %v1668 = vunpack.c.h.b16 %v271
  %v1669 = vunpack.c.l.b16 %v272
  %v1670 = vunpack.c.h.b16 %v272
  %v1671 = vunpack.c.l.b16 %v273
  %v1672 = vunpack.c.h.b16 %v273
  %v1673 = vunpack.c.l.b16 %v274
  %v1674 = vunpack.c.l.b16 %v275
  %v1675 = vunpack.c.h.b16 %v275
  %v1676 = vunpack.c.l.b16 %v276
  %v1677 = vunpack.c.h.b16 %v276
  %v1678 = vunpack.c.l.b16 %v277
  %v1679 = vunpack.c.h.b16 %v277
  %v1680 = vunpack.c.l.b16 %v278
  %v1681 = vunpack.c.l.b16 %v279
  %v1682 = vunpack.c.h.b16 %v279
  %v1683 = vunpack.c.l.b16 %v280
  %v1684 = vunpack.c.h.b16 %v280
  %v1685 = vunpack.c.l.b16 %v281
  %v1686 = vunpack.c.h.b16 %v281
  %v1687 = vunpack.c.l.b16 %v282
  %v1688 = vunpack.c.l.b16 %v283
  %v1689 = vunpack.c.h.b16 %v283
  %v1690 = vunpack.c.l.b16 %v284
  %v1691 = vunpack.c.h.b16 %v284
  %v1692 = vunpack.c.l.b16 %v285
  %v1693 = vunpack.c.h.b16 %v285
  %v1694 = vunpack.c.l.b16 %v286
  %v1695 = vunpack.c.l.b16 %v287
  %v1696 = vunpack.c.h.b16 %v287
  %v1697 = vunpack.c.l.b16 %v288
  %v1698 = vunpack.c.h.b16 %v288
  %v1699 = vunpack.c.l.b16 %v289
  %v1700 = vunpack.c.h.b16 %v289
  %v1701 = vunpack.c.l.b16 %v290
  %v1702 = vunpack.c.l.b16 %v291
  %v1703 = vunpack.c.h.b16 %v291
  %v1704 = vunpack.c.l.b16 %v292
  %v1705 = vunpack.c.h.b16 %v292
  %v1706 = vunpack.c.l.b16 %v293
  %v1707 = vunpack.c.h.b16 %v293
  %v1708 = vunpack.c.l.b16 %v294
  %v1709 = vunpack.c.l.b16 %v295
  %v1710 = vunpack.c.h.b16 %v295
  %v1711 = vunpack.c.l.b16 %v296
  %v1712 = vunpack.c.h.b16 %v296
  %v1713 = vunpack.c.l.b16 %v297
  %v1714 = vunpack.c.h.b16 %v297
  %v1715 = vunpack.c.l.b16 %v298
  %v1716 = vunpack.c.l.b16 %v299
  %v1717 = vunpack.c.h.b16 %v299
  %v1718 = vunpack.c.l.b16 %v300
  %v1719 = vunpack.c.h.b16 %v300
  %v1720 = vunpack.c.l.b16 %v301
  %v1721 = vunpack.c.h.b16 %v301
  %v1722 = vunpack.c.l.b16 %v302
  %v1723 = vunpack.c.l.b16 %v303
  %v1724 = vunpack.c.h.b16 %v303
  %v1725 = vunpack.c.l.b16 %v304
  %v1726 = vunpack.c.h.b16 %v304
  %v1727 = vunpack.c.l.b16 %v305
  %v1728 = vunpack.c.h.b16 %v305
  %v1729 = vunpack.c.l.b16 %v306
  %v1730 = vunpack.c.l.b16 %v307
  %v1731 = vunpack.c.h.b16 %v307
  %v1732 = vunpack.c.l.b16 %v308
  %v1733 = vunpack.c.h.b16 %v308
  %v1734 = vunpack.c.l.b16 %v309
  %v1735 = vunpack.c.h.b16 %v309
  %v1736 = vunpack.c.l.b16 %v310
  %v1737 = vunpack.c.l.b16 %v311
  %v1738 = vunpack.c.h.b16 %v311
  %v1739 = vunpack.c.l.b16 %v312
  %v1740 = vunpack.c.h.b16 %v312
  %v1741 = vunpack.c.l.b16 %v313
  %v1742 = vunpack.c.h.b16 %v313
  %v1743 = vunpack.c.l.b16 %v314
  %v1744 = vunpack.c.l.b16 %v315
  %v1745 = vunpack.c.h.b16 %v315
  %v1746 = vunpack.c.l.b16 %v316
  %v1747 = vunpack.c.h.b16 %v316
  %v1748 = vunpack.c.l.b16 %v317
  %v1749 = vunpack.c.h.b16 %v317
  %v1750 = vunpack.c.l.b16 %v318
  %v1751 = vunpack.c.l.b16 %v319
  %v1752 = vunpack.c.h.b16 %v319
  %v1753 = vunpack.c.l.b16 %v320
  %v1754 = vunpack.c.h.b16 %v320
  %v1755 = vunpack.c.l.b16 %v321
  %v1756 = vunpack.c.h.b16 %v321
  %v1757 = vunpack.c.l.b16 %v322
  %v1758 = vunpack.c.l.b16 %v323
  %v1759 = vunpack.c.h.b16 %v323
  %v1760 = vunpack.c.l.b16 %v324
  %v1761 = vunpack.c.h.b16 %v324
  %v1762 = vunpack.c.l.b16 %v325
  %v1763 = vunpack.c.h.b16 %v325
  %v1764 = vunpack.c.l.b16 %v326
  %v1765 = vunpack.c.l.b16 %v327
  %v1766 = vunpack.c.h.b16 %v327
  %v1767 = vunpack.c.l.b16 %v328
  %v1768 = vunpack.c.h.b16 %v328
  %v1769 = vunpack.c.l.b16 %v329
  %v1770 = vunpack.c.h.b16 %v329
  %v1771 = vunpack.c.l.b16 %v330
  %v1772 = vunpack.c.l.b16 %v331
  %v1773 = vunpack.c.h.b16 %v331
  %v1774 = vunpack.c.l.b16 %v332
  %v1775 = vunpack.c.h.b16 %v332
  %v1776 = vunpack.c.l.b16 %v333
  %v1777 = vunpack.c.h.b16 %v333
  %v1778 = vunpack.c.l.b16 %v334
  %v1779 = vunpack.c.l.b16 %v335
  %v1780 = vunpack.c.h.b16 %v335
  %v1781 = vunpack.c.l.b16 %v336
  %v1782 = vunpack.c.h.b16 %v336
  %v1783 = vunpack.c.l.b16 %v337
  %v1784 = vunpack.c.h.b16 %v337
  %v1785 = vunpack.c.l.b16 %v338
  %v1786 = vunpack.c.l.b16 %v339
  %v1787 = vunpack.c.h.b16 %v339
  %v1788 = vunpack.c.l.b16 %v340
  %v1789 = vunpack.c.h.b16 %v340
  %v1790 = vunpack.c.l.b16 %v341
  %v1791 = vunpack.c.h.b16 %v341
  %v1792 = vunpack.c.l.b16 %v342
  %v1793 = vunpack.c.l.b16 %v343
  %v1794 = vunpack.c.h.b16 %v343
  %v1795 = vunpack.c.l.b16 %v344
  %v1796 = vunpack.c.h.b16 %v344
  %v1797 = vunpack.c.l.b16 %v345
  %v1798 = vunpack.c.h.b16 %v345
  %v1799 = vunpack.c.l.b16 %v346
  %v1800 = vunpack.c.l.b16 %v347
  %v1801 = vunpack.c.h.b16 %v347
  %v1802 = vunpack.c.l.b16 %v348
  %v1803 = vunpack.c.h.b16 %v348
  %v1804 = vunpack.c.l.b16 %v349
  %v1805 = vunpack.c.h.b16 %v349
  %v1806 = vunpack.c.l.b16 %v350
  %v1807 = vunpack.c.l.b16 %v351
  %v1808 = vunpack.c.h.b16 %v351
  %v1809 = vunpack.c.l.b16 %v352
  %v1810 = vunpack.c.h.b16 %v352
  %v1811 = vunpack.c.l.b16 %v353
  %v1812 = vunpack.c.h.b16 %v353
  %v1813 = vunpack.c.l.b16 %v354
  %v1814 = vunpack.c.l.b16 %v355
  %v1815 = vunpack.c.h.b16 %v355
  %v1816 = vunpack.c.l.b16 %v356
  %v1817 = vunpack.c.h.b16 %v356
  %v1818 = vunpack.c.l.b16 %v357
  %v1819 = vunpack.c.h.b16 %v357
  %v1820 = vunpack.c.l.b16 %v358
  %v1821 = vunpack.c.l.b16 %v359
  %v1822 = vunpack.c.h.b16 %v359
  %v1823 = vunpack.c.l.b16 %v360
  %v1824 = vunpack.c.h.b16 %v360
  %v1825 = vunpack.c.l.b16 %v361
  %v1826 = vunpack.c.h.b16 %v361
  %v1827 = vunpack.c.l.b16 %v362
  %v1828 = vunpack.c.l.b16 %v363
  %v1829 = vunpack.c.h.b16 %v363
  %v1830 = vunpack.c.l.b16 %v364
  %v1831 = vunpack.c.h.b16 %v364
  %v1832 = vunpack.c.l.b16 %v365
  %v1833 = vunpack.c.h.b16 %v365
  %v1834 = vunpack.c.l.b16 %v366
  %v1835 = vunpack.c.l.b16 %v367
  %v1836 = vunpack.c.h.b16 %v367
  %v1837 = vunpack.c.l.b16 %v368
  %v1838 = vunpack.c.h.b16 %v368
  %v1839 = vunpack.c.l.b16 %v369
  %v1840 = vunpack.c.h.b16 %v369
  %v1841 = vunpack.c.l.b16 %v370
  %v1842 = vunpack.c.l.b16 %v371
  %v1843 = vunpack.c.h.b16 %v371
  %v1844 = vunpack.c.l.b16 %v372
  %v1845 = vunpack.c.h.b16 %v372
  %v1846 = vunpack.c.l.b16 %v373
  %v1847 = vunpack.c.h.b16 %v373
  %v1848 = vunpack.c.l.b16 %v374
  %v1849 = vunpack.c.l.b16 %v375
  %v1850 = vunpack.c.h.b16 %v375
  %v1851 = vunpack.c.l.b16 %v376
  %v1852 = vunpack.c.h.b16 %v376
  %v1853 = vunpack.c.l.b16 %v377
  %v1854 = vunpack.c.h.b16 %v377
  %v1855 = vunpack.c.l.b16 %v378
  %v1856 = vunpack.c.l.b16 %v379
  %v1857 = vunpack.c.h.b16 %v379
  %v1858 = vunpack.c.l.b16 %v380
  %v1859 = vunpack.c.h.b16 %v380
  %v1860 = vunpack.c.l.b16 %v381
  %v1861 = vunpack.c.h.b16 %v381
  %v1862 = vunpack.c.l.b16 %v382
  %v1863 = vunpack.c.l.b16 %v383
  %v1864 = vunpack.c.h.b16 %v383
  %v1865 = vunpack.c.l.b16 %v384
  %v1866 = vunpack.c.h.b16 %v384
  %v1867 = vunpack.c.l.b16 %v385
  %v1868 = vunpack.c.h.b16 %v385
  %v1869 = vunpack.c.l.b16 %v386
  %v1870 = vunpack.c.l.b16 %v387
  %v1871 = vunpack.c.h.b16 %v387
  %v1872 = vunpack.c.l.b16 %v388
  %v1873 = vunpack.c.h.b16 %v388
  %v1874 = vunpack.c.l.b16 %v389
  %v1875 = vunpack.c.h.b16 %v389
  %v1876 = vunpack.c.l.b16 %v390
  %v1877 = vunpack.c.l.b16 %v391
  %v1878 = vunpack.c.h.b16 %v391
  %v1879 = vunpack.c.l.b16 %v392
  %v1880 = vunpack.c.h.b16 %v392
  %v1881 = vunpack.c.l.b16 %v393
  %v1882 = vunpack.c.h.b16 %v393
  %v1883 = vunpack.c.l.b16 %v394
  %v1884 = vunpack.c.l.b16 %v395
  %v1885 = vunpack.c.h.b16 %v395
  %v1886 = vunpack.c.l.b16 %v396
  %v1887 = vunpack.c.h.b16 %v396
  %v1888 = vunpack.c.l.b16 %v397
  %v1889 = vunpack.c.h.b16 %v397
  %v1890 = vunpack.c.l.b16 %v398
  %v1891 = vunpack.c.l.b16 %v399
  %v1892 = vunpack.c.h.b16 %v399
  %v1893 = vunpack.c.l.b16 %v400
  %v1894 = vunpack.c.h.b16 %v400
  %v1895 = vunpack.c.l.b16 %v401
  %v1896 = vunpack.c.h.b16 %v401
  %v1897 = vunpack.c.l.b16 %v402
  %v1898 = vunpack.c.l.b16 %v403
  %v1899 = vunpack.c.h.b16 %v403
  %v1900 = vunpack.c.l.b16 %v404
  %v1901 = vunpack.c.h.b16 %v404
  %v1902 = vunpack.c.l.b16 %v405
  %v1903 = vunpack.c.h.b16 %v405
  %v1904 = vunpack.c.l.b16 %v406
  %v1905 = vunpack.c.l.b16 %v407
  %v1906 = vunpack.c.h.b16 %v407
  %v1907 = vunpack.c.l.b16 %v408
  %v1908 = vunpack.c.h.b16 %v408
  %v1909 = vunpack.c.l.b16 %v409
  %v1910 = vunpack.c.h.b16 %v409
  %v1911 = vunpack.c.l.b16 %v410
  %v1912 = vunpack.c.l.b16 %v411
  %v1913 = vunpack.c.h.b16 %v411
  %v1914 = vunpack.c.l.b16 %v412
  %v1915 = vunpack.c.h.b16 %v412
  %v1916 = vunpack.c.l.b16 %v413
  %v1917 = vunpack.c.h.b16 %v413
  %v1918 = vunpack.c.l.b16 %v414
  %v1919 = vunpack.c.l.b16 %v415
  %v1920 = vunpack.c.h.b16 %v415
  %v1921 = vunpack.c.l.b16 %v416
  %v1922 = vunpack.c.h.b16 %v416
  %v1923 = vunpack.c.l.b16 %v417
  %v1924 = vunpack.c.h.b16 %v417
  %v1925 = vunpack.c.l.b16 %v418
  %v1926 = vunpack.c.l.b16 %v419
  %v1927 = vunpack.c.h.b16 %v419
  %v1928 = vunpack.c.l.b16 %v420
  %v1929 = vunpack.c.h.b16 %v420
  %v1930 = vunpack.c.l.b16 %v421
  %v1931 = vunpack.c.h.b16 %v421
  %v1932 = vunpack.c.l.b16 %v422
  %v1933 = vunpack.c.l.b16 %v423
  %v1934 = vunpack.c.h.b16 %v423
  %v1935 = vunpack.c.l.b16 %v424
  %v1936 = vunpack.c.h.b16 %v424
  %v1937 = vunpack.c.l.b16 %v425
  %v1938 = vunpack.c.h.b16 %v425
  %v1939 = vunpack.c.l.b16 %v426
  %v1940 = vunpack.c.l.b16 %v427
  %v1941 = vunpack.c.h.b16 %v427
  %v1942 = vunpack.c.l.b16 %v428
  %v1943 = vunpack.c.h.b16 %v428
  %v1944 = vunpack.c.l.b16 %v429
  %v1945 = vunpack.c.h.b16 %v429
  %v1946 = vunpack.c.l.b16 %v430
  %v1947 = vunpack.c.l.b16 %v431
  %v1948 = vunpack.c.h.b16 %v431
  %v1949 = vunpack.c.l.b16 %v432
  %v1950 = vunpack.c.h.b16 %v432
  %v1951 = vunpack.c.l.b16 %v433
  %v1952 = vunpack.c.h.b16 %v433
  %v1953 = vunpack.c.l.b16 %v434
  %v1954 = vunpack.c.l.b16 %v435
  %v1955 = vunpack.c.h.b16 %v435
  %v1956 = vunpack.c.l.b16 %v436
  %v1957 = vunpack.c.h.b16 %v436
  %v1958 = vunpack.c.l.b16 %v437
  %v1959 = vunpack.c.h.b16 %v437
  %v1960 = vunpack.c.l.b16 %v438
  %v1961 = vunpack.c.l.b16 %v439
  %v1962 = vunpack.c.h.b16 %v439
  %v1963 = vunpack.c.l.b16 %v440
  %v1964 = vunpack.c.h.b16 %v440
  %v1965 = vunpack.c.l.b16 %v441
  %v1966 = vunpack.c.h.b16 %v441
  %v1967 = vunpack.c.l.b16 %v442
  %v1968 = vunpack.c.l.b16 %v443
  %v1969 = vunpack.c.h.b16 %v443
  %v1970 = vunpack.c.l.b16 %v444
  %v1971 = vunpack.c.h.b16 %v444
  %v1972 = vunpack.c.l.b16 %v445
  %v1973 = vunpack.c.h.b16 %v445
  %v1974 = vunpack.c.l.b16 %v446
  %v1975 = vunpack.c.l.b16 %v447
  %v1976 = vunpack.c.h.b16 %v447
  %v1977 = vunpack.c.l.b16 %v448
  %v1978 = vunpack.c.h.b16 %v448
  %v1979 = vunpack.c.l.b16 %v449
  %v1980 = vunpack.c.h.b16 %v449
  %v1981 = vunpack.c.l.b16 %v450
  %v1982 = vunpack.c.l.b16 %v451
  %v1983 = vunpack.c.h.b16 %v451
  %v1984 = vunpack.c.l.b16 %v452
  %v1985 = vunpack.c.h.b16 %v452
  %v1986 = vunpack.c.l.b16 %v453
  %v1987 = vunpack.c.h.b16 %v453
  %v1988 = vunpack.c.l.b16 %v454
  %v1989 = vunpack.c.l.b16 %v455
  %v1990 = vunpack.c.h.b16 %v455
  %v1991 = vunpack.c.l.b16 %v456
  %v1992 = vunpack.c.h.b16 %v456
  %v1993 = vunpack.c.l.b16 %v457
  %v1994 = vunpack.c.h.b16 %v457
  %v1995 = vunpack.c.l.b16 %v458
  %v1996 = vunpack.c.l.b16 %v459
  %v1997 = vunpack.c.h.b16 %v459
  %v1998 = vunpack.c.l.b16 %v460
  %v1999 = vunpack.c.h.b16 %v460
  %v2000 = vunpack.c.l.b16 %v461
  %v2001 = vunpack.c.h.b16 %v461
  %v2002 = vunpack.c.l.b16 %v462
  %v2003 = vunpack.c.l.b16 %v463
  %v2004 = vunpack.c.h.b16 %v463
  %v2005 = vunpack.c.l.b16 %v464
  %v2006 = vunpack.c.h.b16 %v464
  %v2007 = vunpack.c.l.b16 %v465
  %v2008 = vunpack.c.h.b16 %v465
  %v2009 = vunpack.c.l.b16 %v466
  %v2010 = vunpack.c.l.b16 %v467
  %v2011 = vunpack.c.h.b16 %v467
  %v2012 = vunpack.c.l.b16 %v468
  %v2013 = vunpack.c.h.b16 %v468
  %v2014 = vunpack.c.l.b16 %v469
  %v2015 = vunpack.c.h.b16 %v469
  %v2016 = vunpack.c.l.b16 %v470
  %v2017 = vunpack.c.l.b16 %v471
  %v2018 = vunpack.c.h.b16 %v471
  %v2019 = vunpack.c.l.b16 %v472
  %v2020 = vunpack.c.h.b16 %v472
  %v2021 = vunpack.c.l.b16 %v473
  %v2022 = vunpack.c.h.b16 %v473
  %v2023 = vunpack.c.l.b16 %v474
  %v2024 = vunpack.c.l.b16 %v475
  %v2025 = vunpack.c.h.b16 %v475
  %v2026 = vunpack.c.l.b16 %v476
  %v2027 = vunpack.c.h.b16 %v476
  %v2028 = vunpack.c.l.b16 %v477
  %v2029 = vunpack.c.h.b16 %v477
  %v2030 = vunpack.c.l.b16 %v478
  %v2031 = vunpack.c.l.b16 %v479
  %v2032 = vunpack.c.h.b16 %v479
  %v2033 = vunpack.c.l.b16 %v480
  %v2034 = vunpack.c.h.b16 %v480
  %v2035 = vunpack.c.l.b16 %v481
  %v2036 = vunpack.c.h.b16 %v481
  %v2037 = vunpack.c.l.b16 %v482
  %v2038 = vunpack.c.l.b16 %v483
  %v2039 = vunpack.c.h.b16 %v483
  %v2040 = vunpack.c.l.b16 %v484
  %v2041 = vunpack.c.h.b16 %v484
  %v2042 = vunpack.c.l.b16 %v485
  %v2043 = vunpack.c.h.b16 %v485
  %v2044 = vunpack.c.l.b16 %v486
  %v2045 = vunpack.c.l.b16 %v487
  %v2046 = vunpack.c.h.b16 %v487
  %v2047 = vunpack.c.l.b16 %v488
  %v2048 = vunpack.c.h.b16 %v488
  %v2049 = vunpack.c.l.b16 %v489
  %v2050 = vunpack.c.h.b16 %v489
  %v2051 = vunpack.c.l.b16 %v490
  %v2052 = vunpack.c.l.b16 %v491
  %v2053 = vunpack.c.h.b16 %v491
  %v2054 = vunpack.c.l.b16 %v492
  %v2055 = vunpack.c.h.b16 %v492
  %v2056 = vunpack.c.l.b16 %v493
  %v2057 = vunpack.c.h.b16 %v493
  %v2058 = vunpack.c.l.b16 %v494
  %v2059 = vunpack.c.l.b16 %v495
  %v2060 = vunpack.c.h.b16 %v495
  %v2061 = vunpack.c.l.b16 %v496
  %v2062 = vunpack.c.h.b16 %v496
  %v2063 = vunpack.c.l.b16 %v497
  %v2064 = vunpack.c.h.b16 %v497
  %v2065 = vunpack.c.l.b16 %v498
  %v2066 = vunpack.c.l.b16 %v499
  %v2067 = vunpack.c.h.b16 %v499
  %v2068 = vunpack.c.l.b16 %v500
  %v2069 = vunpack.c.h.b16 %v500
  %v2070 = vunpack.c.l.b16 %v501
  %v2071 = vunpack.c.h.b16 %v501
  %v2072 = vunpack.c.l.b16 %v502
  %v2073 = vunpack.c.l.b16 %v503
  %v2074 = vunpack.c.h.b16 %v503
  %v2075 = vunpack.c.l.b16 %v504
  %v2076 = vunpack.c.h.b16 %v504
  %v2077 = vunpack.c.l.b16 %v505
  %v2078 = vunpack.c.h.b16 %v505
  %v2079 = vunpack.c.l.b16 %v506
  %v2080 = vunpack.c.l.b16 %v507
  %v2081 = vunpack.c.h.b16 %v507
  %v2082 = vunpack.c.l.b16 %v508
  %v2083 = vunpack.c.h.b16 %v508
  %v2084 = vunpack.c.l.b16 %v509
  %v2085 = vunpack.c.h.b16 %v509
  %v2086 = vunpack.c.l.b16 %v510
  %v2087 = vunpack.c.l.b16 %v511
  %v2088 = vunpack.c.h.b16 %v511
  %v2089 = vunpack.c.l.b16 %v512
  %v2090 = vunpack.c.h.b16 %v512
  %v2091 = vunpack.c.l.b16 %v513
  %v2092 = vunpack.c.h.b16 %v513
  %v2093 = vunpack.c.l.b16 %v514
  %v2094 = vunpack.c.l.b16 %v515
  %v2095 = vunpack.c.h.b16 %v515
  %v2096 = vunpack.c.l.b16 %v516
  %v2097 = vunpack.c.h.b16 %v516
  %v2098 = vunpack.c.l.b16 %v517
  %v2099 = vunpack.c.h.b16 %v517
  %v2100 = vunpack.c.l.b16 %v518
  %v2101 = vunpack.c.l.b16 %v519
  %v2102 = vunpack.c.h.b16 %v519
  %v2103 = vunpack.c.l.b16 %v520
  %v2104 = vunpack.c.h.b16 %v520
  %v2105 = vunpack.c.l.b16 %v521
  %v2106 = vunpack.c.h.b16 %v521
  %v2107 = vunpack.c.l.b16 %v522
  %v2108 = vunpack.c.l.b16 %v523
  %v2109 = vunpack.c.h.b16 %v523
  %v2110 = vunpack.c.l.b16 %v524
  %v2111 = vunpack.c.h.b16 %v524
  %v2112 = vunpack.c.l.b16 %v525
  %v2113 = vunpack.c.h.b16 %v525
  %v2114 = vunpack.c.l.b16 %v526
  %v2115 = vunpack.c.l.b16 %v527
  %v2116 = vunpack.c.h.b16 %v527
  %v2117 = vunpack.c.l.b16 %v528
  %v2118 = vunpack.c.h.b16 %v528
  %v2119 = vunpack.c.l.b16 %v529
  %v2120 = vunpack.c.h.b16 %v529
  %v2121 = vunpack.c.l.b16 %v530
  %v2122 = vunpack.c.l.b16 %v531
  %v2123 = vunpack.c.h.b16 %v531
  %v2124 = vunpack.c.l.b16 %v532
  %v2125 = vunpack.c.h.b16 %v532
  %v2126 = vunpack.c.l.b16 %v533
  %v2127 = vunpack.c.h.b16 %v533
  %v2128 = vunpack.c.l.b16 %v534
  %v2129 = vunpack.c.l.b16 %v535
  %v2130 = vunpack.c.h.b16 %v535
  %v2131 = vunpack.c.l.b16 %v536
  %v2132 = vunpack.c.h.b16 %v536
  %v2133 = vunpack.c.l.b16 %v537
  %v2134 = vunpack.c.h.b16 %v537
  %v2135 = vunpack.c.l.b16 %v538
  %v2136 = vunpack.c.l.b16 %v539
  %v2137 = vunpack.c.h.b16 %v539
  %v2138 = vunpack.c.l.b16 %v540
  %v2139 = vunpack.c.h.b16 %v540
  %v2140 = vunpack.c.l.b16 %v541
  %v2141 = vunpack.c.h.b16 %v541
  %v2142 = vunpack.c.l.b16 %v542
  %v2143 = vunpack.c.l.b16 %v543
  %v2144 = vunpack.c.h.b16 %v543
  %v2145 = vunpack.c.l.b16 %v544
  %v2146 = vunpack.c.h.b16 %v544
  %v2147 = vunpack.c.l.b16 %v545
  %v2148 = vunpack.c.h.b16 %v545
  %v2149 = vunpack.c.l.b16 %v546
  %v2150 = vunpack.c.l.b16 %v547
  %v2151 = vunpack.c.h.b16 %v547
  %v2152 = vunpack.c.l.b16 %v548
  %v2153 = vunpack.c.h.b16 %v548
  %v2154 = vunpack.c.l.b16 %v549
  %v2155 = vunpack.c.h.b16 %v549
  %v2156 = vunpack.c.l.b16 %v550
  %v2157 = vunpack.c.l.b16 %v551
  %v2158 = vunpack.c.h.b16 %v551
  %v2159 = vunpack.c.l.b16 %v552
  %v2160 = vunpack.c.h.b16 %v552
  %v2161 = vunpack.c.l.b16 %v553
  %v2162 = vunpack.c.h.b16 %v553
  %v2163 = vunpack.c.l.b16 %v554
  %v2164 = vunpack.c.l.b16 %v555
  %v2165 = vunpack.c.h.b16 %v555
  %v2166 = vunpack.c.l.b16 %v556
  %v2167 = vunpack.c.h.b16 %v556
  %v2168 = vunpack.c.l.b16 %v557
  %v2169 = vunpack.c.h.b16 %v557
  %v2170 = vunpack.c.l.b16 %v558
  %v2171 = vunpack.c.l.b16 %v559
  %v2172 = vunpack.c.h.b16 %v559
  %v2173 = vunpack.c.l.b16 %v560
  %v2174 = vunpack.c.h.b16 %v560
  %v2175 = vunpack.c.l.b16 %v561
  %v2176 = vunpack.c.h.b16 %v561
  %v2177 = vunpack.c.l.b16 %v562
  %v2178 = vunpack.c.l.b16 %v563
  %v2179 = vunpack.c.h.b16 %v563
  %v2180 = vunpack.c.l.b16 %v564
  %v2181 = vunpack.c.h.b16 %v564
  %v2182 = vunpack.c.l.b16 %v565
  %v2183 = vunpack.c.h.b16 %v565
  %v2184 = vunpack.c.l.b16 %v566
  %v2185 = vunpack.c.l.b16 %v567
  %v2186 = vunpack.c.h.b16 %v567
  %v2187 = vunpack.c.l.b16 %v568
  %v2188 = vunpack.c.h.b16 %v568
  %v2189 = vunpack.c.l.b16 %v569
  %v2190 = vunpack.c.h.b16 %v569
  %v2191 = vunpack.c.l.b16 %v570
  %v2192 = vunpack.c.l.b16 %v571
  %v2193 = vunpack.c.h.b16 %v571
  %v2194 = vunpack.c.l.b16 %v572
  %v2195 = vunpack.c.h.b16 %v572
  %v2196 = vunpack.c.l.b16 %v573
  %v2197 = vunpack.c.h.b16 %v573
  %v2198 = vunpack.c.l.b16 %v574
  %v2199 = vunpack.c.l.b16 %v575
  %v2200 = vunpack.c.h.b16 %v575
  %v2201 = vunpack.c.l.b16 %v576
  %v2202 = vunpack.c.h.b16 %v576
  %v2203 = vunpack.c.l.b16 %v577
  %v2204 = vunpack.c.h.b16 %v577
  %v2205 = vunpack.c.l.b16 %v578
  %v2206 = vunpack.c.l.b16 %v579
  %v2207 = vunpack.c.h.b16 %v579
  %v2208 = vunpack.c.l.b16 %v580
  %v2209 = vunpack.c.h.b16 %v580
  %v2210 = vunpack.c.l.b16 %v581
  %v2211 = vunpack.c.h.b16 %v581
  %v2212 = vunpack.c.l.b16 %v582
  %v2213 = vunpack.c.l.b16 %v583
  %v2214 = vunpack.c.h.b16 %v583
  %v2215 = vunpack.c.l.b16 %v584
  %v2216 = vunpack.c.h.b16 %v584
  %v2217 = vunpack.c.l.b16 %v585
  %v2218 = vunpack.c.h.b16 %v585
  %v2219 = vunpack.c.l.b16 %v586
  %v2220 = vunpack.c.l.b16 %v587
  %v2221 = vunpack.c.h.b16 %v587
  %v2222 = vunpack.c.l.b16 %v588
  %v2223 = vunpack.c.h.b16 %v588
  %v2224 = vunpack.c.l.b16 %v589
  %v2225 = vunpack.c.h.b16 %v589
  %v2226 = vunpack.c.l.b16 %v590
  %v2227 = vunpack.c.l.b16 %v591
  %v2228 = vunpack.c.h.b16 %v591
  %v2229 = vunpack.c.l.b16 %v592
  %v2230 = vunpack.c.h.b16 %v592
  %v2231 = vunpack.c.l.b16 %v593
  %v2232 = vunpack.c.h.b16 %v593
  %v2233 = vunpack.c.l.b16 %v594
  %v2234 = vunpack.c.l.b16 %v595
  %v2235 = vunpack.c.h.b16 %v595
  %v2236 = vunpack.c.l.b16 %v596
  %v2237 = vunpack.c.h.b16 %v596
  %v2238 = vunpack.c.l.b16 %v597
  %v2239 = vunpack.c.h.b16 %v597
  %v2240 = vunpack.c.l.b16 %v598
  %v2241 = vunpack.c.l.b16 %v599
  %v2242 = vunpack.c.h.b16 %v599
  %v2243 = vunpack.c.l.b16 %v600
  %v2244 = vunpack.c.h.b16 %v600
  %v2245 = vunpack.c.l.b16 %v601
  %v2246 = vunpack.c.h.b16 %v601
  %v2247 = vunpack.c.l.b16 %v602
  %v2248 = vunpack.c.l.b16 %v603
  %v2249 = vunpack.c.h.b16 %v603
  %v2250 = vunpack.c.l.b16 %v604
  %v2251 = vunpack.c.h.b16 %v604
  %v2252 = vunpack.c.l.b16 %v605
  %v2253 = vunpack.c.h.b16 %v605
  %v2254 = vunpack.c.l.b16 %v606
  %v2255 = vunpack.c.l.b16 %v607
  %v2256 = vunpack.c.h.b16 %v607
  %v2257 = vunpack.c.l.b16 %v608
  %v2258 = vunpack.c.h.b16 %v608
  %v2259 = vunpack.c.l.b16 %v609
  %v2260 = vunpack.c.h.b16 %v609
  %v2261 = vunpack.c.l.b16 %v610
  %v2262 = vunpack.c.l.b16 %v611
  %v2263 = vunpack.c.h.b16 %v611
  %v2264 = vunpack.c.l.b16 %v612
  %v2265 = vunpack.c.h.b16 %v612
  %v2266 = vunpack.c.l.b16 %v613
  %v2267 = vunpack.c.h.b16 %v613
  %v2268 = vunpack.c.l.b16 %v614
  %v2269 = vunpack.c.l.b16 %v615
  %v2270 = vunpack.c.h.b16 %v615
  %v2271 = vunpack.c.l.b16 %v616
  %v2272 = vunpack.c.h.b16 %v616
  %v2273 = vunpack.c.l.b16 %v617
  %v2274 = vunpack.c.h.b16 %v617
  %v2275 = vunpack.c.l.b16 %v618
  %v2276 = vunpack.c.l.b16 %v619
  %v2277 = vunpack.c.h.b16 %v619
  %v2278 = vunpack.c.l.b16 %v620
  %v2279 = vunpack.c.h.b16 %v620
  %v2280 = vunpack.c.l.b16 %v621
  %v2281 = vunpack.c.h.b16 %v621
  %v2282 = vunpack.c.l.b16 %v622
  %v2283 = vunpack.c.l.b16 %v623
  %v2284 = vunpack.c.h.b16 %v623
  %v2285 = vunpack.c.l.b16 %v624
  %v2286 = vunpack.c.h.b16 %v624
  %v2287 = vunpack.c.l.b16 %v625
  %v2288 = vunpack.c.h.b16 %v625
  %v2289 = vunpack.c.l.b16 %v626
  %v2290 = vunpack.c.l.b16 %v627
  %v2291 = vunpack.c.h.b16 %v627
  %v2292 = vunpack.c.l.b16 %v628
  %v2293 = vunpack.c.h.b16 %v628
  %v2294 = vunpack.c.l.b16 %v629
  %v2295 = vunpack.c.h.b16 %v629
  %v2296 = vunpack.c.l.b16 %v630
  %v2297 = vunpack.c.l.b16 %v631
  %v2298 = vunpack.c.h.b16 %v631
  %v2299 = vunpack.c.l.b16 %v632
  %v2300 = vunpack.c.h.b16 %v632
  %v2301 = vunpack.c.l.b16 %v633
  %v2302 = vunpack.c.h.b16 %v633
  %v2303 = vunpack.c.l.b16 %v634
  %v2304 = vunpack.c.l.b16 %v635
  %v2305 = vunpack.c.h.b16 %v635
  %v2306 = vunpack.c.l.b16 %v636
  %v2307 = vunpack.c.h.b16 %v636
  %v2308 = vunpack.c.l.b16 %v637
  %v2309 = vunpack.c.h.b16 %v637
  %v2310 = vunpack.c.l.b16 %v638
  %v2311 = vunpack.c.l.b16 %v639
  %v2312 = vunpack.c.h.b16 %v639
  %v2313 = vunpack.c.l.b16 %v640
  %v2314 = vunpack.c.h.b16 %v640
  %v2315 = vunpack.c.l.b16 %v641
  %v2316 = vunpack.c.h.b16 %v641
  %v2317 = vunpack.c.l.b16 %v642
  %v2318 = vunpack.c.l.b16 %v643
  %v2319 = vunpack.c.h.b16 %v643
  %v2320 = vunpack.c.l.b16 %v644
  %v2321 = vunpack.c.h.b16 %v644
  %v2322 = vunpack.c.l.b16 %v645
  %v2323 = vunpack.c.h.b16 %v645
  %v2324 = vunpack.c.l.b16 %v646
  %v2325 = vunpack.c.l.b16 %v647
  %v2326 = vunpack.c.h.b16 %v647
  %v2327 = vunpack.c.l.b16 %v648
  %v2328 = vunpack.c.h.b16 %v648
  %v2329 = vunpack.c.l.b16 %v649
  %v2330 = vunpack.c.h.b16 %v649
  %v2331 = vunpack.c.l.b16 %v650
  %v2332 = vunpack.c.l.b16 %v651
  %v2333 = vunpack.c.h.b16 %v651
  %v2334 = vunpack.c.l.b16 %v652
  %v2335 = vunpack.c.h.b16 %v652
  %v2336 = vunpack.c.l.b16 %v653
  %v2337 = vunpack.c.h.b16 %v653
  %v2338 = vunpack.c.l.b16 %v654
  %v2339 = vunpack.c.l.b16 %v655
  %v2340 = vunpack.c.h.b16 %v655
  %v2341 = vunpack.c.l.b16 %v656
  %v2342 = vunpack.c.h.b16 %v656
  %v2343 = vunpack.c.l.b16 %v657
  %v2344 = vunpack.c.h.b16 %v657
  %v2345 = vunpack.c.l.b16 %v658
  %v2346 = vpack.c.b16 %v1303, %v1296
  %v2347 = vpack.c.b16 %v1304, %v1297
  %v2348 = vpack.c.b16 %v1305, %v1298
  %v2349 = vpack.c.b16 %v1306, %v1299
  %v2350 = vpack.c.b16 %v1307, %v1300
  %v2351 = vpack.c.b16 %v1308, %v1301
  %v2352 = vpack.c.b16 %v1309, %v1302
  %v2353 = vpack.c.b16 %v1317, %v1310
  %v2354 = vpack.c.b16 %v1318, %v1311
  %v2355 = vpack.c.b16 %v1319, %v1312
  %v2356 = vpack.c.b16 %v1320, %v1313
  %v2357 = vpack.c.b16 %v1321, %v1314
  %v2358 = vpack.c.b16 %v1322, %v1315
  %v2359 = vpack.c.b16 %v1323, %v1316
  %v2360 = vpack.c.b16 %v1331, %v1324
  %v2361 = vpack.c.b16 %v1332, %v1325
  %v2362 = vpack.c.b16 %v1333, %v1326
  %v2363 = vpack.c.b16 %v1334, %v1327
  %v2364 = vpack.c.b16 %v1335, %v1328
  %v2365 = vpack.c.b16 %v1336, %v1329
  %v2366 = vpack.c.b16 %v1337, %v1330
  %v2367 = vpack.c.b16 %v1345, %v1338
  %v2368 = vpack.c.b16 %v1346, %v1339
  %v2369 = vpack.c.b16 %v1347, %v1340
  %v2370 = vpack.c.b16 %v1348, %v1341
  %v2371 = vpack.c.b16 %v1349, %v1342
  %v2372 = vpack.c.b16 %v1350, %v1343
  %v2373 = vpack.c.b16 %v1351, %v1344
  %v2374 = vpack.c.b16 %v1359, %v1352
  %v2375 = vpack.c.b16 %v1360, %v1353
  %v2376 = vpack.c.b16 %v1361, %v1354
  %v2377 = vpack.c.b16 %v1362, %v1355
  %v2378 = vpack.c.b16 %v1363, %v1356
  %v2379 = vpack.c.b16 %v1364, %v1357
  %v2380 = vpack.c.b16 %v1365, %v1358
  %v2381 = vpack.c.b16 %v1373, %v1366
  %v2382 = vpack.c.b16 %v1374, %v1367
  %v2383 = vpack.c.b16 %v1375, %v1368
  %v2384 = vpack.c.b16 %v1376, %v1369
  %v2385 = vpack.c.b16 %v1377, %v1370
  %v2386 = vpack.c.b16 %v1378, %v1371
  %v2387 = vpack.c.b16 %v1379, %v1372
  %v2388 = vpack.c.b16 %v1387, %v1380
  %v2389 = vpack.c.b16 %v1388, %v1381
  %v2390 = vpack.c.b16 %v1389, %v1382
  %v2391 = vpack.c.b16 %v1390, %v1383
  %v2392 = vpack.c.b16 %v1391, %v1384
  %v2393 = vpack.c.b16 %v1392, %v1385
  %v2394 = vpack.c.b16 %v1393, %v1386
  %v2395 = vpack.c.b16 %v1401, %v1394
  %v2396 = vpack.c.b16 %v1402, %v1395
  %v2397 = vpack.c.b16 %v1403, %v1396
  %v2398 = vpack.c.b16 %v1404, %v1397
  %v2399 = vpack.c.b16 %v1405, %v1398
  %v2400 = vpack.c.b16 %v1406, %v1399
  %v2401 = vpack.c.b16 %v1407, %v1400
  %v2402 = vpack.c.b16 %v1415, %v1408
  %v2403 = vpack.c.b16 %v1416, %v1409
  %v2404 = vpack.c.b16 %v1417, %v1410
  %v2405 = vpack.c.b16 %v1418, %v1411
  %v2406 = vpack.c.b16 %v1419, %v1412
  %v2407 = vpack.c.b16 %v1420, %v1413
  %v2408 = vpack.c.b16 %v1421, %v1414
  %v2409 = vpack.c.b16 %v1429, %v1422
  %v2410 = vpack.c.b16 %v1430, %v1423
  %v2411 = vpack.c.b16 %v1431, %v1424
  %v2412 = vpack.c.b16 %v1432, %v1425
  %v2413 = vpack.c.b16 %v1433, %v1426
  %v2414 = vpack.c.b16 %v1434, %v1427
  %v2415 = vpack.c.b16 %v1435, %v1428
  %v2416 = vpack.c.b16 %v1443, %v1436
  %v2417 = vpack.c.b16 %v1444, %v1437
  %v2418 = vpack.c.b16 %v1445, %v1438
  %v2419 = vpack.c.b16 %v1446, %v1439
  %v2420 = vpack.c.b16 %v1447, %v1440
  %v2421 = vpack.c.b16 %v1448, %v1441
  %v2422 = vpack.c.b16 %v1449, %v1442
  %v2423 = vpack.c.b16 %v1457, %v1450
  %v2424 = vpack.c.b16 %v1458, %v1451
  %v2425 = vpack.c.b16 %v1459, %v1452
  %v2426 = vpack.c.b16 %v1460, %v1453
  %v2427 = vpack.c.b16 %v1461, %v1454
  %v2428 = vpack.c.b16 %v1462, %v1455
  %v2429 = vpack.c.b16 %v1463, %v1456
  %v2430 = vpack.c.b16 %v1471, %v1464
  %v2431 = vpack.c.b16 %v1472, %v1465
  %v2432 = vpack.c.b16 %v1473, %v1466
  %v2433 = vpack.c.b16 %v1474, %v1467
  %v2434 = vpack.c.b16 %v1475, %v1468
  %v2435 = vpack.c.b16 %v1476, %v1469
  %v2436 = vpack.c.b16 %v1477, %v1470
  %v2437 = vpack.c.b16 %v1485, %v1478
  %v2438 = vpack.c.b16 %v1486, %v1479
  %v2439 = vpack.c.b16 %v1487, %v1480
  %v2440 = vpack.c.b16 %v1488, %v1481
  %v2441 = vpack.c.b16 %v1489, %v1482
  %v2442 = vpack.c.b16 %v1490, %v1483
  %v2443 = vpack.c.b16 %v1491, %v1484
  %v2444 = vpack.c.b16 %v1499, %v1492
  %v2445 = vpack.c.b16 %v1500, %v1493
  %v2446 = vpack.c.b16 %v1501, %v1494
  %v2447 = vpack.c.b16 %v1502, %v1495
  %v2448 = vpack.c.b16 %v1503, %v1496
  %v2449 = vpack.c.b16 %v1504, %v1497
  %v2450 = vpack.c.b16 %v1505, %v1498
  %v2451 = vpack.c.b16 %v1513, %v1506
  %v2452 = vpack.c.b16 %v1514, %v1507
  %v2453 = vpack.c.b16 %v1515, %v1508
  %v2454 = vpack.c.b16 %v1516, %v1509
  %v2455 = vpack.c.b16 %v1517, %v1510
  %v2456 = vpack.c.b16 %v1518, %v1511
  %v2457 = vpack.c.b16 %v1519, %v1512
  %v2458 = vpack.c.b16 %v1527, %v1520
  %v2459 = vpack.c.b16 %v1528, %v1521
  %v2460 = vpack.c.b16 %v1529, %v1522
  %v2461 = vpack.c.b16 %v1530, %v1523
  %v2462 = vpack.c.b16 %v1531, %v1524
  %v2463 = vpack.c.b16 %v1532, %v1525
  %v2464 = vpack.c.b16 %v1533, %v1526
  %v2465 = vpack.c.b16 %v1541, %v1534
  %v2466 = vpack.c.b16 %v1542, %v1535
  %v2467 = vpack.c.b16 %v1543, %v1536
  %v2468 = vpack.c.b16 %v1544, %v1537
  %v2469 = vpack.c.b16 %v1545, %v1538
  %v2470 = vpack.c.b16 %v1546, %v1539
  %v2471 = vpack.c.b16 %v1547, %v1540
  %v2472 = vpack.c.b16 %v1555, %v1548
  %v2473 = vpack.c.b16 %v1556, %v1549
  %v2474 = vpack.c.b16 %v1557, %v1550
  %v2475 = vpack.c.b16 %v1558, %v1551
  %v2476 = vpack.c.b16 %v1559, %v1552
  %v2477 = vpack.c.b16 %v1560, %v1553
  %v2478 = vpack.c.b16 %v1561, %v1554
  %v2479 = vpack.c.b16 %v1569, %v1562
  %v2480 = vpack.c.b16 %v1570, %v1563
  %v2481 = vpack.c.b16 %v1571, %v1564
  %v2482 = vpack.c.b16 %v1572, %v1565
  %v2483 = vpack.c.b16 %v1573, %v1566
  %v2484 = vpack.c.b16 %v1574, %v1567
  %v2485 = vpack.c.b16 %v1575, %v1568
  %v2486 = vpack.c.b16 %v1583, %v1576
  %v2487 = vpack.c.b16 %v1584, %v1577
  %v2488 = vpack.c.b16 %v1585, %v1578
  %v2489 = vpack.c.b16 %v1586, %v1579
  %v2490 = vpack.c.b16 %v1587, %v1580
  %v2491 = vpack.c.b16 %v1588, %v1581
  %v2492 = vpack.c.b16 %v1589, %v1582
  %v2493 = vpack.c.b16 %v1597, %v1590
  %v2494 = vpack.c.b16 %v1598, %v1591
  %v2495 = vpack.c.b16 %v1599, %v1592
  %v2496 = vpack.c.b16 %v1600, %v1593
  %v2497 = vpack.c.b16 %v1601, %v1594
  %v2498 = vpack.c.b16 %v1602, %v1595
  %v2499 = vpack.c.b16 %v1603, %v1596
  %v2500 = vpack.c.b16 %v1611, %v1604
  %v2501 = vpack.c.b16 %v1612, %v1605
  %v2502 = vpack.c.b16 %v1613, %v1606
  %v2503 = vpack.c.b16 %v1614, %v1607
  %v2504 = vpack.c.b16 %v1615, %v1608
  %v2505 = vpack.c.b16 %v1616, %v1609
  %v2506 = vpack.c.b16 %v1617, %v1610
  %v2507 = vpack.c.b16 %v1625, %v1618
  %v2508 = vpack.c.b16 %v1626, %v1619
  %v2509 = vpack.c.b16 %v1627, %v1620
  %v2510 = vpack.c.b16 %v1628, %v1621
  %v2511 = vpack.c.b16 %v1629, %v1622
  %v2512 = vpack.c.b16 %v1630, %v1623
  %v2513 = vpack.c.b16 %v1631, %v1624
  %v2514 = vpack.c.b16 %v1639, %v1632
  %v2515 = vpack.c.b16 %v1640, %v1633
  %v2516 = vpack.c.b16 %v1641, %v1634
  %v2517 = vpack.c.b16 %v1642, %v1635
  %v2518 = vpack.c.b16 %v1643, %v1636
  %v2519 = vpack.c.b16 %v1644, %v1637
  %v2520 = vpack.c.b16 %v1645, %v1638
  %v2521 = vpack.c.b16 %v1653, %v1646
  %v2522 = vpack.c.b16 %v1654, %v1647
  %v2523 = vpack.c.b16 %v1655, %v1648
  %v2524 = vpack.c.b16 %v1656, %v1649
  %v2525 = vpack.c.b16 %v1657, %v1650
  %v2526 = vpack.c.b16 %v1658, %v1651
  %v2527 = vpack.c.b16 %v1659, %v1652
  %v2528 = vpack.c.b16 %v1667, %v1660
  %v2529 = vpack.c.b16 %v1668, %v1661
  %v2530 = vpack.c.b16 %v1669, %v1662
  %v2531 = vpack.c.b16 %v1670, %v1663
  %v2532 = vpack.c.b16 %v1671, %v1664
  %v2533 = vpack.c.b16 %v1672, %v1665
  %v2534 = vpack.c.b16 %v1673, %v1666
  %v2535 = vpack.c.b16 %v1681, %v1674
  %v2536 = vpack.c.b16 %v1682, %v1675
  %v2537 = vpack.c.b16 %v1683, %v1676
  %v2538 = vpack.c.b16 %v1684, %v1677
  %v2539 = vpack.c.b16 %v1685, %v1678
  %v2540 = vpack.c.b16 %v1686, %v1679
  %v2541 = vpack.c.b16 %v1687, %v1680
  %v2542 = vpack.c.b16 %v1695, %v1688
  %v2543 = vpack.c.b16 %v1696, %v1689
  %v2544 = vpack.c.b16 %v1697, %v1690
  %v2545 = vpack.c.b16 %v1698, %v1691
  %v2546 = vpack.c.b16 %v1699, %v1692
  %v2547 = vpack.c.b16 %v1700, %v1693
  %v2548 = vpack.c.b16 %v1701, %v1694
  %v2549 = vpack.c.b16 %v1709, %v1702
  %v2550 = vpack.c.b16 %v1710, %v1703
  %v2551 = vpack.c.b16 %v1711, %v1704
  %v2552 = vpack.c.b16 %v1712, %v1705
  %v2553 = vpack.c.b16 %v1713, %v1706
  %v2554 = vpack.c.b16 %v1714, %v1707
  %v2555 = vpack.c.b16 %v1715, %v1708
  %v2556 = vpack.c.b16 %v1723, %v1716
  %v2557 = vpack.c.b16 %v1724, %v1717
  %v2558 = vpack.c.b16 %v1725, %v1718
  %v2559 = vpack.c.b16 %v1726, %v1719
  %v2560 = vpack.c.b16 %v1727, %v1720
  %v2561 = vpack.c.b16 %v1728, %v1721
  %v2562 = vpack.c.b16 %v1729, %v1722
  %v2563 = vpack.c.b16 %v1737, %v1730
  %v2564 = vpack.c.b16 %v1738, %v1731
  %v2565 = vpack.c.b16 %v1739, %v1732
  %v2566 = vpack.c.b16 %v1740, %v1733
  %v2567 = vpack.c.b16 %v1741, %v1734
  %v2568 = vpack.c.b16 %v1742, %v1735
  %v2569 = vpack.c.b16 %v1743, %v1736
  %v2570 = vpack.c.b16 %v1751, %v1744
  %v2571 = vpack.c.b16 %v1752, %v1745
  %v2572 = vpack.c.b16 %v1753, %v1746
  %v2573 = vpack.c.b16 %v1754, %v1747
  %v2574 = vpack.c.b16 %v1755, %v1748
  %v2575 = vpack.c.b16 %v1756, %v1749
  %v2576 = vpack.c.b16 %v1757, %v1750
  %v2577 = vpack.c.b16 %v1765, %v1758
  %v2578 = vpack.c.b16 %v1766, %v1759
  %v2579 = vpack.c.b16 %v1767, %v1760
  %v2580 = vpack.c.b16 %v1768, %v1761
  %v2581 = vpack.c.b16 %v1769, %v1762
  %v2582 = vpack.c.b16 %v1770, %v1763
  %v2583 = vpack.c.b16 %v1771, %v1764
  %v2584 = vpack.c.b16 %v1779, %v1772
  %v2585 = vpack.c.b16 %v1780, %v1773
  %v2586 = vpack.c.b16 %v1781, %v1774
  %v2587 = vpack.c.b16 %v1782, %v1775
  %v2588 = vpack.c.b16 %v1783, %v1776
  %v2589 = vpack.c.b16 %v1784, %v1777
  %v2590 = vpack.c.b16 %v1785, %v1778
  %v2591 = vpack.c.b16 %v1793, %v1786
  %v2592 = vpack.c.b16 %v1794, %v1787
  %v2593 = vpack.c.b16 %v1795, %v1788
  %v2594 = vpack.c.b16 %v1796, %v1789
  %v2595 = vpack.c.b16 %v1797, %v1790
  %v2596 = vpack.c.b16 %v1798, %v1791
  %v2597 = vpack.c.b16 %v1799, %v1792
  %v2598 = vpack.c.b16 %v1807, %v1800
  %v2599 = vpack.c.b16 %v1808, %v1801
  %v2600 = vpack.c.b16 %v1809, %v1802
  %v2601 = vpack.c.b16 %v1810, %v1803
  %v2602 = vpack.c.b16 %v1811, %v1804
  %v2603 = vpack.c.b16 %v1812, %v1805
  %v2604 = vpack.c.b16 %v1813, %v1806
  %v2605 = vpack.c.b16 %v1821, %v1814
  %v2606 = vpack.c.b16 %v1822, %v1815
  %v2607 = vpack.c.b16 %v1823, %v1816
  %v2608 = vpack.c.b16 %v1824, %v1817
  %v2609 = vpack.c.b16 %v1825, %v1818
  %v2610 = vpack.c.b16 %v1826, %v1819
  %v2611 = vpack.c.b16 %v1827, %v1820
  %v2612 = vpack.c.b16 %v1835, %v1828
  %v2613 = vpack.c.b16 %v1836, %v1829
  %v2614 = vpack.c.b16 %v1837, %v1830
  %v2615 = vpack.c.b16 %v1838, %v1831
  %v2616 = vpack.c.b16 %v1839, %v1832
  %v2617 = vpack.c.b16 %v1840, %v1833
  %v2618 = vpack.c.b16 %v1841, %v1834
  %v2619 = vpack.c.b16 %v1849, %v1842
  %v2620 = vpack.c.b16 %v1850, %v1843
  %v2621 = vpack.c.b16 %v1851, %v1844
  %v2622 = vpack.c.b16 %v1852, %v1845
  %v2623 = vpack.c.b16 %v1853, %v1846
  %v2624 = vpack.c.b16 %v1854, %v1847
  %v2625 = vpack.c.b16 %v1855, %v1848
  %v2626 = vpack.c.b16 %v1863, %v1856
  %v2627 = vpack.c.b16 %v1864, %v1857
  %v2628 = vpack.c.b16 %v1865, %v1858
  %v2629 = vpack.c.b16 %v1866, %v1859
  %v2630 = vpack.c.b16 %v1867, %v1860
  %v2631 = vpack.c.b16 %v1868, %v1861
  %v2632 = vpack.c.b16 %v1869, %v1862
  %v2633 = vpack.c.b16 %v1877, %v1870
  %v2634 = vpack.c.b16 %v1878, %v1871
  %v2635 = vpack.c.b16 %v1879, %v1872
  %v2636 = vpack.c.b16 %v1880, %v1873
  %v2637 = vpack.c.b16 %v1881, %v1874
  %v2638 = vpack.c.b16 %v1882, %v1875
  %v2639 = vpack.c.b16 %v1883, %v1876
  %v2640 = vpack.c.b16 %v1891, %v1884
  %v2641 = vpack.c.b16 %v1892, %v1885
  %v2642 = vpack.c.b16 %v1893, %v1886
  %v2643 = vpack.c.b16 %v1894, %v1887
  %v2644 = vpack.c.b16 %v1895, %v1888
  %v2645 = vpack.c.b16 %v1896, %v1889
  %v2646 = vpack.c.b16 %v1897, %v1890
  %v2647 = vpack.c.b16 %v1905, %v1898
  %v2648 = vpack.c.b16 %v1906, %v1899
  %v2649 = vpack.c.b16 %v1907, %v1900
  %v2650 = vpack.c.b16 %v1908, %v1901
  %v2651 = vpack.c.b16 %v1909, %v1902
  %v2652 = vpack.c.b16 %v1910, %v1903
  %v2653 = vpack.c.b16 %v1911, %v1904
  %v2654 = vpack.c.b16 %v1919, %v1912
  %v2655 = vpack.c.b16 %v1920, %v1913
  %v2656 = vpack.c.b16 %v1921, %v1914
  %v2657 = vpack.c.b16 %v1922, %v1915
  %v2658 = vpack.c.b16 %v1923, %v1916
  %v2659 = vpack.c.b16 %v1924, %v1917
  %v2660 = vpack.c.b16 %v1925, %v1918
  %v2661 = vpack.c.b16 %v1933, %v1926
  %v2662 = vpack.c.b16 %v1934, %v1927
  %v2663 = vpack.c.b16 %v1935, %v1928
  %v2664 = vpack.c.b16 %v1936, %v1929
  %v2665 = vpack.c.b16 %v1937, %v1930
  %v2666 = vpack.c.b16 %v1938, %v1931
  %v2667 = vpack.c.b16 %v1939, %v1932
  %v2668 = vpack.c.b16 %v1947, %v1940
  %v2669 = vpack.c.b16 %v1948, %v1941
  %v2670 = vpack.c.b16 %v1949, %v1942
  %v2671 = vpack.c.b16 %v1950, %v1943
  %v2672 = vpack.c.b16 %v1951, %v1944
  %v2673 = vpack.c.b16 %v1952, %v1945
  %v2674 = vpack.c.b16 %v1953, %v1946
  %v2675 = vpack.c.b16 %v1961, %v1954
  %v2676 = vpack.c.b16 %v1962, %v1955
  %v2677 = vpack.c.b16 %v1963, %v1956
  %v2678 = vpack.c.b16 %v1964, %v1957
  %v2679 = vpack.c.b16 %v1965, %v1958
  %v2680 = vpack.c.b16 %v1966, %v1959
  %v2681 = vpack.c.b16 %v1967, %v1960
  %v2682 = vpack.c.b16 %v1975, %v1968
  %v2683 = vpack.c.b16 %v1976, %v1969
  %v2684 = vpack.c.b16 %v1977, %v1970
  %v2685 = vpack.c.b16 %v1978, %v1971
  %v2686 = vpack.c.b16 %v1979, %v1972
  %v2687 = vpack.c.b16 %v1980, %v1973
  %v2688 = vpack.c.b16 %v1981, %v1974
  %v2689 = vpack.c.b16 %v1989, %v1982
  %v2690 = vpack.c.b16 %v1990, %v1983
  %v2691 = vpack.c.b16 %v1991, %v1984
  %v2692 = vpack.c.b16 %v1992, %v1985
  %v2693 = vpack.c.b16 %v1993, %v1986
  %v2694 = vpack.c.b16 %v1994, %v1987
  %v2695 = vpack.c.b16 %v1995, %v1988
  %v2696 = vpack.c.b16 %v2003, %v1996
  %v2697 = vpack.c.b16 %v2004, %v1997
  %v2698 = vpack.c.b16 %v2005, %v1998
  %v2699 = vpack.c.b16 %v2006, %v1999
  %v2700 = vpack.c.b16 %v2007, %v2000
  %v2701 = vpack.c.b16 %v2008, %v2001
  %v2702 = vpack.c.b16 %v2009, %v2002
  %v2703 = vpack.c.b16 %v2017, %v2010
  %v2704 = vpack.c.b16 %v2018, %v2011
  %v2705 = vpack.c.b16 %v2019, %v2012
  %v2706 = vpack.c.b16 %v2020, %v2013
  %v2707 = vpack.c.b16 %v2021, %v2014
  %v2708 = vpack.c.b16 %v2022, %v2015
  %v2709 = vpack.c.b16 %v2023, %v2016
  %v2710 = vpack.c.b16 %v2031, %v2024
  %v2711 = vpack.c.b16 %v2032, %v2025
  %v2712 = vpack.c.b16 %v2033, %v2026
  %v2713 = vpack.c.b16 %v2034, %v2027
  %v2714 = vpack.c.b16 %v2035, %v2028
  %v2715 = vpack.c.b16 %v2036, %v2029
  %v2716 = vpack.c.b16 %v2037, %v2030
  %v2717 = vpack.c.b16 %v2045, %v2038
  %v2718 = vpack.c.b16 %v2046, %v2039
  %v2719 = vpack.c.b16 %v2047, %v2040
  %v2720 = vpack.c.b16 %v2048, %v2041
  %v2721 = vpack.c.b16 %v2049, %v2042
  %v2722 = vpack.c.b16 %v2050, %v2043
  %v2723 = vpack.c.b16 %v2051, %v2044
  %v2724 = vpack.c.b16 %v2059, %v2052
  %v2725 = vpack.c.b16 %v2060, %v2053
  %v2726 = vpack.c.b16 %v2061, %v2054
  %v2727 = vpack.c.b16 %v2062, %v2055
  %v2728 = vpack.c.b16 %v2063, %v2056
  %v2729 = vpack.c.b16 %v2064, %v2057
  %v2730 = vpack.c.b16 %v2065, %v2058
  %v2731 = vpack.c.b16 %v2073, %v2066
  %v2732 = vpack.c.b16 %v2074, %v2067
  %v2733 = vpack.c.b16 %v2075, %v2068
  %v2734 = vpack.c.b16 %v2076, %v2069
  %v2735 = vpack.c.b16 %v2077, %v2070
  %v2736 = vpack.c.b16 %v2078, %v2071
  %v2737 = vpack.c.b16 %v2079, %v2072
  %v2738 = vpack.c.b16 %v2087, %v2080
  %v2739 = vpack.c.b16 %v2088, %v2081
  %v2740 = vpack.c.b16 %v2089, %v2082
  %v2741 = vpack.c.b16 %v2090, %v2083
  %v2742 = vpack.c.b16 %v2091, %v2084
  %v2743 = vpack.c.b16 %v2092, %v2085
  %v2744 = vpack.c.b16 %v2093, %v2086
  %v2745 = vpack.c.b16 %v2101, %v2094
  %v2746 = vpack.c.b16 %v2102, %v2095
  %v2747 = vpack.c.b16 %v2103, %v2096
  %v2748 = vpack.c.b16 %v2104, %v2097
  %v2749 = vpack.c.b16 %v2105, %v2098
  %v2750 = vpack.c.b16 %v2106, %v2099
  %v2751 = vpack.c.b16 %v2107, %v2100
  %v2752 = vpack.c.b16 %v2115, %v2108
  %v2753 = vpack.c.b16 %v2116, %v2109
  %v2754 = vpack.c.b16 %v2117, %v2110
  %v2755 = vpack.c.b16 %v2118, %v2111
  %v2756 = vpack.c.b16 %v2119, %v2112
  %v2757 = vpack.c.b16 %v2120, %v2113
  %v2758 = vpack.c.b16 %v2121, %v2114
  %v2759 = vpack.c.b16 %v2129, %v2122
  %v2760 = vpack.c.b16 %v2130, %v2123
  %v2761 = vpack.c.b16 %v2131, %v2124
  %v2762 = vpack.c.b16 %v2132, %v2125
  %v2763 = vpack.c.b16 %v2133, %v2126
  %v2764 = vpack.c.b16 %v2134, %v2127
  %v2765 = vpack.c.b16 %v2135, %v2128
  %v2766 = vpack.c.b16 %v2143, %v2136
  %v2767 = vpack.c.b16 %v2144, %v2137
  %v2768 = vpack.c.b16 %v2145, %v2138
  %v2769 = vpack.c.b16 %v2146, %v2139
  %v2770 = vpack.c.b16 %v2147, %v2140
  %v2771 = vpack.c.b16 %v2148, %v2141
  %v2772 = vpack.c.b16 %v2149, %v2142
  %v2773 = vpack.c.b16 %v2157, %v2150
  %v2774 = vpack.c.b16 %v2158, %v2151
  %v2775 = vpack.c.b16 %v2159, %v2152
  %v2776 = vpack.c.b16 %v2160, %v2153
  %v2777 = vpack.c.b16 %v2161, %v2154
  %v2778 = vpack.c.b16 %v2162, %v2155
  %v2779 = vpack.c.b16 %v2163, %v2156
  %v2780 = vpack.c.b16 %v2171, %v2164
  %v2781 = vpack.c.b16 %v2172, %v2165
  %v2782 = vpack.c.b16 %v2173, %v2166
  %v2783 = vpack.c.b16 %v2174, %v2167
  %v2784 = vpack.c.b16 %v2175, %v2168
  %v2785 = vpack.c.b16 %v2176, %v2169
  %v2786 = vpack.c.b16 %v2177, %v2170
  %v2787 = vpack.c.b16 %v2185, %v2178
  %v2788 = vpack.c.b16 %v2186, %v2179
  %v2789 = vpack.c.b16 %v2187, %v2180
  %v2790 = vpack.c.b16 %v2188, %v2181
  %v2791 = vpack.c.b16 %v2189, %v2182
  %v2792 = vpack.c.b16 %v2190, %v2183
  %v2793 = vpack.c.b16 %v2191, %v2184
  %v2794 = vpack.c.b16 %v2199, %v2192
  %v2795 = vpack.c.b16 %v2200, %v2193
  %v2796 = vpack.c.b16 %v2201, %v2194
  %v2797 = vpack.c.b16 %v2202, %v2195
  %v2798 = vpack.c.b16 %v2203, %v2196
  %v2799 = vpack.c.b16 %v2204, %v2197
  %v2800 = vpack.c.b16 %v2205, %v2198
  %v2801 = vpack.c.b16 %v2213, %v2206
  %v2802 = vpack.c.b16 %v2214, %v2207
  %v2803 = vpack.c.b16 %v2215, %v2208
  %v2804 = vpack.c.b16 %v2216, %v2209
  %v2805 = vpack.c.b16 %v2217, %v2210
  %v2806 = vpack.c.b16 %v2218, %v2211
  %v2807 = vpack.c.b16 %v2219, %v2212
  %v2808 = vpack.c.b16 %v2227, %v2220
  %v2809 = vpack.c.b16 %v2228, %v2221
  %v2810 = vpack.c.b16 %v2229, %v2222
  %v2811 = vpack.c.b16 %v2230, %v2223
  %v2812 = vpack.c.b16 %v2231, %v2224
  %v2813 = vpack.c.b16 %v2232, %v2225
  %v2814 = vpack.c.b16 %v2233, %v2226
  %v2815 = vpack.c.b16 %v2241, %v2234
  %v2816 = vpack.c.b16 %v2242, %v2235
  %v2817 = vpack.c.b16 %v2243, %v2236
  %v2818 = vpack.c.b16 %v2244, %v2237
  %v2819 = vpack.c.b16 %v2245, %v2238
  %v2820 = vpack.c.b16 %v2246, %v2239
  %v2821 = vpack.c.b16 %v2247, %v2240
  %v2822 = vpack.c.b16 %v2255, %v2248
  %v2823 = vpack.c.b16 %v2256, %v2249
  %v2824 = vpack.c.b16 %v2257, %v2250
  %v2825 = vpack.c.b16 %v2258, %v2251
  %v2826 = vpack.c.b16 %v2259, %v2252
  %v2827 = vpack.c.b16 %v2260, %v2253
  %v2828 = vpack.c.b16 %v2261, %v2254
  %v2829 = vpack.c.b16 %v2269, %v2262
  %v2830 = vpack.c.b16 %v2270, %v2263
  %v2831 = vpack.c.b16 %v2271, %v2264
  %v2832 = vpack.c.b16 %v2272, %v2265
  %v2833 = vpack.c.b16 %v2273, %v2266
  %v2834 = vpack.c.b16 %v2274, %v2267
  %v2835 = vpack.c.b16 %v2275, %v2268
  %v2836 = vpack.c.b16 %v2283, %v2276
  %v2837 = vpack.c.b16 %v2284, %v2277
  %v2838 = vpack.c.b16 %v2285, %v2278
  %v2839 = vpack.c.b16 %v2286, %v2279
  %v2840 = vpack.c.b16 %v2287, %v2280
  %v2841 = vpack.c.b16 %v2288, %v2281
  %v2842 = vpack.c.b16 %v2289, %v2282
  %v2843 = vpack.c.b16 %v2297, %v2290
  %v2844 = vpack.c.b16 %v2298, %v2291
  %v2845 = vpack.c.b16 %v2299, %v2292
  %v2846 = vpack.c.b16 %v2300, %v2293
  %v2847 = vpack.c.b16 %v2301, %v2294
  %v2848 = vpack.c.b16 %v2302, %v2295
  %v2849 = vpack.c.b16 %v2303, %v2296
  %v2850 = vpack.c.b16 %v2311, %v2304
  %v2851 = vpack.c.b16 %v2312, %v2305
  %v2852 = vpack.c.b16 %v2313, %v2306
  %v2853 = vpack.c.b16 %v2314, %v2307
  %v2854 = vpack.c.b16 %v2315, %v2308
  %v2855 = vpack.c.b16 %v2316, %v2309
  %v2856 = vpack.c.b16 %v2317, %v2310
  %v2857 = vpack.c.b16 %v2325, %v2318
  %v2858 = vpack.c.b16 %v2326, %v2319
  %v2859 = vpack.c.b16 %v2327, %v2320
  %v2860 = vpack.c.b16 %v2328, %v2321
  %v2861 = vpack.c.b16 %v2329, %v2322
  %v2862 = vpack.c.b16 %v2330, %v2323
  %v2863 = vpack.c.b16 %v2331, %v2324
  %v2864 = vpack.c.b16 %v2339, %v2332
  %v2865 = vpack.c.b16 %v2340, %v2333
  %v2866 = vpack.c.b16 %v2341, %v2334
  %v2867 = vpack.c.b16 %v2342, %v2335
  %v2868 = vpack.c.b16 %v2343, %v2336
  %v2869 = vpack.c.b16 %v2344, %v2337
  %v2870 = vpack.c.b16 %v2345, %v2338
  %vm3396 = vcmask 392192
  %v3398 = vsel %vm3396, %v58, 0
  %3400 = vmatprep.subr.bf16.mxu0 %v2347
  %3401 = vmatpush1.bf16.msra.mxu0 %v2346
  %3402 = vmatprep.subr.bf16.mxu0 %v2354
  %3403 = vmatpush1.bf16.msra.mxu0 %v2353
  %3404 = vmatprep.subr.bf16.mxu0 %v2361
  %3405 = vmatpush1.bf16.msra.mxu0 %v2360
  %3406 = vmatprep.subr.bf16.mxu0 %v2368
  %3407 = vmatpush1.bf16.msra.mxu0 %v2367
  %3408 = vmatprep.subr.bf16.mxu0 %v2375
  %3409 = vmatpush1.bf16.msra.mxu0 %v2374
  %3410 = vmatprep.subr.bf16.mxu0 %v2382
  %3411 = vmatpush1.bf16.msra.mxu0 %v2381
  %3412 = vmatprep.subr.bf16.mxu0 %v2389
  %3413 = vmatpush1.bf16.msra.mxu0 %v2388
  %3414 = vmatprep.subr.bf16.mxu0 %v2396
  %3415 = vmatpush1.bf16.msra.mxu0 %v2395
  %3416 = vmatprep.subr.bf16.mxu0 %v2403
  %3417 = vmatpush1.bf16.msra.mxu0 %v2402
  %3418 = vmatprep.subr.bf16.mxu0 %v2410
  %3419 = vmatpush1.bf16.msra.mxu0 %v2409
  %3420 = vmatprep.subr.bf16.mxu0 %v2417
  %3421 = vmatpush1.bf16.msra.mxu0 %v2416
  %3422 = vmatprep.subr.bf16.mxu0 %v2424
  %3423 = vmatpush1.bf16.msra.mxu0 %v2423
  %3424 = vmatprep.subr.bf16.mxu0 %v2431
  %3425 = vmatpush1.bf16.msra.mxu0 %v2430
  %3426 = vmatprep.subr.bf16.mxu0 %v2438
  %3427 = vmatpush1.bf16.msra.mxu0 %v2437
  %3428 = vmatprep.subr.bf16.mxu0 %v2445
  %3429 = vmatpush1.bf16.msra.mxu0 %v2444
  %3430 = vmatprep.subr.bf16.mxu0 %v2452
  %3431 = vmatpush1.bf16.msra.mxu0 %v2451
  %3432 = vmatprep.mubr.bf16.mxu0 %v50
  %3433 = vmatmul.mubr.bf16.gmra.mrb[0].mxu0 %v49
  %v3434 = vpop.f32.mrb[0].mxu0
  %v3435 = vadd.f32 %v664, %v3434
  %v3436 = vpop.f32.mrb[0].mxu0
  %v3437 = vadd.f32 %v668, %v3436
  %v3438 = vpop.f32.mrb[0].mxu0
  %v3439 = vpop.f32.mrb[0].mxu0
  %3440 = vdwg.mxu0
  %3441 = vmatprep.subr.bf16.mxu0 %v2459
  %3442 = vmatpush1.bf16.msra.mxu0 %v2458
  %3443 = vmatprep.subr.bf16.mxu0 %v2466
  %3444 = vmatpush1.bf16.msra.mxu0 %v2465
  %3445 = vmatprep.subr.bf16.mxu0 %v2473
  %3446 = vmatpush1.bf16.msra.mxu0 %v2472
  %3447 = vmatprep.subr.bf16.mxu0 %v2480
  %3448 = vmatpush1.bf16.msra.mxu0 %v2479
  %3449 = vmatprep.subr.bf16.mxu0 %v2487
  %3450 = vmatpush1.bf16.msra.mxu0 %v2486
  %3451 = vmatprep.subr.bf16.mxu0 %v2494
  %3452 = vmatpush1.bf16.msra.mxu0 %v2493
  %3453 = vmatprep.subr.bf16.mxu0 %v2501
  %3454 = vmatpush1.bf16.msra.mxu0 %v2500
  %3455 = vmatprep.subr.bf16.mxu0 %v2508
  %3456 = vmatpush1.bf16.msra.mxu0 %v2507
  %3457 = vmatprep.subr.bf16.mxu0 %v2515
  %3458 = vmatpush1.bf16.msra.mxu0 %v2514
  %3459 = vmatprep.subr.bf16.mxu0 %v2522
  %3460 = vmatpush1.bf16.msra.mxu0 %v2521
  %3461 = vmatprep.subr.bf16.mxu0 %v2529
  %3462 = vmatpush1.bf16.msra.mxu0 %v2528
  %3463 = vmatprep.subr.bf16.mxu0 %v2536
  %3464 = vmatpush1.bf16.msra.mxu0 %v2535
  %3465 = vmatprep.subr.bf16.mxu0 %v2543
  %3466 = vmatpush1.bf16.msra.mxu0 %v2542
  %3467 = vmatprep.subr.bf16.mxu0 %v2550
  %3468 = vmatpush1.bf16.msra.mxu0 %v2549
  %3469 = vmatprep.subr.bf16.mxu0 %v2557
  %3470 = vmatpush1.bf16.msra.mxu0 %v2556
  %3471 = vmatprep.subr.bf16.mxu0 %v2564
  %3472 = vmatpush1.bf16.msra.mxu0 %v2563
  %3473 = vmatprep.mubr.bf16.mxu0 %v52
  %3474 = vmatmul.mubr.bf16.gmra.mrb[0].mxu0 %v51
  %v3475 = vpop.f32.mrb[0].mxu0
  %v3476 = vadd.f32 %v3435, %v3475
  %v3477 = vpop.f32.mrb[0].mxu0
  %v3478 = vadd.f32 %v3437, %v3477
  %v3479 = vpop.f32.mrb[0].mxu0
  %v3480 = vpop.f32.mrb[0].mxu0
  %3481 = vdwg.mxu0
  %3482 = vmatprep.subr.bf16.mxu0 %v2571
  %3483 = vmatpush1.bf16.msra.mxu0 %v2570
  %3484 = vmatprep.subr.bf16.mxu0 %v2578
  %3485 = vmatpush1.bf16.msra.mxu0 %v2577
  %3486 = vmatprep.subr.bf16.mxu0 %v2585
  %3487 = vmatpush1.bf16.msra.mxu0 %v2584
  %3488 = vmatprep.subr.bf16.mxu0 %v2592
  %3489 = vmatpush1.bf16.msra.mxu0 %v2591
  %3490 = vmatprep.subr.bf16.mxu0 %v2599
  %3491 = vmatpush1.bf16.msra.mxu0 %v2598
  %3492 = vmatprep.subr.bf16.mxu0 %v2606
  %3493 = vmatpush1.bf16.msra.mxu0 %v2605
  %3494 = vmatprep.subr.bf16.mxu0 %v2613
  %3495 = vmatpush1.bf16.msra.mxu0 %v2612
  %3496 = vmatprep.subr.bf16.mxu0 %v2620
  %3497 = vmatpush1.bf16.msra.mxu0 %v2619
  %3498 = vmatprep.subr.bf16.mxu0 %v2627
  %3499 = vmatpush1.bf16.msra.mxu0 %v2626
  %3500 = vmatprep.subr.bf16.mxu0 %v2634
  %3501 = vmatpush1.bf16.msra.mxu0 %v2633
  %3502 = vmatprep.subr.bf16.mxu0 %v2641
  %3503 = vmatpush1.bf16.msra.mxu0 %v2640
  %3504 = vmatprep.subr.bf16.mxu0 %v2648
  %3505 = vmatpush1.bf16.msra.mxu0 %v2647
  %3506 = vmatprep.subr.bf16.mxu0 %v2655
  %3507 = vmatpush1.bf16.msra.mxu0 %v2654
  %3508 = vmatprep.subr.bf16.mxu0 %v2662
  %3509 = vmatpush1.bf16.msra.mxu0 %v2661
  %3510 = vmatprep.subr.bf16.mxu0 %v2669
  %3511 = vmatpush1.bf16.msra.mxu0 %v2668
  %3512 = vmatprep.subr.bf16.mxu0 %v2676
  %3513 = vmatpush1.bf16.msra.mxu0 %v2675
  %3514 = vmatprep.mubr.bf16.mxu0 %v54
  %3515 = vmatmul.mubr.bf16.gmra.mrb[0].mxu0 %v53
  %v3516 = vpop.f32.mrb[0].mxu0
  %v3517 = vadd.f32 %v3476, %v3516
  %v3518 = vpop.f32.mrb[0].mxu0
  %v3519 = vadd.f32 %v3478, %v3518
  %v3520 = vpop.f32.mrb[0].mxu0
  %v3521 = vpop.f32.mrb[0].mxu0
  %3522 = vdwg.mxu0
  %3523 = vmatprep.subr.bf16.mxu0 %v2683
  %3524 = vmatpush1.bf16.msra.mxu0 %v2682
  %3525 = vmatprep.subr.bf16.mxu0 %v2690
  %3526 = vmatpush1.bf16.msra.mxu0 %v2689
  %3527 = vmatprep.subr.bf16.mxu0 %v2697
  %3528 = vmatpush1.bf16.msra.mxu0 %v2696
  %3529 = vmatprep.subr.bf16.mxu0 %v2704
  %3530 = vmatpush1.bf16.msra.mxu0 %v2703
  %3531 = vmatprep.subr.bf16.mxu0 %v2711
  %3532 = vmatpush1.bf16.msra.mxu0 %v2710
  %3533 = vmatprep.subr.bf16.mxu0 %v2718
  %3534 = vmatpush1.bf16.msra.mxu0 %v2717
  %3535 = vmatprep.subr.bf16.mxu0 %v2725
  %3536 = vmatpush1.bf16.msra.mxu0 %v2724
  %3537 = vmatprep.subr.bf16.mxu0 %v2732
  %3538 = vmatpush1.bf16.msra.mxu0 %v2731
  %3539 = vmatprep.subr.bf16.mxu0 %v2739
  %3540 = vmatpush1.bf16.msra.mxu0 %v2738
  %3541 = vmatprep.subr.bf16.mxu0 %v2746
  %3542 = vmatpush1.bf16.msra.mxu0 %v2745
  %3543 = vmatprep.subr.bf16.mxu0 %v2753
  %3544 = vmatpush1.bf16.msra.mxu0 %v2752
  %3545 = vmatprep.subr.bf16.mxu0 %v2760
  %3546 = vmatpush1.bf16.msra.mxu0 %v2759
  %3547 = vmatprep.subr.bf16.mxu0 %v2767
  %3548 = vmatpush1.bf16.msra.mxu0 %v2766
  %3549 = vmatprep.subr.bf16.mxu0 %v2774
  %3550 = vmatpush1.bf16.msra.mxu0 %v2773
  %3551 = vmatprep.subr.bf16.mxu0 %v2781
  %3552 = vmatpush1.bf16.msra.mxu0 %v2780
  %3553 = vmatprep.subr.bf16.mxu0 %v2788
  %3554 = vmatpush1.bf16.msra.mxu0 %v2787
  %3555 = vmatprep.mubr.bf16.mxu0 %v56
  %3556 = vmatmul.mubr.bf16.gmra.mrb[0].mxu0 %v55
  %v3557 = vpop.f32.mrb[0].mxu0
  %v3558 = vadd.f32 %v3517, %v3557
  %v3559 = vpop.f32.mrb[0].mxu0
  %v3560 = vadd.f32 %v3519, %v3559
  %v3561 = vpop.f32.mrb[0].mxu0
  %v3562 = vpop.f32.mrb[0].mxu0
  %3563 = vdwg.mxu0
  %3564 = vmatprep.subr.bf16.mxu0 %v2795
  %3565 = vmatpush1.bf16.msra.mxu0 %v2794
  %3566 = vmatprep.subr.bf16.mxu0 %v2802
  %3567 = vmatpush1.bf16.msra.mxu0 %v2801
  %3568 = vmatprep.subr.bf16.mxu0 %v2809
  %3569 = vmatpush1.bf16.msra.mxu0 %v2808
  %3570 = vmatprep.subr.bf16.mxu0 %v2816
  %3571 = vmatpush1.bf16.msra.mxu0 %v2815
  %3572 = vmatprep.subr.bf16.mxu0 %v2823
  %3573 = vmatpush1.bf16.msra.mxu0 %v2822
  %3574 = vmatprep.subr.bf16.mxu0 %v2830
  %3575 = vmatpush1.bf16.msra.mxu0 %v2829
  %3576 = vmatprep.subr.bf16.mxu0 %v2837
  %3577 = vmatpush1.bf16.msra.mxu0 %v2836
  %3578 = vmatprep.subr.bf16.mxu0 %v2844
  %3579 = vmatpush1.bf16.msra.mxu0 %v2843
  %3580 = vmatprep.subr.bf16.mxu0 %v2851
  %3581 = vmatpush1.bf16.msra.mxu0 %v2850
  %3582 = vmatprep.subr.bf16.mxu0 %v2858
  %3583 = vmatpush1.bf16.msra.mxu0 %v2857
  %3584 = vmatprep.subr.bf16.mxu0 %v2865
  %3585 = vmatpush1.bf16.msra.mxu0 %v2864
  %3586 = vmatprep.subr.bf16.mxu0 0
  %3587 = vmatpush1.bf16.msra.mxu0 0
  %3588 = vmatprep.subr.bf16.mxu0 0
  %3589 = vmatpush1.bf16.msra.mxu0 0
  %3590 = vmatprep.subr.bf16.mxu0 0
  %3591 = vmatpush1.bf16.msra.mxu0 0
  %3592 = vmatprep.subr.bf16.mxu0 0
  %3593 = vmatpush1.bf16.msra.mxu0 0
  %3594 = vmatprep.subr.bf16.mxu0 0
  %3595 = vmatpush1.bf16.msra.mxu0 0
  %3596 = vmatprep.mubr.bf16.mxu0 %v3398
  %3597 = vmatmul.mubr.bf16.gmra.mrb[0].mxu0 %v57
  %v3598 = vpop.f32.mrb[0].mxu0
  %v3599 = vadd.f32 %v3558, %v3598
  %v3600 = vpop.f32.mrb[0].mxu0
  %v3601 = vadd.f32 %v3560, %v3600
  %v3602 = vpop.f32.mrb[0].mxu0
  %v3603 = vpop.f32.mrb[0].mxu0
  %3604 = vdwg.mxu0
  %3605 = vmatprep.subr.bf16.mxu0 %v2349
  %3606 = vmatpush1.bf16.msra.mxu0 %v2348
  %3607 = vmatprep.subr.bf16.mxu0 %v2356
  %3608 = vmatpush1.bf16.msra.mxu0 %v2355
  %3609 = vmatprep.subr.bf16.mxu0 %v2363
  %3610 = vmatpush1.bf16.msra.mxu0 %v2362
  %3611 = vmatprep.subr.bf16.mxu0 %v2370
  %3612 = vmatpush1.bf16.msra.mxu0 %v2369
  %3613 = vmatprep.subr.bf16.mxu0 %v2377
  %3614 = vmatpush1.bf16.msra.mxu0 %v2376
  %3615 = vmatprep.subr.bf16.mxu0 %v2384
  %3616 = vmatpush1.bf16.msra.mxu0 %v2383
  %3617 = vmatprep.subr.bf16.mxu0 %v2391
  %3618 = vmatpush1.bf16.msra.mxu0 %v2390
  %3619 = vmatprep.subr.bf16.mxu0 %v2398
  %3620 = vmatpush1.bf16.msra.mxu0 %v2397
  %3621 = vmatprep.subr.bf16.mxu0 %v2405
  %3622 = vmatpush1.bf16.msra.mxu0 %v2404
  %3623 = vmatprep.subr.bf16.mxu0 %v2412
  %3624 = vmatpush1.bf16.msra.mxu0 %v2411
  %3625 = vmatprep.subr.bf16.mxu0 %v2419
  %3626 = vmatpush1.bf16.msra.mxu0 %v2418
  %3627 = vmatprep.subr.bf16.mxu0 %v2426
  %3628 = vmatpush1.bf16.msra.mxu0 %v2425
  %3629 = vmatprep.subr.bf16.mxu0 %v2433
  %3630 = vmatpush1.bf16.msra.mxu0 %v2432
  %3631 = vmatprep.subr.bf16.mxu0 %v2440
  %3632 = vmatpush1.bf16.msra.mxu0 %v2439
  %3633 = vmatprep.subr.bf16.mxu0 %v2447
  %3634 = vmatpush1.bf16.msra.mxu0 %v2446
  %3635 = vmatprep.subr.bf16.mxu0 %v2454
  %3636 = vmatpush1.bf16.msra.mxu0 %v2453
  %3637 = vmatprep.mubr.bf16.mxu0 %v50
  %3638 = vmatmul.mubr.bf16.gmra.mrb[0].mxu0 %v49
  %v3639 = vpop.f32.mrb[0].mxu0
  %v3640 = vadd.f32 %v672, %v3639
  %v3641 = vpop.f32.mrb[0].mxu0
  %v3642 = vadd.f32 %v676, %v3641
  %v3643 = vpop.f32.mrb[0].mxu0
  %v3644 = vpop.f32.mrb[0].mxu0
  %3645 = vdwg.mxu0
  %3646 = vmatprep.subr.bf16.mxu0 %v2461
  %3647 = vmatpush1.bf16.msra.mxu0 %v2460
  %3648 = vmatprep.subr.bf16.mxu0 %v2468
  %3649 = vmatpush1.bf16.msra.mxu0 %v2467
  %3650 = vmatprep.subr.bf16.mxu0 %v2475
  %3651 = vmatpush1.bf16.msra.mxu0 %v2474
  %3652 = vmatprep.subr.bf16.mxu0 %v2482
  %3653 = vmatpush1.bf16.msra.mxu0 %v2481
  %3654 = vmatprep.subr.bf16.mxu0 %v2489
  %3655 = vmatpush1.bf16.msra.mxu0 %v2488
  %3656 = vmatprep.subr.bf16.mxu0 %v2496
  %3657 = vmatpush1.bf16.msra.mxu0 %v2495
  %3658 = vmatprep.subr.bf16.mxu0 %v2503
  %3659 = vmatpush1.bf16.msra.mxu0 %v2502
  %3660 = vmatprep.subr.bf16.mxu0 %v2510
  %3661 = vmatpush1.bf16.msra.mxu0 %v2509
  %3662 = vmatprep.subr.bf16.mxu0 %v2517
  %3663 = vmatpush1.bf16.msra.mxu0 %v2516
  %3664 = vmatprep.subr.bf16.mxu0 %v2524
  %3665 = vmatpush1.bf16.msra.mxu0 %v2523
  %3666 = vmatprep.subr.bf16.mxu0 %v2531
  %3667 = vmatpush1.bf16.msra.mxu0 %v2530
  %3668 = vmatprep.subr.bf16.mxu0 %v2538
  %3669 = vmatpush1.bf16.msra.mxu0 %v2537
  %3670 = vmatprep.subr.bf16.mxu0 %v2545
  %3671 = vmatpush1.bf16.msra.mxu0 %v2544
  %3672 = vmatprep.subr.bf16.mxu0 %v2552
  %3673 = vmatpush1.bf16.msra.mxu0 %v2551
  %3674 = vmatprep.subr.bf16.mxu0 %v2559
  %3675 = vmatpush1.bf16.msra.mxu0 %v2558
  %3676 = vmatprep.subr.bf16.mxu0 %v2566
  %3677 = vmatpush1.bf16.msra.mxu0 %v2565
  %3678 = vmatprep.mubr.bf16.mxu0 %v52
  %3679 = vmatmul.mubr.bf16.gmra.mrb[0].mxu0 %v51
  %v3680 = vpop.f32.mrb[0].mxu0
  %v3681 = vadd.f32 %v3640, %v3680
  %v3682 = vpop.f32.mrb[0].mxu0
  %v3683 = vadd.f32 %v3642, %v3682
  %v3684 = vpop.f32.mrb[0].mxu0
  %v3685 = vpop.f32.mrb[0].mxu0
  %3686 = vdwg.mxu0
  %3687 = vmatprep.subr.bf16.mxu0 %v2573
  %3688 = vmatpush1.bf16.msra.mxu0 %v2572
  %3689 = vmatprep.subr.bf16.mxu0 %v2580
  %3690 = vmatpush1.bf16.msra.mxu0 %v2579
  %3691 = vmatprep.subr.bf16.mxu0 %v2587
  %3692 = vmatpush1.bf16.msra.mxu0 %v2586
  %3693 = vmatprep.subr.bf16.mxu0 %v2594
  %3694 = vmatpush1.bf16.msra.mxu0 %v2593
  %3695 = vmatprep.subr.bf16.mxu0 %v2601
  %3696 = vmatpush1.bf16.msra.mxu0 %v2600
  %3697 = vmatprep.subr.bf16.mxu0 %v2608
  %3698 = vmatpush1.bf16.msra.mxu0 %v2607
  %3699 = vmatprep.subr.bf16.mxu0 %v2615
  %3700 = vmatpush1.bf16.msra.mxu0 %v2614
  %3701 = vmatprep.subr.bf16.mxu0 %v2622
  %3702 = vmatpush1.bf16.msra.mxu0 %v2621
  %3703 = vmatprep.subr.bf16.mxu0 %v2629
  %3704 = vmatpush1.bf16.msra.mxu0 %v2628
  %3705 = vmatprep.subr.bf16.mxu0 %v2636
  %3706 = vmatpush1.bf16.msra.mxu0 %v2635
  %3707 = vmatprep.subr.bf16.mxu0 %v2643
  %3708 = vmatpush1.bf16.msra.mxu0 %v2642
  %3709 = vmatprep.subr.bf16.mxu0 %v2650
  %3710 = vmatpush1.bf16.msra.mxu0 %v2649
  %3711 = vmatprep.subr.bf16.mxu0 %v2657
  %3712 = vmatpush1.bf16.msra.mxu0 %v2656
  %3713 = vmatprep.subr.bf16.mxu0 %v2664
  %3714 = vmatpush1.bf16.msra.mxu0 %v2663
  %3715 = vmatprep.subr.bf16.mxu0 %v2671
  %3716 = vmatpush1.bf16.msra.mxu0 %v2670
  %3717 = vmatprep.subr.bf16.mxu0 %v2678
  %3718 = vmatpush1.bf16.msra.mxu0 %v2677
  %3719 = vmatprep.mubr.bf16.mxu0 %v54
  %3720 = vmatmul.mubr.bf16.gmra.mrb[0].mxu0 %v53
  %v3721 = vpop.f32.mrb[0].mxu0
  %v3722 = vadd.f32 %v3681, %v3721
  %v3723 = vpop.f32.mrb[0].mxu0
  %v3724 = vadd.f32 %v3683, %v3723
  %v3725 = vpop.f32.mrb[0].mxu0
  %v3726 = vpop.f32.mrb[0].mxu0
  %3727 = vdwg.mxu0
  %3728 = vmatprep.subr.bf16.mxu0 %v2685
  %3729 = vmatpush1.bf16.msra.mxu0 %v2684
  %3730 = vmatprep.subr.bf16.mxu0 %v2692
  %3731 = vmatpush1.bf16.msra.mxu0 %v2691
  %3732 = vmatprep.subr.bf16.mxu0 %v2699
  %3733 = vmatpush1.bf16.msra.mxu0 %v2698
  %3734 = vmatprep.subr.bf16.mxu0 %v2706
  %3735 = vmatpush1.bf16.msra.mxu0 %v2705
  %3736 = vmatprep.subr.bf16.mxu0 %v2713
  %3737 = vmatpush1.bf16.msra.mxu0 %v2712
  %3738 = vmatprep.subr.bf16.mxu0 %v2720
  %3739 = vmatpush1.bf16.msra.mxu0 %v2719
  %3740 = vmatprep.subr.bf16.mxu0 %v2727
  %3741 = vmatpush1.bf16.msra.mxu0 %v2726
  %3742 = vmatprep.subr.bf16.mxu0 %v2734
  %3743 = vmatpush1.bf16.msra.mxu0 %v2733
  %3744 = vmatprep.subr.bf16.mxu0 %v2741
  %3745 = vmatpush1.bf16.msra.mxu0 %v2740
  %3746 = vmatprep.subr.bf16.mxu0 %v2748
  %3747 = vmatpush1.bf16.msra.mxu0 %v2747
  %3748 = vmatprep.subr.bf16.mxu0 %v2755
  %3749 = vmatpush1.bf16.msra.mxu0 %v2754
  %3750 = vmatprep.subr.bf16.mxu0 %v2762
  %3751 = vmatpush1.bf16.msra.mxu0 %v2761
  %3752 = vmatprep.subr.bf16.mxu0 %v2769
  %3753 = vmatpush1.bf16.msra.mxu0 %v2768
  %3754 = vmatprep.subr.bf16.mxu0 %v2776
  %3755 = vmatpush1.bf16.msra.mxu0 %v2775
  %3756 = vmatprep.subr.bf16.mxu0 %v2783
  %3757 = vmatpush1.bf16.msra.mxu0 %v2782
  %3758 = vmatprep.subr.bf16.mxu0 %v2790
  %3759 = vmatpush1.bf16.msra.mxu0 %v2789
  %3760 = vmatprep.mubr.bf16.mxu0 %v56
  %3761 = vmatmul.mubr.bf16.gmra.mrb[0].mxu0 %v55
  %v3762 = vpop.f32.mrb[0].mxu0
  %v3763 = vadd.f32 %v3722, %v3762
  %v3764 = vpop.f32.mrb[0].mxu0
  %v3765 = vadd.f32 %v3724, %v3764
  %v3766 = vpop.f32.mrb[0].mxu0
  %v3767 = vpop.f32.mrb[0].mxu0
  %3768 = vdwg.mxu0
  %3769 = vmatprep.subr.bf16.mxu0 %v2797
  %3770 = vmatpush1.bf16.msra.mxu0 %v2796
  %3771 = vmatprep.subr.bf16.mxu0 %v2804
  %3772 = vmatpush1.bf16.msra.mxu0 %v2803
  %3773 = vmatprep.subr.bf16.mxu0 %v2811
  %3774 = vmatpush1.bf16.msra.mxu0 %v2810
  %3775 = vmatprep.subr.bf16.mxu0 %v2818
  %3776 = vmatpush1.bf16.msra.mxu0 %v2817
  %3777 = vmatprep.subr.bf16.mxu0 %v2825
  %3778 = vmatpush1.bf16.msra.mxu0 %v2824
  %3779 = vmatprep.subr.bf16.mxu0 %v2832
  %3780 = vmatpush1.bf16.msra.mxu0 %v2831
  %3781 = vmatprep.subr.bf16.mxu0 %v2839
  %3782 = vmatpush1.bf16.msra.mxu0 %v2838
  %3783 = vmatprep.subr.bf16.mxu0 %v2846
  %3784 = vmatpush1.bf16.msra.mxu0 %v2845
  %3785 = vmatprep.subr.bf16.mxu0 %v2853
  %3786 = vmatpush1.bf16.msra.mxu0 %v2852
  %3787 = vmatprep.subr.bf16.mxu0 %v2860
  %3788 = vmatpush1.bf16.msra.mxu0 %v2859
  %3789 = vmatprep.subr.bf16.mxu0 %v2867
  %3790 = vmatpush1.bf16.msra.mxu0 %v2866
  %3791 = vmatprep.subr.bf16.mxu0 0
  %3792 = vmatpush1.bf16.msra.mxu0 0
  %3793 = vmatprep.subr.bf16.mxu0 0
  %3794 = vmatpush1.bf16.msra.mxu0 0
  %3795 = vmatprep.subr.bf16.mxu0 0
  %3796 = vmatpush1.bf16.msra.mxu0 0
  %3797 = vmatprep.subr.bf16.mxu0 0
  %3798 = vmatpush1.bf16.msra.mxu0 0
  %3799 = vmatprep.subr.bf16.mxu0 0
  %3800 = vmatpush1.bf16.msra.mxu0 0
  %3801 = vmatprep.mubr.bf16.mxu0 %v3398
  %3802 = vmatmul.mubr.bf16.gmra.mrb[0].mxu0 %v57
  %v3803 = vpop.f32.mrb[0].mxu0
  %v3804 = vadd.f32 %v3763, %v3803
  %v3805 = vpop.f32.mrb[0].mxu0
  %v3806 = vadd.f32 %v3765, %v3805
  %v3807 = vpop.f32.mrb[0].mxu0
  %v3808 = vpop.f32.mrb[0].mxu0
  %3809 = vdwg.mxu0
  %3810 = vmatprep.subr.bf16.mxu0 %v2351
  %3811 = vmatpush1.bf16.msra.mxu0 %v2350
  %3812 = vmatprep.subr.bf16.mxu0 %v2358
  %3813 = vmatpush1.bf16.msra.mxu0 %v2357
  %3814 = vmatprep.subr.bf16.mxu0 %v2365
  %3815 = vmatpush1.bf16.msra.mxu0 %v2364
  %3816 = vmatprep.subr.bf16.mxu0 %v2372
  %3817 = vmatpush1.bf16.msra.mxu0 %v2371
  %3818 = vmatprep.subr.bf16.mxu0 %v2379
  %3819 = vmatpush1.bf16.msra.mxu0 %v2378
  %3820 = vmatprep.subr.bf16.mxu0 %v2386
  %3821 = vmatpush1.bf16.msra.mxu0 %v2385
  %3822 = vmatprep.subr.bf16.mxu0 %v2393
  %3823 = vmatpush1.bf16.msra.mxu0 %v2392
  %3824 = vmatprep.subr.bf16.mxu0 %v2400
  %3825 = vmatpush1.bf16.msra.mxu0 %v2399
  %3826 = vmatprep.subr.bf16.mxu0 %v2407
  %3827 = vmatpush1.bf16.msra.mxu0 %v2406
  %3828 = vmatprep.subr.bf16.mxu0 %v2414
  %3829 = vmatpush1.bf16.msra.mxu0 %v2413
  %3830 = vmatprep.subr.bf16.mxu0 %v2421
  %3831 = vmatpush1.bf16.msra.mxu0 %v2420
  %3832 = vmatprep.subr.bf16.mxu0 %v2428
  %3833 = vmatpush1.bf16.msra.mxu0 %v2427
  %3834 = vmatprep.subr.bf16.mxu0 %v2435
  %3835 = vmatpush1.bf16.msra.mxu0 %v2434
  %3836 = vmatprep.subr.bf16.mxu0 %v2442
  %3837 = vmatpush1.bf16.msra.mxu0 %v2441
  %3838 = vmatprep.subr.bf16.mxu0 %v2449
  %3839 = vmatpush1.bf16.msra.mxu0 %v2448
  %3840 = vmatprep.subr.bf16.mxu0 %v2456
  %3841 = vmatpush1.bf16.msra.mxu0 %v2455
  %3842 = vmatprep.mubr.bf16.mxu0 %v50
  %3843 = vmatmul.mubr.bf16.gmra.mrb[0].mxu0 %v49
  %v3844 = vpop.f32.mrb[0].mxu0
  %v3845 = vadd.f32 %v680, %v3844
  %v3846 = vpop.f32.mrb[0].mxu0
  %v3847 = vadd.f32 %v684, %v3846
  %v3848 = vpop.f32.mrb[0].mxu0
  %v3849 = vpop.f32.mrb[0].mxu0
  %3850 = vdwg.mxu0
  %3851 = vmatprep.subr.bf16.mxu0 %v2463
  %3852 = vmatpush1.bf16.msra.mxu0 %v2462
  %3853 = vmatprep.subr.bf16.mxu0 %v2470
  %3854 = vmatpush1.bf16.msra.mxu0 %v2469
  %3855 = vmatprep.subr.bf16.mxu0 %v2477
  %3856 = vmatpush1.bf16.msra.mxu0 %v2476
  %3857 = vmatprep.subr.bf16.mxu0 %v2484
  %3858 = vmatpush1.bf16.msra.mxu0 %v2483
  %3859 = vmatprep.subr.bf16.mxu0 %v2491
  %3860 = vmatpush1.bf16.msra.mxu0 %v2490
  %3861 = vmatprep.subr.bf16.mxu0 %v2498
  %3862 = vmatpush1.bf16.msra.mxu0 %v2497
  %3863 = vmatprep.subr.bf16.mxu0 %v2505
  %3864 = vmatpush1.bf16.msra.mxu0 %v2504
  %3865 = vmatprep.subr.bf16.mxu0 %v2512
  %3866 = vmatpush1.bf16.msra.mxu0 %v2511
  %3867 = vmatprep.subr.bf16.mxu0 %v2519
  %3868 = vmatpush1.bf16.msra.mxu0 %v2518
  %3869 = vmatprep.subr.bf16.mxu0 %v2526
  %3870 = vmatpush1.bf16.msra.mxu0 %v2525
  %3871 = vmatprep.subr.bf16.mxu0 %v2533
  %3872 = vmatpush1.bf16.msra.mxu0 %v2532
  %3873 = vmatprep.subr.bf16.mxu0 %v2540
  %3874 = vmatpush1.bf16.msra.mxu0 %v2539
  %3875 = vmatprep.subr.bf16.mxu0 %v2547
  %3876 = vmatpush1.bf16.msra.mxu0 %v2546
  %3877 = vmatprep.subr.bf16.mxu0 %v2554
  %3878 = vmatpush1.bf16.msra.mxu0 %v2553
  %3879 = vmatprep.subr.bf16.mxu0 %v2561
  %3880 = vmatpush1.bf16.msra.mxu0 %v2560
  %3881 = vmatprep.subr.bf16.mxu0 %v2568
  %3882 = vmatpush1.bf16.msra.mxu0 %v2567
  %3883 = vmatprep.mubr.bf16.mxu0 %v52
  %3884 = vmatmul.mubr.bf16.gmra.mrb[0].mxu0 %v51
  %v3885 = vpop.f32.mrb[0].mxu0
  %v3886 = vadd.f32 %v3845, %v3885
  %v3887 = vpop.f32.mrb[0].mxu0
  %v3888 = vadd.f32 %v3847, %v3887
  %v3889 = vpop.f32.mrb[0].mxu0
  %v3890 = vpop.f32.mrb[0].mxu0
  %3891 = vdwg.mxu0
  %3892 = vmatprep.subr.bf16.mxu0 %v2575
  %3893 = vmatpush1.bf16.msra.mxu0 %v2574
  %3894 = vmatprep.subr.bf16.mxu0 %v2582
  %3895 = vmatpush1.bf16.msra.mxu0 %v2581
  %3896 = vmatprep.subr.bf16.mxu0 %v2589
  %3897 = vmatpush1.bf16.msra.mxu0 %v2588
  %3898 = vmatprep.subr.bf16.mxu0 %v2596
  %3899 = vmatpush1.bf16.msra.mxu0 %v2595
  %3900 = vmatprep.subr.bf16.mxu0 %v2603
  %3901 = vmatpush1.bf16.msra.mxu0 %v2602
  %3902 = vmatprep.subr.bf16.mxu0 %v2610
  %3903 = vmatpush1.bf16.msra.mxu0 %v2609
  %3904 = vmatprep.subr.bf16.mxu0 %v2617
  %3905 = vmatpush1.bf16.msra.mxu0 %v2616
  %3906 = vmatprep.subr.bf16.mxu0 %v2624
  %3907 = vmatpush1.bf16.msra.mxu0 %v2623
  %3908 = vmatprep.subr.bf16.mxu0 %v2631
  %3909 = vmatpush1.bf16.msra.mxu0 %v2630
  %3910 = vmatprep.subr.bf16.mxu0 %v2638
  %3911 = vmatpush1.bf16.msra.mxu0 %v2637
  %3912 = vmatprep.subr.bf16.mxu0 %v2645
  %3913 = vmatpush1.bf16.msra.mxu0 %v2644
  %3914 = vmatprep.subr.bf16.mxu0 %v2652
  %3915 = vmatpush1.bf16.msra.mxu0 %v2651
  %3916 = vmatprep.subr.bf16.mxu0 %v2659
  %3917 = vmatpush1.bf16.msra.mxu0 %v2658
  %3918 = vmatprep.subr.bf16.mxu0 %v2666
  %3919 = vmatpush1.bf16.msra.mxu0 %v2665
  %3920 = vmatprep.subr.bf16.mxu0 %v2673
  %3921 = vmatpush1.bf16.msra.mxu0 %v2672
  %3922 = vmatprep.subr.bf16.mxu0 %v2680
  %3923 = vmatpush1.bf16.msra.mxu0 %v2679
  %3924 = vmatprep.mubr.bf16.mxu0 %v54
  %3925 = vmatmul.mubr.bf16.gmra.mrb[0].mxu0 %v53
  %v3926 = vpop.f32.mrb[0].mxu0
  %v3927 = vadd.f32 %v3886, %v3926
  %v3928 = vpop.f32.mrb[0].mxu0
  %v3929 = vadd.f32 %v3888, %v3928
  %v3930 = vpop.f32.mrb[0].mxu0
  %v3931 = vpop.f32.mrb[0].mxu0
  %3932 = vdwg.mxu0
  %3933 = vmatprep.subr.bf16.mxu0 %v2687
  %3934 = vmatpush1.bf16.msra.mxu0 %v2686
  %3935 = vmatprep.subr.bf16.mxu0 %v2694
  %3936 = vmatpush1.bf16.msra.mxu0 %v2693
  %3937 = vmatprep.subr.bf16.mxu0 %v2701
  %3938 = vmatpush1.bf16.msra.mxu0 %v2700
  %3939 = vmatprep.subr.bf16.mxu0 %v2708
  %3940 = vmatpush1.bf16.msra.mxu0 %v2707
  %3941 = vmatprep.subr.bf16.mxu0 %v2715
  %3942 = vmatpush1.bf16.msra.mxu0 %v2714
  %3943 = vmatprep.subr.bf16.mxu0 %v2722
  %3944 = vmatpush1.bf16.msra.mxu0 %v2721
  %3945 = vmatprep.subr.bf16.mxu0 %v2729
  %3946 = vmatpush1.bf16.msra.mxu0 %v2728
  %3947 = vmatprep.subr.bf16.mxu0 %v2736
  %3948 = vmatpush1.bf16.msra.mxu0 %v2735
  %3949 = vmatprep.subr.bf16.mxu0 %v2743
  %3950 = vmatpush1.bf16.msra.mxu0 %v2742
  %3951 = vmatprep.subr.bf16.mxu0 %v2750
  %3952 = vmatpush1.bf16.msra.mxu0 %v2749
  %3953 = vmatprep.subr.bf16.mxu0 %v2757
  %3954 = vmatpush1.bf16.msra.mxu0 %v2756
  %3955 = vmatprep.subr.bf16.mxu0 %v2764
  %3956 = vmatpush1.bf16.msra.mxu0 %v2763
  %3957 = vmatprep.subr.bf16.mxu0 %v2771
  %3958 = vmatpush1.bf16.msra.mxu0 %v2770
  %3959 = vmatprep.subr.bf16.mxu0 %v2778
  %3960 = vmatpush1.bf16.msra.mxu0 %v2777
  %3961 = vmatprep.subr.bf16.mxu0 %v2785
  %3962 = vmatpush1.bf16.msra.mxu0 %v2784
  %3963 = vmatprep.subr.bf16.mxu0 %v2792
  %3964 = vmatpush1.bf16.msra.mxu0 %v2791
  %3965 = vmatprep.mubr.bf16.mxu0 %v56
  %3966 = vmatmul.mubr.bf16.gmra.mrb[0].mxu0 %v55
  %v3967 = vpop.f32.mrb[0].mxu0
  %v3968 = vadd.f32 %v3927, %v3967
  %v3969 = vpop.f32.mrb[0].mxu0
  %v3970 = vadd.f32 %v3929, %v3969
  %v3971 = vpop.f32.mrb[0].mxu0
  %v3972 = vpop.f32.mrb[0].mxu0
  %3973 = vdwg.mxu0
  %3974 = vmatprep.subr.bf16.mxu0 %v2799
  %3975 = vmatpush1.bf16.msra.mxu0 %v2798
  %3976 = vmatprep.subr.bf16.mxu0 %v2806
  %3977 = vmatpush1.bf16.msra.mxu0 %v2805
  %3978 = vmatprep.subr.bf16.mxu0 %v2813
  %3979 = vmatpush1.bf16.msra.mxu0 %v2812
  %3980 = vmatprep.subr.bf16.mxu0 %v2820
  %3981 = vmatpush1.bf16.msra.mxu0 %v2819
  %3982 = vmatprep.subr.bf16.mxu0 %v2827
  %3983 = vmatpush1.bf16.msra.mxu0 %v2826
  %3984 = vmatprep.subr.bf16.mxu0 %v2834
  %3985 = vmatpush1.bf16.msra.mxu0 %v2833
  %3986 = vmatprep.subr.bf16.mxu0 %v2841
  %3987 = vmatpush1.bf16.msra.mxu0 %v2840
  %3988 = vmatprep.subr.bf16.mxu0 %v2848
  %3989 = vmatpush1.bf16.msra.mxu0 %v2847
  %3990 = vmatprep.subr.bf16.mxu0 %v2855
  %3991 = vmatpush1.bf16.msra.mxu0 %v2854
  %3992 = vmatprep.subr.bf16.mxu0 %v2862
  %3993 = vmatpush1.bf16.msra.mxu0 %v2861
  %3994 = vmatprep.subr.bf16.mxu0 %v2869
  %3995 = vmatpush1.bf16.msra.mxu0 %v2868
  %3996 = vmatprep.subr.bf16.mxu0 0
  %3997 = vmatpush1.bf16.msra.mxu0 0
  %3998 = vmatprep.subr.bf16.mxu0 0
  %3999 = vmatpush1.bf16.msra.mxu0 0
  %4000 = vmatprep.subr.bf16.mxu0 0
  %4001 = vmatpush1.bf16.msra.mxu0 0
  %4002 = vmatprep.subr.bf16.mxu0 0
  %4003 = vmatpush1.bf16.msra.mxu0 0
  %4004 = vmatprep.subr.bf16.mxu0 0
  %4005 = vmatpush1.bf16.msra.mxu0 0
  %4006 = vmatprep.mubr.bf16.mxu0 %v3398
  %4007 = vmatmul.mubr.bf16.gmra.mrb[0].mxu0 %v57
  %v4008 = vpop.f32.mrb[0].mxu0
  %v4009 = vadd.f32 %v3968, %v4008
  %v4010 = vpop.f32.mrb[0].mxu0
  %v4011 = vadd.f32 %v3970, %v4010
  %v4012 = vpop.f32.mrb[0].mxu0
  %v4013 = vpop.f32.mrb[0].mxu0
  %4014 = vdwg.mxu0
  %4015 = vmatprep.subr.bf16.mxu0 0
  %4016 = vmatpush1.bf16.msra.mxu0 %v2352
  %4017 = vmatprep.subr.bf16.mxu0 0
  %4018 = vmatpush1.bf16.msra.mxu0 %v2359
  %4019 = vmatprep.subr.bf16.mxu0 0
  %4020 = vmatpush1.bf16.msra.mxu0 %v2366
  %4021 = vmatprep.subr.bf16.mxu0 0
  %4022 = vmatpush1.bf16.msra.mxu0 %v2373
  %4023 = vmatprep.subr.bf16.mxu0 0
  %4024 = vmatpush1.bf16.msra.mxu0 %v2380
  %4025 = vmatprep.subr.bf16.mxu0 0
  %4026 = vmatpush1.bf16.msra.mxu0 %v2387
  %4027 = vmatprep.subr.bf16.mxu0 0
  %4028 = vmatpush1.bf16.msra.mxu0 %v2394
  %4029 = vmatprep.subr.bf16.mxu0 0
  %4030 = vmatpush1.bf16.msra.mxu0 %v2401
  %4031 = vmatprep.subr.bf16.mxu0 0
  %4032 = vmatpush1.bf16.msra.mxu0 %v2408
  %4033 = vmatprep.subr.bf16.mxu0 0
  %4034 = vmatpush1.bf16.msra.mxu0 %v2415
  %4035 = vmatprep.subr.bf16.mxu0 0
  %4036 = vmatpush1.bf16.msra.mxu0 %v2422
  %4037 = vmatprep.subr.bf16.mxu0 0
  %4038 = vmatpush1.bf16.msra.mxu0 %v2429
  %4039 = vmatprep.subr.bf16.mxu0 0
  %4040 = vmatpush1.bf16.msra.mxu0 %v2436
  %4041 = vmatprep.subr.bf16.mxu0 0
  %4042 = vmatpush1.bf16.msra.mxu0 %v2443
  %4043 = vmatprep.subr.bf16.mxu0 0
  %4044 = vmatpush1.bf16.msra.mxu0 %v2450
  %4045 = vmatprep.subr.bf16.mxu0 0
  %4046 = vmatpush1.bf16.msra.mxu0 %v2457
  %4047 = vmatprep.mubr.bf16.mxu0 %v50
  %4048 = vmatmul.mubr.bf16.gmra.mrb[0].mxu0 %v49
  %v4049 = vpop.f32.mrb[0].mxu0
  %v4050 = vadd.f32 %v688, %v4049
  %v4051 = vpop.f32.mrb[0].mxu0
  %v4052 = vpop.f32.mrb[0].mxu0
  %v4053 = vpop.f32.mrb[0].mxu0
  %4054 = vdwg.mxu0
  %4055 = vmatprep.subr.bf16.mxu0 0
  %4056 = vmatpush1.bf16.msra.mxu0 %v2464
  %4057 = vmatprep.subr.bf16.mxu0 0
  %4058 = vmatpush1.bf16.msra.mxu0 %v2471
  %4059 = vmatprep.subr.bf16.mxu0 0
  %4060 = vmatpush1.bf16.msra.mxu0 %v2478
  %4061 = vmatprep.subr.bf16.mxu0 0
  %4062 = vmatpush1.bf16.msra.mxu0 %v2485
  %4063 = vmatprep.subr.bf16.mxu0 0
  %4064 = vmatpush1.bf16.msra.mxu0 %v2492
  %4065 = vmatprep.subr.bf16.mxu0 0
  %4066 = vmatpush1.bf16.msra.mxu0 %v2499
  %4067 = vmatprep.subr.bf16.mxu0 0
  %4068 = vmatpush1.bf16.msra.mxu0 %v2506
  %4069 = vmatprep.subr.bf16.mxu0 0
  %4070 = vmatpush1.bf16.msra.mxu0 %v2513
  %4071 = vmatprep.subr.bf16.mxu0 0
  %4072 = vmatpush1.bf16.msra.mxu0 %v2520
  %4073 = vmatprep.subr.bf16.mxu0 0
  %4074 = vmatpush1.bf16.msra.mxu0 %v2527
  %4075 = vmatprep.subr.bf16.mxu0 0
  %4076 = vmatpush1.bf16.msra.mxu0 %v2534
  %4077 = vmatprep.subr.bf16.mxu0 0
  %4078 = vmatpush1.bf16.msra.mxu0 %v2541
  %4079 = vmatprep.subr.bf16.mxu0 0
  %4080 = vmatpush1.bf16.msra.mxu0 %v2548
  %4081 = vmatprep.subr.bf16.mxu0 0
  %4082 = vmatpush1.bf16.msra.mxu0 %v2555
  %4083 = vmatprep.subr.bf16.mxu0 0
  %4084 = vmatpush1.bf16.msra.mxu0 %v2562
  %4085 = vmatprep.subr.bf16.mxu0 0
  %4086 = vmatpush1.bf16.msra.mxu0 %v2569
  %4087 = vmatprep.mubr.bf16.mxu0 %v52
  %4088 = vmatmul.mubr.bf16.gmra.mrb[0].mxu0 %v51
  %v4089 = vpop.f32.mrb[0].mxu0
  %v4090 = vadd.f32 %v4050, %v4089
  %v4091 = vpop.f32.mrb[0].mxu0
  %v4092 = vpop.f32.mrb[0].mxu0
  %v4093 = vpop.f32.mrb[0].mxu0
  %4094 = vdwg.mxu0
  %4095 = vmatprep.subr.bf16.mxu0 0
  %4096 = vmatpush1.bf16.msra.mxu0 %v2576
  %4097 = vmatprep.subr.bf16.mxu0 0
  %4098 = vmatpush1.bf16.msra.mxu0 %v2583
  %4099 = vmatprep.subr.bf16.mxu0 0
  %4100 = vmatpush1.bf16.msra.mxu0 %v2590
  %4101 = vmatprep.subr.bf16.mxu0 0
  %4102 = vmatpush1.bf16.msra.mxu0 %v2597
  %4103 = vmatprep.subr.bf16.mxu0 0
  %4104 = vmatpush1.bf16.msra.mxu0 %v2604
  %4105 = vmatprep.subr.bf16.mxu0 0
  %4106 = vmatpush1.bf16.msra.mxu0 %v2611
  %4107 = vmatprep.subr.bf16.mxu0 0
  %4108 = vmatpush1.bf16.msra.mxu0 %v2618
  %4109 = vmatprep.subr.bf16.mxu0 0
  %4110 = vmatpush1.bf16.msra.mxu0 %v2625
  %4111 = vmatprep.subr.bf16.mxu0 0
  %4112 = vmatpush1.bf16.msra.mxu0 %v2632
  %4113 = vmatprep.subr.bf16.mxu0 0
  %4114 = vmatpush1.bf16.msra.mxu0 %v2639
  %4115 = vmatprep.subr.bf16.mxu0 0
  %4116 = vmatpush1.bf16.msra.mxu0 %v2646
  %4117 = vmatprep.subr.bf16.mxu0 0
  %4118 = vmatpush1.bf16.msra.mxu0 %v2653
  %4119 = vmatprep.subr.bf16.mxu0 0
  %4120 = vmatpush1.bf16.msra.mxu0 %v2660
  %4121 = vmatprep.subr.bf16.mxu0 0
  %4122 = vmatpush1.bf16.msra.mxu0 %v2667
  %4123 = vmatprep.subr.bf16.mxu0 0
  %4124 = vmatpush1.bf16.msra.mxu0 %v2674
  %4125 = vmatprep.subr.bf16.mxu0 0
  %4126 = vmatpush1.bf16.msra.mxu0 %v2681
  %4127 = vmatprep.mubr.bf16.mxu0 %v54
  %4128 = vmatmul.mubr.bf16.gmra.mrb[0].mxu0 %v53
  %v4129 = vpop.f32.mrb[0].mxu0
  %v4130 = vadd.f32 %v4090, %v4129
  %v4131 = vpop.f32.mrb[0].mxu0
  %v4132 = vpop.f32.mrb[0].mxu0
  %v4133 = vpop.f32.mrb[0].mxu0
  %4134 = vdwg.mxu0
  %4135 = vmatprep.subr.bf16.mxu0 0
  %4136 = vmatpush1.bf16.msra.mxu0 %v2688
  %4137 = vmatprep.subr.bf16.mxu0 0
  %4138 = vmatpush1.bf16.msra.mxu0 %v2695
  %4139 = vmatprep.subr.bf16.mxu0 0
  %4140 = vmatpush1.bf16.msra.mxu0 %v2702
  %4141 = vmatprep.subr.bf16.mxu0 0
  %4142 = vmatpush1.bf16.msra.mxu0 %v2709
  %4143 = vmatprep.subr.bf16.mxu0 0
  %4144 = vmatpush1.bf16.msra.mxu0 %v2716
  %4145 = vmatprep.subr.bf16.mxu0 0
  %4146 = vmatpush1.bf16.msra.mxu0 %v2723
  %4147 = vmatprep.subr.bf16.mxu0 0
  %4148 = vmatpush1.bf16.msra.mxu0 %v2730
  %4149 = vmatprep.subr.bf16.mxu0 0
  %4150 = vmatpush1.bf16.msra.mxu0 %v2737
  %4151 = vmatprep.subr.bf16.mxu0 0
  %4152 = vmatpush1.bf16.msra.mxu0 %v2744
  %4153 = vmatprep.subr.bf16.mxu0 0
  %4154 = vmatpush1.bf16.msra.mxu0 %v2751
  %4155 = vmatprep.subr.bf16.mxu0 0
  %4156 = vmatpush1.bf16.msra.mxu0 %v2758
  %4157 = vmatprep.subr.bf16.mxu0 0
  %4158 = vmatpush1.bf16.msra.mxu0 %v2765
  %4159 = vmatprep.subr.bf16.mxu0 0
  %4160 = vmatpush1.bf16.msra.mxu0 %v2772
  %4161 = vmatprep.subr.bf16.mxu0 0
  %4162 = vmatpush1.bf16.msra.mxu0 %v2779
  %4163 = vmatprep.subr.bf16.mxu0 0
  %4164 = vmatpush1.bf16.msra.mxu0 %v2786
  %4165 = vmatprep.subr.bf16.mxu0 0
  %4166 = vmatpush1.bf16.msra.mxu0 %v2793
  %4167 = vmatprep.mubr.bf16.mxu0 %v56
  %4168 = vmatmul.mubr.bf16.gmra.mrb[0].mxu0 %v55
  %v4169 = vpop.f32.mrb[0].mxu0
  %v4170 = vadd.f32 %v4130, %v4169
  %v4171 = vpop.f32.mrb[0].mxu0
  %v4172 = vpop.f32.mrb[0].mxu0
  %v4173 = vpop.f32.mrb[0].mxu0
  %4174 = vdwg.mxu0
  %4175 = vmatprep.subr.bf16.mxu0 0
  %4176 = vmatpush1.bf16.msra.mxu0 %v2800
  %4177 = vmatprep.subr.bf16.mxu0 0
  %4178 = vmatpush1.bf16.msra.mxu0 %v2807
  %4179 = vmatprep.subr.bf16.mxu0 0
  %4180 = vmatpush1.bf16.msra.mxu0 %v2814
  %4181 = vmatprep.subr.bf16.mxu0 0
  %4182 = vmatpush1.bf16.msra.mxu0 %v2821
  %4183 = vmatprep.subr.bf16.mxu0 0
  %4184 = vmatpush1.bf16.msra.mxu0 %v2828
  %4185 = vmatprep.subr.bf16.mxu0 0
  %4186 = vmatpush1.bf16.msra.mxu0 %v2835
  %4187 = vmatprep.subr.bf16.mxu0 0
  %4188 = vmatpush1.bf16.msra.mxu0 %v2842
  %4189 = vmatprep.subr.bf16.mxu0 0
  %4190 = vmatpush1.bf16.msra.mxu0 %v2849
  %4191 = vmatprep.subr.bf16.mxu0 0
  %4192 = vmatpush1.bf16.msra.mxu0 %v2856
  %4193 = vmatprep.subr.bf16.mxu0 0
  %4194 = vmatpush1.bf16.msra.mxu0 %v2863
  %4195 = vmatprep.subr.bf16.mxu0 0
  %4196 = vmatpush1.bf16.msra.mxu0 %v2870
  %4197 = vmatprep.subr.bf16.mxu0 0
  %4198 = vmatpush1.bf16.msra.mxu0 0
  %4199 = vmatprep.subr.bf16.mxu0 0
  %4200 = vmatpush1.bf16.msra.mxu0 0
  %4201 = vmatprep.subr.bf16.mxu0 0
  %4202 = vmatpush1.bf16.msra.mxu0 0
  %4203 = vmatprep.subr.bf16.mxu0 0
  %4204 = vmatpush1.bf16.msra.mxu0 0
  %4205 = vmatprep.subr.bf16.mxu0 0
  %4206 = vmatpush1.bf16.msra.mxu0 0
  %4207 = vmatprep.mubr.bf16.mxu0 %v3398
  %4208 = vmatmul.mubr.bf16.gmra.mrb[0].mxu0 %v57
  %v4209 = vpop.f32.mrb[0].mxu0
  %v4210 = vadd.f32 %v4170, %v4209
  %v4211 = vpop.f32.mrb[0].mxu0
  %v4212 = vpop.f32.mrb[0].mxu0
  %v4213 = vpop.f32.mrb[0].mxu0
  %4214 = vdwg.mxu0
  %v4215 = vmul.f32 %v3599, 0.01
  %v4216 = vmul.f32 %v3601, 0.01
  %v4217 = vmul.f32 %v3804, 0.01
  %v4218 = vmul.f32 %v3806, 0.01
  %v4219 = vmul.f32 %v4009, 0.01
  %v4220 = vmul.f32 %v4011, 0.01
  %v4221 = vmul.f32 %v4210, 0.01
  %v4222 = vmax.f32 %v3599, %v4215
  %v4223 = vmax.f32 %v3601, %v4216
  %v4224 = vmax.f32 %v3804, %v4217
  %v4225 = vmax.f32 %v3806, %v4218
  %v4226 = vmax.f32 %v4009, %v4219
  %v4227 = vmax.f32 %v4011, %v4220
  %v4228 = vmax.f32 %v4210, %v4221
  %v4229 = vpack.c.bf16 %v4222, %v4222
  %v4230 = vpack.c.bf16 %v4223, %v4223
  %v4231 = vpack.c.bf16 %v4224, %v4224
  %v4232 = vpack.c.bf16 %v4225, %v4225
  %v4233 = vpack.c.bf16 %v4226, %v4226
  %v4234 = vpack.c.bf16 %v4227, %v4227
  %v4235 = vpack.c.bf16 %v4228, %v4228
  %v4236 = vld [vmem:[%s3] sm:$0xf]
  %v4237 = vld [vmem:[%s3 + $0x4] sm:$0xf]
  %v4238 = vld [vmem:[%s3 + $0x8] sm:$0xf]
  %v4239 = vld [vmem:[%s3 + $0xc] sm:$0xf]
  %v4240 = vld [vmem:[%s3 + $0x10] sm:$0xf]
  %v4241 = vld [vmem:[%s3 + $0x14] sm:$0xf]
  %v4242 = vld [vmem:[%s3 + $0x18] sm:$0xf]
  %v4243 = vld [vmem:[%s3 + $0x1c] sm:$0xf]
  %v4244 = vld [vmem:[%s3 + $0x20] sm:$0xf]
  %v4245 = vld [vmem:[%s3 + $0x24] sm:$0xf]
  %v4246 = vld [vmem:[%s3 + $0x28] sm:$0xf]
  %v4247 = vld [vmem:[%s3 + $0x2c] sm:$0xf]
  %v4248 = vld [vmem:[%s3 + $0x30] sm:$0xf]
  %v4249 = vld [vmem:[%s3 + $0x34] sm:$0xf]
  %v4250 = vld [vmem:[%s3 + $0x38] sm:$0xf]
  %v4251 = vld [vmem:[%s3 + $0x3c] sm:$0xf]
  %v4252 = vld [vmem:[%s3 + $0x40] sm:$0xf]
  %v4253 = vld [vmem:[%s3 + $0x44] sm:$0xf]
  %v4254 = vld [vmem:[%s3 + $0x48] sm:$0xf]
  %v4255 = vld [vmem:[%s3 + $0x4c] sm:$0xf]
  %v4256 = vld [vmem:[%s3 + $0x50] sm:$0xf]
  %v4257 = vld [vmem:[%s3 + $0x54] sm:$0xf]
  %v4258 = vld [vmem:[%s3 + $0x58] sm:$0xf]
  %v4259 = vld [vmem:[%s3 + $0x5c] sm:$0xf]
  %v4260 = vld [vmem:[%s3 + $0x60] sm:$0xf]
  %v4261 = vld [vmem:[%s3 + $0x64] sm:$0xf]
  %v4262 = vld [vmem:[%s3 + $0x68] sm:$0xf]
  %v4263 = vld [vmem:[%s3 + $0x6c] sm:$0xf]
  %v4264 = vld [vmem:[%s3 + $0x70] sm:$0xf]
  %v4265 = vld [vmem:[%s3 + $0x74] sm:$0xf]
  %v4266 = vld [vmem:[%s3 + $0x78] sm:$0xf]
  %v4267 = vld [vmem:[%s3 + $0x7c] sm:$0xf]
  %v4268 = vld [vmem:[%s3 + $0x80] sm:$0xf]
  %v4269 = vld [vmem:[%s3 + $0x84] sm:$0xf]
  %v4270 = vld [vmem:[%s3 + $0x88] sm:$0xf]
  %v4271 = vld [vmem:[%s3 + $0x8c] sm:$0xf]
  %v4272 = vld [vmem:[%s3 + $0x90] sm:$0xf]
  %v4273 = vld [vmem:[%s3 + $0x94] sm:$0xf]
  %v4274 = vld [vmem:[%s3 + $0x98] sm:$0xf]
  %v4275 = vld [vmem:[%s3 + $0x9c] sm:$0xf]
  %v4276 = vld [vmem:[%s3 + $0xa0] sm:$0xf]
  %v4277 = vld [vmem:[%s3 + $0xa4] sm:$0xf]
  %v4320 = vunpack.c.l.b16 %v4236
  %v4321 = vunpack.c.l.b16 %v4237
  %v4322 = vunpack.c.l.b16 %v4238
  %v4323 = vunpack.c.l.b16 %v4239
  %v4324 = vunpack.c.l.b16 %v4240
  %v4325 = vunpack.c.l.b16 %v4241
  %v4326 = vunpack.c.l.b16 %v4242
  %v4327 = vunpack.c.l.b16 %v4243
  %v4328 = vunpack.c.l.b16 %v4244
  %v4329 = vunpack.c.l.b16 %v4245
  %v4330 = vunpack.c.l.b16 %v4246
  %v4331 = vunpack.c.l.b16 %v4247
  %v4332 = vunpack.c.l.b16 %v4248
  %v4333 = vunpack.c.l.b16 %v4249
  %v4334 = vunpack.c.l.b16 %v4250
  %v4335 = vunpack.c.l.b16 %v4251
  %v4336 = vunpack.c.l.b16 %v4252
  %v4337 = vunpack.c.l.b16 %v4253
  %v4338 = vunpack.c.l.b16 %v4254
  %v4339 = vunpack.c.l.b16 %v4255
  %v4340 = vunpack.c.l.b16 %v4256
  %v4341 = vunpack.c.l.b16 %v4257
  %v4342 = vunpack.c.l.b16 %v4258
  %v4343 = vunpack.c.l.b16 %v4259
  %v4344 = vunpack.c.l.b16 %v4260
  %v4345 = vunpack.c.l.b16 %v4261
  %v4346 = vunpack.c.l.b16 %v4262
  %v4347 = vunpack.c.l.b16 %v4263
  %v4348 = vunpack.c.l.b16 %v4264
  %v4349 = vunpack.c.l.b16 %v4265
  %v4350 = vunpack.c.l.b16 %v4266
  %v4351 = vunpack.c.l.b16 %v4267
  %v4352 = vunpack.c.l.b16 %v4268
  %v4353 = vunpack.c.l.b16 %v4269
  %v4354 = vunpack.c.l.b16 %v4270
  %v4355 = vunpack.c.l.b16 %v4271
  %v4356 = vunpack.c.l.b16 %v4272
  %v4357 = vunpack.c.l.b16 %v4273
  %v4358 = vunpack.c.l.b16 %v4274
  %v4359 = vunpack.c.l.b16 %v4275
  %v4360 = vunpack.c.l.b16 %v4276
  %v4361 = vunpack.c.l.b16 %v4277
  %v4362 = vpack.c.b16 %v4321, %v4320
  %v4363 = vpack.c.b16 %v4323, %v4322
  %v4364 = vpack.c.b16 %v4325, %v4324
  %v4365 = vpack.c.b16 %v4327, %v4326
  %v4366 = vpack.c.b16 %v4329, %v4328
  %v4367 = vpack.c.b16 %v4331, %v4330
  %v4368 = vpack.c.b16 %v4333, %v4332
  %v4369 = vpack.c.b16 %v4335, %v4334
  %v4370 = vpack.c.b16 %v4337, %v4336
  %v4371 = vpack.c.b16 %v4339, %v4338
  %v4372 = vpack.c.b16 %v4341, %v4340
  %v4373 = vpack.c.b16 %v4343, %v4342
  %v4374 = vpack.c.b16 %v4345, %v4344
  %v4375 = vpack.c.b16 %v4347, %v4346
  %v4376 = vpack.c.b16 %v4349, %v4348
  %v4377 = vpack.c.b16 %v4351, %v4350
  %v4378 = vpack.c.b16 %v4353, %v4352
  %v4379 = vpack.c.b16 %v4355, %v4354
  %v4380 = vpack.c.b16 %v4357, %v4356
  %v4381 = vpack.c.b16 %v4359, %v4358
  %v4382 = vpack.c.b16 %v4361, %v4360
  %vm4404 = vcmask 654336
  %v4406 = vsel %vm4404, %v4231, 0
  %4408 = vmatprep.subr.bf16.mxu0 0
  %4409 = vmatpush1.bf16.msra.mxu0 %v4362
  %4410 = vmatprep.subr.bf16.mxu0 0
  %4411 = vmatpush1.bf16.msra.mxu0 %v4363
  %4412 = vmatprep.subr.bf16.mxu0 0
  %4413 = vmatpush1.bf16.msra.mxu0 %v4364
  %4414 = vmatprep.subr.bf16.mxu0 0
  %4415 = vmatpush1.bf16.msra.mxu0 %v4365
  %4416 = vmatprep.subr.bf16.mxu0 0
  %4417 = vmatpush1.bf16.msra.mxu0 %v4366
  %4418 = vmatprep.subr.bf16.mxu0 0
  %4419 = vmatpush1.bf16.msra.mxu0 %v4367
  %4420 = vmatprep.subr.bf16.mxu0 0
  %4421 = vmatpush1.bf16.msra.mxu0 %v4368
  %4422 = vmatprep.subr.bf16.mxu0 0
  %4423 = vmatpush1.bf16.msra.mxu0 %v4369
  %4424 = vmatprep.subr.bf16.mxu0 0
  %4425 = vmatpush1.bf16.msra.mxu0 %v4370
  %4426 = vmatprep.subr.bf16.mxu0 0
  %4427 = vmatpush1.bf16.msra.mxu0 %v4371
  %4428 = vmatprep.subr.bf16.mxu0 0
  %4429 = vmatpush1.bf16.msra.mxu0 %v4372
  %4430 = vmatprep.subr.bf16.mxu0 0
  %4431 = vmatpush1.bf16.msra.mxu0 %v4373
  %4432 = vmatprep.subr.bf16.mxu0 0
  %4433 = vmatpush1.bf16.msra.mxu0 %v4374
  %4434 = vmatprep.subr.bf16.mxu0 0
  %4435 = vmatpush1.bf16.msra.mxu0 %v4375
  %4436 = vmatprep.subr.bf16.mxu0 0
  %4437 = vmatpush1.bf16.msra.mxu0 %v4376
  %4438 = vmatprep.subr.bf16.mxu0 0
  %4439 = vmatpush1.bf16.msra.mxu0 %v4377
  %4440 = vmatprep.mubr.bf16.mxu0 %v4230
  %4441 = vmatmul.mubr.bf16.gmra.mrb[0].mxu0 %v4229
  %v4442 = vpop.f32.mrb[0].mxu0
  %v4443 = vadd.f32 0.0, %v4442
  %v4444 = vpop.f32.mrb[0].mxu0
  %v4445 = vpop.f32.mrb[0].mxu0
  %v4446 = vpop.f32.mrb[0].mxu0
  %4447 = vdwg.mxu0
  %4448 = vmatprep.subr.bf16.mxu0 0
  %4449 = vmatpush1.bf16.msra.mxu0 %v4378
  %4450 = vmatprep.subr.bf16.mxu0 0
  %4451 = vmatpush1.bf16.msra.mxu0 %v4379
  %4452 = vmatprep.subr.bf16.mxu0 0
  %4453 = vmatpush1.bf16.msra.mxu0 %v4380
  %4454 = vmatprep.subr.bf16.mxu0 0
  %4455 = vmatpush1.bf16.msra.mxu0 %v4381
  %4456 = vmatprep.subr.bf16.mxu0 0
  %4457 = vmatpush1.bf16.msra.mxu0 %v4382
  %4458 = vmatprep.subr.bf16.mxu0 0
  %4459 = vmatpush1.bf16.msra.mxu0 0
  %4460 = vmatprep.subr.bf16.mxu0 0
  %4461 = vmatpush1.bf16.msra.mxu0 0
  %4462 = vmatprep.subr.bf16.mxu0 0
  %4463 = vmatpush1.bf16.msra.mxu0 0
  %4464 = vmatprep.subr.bf16.mxu0 0
  %4465 = vmatpush1.bf16.msra.mxu0 0
  %4466 = vmatprep.subr.bf16.mxu0 0
  %4467 = vmatpush1.bf16.msra.mxu0 0
  %4468 = vmatprep.subr.bf16.mxu0 0
  %4469 = vmatpush1.bf16.msra.mxu0 0
  %4470 = vmatprep.subr.bf16.mxu0 0
  %4471 = vmatpush1.bf16.msra.mxu0 0
  %4472 = vmatprep.subr.bf16.mxu0 0
  %4473 = vmatpush1.bf16.msra.mxu0 0
  %4474 = vmatprep.subr.bf16.mxu0 0
  %4475 = vmatpush1.bf16.msra.mxu0 0
  %4476 = vmatprep.subr.bf16.mxu0 0
  %4477 = vmatpush1.bf16.msra.mxu0 0
  %4478 = vmatprep.subr.bf16.mxu0 0
  %4479 = vmatpush1.bf16.msra.mxu0 0
  %4480 = vmatprep.mubr.bf16.mxu0 0
  %4481 = vmatmul.mubr.bf16.gmra.mrb[0].mxu0 %v4406
  %v4482 = vpop.f32.mrb[0].mxu0
  %v4483 = vadd.f32 %v4443, %v4482
  %v4484 = vpop.f32.mrb[0].mxu0
  %v4485 = vpop.f32.mrb[0].mxu0
  %v4486 = vpop.f32.mrb[0].mxu0
  %4487 = vdwg.mxu0
  %s4488 = scalar_lea.vmem %s3, 168
  %v4489 = vld [vmem:[%s4488] sm:$0xf]
  %v4490 = vld [vmem:[%s4488 + $0x4] sm:$0xf]
  %v4491 = vld [vmem:[%s4488 + $0x8] sm:$0xf]
  %v4492 = vld [vmem:[%s4488 + $0xc] sm:$0xf]
  %v4493 = vld [vmem:[%s4488 + $0x10] sm:$0xf]
  %v4494 = vld [vmem:[%s4488 + $0x14] sm:$0xf]
  %v4495 = vld [vmem:[%s4488 + $0x18] sm:$0xf]
  %v4496 = vld [vmem:[%s4488 + $0x1c] sm:$0xf]
  %v4497 = vld [vmem:[%s4488 + $0x20] sm:$0xf]
  %v4498 = vld [vmem:[%s4488 + $0x24] sm:$0xf]
  %v4499 = vld [vmem:[%s4488 + $0x28] sm:$0xf]
  %v4500 = vld [vmem:[%s4488 + $0x2c] sm:$0xf]
  %v4501 = vld [vmem:[%s4488 + $0x30] sm:$0xf]
  %v4502 = vld [vmem:[%s4488 + $0x34] sm:$0xf]
  %v4503 = vld [vmem:[%s4488 + $0x38] sm:$0xf]
  %v4504 = vld [vmem:[%s4488 + $0x3c] sm:$0xf]
  %v4505 = vld [vmem:[%s4488 + $0x40] sm:$0xf]
  %v4506 = vld [vmem:[%s4488 + $0x44] sm:$0xf]
  %v4507 = vld [vmem:[%s4488 + $0x48] sm:$0xf]
  %v4508 = vld [vmem:[%s4488 + $0x4c] sm:$0xf]
  %v4509 = vld [vmem:[%s4488 + $0x50] sm:$0xf]
  %v4510 = vld [vmem:[%s4488 + $0x54] sm:$0xf]
  %v4511 = vld [vmem:[%s4488 + $0x58] sm:$0xf]
  %v4512 = vld [vmem:[%s4488 + $0x5c] sm:$0xf]
  %v4513 = vld [vmem:[%s4488 + $0x60] sm:$0xf]
  %v4514 = vld [vmem:[%s4488 + $0x64] sm:$0xf]
  %v4515 = vld [vmem:[%s4488 + $0x68] sm:$0xf]
  %v4516 = vld [vmem:[%s4488 + $0x6c] sm:$0xf]
  %v4517 = vld [vmem:[%s4488 + $0x70] sm:$0xf]
  %v4518 = vld [vmem:[%s4488 + $0x74] sm:$0xf]
  %v4519 = vld [vmem:[%s4488 + $0x78] sm:$0xf]
  %v4520 = vld [vmem:[%s4488 + $0x7c] sm:$0xf]
  %v4521 = vld [vmem:[%s4488 + $0x80] sm:$0xf]
  %v4522 = vld [vmem:[%s4488 + $0x84] sm:$0xf]
  %v4523 = vld [vmem:[%s4488 + $0x88] sm:$0xf]
  %v4524 = vld [vmem:[%s4488 + $0x8c] sm:$0xf]
  %v4525 = vld [vmem:[%s4488 + $0x90] sm:$0xf]
  %v4526 = vld [vmem:[%s4488 + $0x94] sm:$0xf]
  %v4527 = vld [vmem:[%s4488 + $0x98] sm:$0xf]
  %v4528 = vld [vmem:[%s4488 + $0x9c] sm:$0xf]
  %v4529 = vld [vmem:[%s4488 + $0xa0] sm:$0xf]
  %v4530 = vld [vmem:[%s4488 + $0xa4] sm:$0xf]
  %v4573 = vunpack.c.l.b16 %v4489
  %v4574 = vunpack.c.l.b16 %v4490
  %v4575 = vunpack.c.l.b16 %v4491
  %v4576 = vunpack.c.l.b16 %v4492
  %v4577 = vunpack.c.l.b16 %v4493
  %v4578 = vunpack.c.l.b16 %v4494
  %v4579 = vunpack.c.l.b16 %v4495
  %v4580 = vunpack.c.l.b16 %v4496
  %v4581 = vunpack.c.l.b16 %v4497
  %v4582 = vunpack.c.l.b16 %v4498
  %v4583 = vunpack.c.l.b16 %v4499
  %v4584 = vunpack.c.l.b16 %v4500
  %v4585 = vunpack.c.l.b16 %v4501
  %v4586 = vunpack.c.l.b16 %v4502
  %v4587 = vunpack.c.l.b16 %v4503
  %v4588 = vunpack.c.l.b16 %v4504
  %v4589 = vunpack.c.l.b16 %v4505
  %v4590 = vunpack.c.l.b16 %v4506
  %v4591 = vunpack.c.l.b16 %v4507
  %v4592 = vunpack.c.l.b16 %v4508
  %v4593 = vunpack.c.l.b16 %v4509
  %v4594 = vunpack.c.l.b16 %v4510
  %v4595 = vunpack.c.l.b16 %v4511
  %v4596 = vunpack.c.l.b16 %v4512
  %v4597 = vunpack.c.l.b16 %v4513
  %v4598 = vunpack.c.l.b16 %v4514
  %v4599 = vunpack.c.l.b16 %v4515
  %v4600 = vunpack.c.l.b16 %v4516
  %v4601 = vunpack.c.l.b16 %v4517
  %v4602 = vunpack.c.l.b16 %v4518
  %v4603 = vunpack.c.l.b16 %v4519
  %v4604 = vunpack.c.l.b16 %v4520
  %v4605 = vunpack.c.l.b16 %v4521
  %v4606 = vunpack.c.l.b16 %v4522
  %v4607 = vunpack.c.l.b16 %v4523
  %v4608 = vunpack.c.l.b16 %v4524
  %v4609 = vunpack.c.l.b16 %v4525
  %v4610 = vunpack.c.l.b16 %v4526
  %v4611 = vunpack.c.l.b16 %v4527
  %v4612 = vunpack.c.l.b16 %v4528
  %v4613 = vunpack.c.l.b16 %v4529
  %v4614 = vunpack.c.l.b16 %v4530
  %v4615 = vpack.c.b16 %v4574, %v4573
  %v4616 = vpack.c.b16 %v4576, %v4575
  %v4617 = vpack.c.b16 %v4578, %v4577
  %v4618 = vpack.c.b16 %v4580, %v4579
  %v4619 = vpack.c.b16 %v4582, %v4581
  %v4620 = vpack.c.b16 %v4584, %v4583
  %v4621 = vpack.c.b16 %v4586, %v4585
  %v4622 = vpack.c.b16 %v4588, %v4587
  %v4623 = vpack.c.b16 %v4590, %v4589
  %v4624 = vpack.c.b16 %v4592, %v4591
  %v4625 = vpack.c.b16 %v4594, %v4593
  %v4626 = vpack.c.b16 %v4596, %v4595
  %v4627 = vpack.c.b16 %v4598, %v4597
  %v4628 = vpack.c.b16 %v4600, %v4599
  %v4629 = vpack.c.b16 %v4602, %v4601
  %v4630 = vpack.c.b16 %v4604, %v4603
  %v4631 = vpack.c.b16 %v4606, %v4605
  %v4632 = vpack.c.b16 %v4608, %v4607
  %v4633 = vpack.c.b16 %v4610, %v4609
  %v4634 = vpack.c.b16 %v4612, %v4611
  %v4635 = vpack.c.b16 %v4614, %v4613
  %4657 = vmatprep.subr.bf16.mxu0 0
  %4658 = vmatpush1.bf16.msra.mxu0 %v4615
  %4659 = vmatprep.subr.bf16.mxu0 0
  %4660 = vmatpush1.bf16.msra.mxu0 %v4616
  %4661 = vmatprep.subr.bf16.mxu0 0
  %4662 = vmatpush1.bf16.msra.mxu0 %v4617
  %4663 = vmatprep.subr.bf16.mxu0 0
  %4664 = vmatpush1.bf16.msra.mxu0 %v4618
  %4665 = vmatprep.subr.bf16.mxu0 0
  %4666 = vmatpush1.bf16.msra.mxu0 %v4619
  %4667 = vmatprep.subr.bf16.mxu0 0
  %4668 = vmatpush1.bf16.msra.mxu0 %v4620
  %4669 = vmatprep.subr.bf16.mxu0 0
  %4670 = vmatpush1.bf16.msra.mxu0 %v4621
  %4671 = vmatprep.subr.bf16.mxu0 0
  %4672 = vmatpush1.bf16.msra.mxu0 %v4622
  %4673 = vmatprep.subr.bf16.mxu0 0
  %4674 = vmatpush1.bf16.msra.mxu0 %v4623
  %4675 = vmatprep.subr.bf16.mxu0 0
  %4676 = vmatpush1.bf16.msra.mxu0 %v4624
  %4677 = vmatprep.subr.bf16.mxu0 0
  %4678 = vmatpush1.bf16.msra.mxu0 %v4625
  %4679 = vmatprep.subr.bf16.mxu0 0
  %4680 = vmatpush1.bf16.msra.mxu0 %v4626
  %4681 = vmatprep.subr.bf16.mxu0 0
  %4682 = vmatpush1.bf16.msra.mxu0 %v4627
  %4683 = vmatprep.subr.bf16.mxu0 0
  %4684 = vmatpush1.bf16.msra.mxu0 %v4628
  %4685 = vmatprep.subr.bf16.mxu0 0
  %4686 = vmatpush1.bf16.msra.mxu0 %v4629
  %4687 = vmatprep.subr.bf16.mxu0 0
  %4688 = vmatpush1.bf16.msra.mxu0 %v4630
  %4689 = vmatprep.mubr.bf16.mxu0 %v4230
  %4690 = vmatmul.mubr.bf16.gmra.mrb[0].mxu0 %v4229
  %v4691 = vpop.f32.mrb[0].mxu0
  %v4692 = vadd.f32 0.0, %v4691
  %v4693 = vpop.f32.mrb[0].mxu0
  %v4694 = vpop.f32.mrb[0].mxu0
  %v4695 = vpop.f32.mrb[0].mxu0
  %4696 = vdwg.mxu0
  %4697 = vmatprep.subr.bf16.mxu0 0
  %4698 = vmatpush1.bf16.msra.mxu0 %v4631
  %4699 = vmatprep.subr.bf16.mxu0 0
  %4700 = vmatpush1.bf16.msra.mxu0 %v4632
  %4701 = vmatprep.subr.bf16.mxu0 0
  %4702 = vmatpush1.bf16.msra.mxu0 %v4633
  %4703 = vmatprep.subr.bf16.mxu0 0
  %4704 = vmatpush1.bf16.msra.mxu0 %v4634
  %4705 = vmatprep.subr.bf16.mxu0 0
  %4706 = vmatpush1.bf16.msra.mxu0 %v4635
  %4707 = vmatprep.subr.bf16.mxu0 0
  %4708 = vmatpush1.bf16.msra.mxu0 0
  %4709 = vmatprep.subr.bf16.mxu0 0
  %4710 = vmatpush1.bf16.msra.mxu0 0
  %4711 = vmatprep.subr.bf16.mxu0 0
  %4712 = vmatpush1.bf16.msra.mxu0 0
  %4713 = vmatprep.subr.bf16.mxu0 0
  %4714 = vmatpush1.bf16.msra.mxu0 0
  %4715 = vmatprep.subr.bf16.mxu0 0
  %4716 = vmatpush1.bf16.msra.mxu0 0
  %4717 = vmatprep.subr.bf16.mxu0 0
  %4718 = vmatpush1.bf16.msra.mxu0 0
  %4719 = vmatprep.subr.bf16.mxu0 0
  %4720 = vmatpush1.bf16.msra.mxu0 0
  %4721 = vmatprep.subr.bf16.mxu0 0
  %4722 = vmatpush1.bf16.msra.mxu0 0
  %4723 = vmatprep.subr.bf16.mxu0 0
  %4724 = vmatpush1.bf16.msra.mxu0 0
  %4725 = vmatprep.subr.bf16.mxu0 0
  %4726 = vmatpush1.bf16.msra.mxu0 0
  %4727 = vmatprep.subr.bf16.mxu0 0
  %4728 = vmatpush1.bf16.msra.mxu0 0
  %4729 = vmatprep.mubr.bf16.mxu0 0
  %4730 = vmatmul.mubr.bf16.gmra.mrb[0].mxu0 %v4406
  %v4731 = vpop.f32.mrb[0].mxu0
  %v4732 = vadd.f32 %v4692, %v4731
  %v4733 = vpop.f32.mrb[0].mxu0
  %v4734 = vpop.f32.mrb[0].mxu0
  %v4735 = vpop.f32.mrb[0].mxu0
  %4736 = vdwg.mxu0
  %s4737 = scalar_lea.vmem %s3, 336
  %v4738 = vld [vmem:[%s4737] sm:$0xf]
  %v4739 = vld [vmem:[%s4737 + $0x4] sm:$0xf]
  %v4740 = vld [vmem:[%s4737 + $0x8] sm:$0xf]
  %v4741 = vld [vmem:[%s4737 + $0xc] sm:$0xf]
  %v4742 = vld [vmem:[%s4737 + $0x10] sm:$0xf]
  %v4743 = vld [vmem:[%s4737 + $0x14] sm:$0xf]
  %v4744 = vld [vmem:[%s4737 + $0x18] sm:$0xf]
  %v4745 = vld [vmem:[%s4737 + $0x1c] sm:$0xf]
  %v4746 = vld [vmem:[%s4737 + $0x20] sm:$0xf]
  %v4747 = vld [vmem:[%s4737 + $0x24] sm:$0xf]
  %v4748 = vld [vmem:[%s4737 + $0x28] sm:$0xf]
  %v4749 = vld [vmem:[%s4737 + $0x2c] sm:$0xf]
  %v4750 = vld [vmem:[%s4737 + $0x30] sm:$0xf]
  %v4751 = vld [vmem:[%s4737 + $0x34] sm:$0xf]
  %v4752 = vld [vmem:[%s4737 + $0x38] sm:$0xf]
  %v4753 = vld [vmem:[%s4737 + $0x3c] sm:$0xf]
  %v4754 = vld [vmem:[%s4737 + $0x40] sm:$0xf]
  %v4755 = vld [vmem:[%s4737 + $0x44] sm:$0xf]
  %v4756 = vld [vmem:[%s4737 + $0x48] sm:$0xf]
  %v4757 = vld [vmem:[%s4737 + $0x4c] sm:$0xf]
  %v4758 = vld [vmem:[%s4737 + $0x50] sm:$0xf]
  %v4759 = vld [vmem:[%s4737 + $0x54] sm:$0xf]
  %v4760 = vld [vmem:[%s4737 + $0x58] sm:$0xf]
  %v4761 = vld [vmem:[%s4737 + $0x5c] sm:$0xf]
  %v4762 = vld [vmem:[%s4737 + $0x60] sm:$0xf]
  %v4763 = vld [vmem:[%s4737 + $0x64] sm:$0xf]
  %v4764 = vld [vmem:[%s4737 + $0x68] sm:$0xf]
  %v4765 = vld [vmem:[%s4737 + $0x6c] sm:$0xf]
  %v4766 = vld [vmem:[%s4737 + $0x70] sm:$0xf]
  %v4767 = vld [vmem:[%s4737 + $0x74] sm:$0xf]
  %v4768 = vld [vmem:[%s4737 + $0x78] sm:$0xf]
  %v4769 = vld [vmem:[%s4737 + $0x7c] sm:$0xf]
  %v4770 = vld [vmem:[%s4737 + $0x80] sm:$0xf]
  %v4771 = vld [vmem:[%s4737 + $0x84] sm:$0xf]
  %v4772 = vld [vmem:[%s4737 + $0x88] sm:$0xf]
  %v4773 = vld [vmem:[%s4737 + $0x8c] sm:$0xf]
  %v4774 = vld [vmem:[%s4737 + $0x90] sm:$0xf]
  %v4775 = vld [vmem:[%s4737 + $0x94] sm:$0xf]
  %v4776 = vld [vmem:[%s4737 + $0x98] sm:$0xf]
  %v4777 = vld [vmem:[%s4737 + $0x9c] sm:$0xf]
  %v4778 = vld [vmem:[%s4737 + $0xa0] sm:$0xf]
  %v4779 = vld [vmem:[%s4737 + $0xa4] sm:$0xf]
  %v4822 = vunpack.c.l.b16 %v4738
  %v4823 = vunpack.c.l.b16 %v4739
  %v4824 = vunpack.c.l.b16 %v4740
  %v4825 = vunpack.c.l.b16 %v4741
  %v4826 = vunpack.c.l.b16 %v4742
  %v4827 = vunpack.c.l.b16 %v4743
  %v4828 = vunpack.c.l.b16 %v4744
  %v4829 = vunpack.c.l.b16 %v4745
  %v4830 = vunpack.c.l.b16 %v4746
  %v4831 = vunpack.c.l.b16 %v4747
  %v4832 = vunpack.c.l.b16 %v4748
  %v4833 = vunpack.c.l.b16 %v4749
  %v4834 = vunpack.c.l.b16 %v4750
  %v4835 = vunpack.c.l.b16 %v4751
  %v4836 = vunpack.c.l.b16 %v4752
  %v4837 = vunpack.c.l.b16 %v4753
  %v4838 = vunpack.c.l.b16 %v4754
  %v4839 = vunpack.c.l.b16 %v4755
  %v4840 = vunpack.c.l.b16 %v4756
  %v4841 = vunpack.c.l.b16 %v4757
  %v4842 = vunpack.c.l.b16 %v4758
  %v4843 = vunpack.c.l.b16 %v4759
  %v4844 = vunpack.c.l.b16 %v4760
  %v4845 = vunpack.c.l.b16 %v4761
  %v4846 = vunpack.c.l.b16 %v4762
  %v4847 = vunpack.c.l.b16 %v4763
  %v4848 = vunpack.c.l.b16 %v4764
  %v4849 = vunpack.c.l.b16 %v4765
  %v4850 = vunpack.c.l.b16 %v4766
  %v4851 = vunpack.c.l.b16 %v4767
  %v4852 = vunpack.c.l.b16 %v4768
  %v4853 = vunpack.c.l.b16 %v4769
  %v4854 = vunpack.c.l.b16 %v4770
  %v4855 = vunpack.c.l.b16 %v4771
  %v4856 = vunpack.c.l.b16 %v4772
  %v4857 = vunpack.c.l.b16 %v4773
  %v4858 = vunpack.c.l.b16 %v4774
  %v4859 = vunpack.c.l.b16 %v4775
  %v4860 = vunpack.c.l.b16 %v4776
  %v4861 = vunpack.c.l.b16 %v4777
  %v4862 = vunpack.c.l.b16 %v4778
  %v4863 = vunpack.c.l.b16 %v4779
  %v4864 = vpack.c.b16 %v4823, %v4822
  %v4865 = vpack.c.b16 %v4825, %v4824
  %v4866 = vpack.c.b16 %v4827, %v4826
  %v4867 = vpack.c.b16 %v4829, %v4828
  %v4868 = vpack.c.b16 %v4831, %v4830
  %v4869 = vpack.c.b16 %v4833, %v4832
  %v4870 = vpack.c.b16 %v4835, %v4834
  %v4871 = vpack.c.b16 %v4837, %v4836
  %v4872 = vpack.c.b16 %v4839, %v4838
  %v4873 = vpack.c.b16 %v4841, %v4840
  %v4874 = vpack.c.b16 %v4843, %v4842
  %v4875 = vpack.c.b16 %v4845, %v4844
  %v4876 = vpack.c.b16 %v4847, %v4846
  %v4877 = vpack.c.b16 %v4849, %v4848
  %v4878 = vpack.c.b16 %v4851, %v4850
  %v4879 = vpack.c.b16 %v4853, %v4852
  %v4880 = vpack.c.b16 %v4855, %v4854
  %v4881 = vpack.c.b16 %v4857, %v4856
  %v4882 = vpack.c.b16 %v4859, %v4858
  %v4883 = vpack.c.b16 %v4861, %v4860
  %v4884 = vpack.c.b16 %v4863, %v4862
  %v4907 = vsel %vm4404, %v4232, 0
  %4909 = vmatprep.subr.bf16.mxu0 0
  %4910 = vmatpush1.bf16.msra.mxu0 %v4864
  %4911 = vmatprep.subr.bf16.mxu0 0
  %4912 = vmatpush1.bf16.msra.mxu0 %v4865
  %4913 = vmatprep.subr.bf16.mxu0 0
  %4914 = vmatpush1.bf16.msra.mxu0 %v4866
  %4915 = vmatprep.subr.bf16.mxu0 0
  %4916 = vmatpush1.bf16.msra.mxu0 %v4867
  %4917 = vmatprep.subr.bf16.mxu0 0
  %4918 = vmatpush1.bf16.msra.mxu0 %v4868
  %4919 = vmatprep.subr.bf16.mxu0 0
  %4920 = vmatpush1.bf16.msra.mxu0 %v4869
  %4921 = vmatprep.subr.bf16.mxu0 0
  %4922 = vmatpush1.bf16.msra.mxu0 %v4870
  %4923 = vmatprep.subr.bf16.mxu0 0
  %4924 = vmatpush1.bf16.msra.mxu0 %v4871
  %4925 = vmatprep.subr.bf16.mxu0 0
  %4926 = vmatpush1.bf16.msra.mxu0 %v4872
  %4927 = vmatprep.subr.bf16.mxu0 0
  %4928 = vmatpush1.bf16.msra.mxu0 %v4873
  %4929 = vmatprep.subr.bf16.mxu0 0
  %4930 = vmatpush1.bf16.msra.mxu0 %v4874
  %4931 = vmatprep.subr.bf16.mxu0 0
  %4932 = vmatpush1.bf16.msra.mxu0 %v4875
  %4933 = vmatprep.subr.bf16.mxu0 0
  %4934 = vmatpush1.bf16.msra.mxu0 %v4876
  %4935 = vmatprep.subr.bf16.mxu0 0
  %4936 = vmatpush1.bf16.msra.mxu0 %v4877
  %4937 = vmatprep.subr.bf16.mxu0 0
  %4938 = vmatpush1.bf16.msra.mxu0 %v4878
  %4939 = vmatprep.subr.bf16.mxu0 0
  %4940 = vmatpush1.bf16.msra.mxu0 %v4879
  %4941 = vmatprep.mubr.bf16.mxu0 %v4231
  %4942 = vmatmul.mubr.bf16.gmra.mrb[0].mxu0 %v4230
  %v4943 = vpop.f32.mrb[0].mxu0
  %v4944 = vadd.f32 0.0, %v4943
  %v4945 = vpop.f32.mrb[0].mxu0
  %v4946 = vpop.f32.mrb[0].mxu0
  %v4947 = vpop.f32.mrb[0].mxu0
  %4948 = vdwg.mxu0
  %4949 = vmatprep.subr.bf16.mxu0 0
  %4950 = vmatpush1.bf16.msra.mxu0 %v4880
  %4951 = vmatprep.subr.bf16.mxu0 0
  %4952 = vmatpush1.bf16.msra.mxu0 %v4881
  %4953 = vmatprep.subr.bf16.mxu0 0
  %4954 = vmatpush1.bf16.msra.mxu0 %v4882
  %4955 = vmatprep.subr.bf16.mxu0 0
  %4956 = vmatpush1.bf16.msra.mxu0 %v4883
  %4957 = vmatprep.subr.bf16.mxu0 0
  %4958 = vmatpush1.bf16.msra.mxu0 %v4884
  %4959 = vmatprep.subr.bf16.mxu0 0
  %4960 = vmatpush1.bf16.msra.mxu0 0
  %4961 = vmatprep.subr.bf16.mxu0 0
  %4962 = vmatpush1.bf16.msra.mxu0 0
  %4963 = vmatprep.subr.bf16.mxu0 0
  %4964 = vmatpush1.bf16.msra.mxu0 0
  %4965 = vmatprep.subr.bf16.mxu0 0
  %4966 = vmatpush1.bf16.msra.mxu0 0
  %4967 = vmatprep.subr.bf16.mxu0 0
  %4968 = vmatpush1.bf16.msra.mxu0 0
  %4969 = vmatprep.subr.bf16.mxu0 0
  %4970 = vmatpush1.bf16.msra.mxu0 0
  %4971 = vmatprep.subr.bf16.mxu0 0
  %4972 = vmatpush1.bf16.msra.mxu0 0
  %4973 = vmatprep.subr.bf16.mxu0 0
  %4974 = vmatpush1.bf16.msra.mxu0 0
  %4975 = vmatprep.subr.bf16.mxu0 0
  %4976 = vmatpush1.bf16.msra.mxu0 0
  %4977 = vmatprep.subr.bf16.mxu0 0
  %4978 = vmatpush1.bf16.msra.mxu0 0
  %4979 = vmatprep.subr.bf16.mxu0 0
  %4980 = vmatpush1.bf16.msra.mxu0 0
  %4981 = vmatprep.mubr.bf16.mxu0 0
  %4982 = vmatmul.mubr.bf16.gmra.mrb[0].mxu0 %v4907
  %v4983 = vpop.f32.mrb[0].mxu0
  %v4984 = vadd.f32 %v4944, %v4983
  %v4985 = vpop.f32.mrb[0].mxu0
  %v4986 = vpop.f32.mrb[0].mxu0
  %v4987 = vpop.f32.mrb[0].mxu0
  %4988 = vdwg.mxu0
  %s4989 = scalar_lea.vmem %s3, 504
  %v4990 = vld [vmem:[%s4989] sm:$0xf]
  %v4991 = vld [vmem:[%s4989 + $0x4] sm:$0xf]
  %v4992 = vld [vmem:[%s4989 + $0x8] sm:$0xf]
  %v4993 = vld [vmem:[%s4989 + $0xc] sm:$0xf]
  %v4994 = vld [vmem:[%s4989 + $0x10] sm:$0xf]
  %v4995 = vld [vmem:[%s4989 + $0x14] sm:$0xf]
  %v4996 = vld [vmem:[%s4989 + $0x18] sm:$0xf]
  %v4997 = vld [vmem:[%s4989 + $0x1c] sm:$0xf]
  %v4998 = vld [vmem:[%s4989 + $0x20] sm:$0xf]
  %v4999 = vld [vmem:[%s4989 + $0x24] sm:$0xf]
  %v5000 = vld [vmem:[%s4989 + $0x28] sm:$0xf]
  %v5001 = vld [vmem:[%s4989 + $0x2c] sm:$0xf]
  %v5002 = vld [vmem:[%s4989 + $0x30] sm:$0xf]
  %v5003 = vld [vmem:[%s4989 + $0x34] sm:$0xf]
  %v5004 = vld [vmem:[%s4989 + $0x38] sm:$0xf]
  %v5005 = vld [vmem:[%s4989 + $0x3c] sm:$0xf]
  %v5006 = vld [vmem:[%s4989 + $0x40] sm:$0xf]
  %v5007 = vld [vmem:[%s4989 + $0x44] sm:$0xf]
  %v5008 = vld [vmem:[%s4989 + $0x48] sm:$0xf]
  %v5009 = vld [vmem:[%s4989 + $0x4c] sm:$0xf]
  %v5010 = vld [vmem:[%s4989 + $0x50] sm:$0xf]
  %v5011 = vld [vmem:[%s4989 + $0x54] sm:$0xf]
  %v5012 = vld [vmem:[%s4989 + $0x58] sm:$0xf]
  %v5013 = vld [vmem:[%s4989 + $0x5c] sm:$0xf]
  %v5014 = vld [vmem:[%s4989 + $0x60] sm:$0xf]
  %v5015 = vld [vmem:[%s4989 + $0x64] sm:$0xf]
  %v5016 = vld [vmem:[%s4989 + $0x68] sm:$0xf]
  %v5017 = vld [vmem:[%s4989 + $0x6c] sm:$0xf]
  %v5018 = vld [vmem:[%s4989 + $0x70] sm:$0xf]
  %v5019 = vld [vmem:[%s4989 + $0x74] sm:$0xf]
  %v5020 = vld [vmem:[%s4989 + $0x78] sm:$0xf]
  %v5021 = vld [vmem:[%s4989 + $0x7c] sm:$0xf]
  %v5022 = vld [vmem:[%s4989 + $0x80] sm:$0xf]
  %v5023 = vld [vmem:[%s4989 + $0x84] sm:$0xf]
  %v5024 = vld [vmem:[%s4989 + $0x88] sm:$0xf]
  %v5025 = vld [vmem:[%s4989 + $0x8c] sm:$0xf]
  %v5026 = vld [vmem:[%s4989 + $0x90] sm:$0xf]
  %v5027 = vld [vmem:[%s4989 + $0x94] sm:$0xf]
  %v5028 = vld [vmem:[%s4989 + $0x98] sm:$0xf]
  %v5029 = vld [vmem:[%s4989 + $0x9c] sm:$0xf]
  %v5030 = vld [vmem:[%s4989 + $0xa0] sm:$0xf]
  %v5031 = vld [vmem:[%s4989 + $0xa4] sm:$0xf]
  %v5074 = vunpack.c.l.b16 %v4990
  %v5075 = vunpack.c.l.b16 %v4991
  %v5076 = vunpack.c.l.b16 %v4992
  %v5077 = vunpack.c.l.b16 %v4993
  %v5078 = vunpack.c.l.b16 %v4994
  %v5079 = vunpack.c.l.b16 %v4995
  %v5080 = vunpack.c.l.b16 %v4996
  %v5081 = vunpack.c.l.b16 %v4997
  %v5082 = vunpack.c.l.b16 %v4998
  %v5083 = vunpack.c.l.b16 %v4999
  %v5084 = vunpack.c.l.b16 %v5000
  %v5085 = vunpack.c.l.b16 %v5001
  %v5086 = vunpack.c.l.b16 %v5002
  %v5087 = vunpack.c.l.b16 %v5003
  %v5088 = vunpack.c.l.b16 %v5004
  %v5089 = vunpack.c.l.b16 %v5005
  %v5090 = vunpack.c.l.b16 %v5006
  %v5091 = vunpack.c.l.b16 %v5007
  %v5092 = vunpack.c.l.b16 %v5008
  %v5093 = vunpack.c.l.b16 %v5009
  %v5094 = vunpack.c.l.b16 %v5010
  %v5095 = vunpack.c.l.b16 %v5011
  %v5096 = vunpack.c.l.b16 %v5012
  %v5097 = vunpack.c.l.b16 %v5013
  %v5098 = vunpack.c.l.b16 %v5014
  %v5099 = vunpack.c.l.b16 %v5015
  %v5100 = vunpack.c.l.b16 %v5016
  %v5101 = vunpack.c.l.b16 %v5017
  %v5102 = vunpack.c.l.b16 %v5018
  %v5103 = vunpack.c.l.b16 %v5019
  %v5104 = vunpack.c.l.b16 %v5020
  %v5105 = vunpack.c.l.b16 %v5021
  %v5106 = vunpack.c.l.b16 %v5022
  %v5107 = vunpack.c.l.b16 %v5023
  %v5108 = vunpack.c.l.b16 %v5024
  %v5109 = vunpack.c.l.b16 %v5025
  %v5110 = vunpack.c.l.b16 %v5026
  %v5111 = vunpack.c.l.b16 %v5027
  %v5112 = vunpack.c.l.b16 %v5028
  %v5113 = vunpack.c.l.b16 %v5029
  %v5114 = vunpack.c.l.b16 %v5030
  %v5115 = vunpack.c.l.b16 %v5031
  %v5116 = vpack.c.b16 %v5075, %v5074
  %v5117 = vpack.c.b16 %v5077, %v5076
  %v5118 = vpack.c.b16 %v5079, %v5078
  %v5119 = vpack.c.b16 %v5081, %v5080
  %v5120 = vpack.c.b16 %v5083, %v5082
  %v5121 = vpack.c.b16 %v5085, %v5084
  %v5122 = vpack.c.b16 %v5087, %v5086
  %v5123 = vpack.c.b16 %v5089, %v5088
  %v5124 = vpack.c.b16 %v5091, %v5090
  %v5125 = vpack.c.b16 %v5093, %v5092
  %v5126 = vpack.c.b16 %v5095, %v5094
  %v5127 = vpack.c.b16 %v5097, %v5096
  %v5128 = vpack.c.b16 %v5099, %v5098
  %v5129 = vpack.c.b16 %v5101, %v5100
  %v5130 = vpack.c.b16 %v5103, %v5102
  %v5131 = vpack.c.b16 %v5105, %v5104
  %v5132 = vpack.c.b16 %v5107, %v5106
  %v5133 = vpack.c.b16 %v5109, %v5108
  %v5134 = vpack.c.b16 %v5111, %v5110
  %v5135 = vpack.c.b16 %v5113, %v5112
  %v5136 = vpack.c.b16 %v5115, %v5114
  %v5159 = vsel %vm4404, %v4233, 0
  %5161 = vmatprep.subr.bf16.mxu0 0
  %5162 = vmatpush1.bf16.msra.mxu0 %v5116
  %5163 = vmatprep.subr.bf16.mxu0 0
  %5164 = vmatpush1.bf16.msra.mxu0 %v5117
  %5165 = vmatprep.subr.bf16.mxu0 0
  %5166 = vmatpush1.bf16.msra.mxu0 %v5118
  %5167 = vmatprep.subr.bf16.mxu0 0
  %5168 = vmatpush1.bf16.msra.mxu0 %v5119
  %5169 = vmatprep.subr.bf16.mxu0 0
  %5170 = vmatpush1.bf16.msra.mxu0 %v5120
  %5171 = vmatprep.subr.bf16.mxu0 0
  %5172 = vmatpush1.bf16.msra.mxu0 %v5121
  %5173 = vmatprep.subr.bf16.mxu0 0
  %5174 = vmatpush1.bf16.msra.mxu0 %v5122
  %5175 = vmatprep.subr.bf16.mxu0 0
  %5176 = vmatpush1.bf16.msra.mxu0 %v5123
  %5177 = vmatprep.subr.bf16.mxu0 0
  %5178 = vmatpush1.bf16.msra.mxu0 %v5124
  %5179 = vmatprep.subr.bf16.mxu0 0
  %5180 = vmatpush1.bf16.msra.mxu0 %v5125
  %5181 = vmatprep.subr.bf16.mxu0 0
  %5182 = vmatpush1.bf16.msra.mxu0 %v5126
  %5183 = vmatprep.subr.bf16.mxu0 0
  %5184 = vmatpush1.bf16.msra.mxu0 %v5127
  %5185 = vmatprep.subr.bf16.mxu0 0
  %5186 = vmatpush1.bf16.msra.mxu0 %v5128
  %5187 = vmatprep.subr.bf16.mxu0 0
  %5188 = vmatpush1.bf16.msra.mxu0 %v5129
  %5189 = vmatprep.subr.bf16.mxu0 0
  %5190 = vmatpush1.bf16.msra.mxu0 %v5130
  %5191 = vmatprep.subr.bf16.mxu0 0
  %5192 = vmatpush1.bf16.msra.mxu0 %v5131
  %5193 = vmatprep.mubr.bf16.mxu0 %v4232
  %5194 = vmatmul.mubr.bf16.gmra.mrb[0].mxu0 %v4231
  %v5195 = vpop.f32.mrb[0].mxu0
  %v5196 = vadd.f32 0.0, %v5195
  %v5197 = vpop.f32.mrb[0].mxu0
  %v5198 = vpop.f32.mrb[0].mxu0
  %v5199 = vpop.f32.mrb[0].mxu0
  %5200 = vdwg.mxu0
  %5201 = vmatprep.subr.bf16.mxu0 0
  %5202 = vmatpush1.bf16.msra.mxu0 %v5132
  %5203 = vmatprep.subr.bf16.mxu0 0
  %5204 = vmatpush1.bf16.msra.mxu0 %v5133
  %5205 = vmatprep.subr.bf16.mxu0 0
  %5206 = vmatpush1.bf16.msra.mxu0 %v5134
  %5207 = vmatprep.subr.bf16.mxu0 0
  %5208 = vmatpush1.bf16.msra.mxu0 %v5135
  %5209 = vmatprep.subr.bf16.mxu0 0
  %5210 = vmatpush1.bf16.msra.mxu0 %v5136
  %5211 = vmatprep.subr.bf16.mxu0 0
  %5212 = vmatpush1.bf16.msra.mxu0 0
  %5213 = vmatprep.subr.bf16.mxu0 0
  %5214 = vmatpush1.bf16.msra.mxu0 0
  %5215 = vmatprep.subr.bf16.mxu0 0
  %5216 = vmatpush1.bf16.msra.mxu0 0
  %5217 = vmatprep.subr.bf16.mxu0 0
  %5218 = vmatpush1.bf16.msra.mxu0 0
  %5219 = vmatprep.subr.bf16.mxu0 0
  %5220 = vmatpush1.bf16.msra.mxu0 0
  %5221 = vmatprep.subr.bf16.mxu0 0
  %5222 = vmatpush1.bf16.msra.mxu0 0
  %5223 = vmatprep.subr.bf16.mxu0 0
  %5224 = vmatpush1.bf16.msra.mxu0 0
  %5225 = vmatprep.subr.bf16.mxu0 0
  %5226 = vmatpush1.bf16.msra.mxu0 0
  %5227 = vmatprep.subr.bf16.mxu0 0
  %5228 = vmatpush1.bf16.msra.mxu0 0
  %5229 = vmatprep.subr.bf16.mxu0 0
  %5230 = vmatpush1.bf16.msra.mxu0 0
  %5231 = vmatprep.subr.bf16.mxu0 0
  %5232 = vmatpush1.bf16.msra.mxu0 0
  %5233 = vmatprep.mubr.bf16.mxu0 0
  %5234 = vmatmul.mubr.bf16.gmra.mrb[0].mxu0 %v5159
  %v5235 = vpop.f32.mrb[0].mxu0
  %v5236 = vadd.f32 %v5196, %v5235
  %v5237 = vpop.f32.mrb[0].mxu0
  %v5238 = vpop.f32.mrb[0].mxu0
  %v5239 = vpop.f32.mrb[0].mxu0
  %5240 = vdwg.mxu0
  %s5241 = scalar_lea.vmem %s3, 672
  %v5242 = vld [vmem:[%s5241] sm:$0xf]
  %v5243 = vld [vmem:[%s5241 + $0x4] sm:$0xf]
  %v5244 = vld [vmem:[%s5241 + $0x8] sm:$0xf]
  %v5245 = vld [vmem:[%s5241 + $0xc] sm:$0xf]
  %v5246 = vld [vmem:[%s5241 + $0x10] sm:$0xf]
  %v5247 = vld [vmem:[%s5241 + $0x14] sm:$0xf]
  %v5248 = vld [vmem:[%s5241 + $0x18] sm:$0xf]
  %v5249 = vld [vmem:[%s5241 + $0x1c] sm:$0xf]
  %v5250 = vld [vmem:[%s5241 + $0x20] sm:$0xf]
  %v5251 = vld [vmem:[%s5241 + $0x24] sm:$0xf]
  %v5252 = vld [vmem:[%s5241 + $0x28] sm:$0xf]
  %v5253 = vld [vmem:[%s5241 + $0x2c] sm:$0xf]
  %v5254 = vld [vmem:[%s5241 + $0x30] sm:$0xf]
  %v5255 = vld [vmem:[%s5241 + $0x34] sm:$0xf]
  %v5256 = vld [vmem:[%s5241 + $0x38] sm:$0xf]
  %v5257 = vld [vmem:[%s5241 + $0x3c] sm:$0xf]
  %v5258 = vld [vmem:[%s5241 + $0x40] sm:$0xf]
  %v5259 = vld [vmem:[%s5241 + $0x44] sm:$0xf]
  %v5260 = vld [vmem:[%s5241 + $0x48] sm:$0xf]
  %v5261 = vld [vmem:[%s5241 + $0x4c] sm:$0xf]
  %v5262 = vld [vmem:[%s5241 + $0x50] sm:$0xf]
  %v5263 = vld [vmem:[%s5241 + $0x54] sm:$0xf]
  %v5264 = vld [vmem:[%s5241 + $0x58] sm:$0xf]
  %v5265 = vld [vmem:[%s5241 + $0x5c] sm:$0xf]
  %v5266 = vld [vmem:[%s5241 + $0x60] sm:$0xf]
  %v5267 = vld [vmem:[%s5241 + $0x64] sm:$0xf]
  %v5268 = vld [vmem:[%s5241 + $0x68] sm:$0xf]
  %v5269 = vld [vmem:[%s5241 + $0x6c] sm:$0xf]
  %v5270 = vld [vmem:[%s5241 + $0x70] sm:$0xf]
  %v5271 = vld [vmem:[%s5241 + $0x74] sm:$0xf]
  %v5272 = vld [vmem:[%s5241 + $0x78] sm:$0xf]
  %v5273 = vld [vmem:[%s5241 + $0x7c] sm:$0xf]
  %v5274 = vld [vmem:[%s5241 + $0x80] sm:$0xf]
  %v5275 = vld [vmem:[%s5241 + $0x84] sm:$0xf]
  %v5276 = vld [vmem:[%s5241 + $0x88] sm:$0xf]
  %v5277 = vld [vmem:[%s5241 + $0x8c] sm:$0xf]
  %v5278 = vld [vmem:[%s5241 + $0x90] sm:$0xf]
  %v5279 = vld [vmem:[%s5241 + $0x94] sm:$0xf]
  %v5280 = vld [vmem:[%s5241 + $0x98] sm:$0xf]
  %v5281 = vld [vmem:[%s5241 + $0x9c] sm:$0xf]
  %v5282 = vld [vmem:[%s5241 + $0xa0] sm:$0xf]
  %v5283 = vld [vmem:[%s5241 + $0xa4] sm:$0xf]
  %v5326 = vunpack.c.l.b16 %v5242
  %v5327 = vunpack.c.l.b16 %v5243
  %v5328 = vunpack.c.l.b16 %v5244
  %v5329 = vunpack.c.l.b16 %v5245
  %v5330 = vunpack.c.l.b16 %v5246
  %v5331 = vunpack.c.l.b16 %v5247
  %v5332 = vunpack.c.l.b16 %v5248
  %v5333 = vunpack.c.l.b16 %v5249
  %v5334 = vunpack.c.l.b16 %v5250
  %v5335 = vunpack.c.l.b16 %v5251
  %v5336 = vunpack.c.l.b16 %v5252
  %v5337 = vunpack.c.l.b16 %v5253
  %v5338 = vunpack.c.l.b16 %v5254
  %v5339 = vunpack.c.l.b16 %v5255
  %v5340 = vunpack.c.l.b16 %v5256
  %v5341 = vunpack.c.l.b16 %v5257
  %v5342 = vunpack.c.l.b16 %v5258
  %v5343 = vunpack.c.l.b16 %v5259
  %v5344 = vunpack.c.l.b16 %v5260
  %v5345 = vunpack.c.l.b16 %v5261
  %v5346 = vunpack.c.l.b16 %v5262
  %v5347 = vunpack.c.l.b16 %v5263
  %v5348 = vunpack.c.l.b16 %v5264
  %v5349 = vunpack.c.l.b16 %v5265
  %v5350 = vunpack.c.l.b16 %v5266
  %v5351 = vunpack.c.l.b16 %v5267
  %v5352 = vunpack.c.l.b16 %v5268
  %v5353 = vunpack.c.l.b16 %v5269
  %v5354 = vunpack.c.l.b16 %v5270
  %v5355 = vunpack.c.l.b16 %v5271
  %v5356 = vunpack.c.l.b16 %v5272
  %v5357 = vunpack.c.l.b16 %v5273
  %v5358 = vunpack.c.l.b16 %v5274
  %v5359 = vunpack.c.l.b16 %v5275
  %v5360 = vunpack.c.l.b16 %v5276
  %v5361 = vunpack.c.l.b16 %v5277
  %v5362 = vunpack.c.l.b16 %v5278
  %v5363 = vunpack.c.l.b16 %v5279
  %v5364 = vunpack.c.l.b16 %v5280
  %v5365 = vunpack.c.l.b16 %v5281
  %v5366 = vunpack.c.l.b16 %v5282
  %v5367 = vunpack.c.l.b16 %v5283
  %v5368 = vpack.c.b16 %v5327, %v5326
  %v5369 = vpack.c.b16 %v5329, %v5328
  %v5370 = vpack.c.b16 %v5331, %v5330
  %v5371 = vpack.c.b16 %v5333, %v5332
  %v5372 = vpack.c.b16 %v5335, %v5334
  %v5373 = vpack.c.b16 %v5337, %v5336
  %v5374 = vpack.c.b16 %v5339, %v5338
  %v5375 = vpack.c.b16 %v5341, %v5340
  %v5376 = vpack.c.b16 %v5343, %v5342
  %v5377 = vpack.c.b16 %v5345, %v5344
  %v5378 = vpack.c.b16 %v5347, %v5346
  %v5379 = vpack.c.b16 %v5349, %v5348
  %v5380 = vpack.c.b16 %v5351, %v5350
  %v5381 = vpack.c.b16 %v5353, %v5352
  %v5382 = vpack.c.b16 %v5355, %v5354
  %v5383 = vpack.c.b16 %v5357, %v5356
  %v5384 = vpack.c.b16 %v5359, %v5358
  %v5385 = vpack.c.b16 %v5361, %v5360
  %v5386 = vpack.c.b16 %v5363, %v5362
  %v5387 = vpack.c.b16 %v5365, %v5364
  %v5388 = vpack.c.b16 %v5367, %v5366
  %v5411 = vsel %vm4404, %v4234, 0
  %5413 = vmatprep.subr.bf16.mxu0 0
  %5414 = vmatpush1.bf16.msra.mxu0 %v5368
  %5415 = vmatprep.subr.bf16.mxu0 0
  %5416 = vmatpush1.bf16.msra.mxu0 %v5369
  %5417 = vmatprep.subr.bf16.mxu0 0
  %5418 = vmatpush1.bf16.msra.mxu0 %v5370
  %5419 = vmatprep.subr.bf16.mxu0 0
  %5420 = vmatpush1.bf16.msra.mxu0 %v5371
  %5421 = vmatprep.subr.bf16.mxu0 0
  %5422 = vmatpush1.bf16.msra.mxu0 %v5372
  %5423 = vmatprep.subr.bf16.mxu0 0
  %5424 = vmatpush1.bf16.msra.mxu0 %v5373
  %5425 = vmatprep.subr.bf16.mxu0 0
  %5426 = vmatpush1.bf16.msra.mxu0 %v5374
  %5427 = vmatprep.subr.bf16.mxu0 0
  %5428 = vmatpush1.bf16.msra.mxu0 %v5375
  %5429 = vmatprep.subr.bf16.mxu0 0
  %5430 = vmatpush1.bf16.msra.mxu0 %v5376
  %5431 = vmatprep.subr.bf16.mxu0 0
  %5432 = vmatpush1.bf16.msra.mxu0 %v5377
  %5433 = vmatprep.subr.bf16.mxu0 0
  %5434 = vmatpush1.bf16.msra.mxu0 %v5378
  %5435 = vmatprep.subr.bf16.mxu0 0
  %5436 = vmatpush1.bf16.msra.mxu0 %v5379
  %5437 = vmatprep.subr.bf16.mxu0 0
  %5438 = vmatpush1.bf16.msra.mxu0 %v5380
  %5439 = vmatprep.subr.bf16.mxu0 0
  %5440 = vmatpush1.bf16.msra.mxu0 %v5381
  %5441 = vmatprep.subr.bf16.mxu0 0
  %5442 = vmatpush1.bf16.msra.mxu0 %v5382
  %5443 = vmatprep.subr.bf16.mxu0 0
  %5444 = vmatpush1.bf16.msra.mxu0 %v5383
  %5445 = vmatprep.mubr.bf16.mxu0 %v4233
  %5446 = vmatmul.mubr.bf16.gmra.mrb[0].mxu0 %v4232
  %v5447 = vpop.f32.mrb[0].mxu0
  %v5448 = vadd.f32 0.0, %v5447
  %v5449 = vpop.f32.mrb[0].mxu0
  %v5450 = vpop.f32.mrb[0].mxu0
  %v5451 = vpop.f32.mrb[0].mxu0
  %5452 = vdwg.mxu0
  %5453 = vmatprep.subr.bf16.mxu0 0
  %5454 = vmatpush1.bf16.msra.mxu0 %v5384
  %5455 = vmatprep.subr.bf16.mxu0 0
  %5456 = vmatpush1.bf16.msra.mxu0 %v5385
  %5457 = vmatprep.subr.bf16.mxu0 0
  %5458 = vmatpush1.bf16.msra.mxu0 %v5386
  %5459 = vmatprep.subr.bf16.mxu0 0
  %5460 = vmatpush1.bf16.msra.mxu0 %v5387
  %5461 = vmatprep.subr.bf16.mxu0 0
  %5462 = vmatpush1.bf16.msra.mxu0 %v5388
  %5463 = vmatprep.subr.bf16.mxu0 0
  %5464 = vmatpush1.bf16.msra.mxu0 0
  %5465 = vmatprep.subr.bf16.mxu0 0
  %5466 = vmatpush1.bf16.msra.mxu0 0
  %5467 = vmatprep.subr.bf16.mxu0 0
  %5468 = vmatpush1.bf16.msra.mxu0 0
  %5469 = vmatprep.subr.bf16.mxu0 0
  %5470 = vmatpush1.bf16.msra.mxu0 0
  %5471 = vmatprep.subr.bf16.mxu0 0
  %5472 = vmatpush1.bf16.msra.mxu0 0
  %5473 = vmatprep.subr.bf16.mxu0 0
  %5474 = vmatpush1.bf16.msra.mxu0 0
  %5475 = vmatprep.subr.bf16.mxu0 0
  %5476 = vmatpush1.bf16.msra.mxu0 0
  %5477 = vmatprep.subr.bf16.mxu0 0
  %5478 = vmatpush1.bf16.msra.mxu0 0
  %5479 = vmatprep.subr.bf16.mxu0 0
  %5480 = vmatpush1.bf16.msra.mxu0 0
  %5481 = vmatprep.subr.bf16.mxu0 0
  %5482 = vmatpush1.bf16.msra.mxu0 0
  %5483 = vmatprep.subr.bf16.mxu0 0
  %5484 = vmatpush1.bf16.msra.mxu0 0
  %5485 = vmatprep.mubr.bf16.mxu0 0
  %5486 = vmatmul.mubr.bf16.gmra.mrb[0].mxu0 %v5411
  %v5487 = vpop.f32.mrb[0].mxu0
  %v5488 = vadd.f32 %v5448, %v5487
  %v5489 = vpop.f32.mrb[0].mxu0
  %v5490 = vpop.f32.mrb[0].mxu0
  %v5491 = vpop.f32.mrb[0].mxu0
  %5492 = vdwg.mxu0
  %s5493 = scalar_lea.vmem %s3, 840
  %v5494 = vld [vmem:[%s5493] sm:$0xf]
  %v5495 = vld [vmem:[%s5493 + $0x4] sm:$0xf]
  %v5496 = vld [vmem:[%s5493 + $0x8] sm:$0xf]
  %v5497 = vld [vmem:[%s5493 + $0xc] sm:$0xf]
  %v5498 = vld [vmem:[%s5493 + $0x10] sm:$0xf]
  %v5499 = vld [vmem:[%s5493 + $0x14] sm:$0xf]
  %v5500 = vld [vmem:[%s5493 + $0x18] sm:$0xf]
  %v5501 = vld [vmem:[%s5493 + $0x1c] sm:$0xf]
  %v5502 = vld [vmem:[%s5493 + $0x20] sm:$0xf]
  %v5503 = vld [vmem:[%s5493 + $0x24] sm:$0xf]
  %v5504 = vld [vmem:[%s5493 + $0x28] sm:$0xf]
  %v5505 = vld [vmem:[%s5493 + $0x2c] sm:$0xf]
  %v5506 = vld [vmem:[%s5493 + $0x30] sm:$0xf]
  %v5507 = vld [vmem:[%s5493 + $0x34] sm:$0xf]
  %v5508 = vld [vmem:[%s5493 + $0x38] sm:$0xf]
  %v5509 = vld [vmem:[%s5493 + $0x3c] sm:$0xf]
  %v5510 = vld [vmem:[%s5493 + $0x40] sm:$0xf]
  %v5511 = vld [vmem:[%s5493 + $0x44] sm:$0xf]
  %v5512 = vld [vmem:[%s5493 + $0x48] sm:$0xf]
  %v5513 = vld [vmem:[%s5493 + $0x4c] sm:$0xf]
  %v5514 = vld [vmem:[%s5493 + $0x50] sm:$0xf]
  %v5515 = vld [vmem:[%s5493 + $0x54] sm:$0xf]
  %v5516 = vld [vmem:[%s5493 + $0x58] sm:$0xf]
  %v5517 = vld [vmem:[%s5493 + $0x5c] sm:$0xf]
  %v5518 = vld [vmem:[%s5493 + $0x60] sm:$0xf]
  %v5519 = vld [vmem:[%s5493 + $0x64] sm:$0xf]
  %v5520 = vld [vmem:[%s5493 + $0x68] sm:$0xf]
  %v5521 = vld [vmem:[%s5493 + $0x6c] sm:$0xf]
  %v5522 = vld [vmem:[%s5493 + $0x70] sm:$0xf]
  %v5523 = vld [vmem:[%s5493 + $0x74] sm:$0xf]
  %v5524 = vld [vmem:[%s5493 + $0x78] sm:$0xf]
  %v5525 = vld [vmem:[%s5493 + $0x7c] sm:$0xf]
  %v5526 = vld [vmem:[%s5493 + $0x80] sm:$0xf]
  %v5527 = vld [vmem:[%s5493 + $0x84] sm:$0xf]
  %v5528 = vld [vmem:[%s5493 + $0x88] sm:$0xf]
  %v5529 = vld [vmem:[%s5493 + $0x8c] sm:$0xf]
  %v5530 = vld [vmem:[%s5493 + $0x90] sm:$0xf]
  %v5531 = vld [vmem:[%s5493 + $0x94] sm:$0xf]
  %v5532 = vld [vmem:[%s5493 + $0x98] sm:$0xf]
  %v5533 = vld [vmem:[%s5493 + $0x9c] sm:$0xf]
  %v5534 = vld [vmem:[%s5493 + $0xa0] sm:$0xf]
  %v5535 = vld [vmem:[%s5493 + $0xa4] sm:$0xf]
  %v5578 = vunpack.c.l.b16 %v5494
  %v5579 = vunpack.c.l.b16 %v5495
  %v5580 = vunpack.c.l.b16 %v5496
  %v5581 = vunpack.c.l.b16 %v5497
  %v5582 = vunpack.c.l.b16 %v5498
  %v5583 = vunpack.c.l.b16 %v5499
  %v5584 = vunpack.c.l.b16 %v5500
  %v5585 = vunpack.c.l.b16 %v5501
  %v5586 = vunpack.c.l.b16 %v5502
  %v5587 = vunpack.c.l.b16 %v5503
  %v5588 = vunpack.c.l.b16 %v5504
  %v5589 = vunpack.c.l.b16 %v5505
  %v5590 = vunpack.c.l.b16 %v5506
  %v5591 = vunpack.c.l.b16 %v5507
  %v5592 = vunpack.c.l.b16 %v5508
  %v5593 = vunpack.c.l.b16 %v5509
  %v5594 = vunpack.c.l.b16 %v5510
  %v5595 = vunpack.c.l.b16 %v5511
  %v5596 = vunpack.c.l.b16 %v5512
  %v5597 = vunpack.c.l.b16 %v5513
  %v5598 = vunpack.c.l.b16 %v5514
  %v5599 = vunpack.c.l.b16 %v5515
  %v5600 = vunpack.c.l.b16 %v5516
  %v5601 = vunpack.c.l.b16 %v5517
  %v5602 = vunpack.c.l.b16 %v5518
  %v5603 = vunpack.c.l.b16 %v5519
  %v5604 = vunpack.c.l.b16 %v5520
  %v5605 = vunpack.c.l.b16 %v5521
  %v5606 = vunpack.c.l.b16 %v5522
  %v5607 = vunpack.c.l.b16 %v5523
  %v5608 = vunpack.c.l.b16 %v5524
  %v5609 = vunpack.c.l.b16 %v5525
  %v5610 = vunpack.c.l.b16 %v5526
  %v5611 = vunpack.c.l.b16 %v5527
  %v5612 = vunpack.c.l.b16 %v5528
  %v5613 = vunpack.c.l.b16 %v5529
  %v5614 = vunpack.c.l.b16 %v5530
  %v5615 = vunpack.c.l.b16 %v5531
  %v5616 = vunpack.c.l.b16 %v5532
  %v5617 = vunpack.c.l.b16 %v5533
  %v5618 = vunpack.c.l.b16 %v5534
  %v5619 = vunpack.c.l.b16 %v5535
  %v5620 = vpack.c.b16 %v5579, %v5578
  %v5621 = vpack.c.b16 %v5581, %v5580
  %v5622 = vpack.c.b16 %v5583, %v5582
  %v5623 = vpack.c.b16 %v5585, %v5584
  %v5624 = vpack.c.b16 %v5587, %v5586
  %v5625 = vpack.c.b16 %v5589, %v5588
  %v5626 = vpack.c.b16 %v5591, %v5590
  %v5627 = vpack.c.b16 %v5593, %v5592
  %v5628 = vpack.c.b16 %v5595, %v5594
  %v5629 = vpack.c.b16 %v5597, %v5596
  %v5630 = vpack.c.b16 %v5599, %v5598
  %v5631 = vpack.c.b16 %v5601, %v5600
  %v5632 = vpack.c.b16 %v5603, %v5602
  %v5633 = vpack.c.b16 %v5605, %v5604
  %v5634 = vpack.c.b16 %v5607, %v5606
  %v5635 = vpack.c.b16 %v5609, %v5608
  %v5636 = vpack.c.b16 %v5611, %v5610
  %v5637 = vpack.c.b16 %v5613, %v5612
  %v5638 = vpack.c.b16 %v5615, %v5614
  %v5639 = vpack.c.b16 %v5617, %v5616
  %v5640 = vpack.c.b16 %v5619, %v5618
  %v5663 = vsel %vm4404, %v4235, 0
  %5665 = vmatprep.subr.bf16.mxu0 0
  %5666 = vmatpush1.bf16.msra.mxu0 %v5620
  %5667 = vmatprep.subr.bf16.mxu0 0
  %5668 = vmatpush1.bf16.msra.mxu0 %v5621
  %5669 = vmatprep.subr.bf16.mxu0 0
  %5670 = vmatpush1.bf16.msra.mxu0 %v5622
  %5671 = vmatprep.subr.bf16.mxu0 0
  %5672 = vmatpush1.bf16.msra.mxu0 %v5623
  %5673 = vmatprep.subr.bf16.mxu0 0
  %5674 = vmatpush1.bf16.msra.mxu0 %v5624
  %5675 = vmatprep.subr.bf16.mxu0 0
  %5676 = vmatpush1.bf16.msra.mxu0 %v5625
  %5677 = vmatprep.subr.bf16.mxu0 0
  %5678 = vmatpush1.bf16.msra.mxu0 %v5626
  %5679 = vmatprep.subr.bf16.mxu0 0
  %5680 = vmatpush1.bf16.msra.mxu0 %v5627
  %5681 = vmatprep.subr.bf16.mxu0 0
  %5682 = vmatpush1.bf16.msra.mxu0 %v5628
  %5683 = vmatprep.subr.bf16.mxu0 0
  %5684 = vmatpush1.bf16.msra.mxu0 %v5629
  %5685 = vmatprep.subr.bf16.mxu0 0
  %5686 = vmatpush1.bf16.msra.mxu0 %v5630
  %5687 = vmatprep.subr.bf16.mxu0 0
  %5688 = vmatpush1.bf16.msra.mxu0 %v5631
  %5689 = vmatprep.subr.bf16.mxu0 0
  %5690 = vmatpush1.bf16.msra.mxu0 %v5632
  %5691 = vmatprep.subr.bf16.mxu0 0
  %5692 = vmatpush1.bf16.msra.mxu0 %v5633
  %5693 = vmatprep.subr.bf16.mxu0 0
  %5694 = vmatpush1.bf16.msra.mxu0 %v5634
  %5695 = vmatprep.subr.bf16.mxu0 0
  %5696 = vmatpush1.bf16.msra.mxu0 %v5635
  %5697 = vmatprep.mubr.bf16.mxu0 %v4234
  %5698 = vmatmul.mubr.bf16.gmra.mrb[0].mxu0 %v4233
  %v5699 = vpop.f32.mrb[0].mxu0
  %v5700 = vadd.f32 0.0, %v5699
  %v5701 = vpop.f32.mrb[0].mxu0
  %v5702 = vpop.f32.mrb[0].mxu0
  %v5703 = vpop.f32.mrb[0].mxu0
  %5704 = vdwg.mxu0
  %5705 = vmatprep.subr.bf16.mxu0 0
  %5706 = vmatpush1.bf16.msra.mxu0 %v5636
  %5707 = vmatprep.subr.bf16.mxu0 0
  %5708 = vmatpush1.bf16.msra.mxu0 %v5637
  %5709 = vmatprep.subr.bf16.mxu0 0
  %5710 = vmatpush1.bf16.msra.mxu0 %v5638
  %5711 = vmatprep.subr.bf16.mxu0 0
  %5712 = vmatpush1.bf16.msra.mxu0 %v5639
  %5713 = vmatprep.subr.bf16.mxu0 0
  %5714 = vmatpush1.bf16.msra.mxu0 %v5640
  %5715 = vmatprep.subr.bf16.mxu0 0
  %5716 = vmatpush1.bf16.msra.mxu0 0
  %5717 = vmatprep.subr.bf16.mxu0 0
  %5718 = vmatpush1.bf16.msra.mxu0 0
  %5719 = vmatprep.subr.bf16.mxu0 0
  %5720 = vmatpush1.bf16.msra.mxu0 0
  %5721 = vmatprep.subr.bf16.mxu0 0
  %5722 = vmatpush1.bf16.msra.mxu0 0
  %5723 = vmatprep.subr.bf16.mxu0 0
  %5724 = vmatpush1.bf16.msra.mxu0 0
  %5725 = vmatprep.subr.bf16.mxu0 0
  %5726 = vmatpush1.bf16.msra.mxu0 0
  %5727 = vmatprep.subr.bf16.mxu0 0
  %5728 = vmatpush1.bf16.msra.mxu0 0
  %5729 = vmatprep.subr.bf16.mxu0 0
  %5730 = vmatpush1.bf16.msra.mxu0 0
  %5731 = vmatprep.subr.bf16.mxu0 0
  %5732 = vmatpush1.bf16.msra.mxu0 0
  %5733 = vmatprep.subr.bf16.mxu0 0
  %5734 = vmatpush1.bf16.msra.mxu0 0
  %5735 = vmatprep.subr.bf16.mxu0 0
  %5736 = vmatpush1.bf16.msra.mxu0 0
  %5737 = vmatprep.mubr.bf16.mxu0 0
  %5738 = vmatmul.mubr.bf16.gmra.mrb[0].mxu0 %v5663
  %v5739 = vpop.f32.mrb[0].mxu0
  %v5740 = vadd.f32 %v5700, %v5739
  %v5741 = vpop.f32.mrb[0].mxu0
  %v5742 = vpop.f32.mrb[0].mxu0
  %v5743 = vpop.f32.mrb[0].mxu0
  %5744 = vdwg.mxu0
  %v5745 = vld [vmem:[%s4] sm:$0x3f]
  %v5747 = vlaneseq
  %v5748 = vshrl.u32 %v5747, 7
  %v5749 = vsub.s32 0, %v5748
  %v5750 = vrot.slane %v5745, %v5749
  %v5751 = vlaneseq
  %v5752 = vshrl.u32 %v5751, 7
  %v5753 = vsub.s32 1, %v5752
  %v5754 = vrot.slane %v5745, %v5753
  %v5755 = vlaneseq
  %v5756 = vshrl.u32 %v5755, 7
  %v5757 = vsub.s32 2, %v5756
  %v5758 = vrot.slane %v5745, %v5757
  %v5759 = vlaneseq
  %v5760 = vshrl.u32 %v5759, 7
  %v5761 = vsub.s32 3, %v5760
  %v5762 = vrot.slane %v5745, %v5761
  %v5763 = vlaneseq
  %v5764 = vshrl.u32 %v5763, 7
  %v5765 = vsub.s32 4, %v5764
  %v5766 = vrot.slane %v5745, %v5765
  %v5767 = vlaneseq
  %v5768 = vshrl.u32 %v5767, 7
  %v5769 = vsub.s32 5, %v5768
  %v5770 = vrot.slane %v5745, %v5769
  %v5777 = vadd.f32 %v4483, %v5750
  %v5778 = vadd.f32 %v4732, %v5754
  %v5779 = vadd.f32 %v4984, %v5758
  %v5780 = vadd.f32 %v5236, %v5762
  %v5781 = vadd.f32 %v5488, %v5766
  %v5782 = vadd.f32 %v5740, %v5770
  %v5783 = vmul.f32 %v5777, 0.01
  %v5784 = vmul.f32 %v5778, 0.01
  %v5785 = vmul.f32 %v5779, 0.01
  %v5786 = vmul.f32 %v5780, 0.01
  %v5787 = vmul.f32 %v5781, 0.01
  %v5788 = vmul.f32 %v5782, 0.01
  %v5789 = vmax.f32 %v5777, %v5783
  %v5790 = vmax.f32 %v5778, %v5784
  %v5791 = vmax.f32 %v5779, %v5785
  %v5792 = vmax.f32 %v5780, %v5786
  %v5793 = vmax.f32 %v5781, %v5787
  %v5794 = vmax.f32 %v5782, %v5788
  %v5795 = vpack.c.bf16 %v5789, %v5789
  %v5796 = vpack.c.bf16 %v5790, %v5790
  %v5797 = vpack.c.bf16 %v5791, %v5791
  %v5798 = vpack.c.bf16 %v5792, %v5792
  %v5799 = vpack.c.bf16 %v5793, %v5793
  %v5800 = vpack.c.bf16 %v5794, %v5794
  %v5801 = vld [vmem:[%s5] sm:$0xf]
  %v5802 = vld [vmem:[%s5 + $0x4] sm:$0xf]
  %v5803 = vld [vmem:[%s5 + $0x8] sm:$0xf]
  %v5804 = vld [vmem:[%s5 + $0xc] sm:$0xf]
  %v5805 = vld [vmem:[%s5 + $0x10] sm:$0xf]
  %v5806 = vld [vmem:[%s5 + $0x14] sm:$0xf]
  %v5807 = vld [vmem:[%s5 + $0x18] sm:$0xf]
  %v5808 = vld [vmem:[%s5 + $0x1c] sm:$0xf]
  %v5809 = vld [vmem:[%s5 + $0x20] sm:$0xf]
  %v5810 = vld [vmem:[%s5 + $0x24] sm:$0xf]
  %v5811 = vld [vmem:[%s5 + $0x28] sm:$0xf]
  %v5812 = vld [vmem:[%s5 + $0x2c] sm:$0xf]
  %v5813 = vld [vmem:[%s5 + $0x30] sm:$0xf]
  %v5814 = vld [vmem:[%s5 + $0x34] sm:$0xf]
  %v5815 = vld [vmem:[%s5 + $0x38] sm:$0xf]
  %v5816 = vld [vmem:[%s5 + $0x3c] sm:$0xf]
  %v5817 = vld [vmem:[%s5 + $0x40] sm:$0xf]
  %v5818 = vld [vmem:[%s5 + $0x44] sm:$0xf]
  %v5819 = vld [vmem:[%s5 + $0x48] sm:$0xf]
  %v5820 = vld [vmem:[%s5 + $0x4c] sm:$0xf]
  %v5821 = vld [vmem:[%s5 + $0x50] sm:$0xf]
  %v5822 = vld [vmem:[%s5 + $0x54] sm:$0xf]
  %v5823 = vld [vmem:[%s5 + $0x58] sm:$0xf]
  %v5824 = vld [vmem:[%s5 + $0x5c] sm:$0xf]
  %v5825 = vld [vmem:[%s5 + $0x60] sm:$0xf]
  %v5826 = vld [vmem:[%s5 + $0x64] sm:$0xf]
  %v5827 = vld [vmem:[%s5 + $0x68] sm:$0xf]
  %v5828 = vld [vmem:[%s5 + $0x6c] sm:$0xf]
  %v5829 = vld [vmem:[%s5 + $0x70] sm:$0xf]
  %v5830 = vld [vmem:[%s5 + $0x74] sm:$0xf]
  %v5831 = vld [vmem:[%s5 + $0x78] sm:$0xf]
  %v5832 = vld [vmem:[%s5 + $0x7c] sm:$0xf]
  %v5833 = vld [vmem:[%s5 + $0x80] sm:$0xf]
  %v5834 = vld [vmem:[%s5 + $0x84] sm:$0xf]
  %v5835 = vld [vmem:[%s5 + $0x88] sm:$0xf]
  %v5836 = vld [vmem:[%s5 + $0x8c] sm:$0xf]
  %v5837 = vld [vmem:[%s5 + $0x90] sm:$0xf]
  %v5838 = vld [vmem:[%s5 + $0x94] sm:$0xf]
  %v5839 = vld [vmem:[%s5 + $0x98] sm:$0xf]
  %v5840 = vld [vmem:[%s5 + $0x9c] sm:$0xf]
  %v5841 = vld [vmem:[%s5 + $0xa0] sm:$0xf]
  %v5883 = vunpack.c.l.b16 %v5801
  %v5884 = vunpack.c.l.b16 %v5802
  %v5885 = vunpack.c.l.b16 %v5803
  %v5886 = vunpack.c.l.b16 %v5804
  %v5887 = vunpack.c.l.b16 %v5805
  %v5888 = vunpack.c.l.b16 %v5806
  %v5889 = vunpack.c.l.b16 %v5807
  %v5890 = vunpack.c.l.b16 %v5808
  %v5891 = vunpack.c.l.b16 %v5809
  %v5892 = vunpack.c.l.b16 %v5810
  %v5893 = vunpack.c.l.b16 %v5811
  %v5894 = vunpack.c.l.b16 %v5812
  %v5895 = vunpack.c.l.b16 %v5813
  %v5896 = vunpack.c.l.b16 %v5814
  %v5897 = vunpack.c.l.b16 %v5815
  %v5898 = vunpack.c.l.b16 %v5816
  %v5899 = vunpack.c.l.b16 %v5817
  %v5900 = vunpack.c.l.b16 %v5818
  %v5901 = vunpack.c.l.b16 %v5819
  %v5902 = vunpack.c.l.b16 %v5820
  %v5903 = vunpack.c.l.b16 %v5821
  %v5904 = vunpack.c.l.b16 %v5822
  %v5905 = vunpack.c.l.b16 %v5823
  %v5906 = vunpack.c.l.b16 %v5824
  %v5907 = vunpack.c.l.b16 %v5825
  %v5908 = vunpack.c.l.b16 %v5826
  %v5909 = vunpack.c.l.b16 %v5827
  %v5910 = vunpack.c.l.b16 %v5828
  %v5911 = vunpack.c.l.b16 %v5829
  %v5912 = vunpack.c.l.b16 %v5830
  %v5913 = vunpack.c.l.b16 %v5831
  %v5914 = vunpack.c.l.b16 %v5832
  %v5915 = vunpack.c.l.b16 %v5833
  %v5916 = vunpack.c.l.b16 %v5834
  %v5917 = vunpack.c.l.b16 %v5835
  %v5918 = vunpack.c.l.b16 %v5836
  %v5919 = vunpack.c.l.b16 %v5837
  %v5920 = vunpack.c.l.b16 %v5838
  %v5921 = vunpack.c.l.b16 %v5839
  %v5922 = vunpack.c.l.b16 %v5840
  %v5923 = vunpack.c.l.b16 %v5841
  %v5924 = vpack.c.b16 %v5884, %v5883
  %v5925 = vpack.c.b16 %v5886, %v5885
  %v5926 = vpack.c.b16 %v5888, %v5887
  %v5927 = vpack.c.b16 %v5890, %v5889
  %v5928 = vpack.c.b16 %v5892, %v5891
  %v5929 = vpack.c.b16 %v5894, %v5893
  %v5930 = vpack.c.b16 %v5896, %v5895
  %v5931 = vpack.c.b16 %v5898, %v5897
  %v5932 = vpack.c.b16 %v5900, %v5899
  %v5933 = vpack.c.b16 %v5902, %v5901
  %v5934 = vpack.c.b16 %v5904, %v5903
  %v5935 = vpack.c.b16 %v5906, %v5905
  %v5936 = vpack.c.b16 %v5908, %v5907
  %v5937 = vpack.c.b16 %v5910, %v5909
  %v5938 = vpack.c.b16 %v5912, %v5911
  %v5939 = vpack.c.b16 %v5914, %v5913
  %v5940 = vpack.c.b16 %v5916, %v5915
  %v5941 = vpack.c.b16 %v5918, %v5917
  %v5942 = vpack.c.b16 %v5920, %v5919
  %v5943 = vpack.c.b16 %v5922, %v5921
  %v5944 = vpack.c.b16 %v5923, %v5923
  %vm5965 = vcmask 588800
  %v5967 = vsel %vm5965, %v5797, 0
  %vm5969 = vcmask 1043456
  %v5971 = vsel %vm5969, %v5944, 0
  %5973 = vmatprep.subr.bf16.mxu0 0
  %5974 = vmatpush1.bf16.msra.mxu0 %v5924
  %5975 = vmatprep.subr.bf16.mxu0 0
  %5976 = vmatpush1.bf16.msra.mxu0 %v5925
  %5977 = vmatprep.subr.bf16.mxu0 0
  %5978 = vmatpush1.bf16.msra.mxu0 %v5926
  %5979 = vmatprep.subr.bf16.mxu0 0
  %5980 = vmatpush1.bf16.msra.mxu0 %v5927
  %5981 = vmatprep.subr.bf16.mxu0 0
  %5982 = vmatpush1.bf16.msra.mxu0 %v5928
  %5983 = vmatprep.subr.bf16.mxu0 0
  %5984 = vmatpush1.bf16.msra.mxu0 %v5929
  %5985 = vmatprep.subr.bf16.mxu0 0
  %5986 = vmatpush1.bf16.msra.mxu0 %v5930
  %5987 = vmatprep.subr.bf16.mxu0 0
  %5988 = vmatpush1.bf16.msra.mxu0 %v5931
  %5989 = vmatprep.subr.bf16.mxu0 0
  %5990 = vmatpush1.bf16.msra.mxu0 %v5932
  %5991 = vmatprep.subr.bf16.mxu0 0
  %5992 = vmatpush1.bf16.msra.mxu0 %v5933
  %5993 = vmatprep.subr.bf16.mxu0 0
  %5994 = vmatpush1.bf16.msra.mxu0 %v5934
  %5995 = vmatprep.subr.bf16.mxu0 0
  %5996 = vmatpush1.bf16.msra.mxu0 %v5935
  %5997 = vmatprep.subr.bf16.mxu0 0
  %5998 = vmatpush1.bf16.msra.mxu0 %v5936
  %5999 = vmatprep.subr.bf16.mxu0 0
  %6000 = vmatpush1.bf16.msra.mxu0 %v5937
  %6001 = vmatprep.subr.bf16.mxu0 0
  %6002 = vmatpush1.bf16.msra.mxu0 %v5938
  %6003 = vmatprep.subr.bf16.mxu0 0
  %6004 = vmatpush1.bf16.msra.mxu0 %v5939
  %6005 = vmatprep.mubr.bf16.mxu0 %v5796
  %6006 = vmatmul.mubr.bf16.gmra.mrb[0].mxu0 %v5795
  %v6007 = vpop.f32.mrb[0].mxu0
  %v6008 = vadd.f32 0.0, %v6007
  %v6009 = vpop.f32.mrb[0].mxu0
  %v6010 = vpop.f32.mrb[0].mxu0
  %v6011 = vpop.f32.mrb[0].mxu0
  %6012 = vdwg.mxu0
  %6013 = vmatprep.subr.bf16.mxu0 0
  %6014 = vmatpush1.bf16.msra.mxu0 %v5940
  %6015 = vmatprep.subr.bf16.mxu0 0
  %6016 = vmatpush1.bf16.msra.mxu0 %v5941
  %6017 = vmatprep.subr.bf16.mxu0 0
  %6018 = vmatpush1.bf16.msra.mxu0 %v5942
  %6019 = vmatprep.subr.bf16.mxu0 0
  %6020 = vmatpush1.bf16.msra.mxu0 %v5943
  %6021 = vmatprep.subr.bf16.mxu0 0
  %6022 = vmatpush1.bf16.msra.mxu0 %v5971
  %6023 = vmatprep.subr.bf16.mxu0 0
  %6024 = vmatpush1.bf16.msra.mxu0 0
  %6025 = vmatprep.subr.bf16.mxu0 0
  %6026 = vmatpush1.bf16.msra.mxu0 0
  %6027 = vmatprep.subr.bf16.mxu0 0
  %6028 = vmatpush1.bf16.msra.mxu0 0
  %6029 = vmatprep.subr.bf16.mxu0 0
  %6030 = vmatpush1.bf16.msra.mxu0 0
  %6031 = vmatprep.subr.bf16.mxu0 0
  %6032 = vmatpush1.bf16.msra.mxu0 0
  %6033 = vmatprep.subr.bf16.mxu0 0
  %6034 = vmatpush1.bf16.msra.mxu0 0
  %6035 = vmatprep.subr.bf16.mxu0 0
  %6036 = vmatpush1.bf16.msra.mxu0 0
  %6037 = vmatprep.subr.bf16.mxu0 0
  %6038 = vmatpush1.bf16.msra.mxu0 0
  %6039 = vmatprep.subr.bf16.mxu0 0
  %6040 = vmatpush1.bf16.msra.mxu0 0
  %6041 = vmatprep.subr.bf16.mxu0 0
  %6042 = vmatpush1.bf16.msra.mxu0 0
  %6043 = vmatprep.subr.bf16.mxu0 0
  %6044 = vmatpush1.bf16.msra.mxu0 0
  %6045 = vmatprep.mubr.bf16.mxu0 0
  %6046 = vmatmul.mubr.bf16.gmra.mrb[0].mxu0 %v5967
  %v6047 = vpop.f32.mrb[0].mxu0
  %v6048 = vadd.f32 %v6008, %v6047
  %v6049 = vpop.f32.mrb[0].mxu0
  %v6050 = vpop.f32.mrb[0].mxu0
  %v6051 = vpop.f32.mrb[0].mxu0
  %6052 = vdwg.mxu0
  %s6053 = scalar_lea.vmem %s5, 164
  %v6054 = vld [vmem:[%s6053] sm:$0xf]
  %v6055 = vld [vmem:[%s6053 + $0x4] sm:$0xf]
  %v6056 = vld [vmem:[%s6053 + $0x8] sm:$0xf]
  %v6057 = vld [vmem:[%s6053 + $0xc] sm:$0xf]
  %v6058 = vld [vmem:[%s6053 + $0x10] sm:$0xf]
  %v6059 = vld [vmem:[%s6053 + $0x14] sm:$0xf]
  %v6060 = vld [vmem:[%s6053 + $0x18] sm:$0xf]
  %v6061 = vld [vmem:[%s6053 + $0x1c] sm:$0xf]
  %v6062 = vld [vmem:[%s6053 + $0x20] sm:$0xf]
  %v6063 = vld [vmem:[%s6053 + $0x24] sm:$0xf]
  %v6064 = vld [vmem:[%s6053 + $0x28] sm:$0xf]
  %v6065 = vld [vmem:[%s6053 + $0x2c] sm:$0xf]
  %v6066 = vld [vmem:[%s6053 + $0x30] sm:$0xf]
  %v6067 = vld [vmem:[%s6053 + $0x34] sm:$0xf]
  %v6068 = vld [vmem:[%s6053 + $0x38] sm:$0xf]
  %v6069 = vld [vmem:[%s6053 + $0x3c] sm:$0xf]
  %v6070 = vld [vmem:[%s6053 + $0x40] sm:$0xf]
  %v6071 = vld [vmem:[%s6053 + $0x44] sm:$0xf]
  %v6072 = vld [vmem:[%s6053 + $0x48] sm:$0xf]
  %v6073 = vld [vmem:[%s6053 + $0x4c] sm:$0xf]
  %v6074 = vld [vmem:[%s6053 + $0x50] sm:$0xf]
  %v6075 = vld [vmem:[%s6053 + $0x54] sm:$0xf]
  %v6076 = vld [vmem:[%s6053 + $0x58] sm:$0xf]
  %v6077 = vld [vmem:[%s6053 + $0x5c] sm:$0xf]
  %v6078 = vld [vmem:[%s6053 + $0x60] sm:$0xf]
  %v6079 = vld [vmem:[%s6053 + $0x64] sm:$0xf]
  %v6080 = vld [vmem:[%s6053 + $0x68] sm:$0xf]
  %v6081 = vld [vmem:[%s6053 + $0x6c] sm:$0xf]
  %v6082 = vld [vmem:[%s6053 + $0x70] sm:$0xf]
  %v6083 = vld [vmem:[%s6053 + $0x74] sm:$0xf]
  %v6084 = vld [vmem:[%s6053 + $0x78] sm:$0xf]
  %v6085 = vld [vmem:[%s6053 + $0x7c] sm:$0xf]
  %v6086 = vld [vmem:[%s6053 + $0x80] sm:$0xf]
  %v6087 = vld [vmem:[%s6053 + $0x84] sm:$0xf]
  %v6088 = vld [vmem:[%s6053 + $0x88] sm:$0xf]
  %v6089 = vld [vmem:[%s6053 + $0x8c] sm:$0xf]
  %v6090 = vld [vmem:[%s6053 + $0x90] sm:$0xf]
  %v6091 = vld [vmem:[%s6053 + $0x94] sm:$0xf]
  %v6092 = vld [vmem:[%s6053 + $0x98] sm:$0xf]
  %v6093 = vld [vmem:[%s6053 + $0x9c] sm:$0xf]
  %v6094 = vld [vmem:[%s6053 + $0xa0] sm:$0xf]
  %v6136 = vunpack.c.l.b16 %v6054
  %v6137 = vunpack.c.l.b16 %v6055
  %v6138 = vunpack.c.l.b16 %v6056
  %v6139 = vunpack.c.l.b16 %v6057
  %v6140 = vunpack.c.l.b16 %v6058
  %v6141 = vunpack.c.l.b16 %v6059
  %v6142 = vunpack.c.l.b16 %v6060
  %v6143 = vunpack.c.l.b16 %v6061
  %v6144 = vunpack.c.l.b16 %v6062
  %v6145 = vunpack.c.l.b16 %v6063
  %v6146 = vunpack.c.l.b16 %v6064
  %v6147 = vunpack.c.l.b16 %v6065
  %v6148 = vunpack.c.l.b16 %v6066
  %v6149 = vunpack.c.l.b16 %v6067
  %v6150 = vunpack.c.l.b16 %v6068
  %v6151 = vunpack.c.l.b16 %v6069
  %v6152 = vunpack.c.l.b16 %v6070
  %v6153 = vunpack.c.l.b16 %v6071
  %v6154 = vunpack.c.l.b16 %v6072
  %v6155 = vunpack.c.l.b16 %v6073
  %v6156 = vunpack.c.l.b16 %v6074
  %v6157 = vunpack.c.l.b16 %v6075
  %v6158 = vunpack.c.l.b16 %v6076
  %v6159 = vunpack.c.l.b16 %v6077
  %v6160 = vunpack.c.l.b16 %v6078
  %v6161 = vunpack.c.l.b16 %v6079
  %v6162 = vunpack.c.l.b16 %v6080
  %v6163 = vunpack.c.l.b16 %v6081
  %v6164 = vunpack.c.l.b16 %v6082
  %v6165 = vunpack.c.l.b16 %v6083
  %v6166 = vunpack.c.l.b16 %v6084
  %v6167 = vunpack.c.l.b16 %v6085
  %v6168 = vunpack.c.l.b16 %v6086
  %v6169 = vunpack.c.l.b16 %v6087
  %v6170 = vunpack.c.l.b16 %v6088
  %v6171 = vunpack.c.l.b16 %v6089
  %v6172 = vunpack.c.l.b16 %v6090
  %v6173 = vunpack.c.l.b16 %v6091
  %v6174 = vunpack.c.l.b16 %v6092
  %v6175 = vunpack.c.l.b16 %v6093
  %v6176 = vunpack.c.l.b16 %v6094
  %v6177 = vpack.c.b16 %v6137, %v6136
  %v6178 = vpack.c.b16 %v6139, %v6138
  %v6179 = vpack.c.b16 %v6141, %v6140
  %v6180 = vpack.c.b16 %v6143, %v6142
  %v6181 = vpack.c.b16 %v6145, %v6144
  %v6182 = vpack.c.b16 %v6147, %v6146
  %v6183 = vpack.c.b16 %v6149, %v6148
  %v6184 = vpack.c.b16 %v6151, %v6150
  %v6185 = vpack.c.b16 %v6153, %v6152
  %v6186 = vpack.c.b16 %v6155, %v6154
  %v6187 = vpack.c.b16 %v6157, %v6156
  %v6188 = vpack.c.b16 %v6159, %v6158
  %v6189 = vpack.c.b16 %v6161, %v6160
  %v6190 = vpack.c.b16 %v6163, %v6162
  %v6191 = vpack.c.b16 %v6165, %v6164
  %v6192 = vpack.c.b16 %v6167, %v6166
  %v6193 = vpack.c.b16 %v6169, %v6168
  %v6194 = vpack.c.b16 %v6171, %v6170
  %v6195 = vpack.c.b16 %v6173, %v6172
  %v6196 = vpack.c.b16 %v6175, %v6174
  %v6197 = vpack.c.b16 %v6176, %v6176
  %v6219 = vsel %vm5969, %v6197, 0
  %6221 = vmatprep.subr.bf16.mxu0 0
  %6222 = vmatpush1.bf16.msra.mxu0 %v6177
  %6223 = vmatprep.subr.bf16.mxu0 0
  %6224 = vmatpush1.bf16.msra.mxu0 %v6178
  %6225 = vmatprep.subr.bf16.mxu0 0
  %6226 = vmatpush1.bf16.msra.mxu0 %v6179
  %6227 = vmatprep.subr.bf16.mxu0 0
  %6228 = vmatpush1.bf16.msra.mxu0 %v6180
  %6229 = vmatprep.subr.bf16.mxu0 0
  %6230 = vmatpush1.bf16.msra.mxu0 %v6181
  %6231 = vmatprep.subr.bf16.mxu0 0
  %6232 = vmatpush1.bf16.msra.mxu0 %v6182
  %6233 = vmatprep.subr.bf16.mxu0 0
  %6234 = vmatpush1.bf16.msra.mxu0 %v6183
  %6235 = vmatprep.subr.bf16.mxu0 0
  %6236 = vmatpush1.bf16.msra.mxu0 %v6184
  %6237 = vmatprep.subr.bf16.mxu0 0
  %6238 = vmatpush1.bf16.msra.mxu0 %v6185
  %6239 = vmatprep.subr.bf16.mxu0 0
  %6240 = vmatpush1.bf16.msra.mxu0 %v6186
  %6241 = vmatprep.subr.bf16.mxu0 0
  %6242 = vmatpush1.bf16.msra.mxu0 %v6187
  %6243 = vmatprep.subr.bf16.mxu0 0
  %6244 = vmatpush1.bf16.msra.mxu0 %v6188
  %6245 = vmatprep.subr.bf16.mxu0 0
  %6246 = vmatpush1.bf16.msra.mxu0 %v6189
  %6247 = vmatprep.subr.bf16.mxu0 0
  %6248 = vmatpush1.bf16.msra.mxu0 %v6190
  %6249 = vmatprep.subr.bf16.mxu0 0
  %6250 = vmatpush1.bf16.msra.mxu0 %v6191
  %6251 = vmatprep.subr.bf16.mxu0 0
  %6252 = vmatpush1.bf16.msra.mxu0 %v6192
  %6253 = vmatprep.mubr.bf16.mxu0 %v5796
  %6254 = vmatmul.mubr.bf16.gmra.mrb[0].mxu0 %v5795
  %v6255 = vpop.f32.mrb[0].mxu0
  %v6256 = vadd.f32 0.0, %v6255
  %v6257 = vpop.f32.mrb[0].mxu0
  %v6258 = vpop.f32.mrb[0].mxu0
  %v6259 = vpop.f32.mrb[0].mxu0
  %6260 = vdwg.mxu0
  %6261 = vmatprep.subr.bf16.mxu0 0
  %6262 = vmatpush1.bf16.msra.mxu0 %v6193
  %6263 = vmatprep.subr.bf16.mxu0 0
  %6264 = vmatpush1.bf16.msra.mxu0 %v6194
  %6265 = vmatprep.subr.bf16.mxu0 0
  %6266 = vmatpush1.bf16.msra.mxu0 %v6195
  %6267 = vmatprep.subr.bf16.mxu0 0
  %6268 = vmatpush1.bf16.msra.mxu0 %v6196
  %6269 = vmatprep.subr.bf16.mxu0 0
  %6270 = vmatpush1.bf16.msra.mxu0 %v6219
  %6271 = vmatprep.subr.bf16.mxu0 0
  %6272 = vmatpush1.bf16.msra.mxu0 0
  %6273 = vmatprep.subr.bf16.mxu0 0
  %6274 = vmatpush1.bf16.msra.mxu0 0
  %6275 = vmatprep.subr.bf16.mxu0 0
  %6276 = vmatpush1.bf16.msra.mxu0 0
  %6277 = vmatprep.subr.bf16.mxu0 0
  %6278 = vmatpush1.bf16.msra.mxu0 0
  %6279 = vmatprep.subr.bf16.mxu0 0
  %6280 = vmatpush1.bf16.msra.mxu0 0
  %6281 = vmatprep.subr.bf16.mxu0 0
  %6282 = vmatpush1.bf16.msra.mxu0 0
  %6283 = vmatprep.subr.bf16.mxu0 0
  %6284 = vmatpush1.bf16.msra.mxu0 0
  %6285 = vmatprep.subr.bf16.mxu0 0
  %6286 = vmatpush1.bf16.msra.mxu0 0
  %6287 = vmatprep.subr.bf16.mxu0 0
  %6288 = vmatpush1.bf16.msra.mxu0 0
  %6289 = vmatprep.subr.bf16.mxu0 0
  %6290 = vmatpush1.bf16.msra.mxu0 0
  %6291 = vmatprep.subr.bf16.mxu0 0
  %6292 = vmatpush1.bf16.msra.mxu0 0
  %6293 = vmatprep.mubr.bf16.mxu0 0
  %6294 = vmatmul.mubr.bf16.gmra.mrb[0].mxu0 %v5967
  %v6295 = vpop.f32.mrb[0].mxu0
  %v6296 = vadd.f32 %v6256, %v6295
  %v6297 = vpop.f32.mrb[0].mxu0
  %v6298 = vpop.f32.mrb[0].mxu0
  %v6299 = vpop.f32.mrb[0].mxu0
  %6300 = vdwg.mxu0
  %s6301 = scalar_lea.vmem %s5, 328
  %v6302 = vld [vmem:[%s6301] sm:$0xf]
  %v6303 = vld [vmem:[%s6301 + $0x4] sm:$0xf]
  %v6304 = vld [vmem:[%s6301 + $0x8] sm:$0xf]
  %v6305 = vld [vmem:[%s6301 + $0xc] sm:$0xf]
  %v6306 = vld [vmem:[%s6301 + $0x10] sm:$0xf]
  %v6307 = vld [vmem:[%s6301 + $0x14] sm:$0xf]
  %v6308 = vld [vmem:[%s6301 + $0x18] sm:$0xf]
  %v6309 = vld [vmem:[%s6301 + $0x1c] sm:$0xf]
  %v6310 = vld [vmem:[%s6301 + $0x20] sm:$0xf]
  %v6311 = vld [vmem:[%s6301 + $0x24] sm:$0xf]
  %v6312 = vld [vmem:[%s6301 + $0x28] sm:$0xf]
  %v6313 = vld [vmem:[%s6301 + $0x2c] sm:$0xf]
  %v6314 = vld [vmem:[%s6301 + $0x30] sm:$0xf]
  %v6315 = vld [vmem:[%s6301 + $0x34] sm:$0xf]
  %v6316 = vld [vmem:[%s6301 + $0x38] sm:$0xf]
  %v6317 = vld [vmem:[%s6301 + $0x3c] sm:$0xf]
  %v6318 = vld [vmem:[%s6301 + $0x40] sm:$0xf]
  %v6319 = vld [vmem:[%s6301 + $0x44] sm:$0xf]
  %v6320 = vld [vmem:[%s6301 + $0x48] sm:$0xf]
  %v6321 = vld [vmem:[%s6301 + $0x4c] sm:$0xf]
  %v6322 = vld [vmem:[%s6301 + $0x50] sm:$0xf]
  %v6323 = vld [vmem:[%s6301 + $0x54] sm:$0xf]
  %v6324 = vld [vmem:[%s6301 + $0x58] sm:$0xf]
  %v6325 = vld [vmem:[%s6301 + $0x5c] sm:$0xf]
  %v6326 = vld [vmem:[%s6301 + $0x60] sm:$0xf]
  %v6327 = vld [vmem:[%s6301 + $0x64] sm:$0xf]
  %v6328 = vld [vmem:[%s6301 + $0x68] sm:$0xf]
  %v6329 = vld [vmem:[%s6301 + $0x6c] sm:$0xf]
  %v6330 = vld [vmem:[%s6301 + $0x70] sm:$0xf]
  %v6331 = vld [vmem:[%s6301 + $0x74] sm:$0xf]
  %v6332 = vld [vmem:[%s6301 + $0x78] sm:$0xf]
  %v6333 = vld [vmem:[%s6301 + $0x7c] sm:$0xf]
  %v6334 = vld [vmem:[%s6301 + $0x80] sm:$0xf]
  %v6335 = vld [vmem:[%s6301 + $0x84] sm:$0xf]
  %v6336 = vld [vmem:[%s6301 + $0x88] sm:$0xf]
  %v6337 = vld [vmem:[%s6301 + $0x8c] sm:$0xf]
  %v6338 = vld [vmem:[%s6301 + $0x90] sm:$0xf]
  %v6339 = vld [vmem:[%s6301 + $0x94] sm:$0xf]
  %v6340 = vld [vmem:[%s6301 + $0x98] sm:$0xf]
  %v6341 = vld [vmem:[%s6301 + $0x9c] sm:$0xf]
  %v6342 = vld [vmem:[%s6301 + $0xa0] sm:$0xf]
  %v6384 = vunpack.c.l.b16 %v6302
  %v6385 = vunpack.c.l.b16 %v6303
  %v6386 = vunpack.c.l.b16 %v6304
  %v6387 = vunpack.c.l.b16 %v6305
  %v6388 = vunpack.c.l.b16 %v6306
  %v6389 = vunpack.c.l.b16 %v6307
  %v6390 = vunpack.c.l.b16 %v6308
  %v6391 = vunpack.c.l.b16 %v6309
  %v6392 = vunpack.c.l.b16 %v6310
  %v6393 = vunpack.c.l.b16 %v6311
  %v6394 = vunpack.c.l.b16 %v6312
  %v6395 = vunpack.c.l.b16 %v6313
  %v6396 = vunpack.c.l.b16 %v6314
  %v6397 = vunpack.c.l.b16 %v6315
  %v6398 = vunpack.c.l.b16 %v6316
  %v6399 = vunpack.c.l.b16 %v6317
  %v6400 = vunpack.c.l.b16 %v6318
  %v6401 = vunpack.c.l.b16 %v6319
  %v6402 = vunpack.c.l.b16 %v6320
  %v6403 = vunpack.c.l.b16 %v6321
  %v6404 = vunpack.c.l.b16 %v6322
  %v6405 = vunpack.c.l.b16 %v6323
  %v6406 = vunpack.c.l.b16 %v6324
  %v6407 = vunpack.c.l.b16 %v6325
  %v6408 = vunpack.c.l.b16 %v6326
  %v6409 = vunpack.c.l.b16 %v6327
  %v6410 = vunpack.c.l.b16 %v6328
  %v6411 = vunpack.c.l.b16 %v6329
  %v6412 = vunpack.c.l.b16 %v6330
  %v6413 = vunpack.c.l.b16 %v6331
  %v6414 = vunpack.c.l.b16 %v6332
  %v6415 = vunpack.c.l.b16 %v6333
  %v6416 = vunpack.c.l.b16 %v6334
  %v6417 = vunpack.c.l.b16 %v6335
  %v6418 = vunpack.c.l.b16 %v6336
  %v6419 = vunpack.c.l.b16 %v6337
  %v6420 = vunpack.c.l.b16 %v6338
  %v6421 = vunpack.c.l.b16 %v6339
  %v6422 = vunpack.c.l.b16 %v6340
  %v6423 = vunpack.c.l.b16 %v6341
  %v6424 = vunpack.c.l.b16 %v6342
  %v6425 = vpack.c.b16 %v6385, %v6384
  %v6426 = vpack.c.b16 %v6387, %v6386
  %v6427 = vpack.c.b16 %v6389, %v6388
  %v6428 = vpack.c.b16 %v6391, %v6390
  %v6429 = vpack.c.b16 %v6393, %v6392
  %v6430 = vpack.c.b16 %v6395, %v6394
  %v6431 = vpack.c.b16 %v6397, %v6396
  %v6432 = vpack.c.b16 %v6399, %v6398
  %v6433 = vpack.c.b16 %v6401, %v6400
  %v6434 = vpack.c.b16 %v6403, %v6402
  %v6435 = vpack.c.b16 %v6405, %v6404
  %v6436 = vpack.c.b16 %v6407, %v6406
  %v6437 = vpack.c.b16 %v6409, %v6408
  %v6438 = vpack.c.b16 %v6411, %v6410
  %v6439 = vpack.c.b16 %v6413, %v6412
  %v6440 = vpack.c.b16 %v6415, %v6414
  %v6441 = vpack.c.b16 %v6417, %v6416
  %v6442 = vpack.c.b16 %v6419, %v6418
  %v6443 = vpack.c.b16 %v6421, %v6420
  %v6444 = vpack.c.b16 %v6423, %v6422
  %v6445 = vpack.c.b16 %v6424, %v6424
  %v6467 = vsel %vm5965, %v5798, 0
  %v6470 = vsel %vm5969, %v6445, 0
  %6472 = vmatprep.subr.bf16.mxu0 0
  %6473 = vmatpush1.bf16.msra.mxu0 %v6425
  %6474 = vmatprep.subr.bf16.mxu0 0
  %6475 = vmatpush1.bf16.msra.mxu0 %v6426
  %6476 = vmatprep.subr.bf16.mxu0 0
  %6477 = vmatpush1.bf16.msra.mxu0 %v6427
  %6478 = vmatprep.subr.bf16.mxu0 0
  %6479 = vmatpush1.bf16.msra.mxu0 %v6428
  %6480 = vmatprep.subr.bf16.mxu0 0
  %6481 = vmatpush1.bf16.msra.mxu0 %v6429
  %6482 = vmatprep.subr.bf16.mxu0 0
  %6483 = vmatpush1.bf16.msra.mxu0 %v6430
  %6484 = vmatprep.subr.bf16.mxu0 0
  %6485 = vmatpush1.bf16.msra.mxu0 %v6431
  %6486 = vmatprep.subr.bf16.mxu0 0
  %6487 = vmatpush1.bf16.msra.mxu0 %v6432
  %6488 = vmatprep.subr.bf16.mxu0 0
  %6489 = vmatpush1.bf16.msra.mxu0 %v6433
  %6490 = vmatprep.subr.bf16.mxu0 0
  %6491 = vmatpush1.bf16.msra.mxu0 %v6434
  %6492 = vmatprep.subr.bf16.mxu0 0
  %6493 = vmatpush1.bf16.msra.mxu0 %v6435
  %6494 = vmatprep.subr.bf16.mxu0 0
  %6495 = vmatpush1.bf16.msra.mxu0 %v6436
  %6496 = vmatprep.subr.bf16.mxu0 0
  %6497 = vmatpush1.bf16.msra.mxu0 %v6437
  %6498 = vmatprep.subr.bf16.mxu0 0
  %6499 = vmatpush1.bf16.msra.mxu0 %v6438
  %6500 = vmatprep.subr.bf16.mxu0 0
  %6501 = vmatpush1.bf16.msra.mxu0 %v6439
  %6502 = vmatprep.subr.bf16.mxu0 0
  %6503 = vmatpush1.bf16.msra.mxu0 %v6440
  %6504 = vmatprep.mubr.bf16.mxu0 %v5797
  %6505 = vmatmul.mubr.bf16.gmra.mrb[0].mxu0 %v5796
  %v6506 = vpop.f32.mrb[0].mxu0
  %v6507 = vadd.f32 0.0, %v6506
  %v6508 = vpop.f32.mrb[0].mxu0
  %v6509 = vpop.f32.mrb[0].mxu0
  %v6510 = vpop.f32.mrb[0].mxu0
  %6511 = vdwg.mxu0
  %6512 = vmatprep.subr.bf16.mxu0 0
  %6513 = vmatpush1.bf16.msra.mxu0 %v6441
  %6514 = vmatprep.subr.bf16.mxu0 0
  %6515 = vmatpush1.bf16.msra.mxu0 %v6442
  %6516 = vmatprep.subr.bf16.mxu0 0
  %6517 = vmatpush1.bf16.msra.mxu0 %v6443
  %6518 = vmatprep.subr.bf16.mxu0 0
  %6519 = vmatpush1.bf16.msra.mxu0 %v6444
  %6520 = vmatprep.subr.bf16.mxu0 0
  %6521 = vmatpush1.bf16.msra.mxu0 %v6470
  %6522 = vmatprep.subr.bf16.mxu0 0
  %6523 = vmatpush1.bf16.msra.mxu0 0
  %6524 = vmatprep.subr.bf16.mxu0 0
  %6525 = vmatpush1.bf16.msra.mxu0 0
  %6526 = vmatprep.subr.bf16.mxu0 0
  %6527 = vmatpush1.bf16.msra.mxu0 0
  %6528 = vmatprep.subr.bf16.mxu0 0
  %6529 = vmatpush1.bf16.msra.mxu0 0
  %6530 = vmatprep.subr.bf16.mxu0 0
  %6531 = vmatpush1.bf16.msra.mxu0 0
  %6532 = vmatprep.subr.bf16.mxu0 0
  %6533 = vmatpush1.bf16.msra.mxu0 0
  %6534 = vmatprep.subr.bf16.mxu0 0
  %6535 = vmatpush1.bf16.msra.mxu0 0
  %6536 = vmatprep.subr.bf16.mxu0 0
  %6537 = vmatpush1.bf16.msra.mxu0 0
  %6538 = vmatprep.subr.bf16.mxu0 0
  %6539 = vmatpush1.bf16.msra.mxu0 0
  %6540 = vmatprep.subr.bf16.mxu0 0
  %6541 = vmatpush1.bf16.msra.mxu0 0
  %6542 = vmatprep.subr.bf16.mxu0 0
  %6543 = vmatpush1.bf16.msra.mxu0 0
  %6544 = vmatprep.mubr.bf16.mxu0 0
  %6545 = vmatmul.mubr.bf16.gmra.mrb[0].mxu0 %v6467
  %v6546 = vpop.f32.mrb[0].mxu0
  %v6547 = vadd.f32 %v6507, %v6546
  %v6548 = vpop.f32.mrb[0].mxu0
  %v6549 = vpop.f32.mrb[0].mxu0
  %v6550 = vpop.f32.mrb[0].mxu0
  %6551 = vdwg.mxu0
  %s6552 = scalar_lea.vmem %s5, 492
  %v6553 = vld [vmem:[%s6552] sm:$0xf]
  %v6554 = vld [vmem:[%s6552 + $0x4] sm:$0xf]
  %v6555 = vld [vmem:[%s6552 + $0x8] sm:$0xf]
  %v6556 = vld [vmem:[%s6552 + $0xc] sm:$0xf]
  %v6557 = vld [vmem:[%s6552 + $0x10] sm:$0xf]
  %v6558 = vld [vmem:[%s6552 + $0x14] sm:$0xf]
  %v6559 = vld [vmem:[%s6552 + $0x18] sm:$0xf]
  %v6560 = vld [vmem:[%s6552 + $0x1c] sm:$0xf]
  %v6561 = vld [vmem:[%s6552 + $0x20] sm:$0xf]
  %v6562 = vld [vmem:[%s6552 + $0x24] sm:$0xf]
  %v6563 = vld [vmem:[%s6552 + $0x28] sm:$0xf]
  %v6564 = vld [vmem:[%s6552 + $0x2c] sm:$0xf]
  %v6565 = vld [vmem:[%s6552 + $0x30] sm:$0xf]
  %v6566 = vld [vmem:[%s6552 + $0x34] sm:$0xf]
  %v6567 = vld [vmem:[%s6552 + $0x38] sm:$0xf]
  %v6568 = vld [vmem:[%s6552 + $0x3c] sm:$0xf]
  %v6569 = vld [vmem:[%s6552 + $0x40] sm:$0xf]
  %v6570 = vld [vmem:[%s6552 + $0x44] sm:$0xf]
  %v6571 = vld [vmem:[%s6552 + $0x48] sm:$0xf]
  %v6572 = vld [vmem:[%s6552 + $0x4c] sm:$0xf]
  %v6573 = vld [vmem:[%s6552 + $0x50] sm:$0xf]
  %v6574 = vld [vmem:[%s6552 + $0x54] sm:$0xf]
  %v6575 = vld [vmem:[%s6552 + $0x58] sm:$0xf]
  %v6576 = vld [vmem:[%s6552 + $0x5c] sm:$0xf]
  %v6577 = vld [vmem:[%s6552 + $0x60] sm:$0xf]
  %v6578 = vld [vmem:[%s6552 + $0x64] sm:$0xf]
  %v6579 = vld [vmem:[%s6552 + $0x68] sm:$0xf]
  %v6580 = vld [vmem:[%s6552 + $0x6c] sm:$0xf]
  %v6581 = vld [vmem:[%s6552 + $0x70] sm:$0xf]
  %v6582 = vld [vmem:[%s6552 + $0x74] sm:$0xf]
  %v6583 = vld [vmem:[%s6552 + $0x78] sm:$0xf]
  %v6584 = vld [vmem:[%s6552 + $0x7c] sm:$0xf]
  %v6585 = vld [vmem:[%s6552 + $0x80] sm:$0xf]
  %v6586 = vld [vmem:[%s6552 + $0x84] sm:$0xf]
  %v6587 = vld [vmem:[%s6552 + $0x88] sm:$0xf]
  %v6588 = vld [vmem:[%s6552 + $0x8c] sm:$0xf]
  %v6589 = vld [vmem:[%s6552 + $0x90] sm:$0xf]
  %v6590 = vld [vmem:[%s6552 + $0x94] sm:$0xf]
  %v6591 = vld [vmem:[%s6552 + $0x98] sm:$0xf]
  %v6592 = vld [vmem:[%s6552 + $0x9c] sm:$0xf]
  %v6593 = vld [vmem:[%s6552 + $0xa0] sm:$0xf]
  %v6635 = vunpack.c.l.b16 %v6553
  %v6636 = vunpack.c.l.b16 %v6554
  %v6637 = vunpack.c.l.b16 %v6555
  %v6638 = vunpack.c.l.b16 %v6556
  %v6639 = vunpack.c.l.b16 %v6557
  %v6640 = vunpack.c.l.b16 %v6558
  %v6641 = vunpack.c.l.b16 %v6559
  %v6642 = vunpack.c.l.b16 %v6560
  %v6643 = vunpack.c.l.b16 %v6561
  %v6644 = vunpack.c.l.b16 %v6562
  %v6645 = vunpack.c.l.b16 %v6563
  %v6646 = vunpack.c.l.b16 %v6564
  %v6647 = vunpack.c.l.b16 %v6565
  %v6648 = vunpack.c.l.b16 %v6566
  %v6649 = vunpack.c.l.b16 %v6567
  %v6650 = vunpack.c.l.b16 %v6568
  %v6651 = vunpack.c.l.b16 %v6569
  %v6652 = vunpack.c.l.b16 %v6570
  %v6653 = vunpack.c.l.b16 %v6571
  %v6654 = vunpack.c.l.b16 %v6572
  %v6655 = vunpack.c.l.b16 %v6573
  %v6656 = vunpack.c.l.b16 %v6574
  %v6657 = vunpack.c.l.b16 %v6575
  %v6658 = vunpack.c.l.b16 %v6576
  %v6659 = vunpack.c.l.b16 %v6577
  %v6660 = vunpack.c.l.b16 %v6578
  %v6661 = vunpack.c.l.b16 %v6579
  %v6662 = vunpack.c.l.b16 %v6580
  %v6663 = vunpack.c.l.b16 %v6581
  %v6664 = vunpack.c.l.b16 %v6582
  %v6665 = vunpack.c.l.b16 %v6583
  %v6666 = vunpack.c.l.b16 %v6584
  %v6667 = vunpack.c.l.b16 %v6585
  %v6668 = vunpack.c.l.b16 %v6586
  %v6669 = vunpack.c.l.b16 %v6587
  %v6670 = vunpack.c.l.b16 %v6588
  %v6671 = vunpack.c.l.b16 %v6589
  %v6672 = vunpack.c.l.b16 %v6590
  %v6673 = vunpack.c.l.b16 %v6591
  %v6674 = vunpack.c.l.b16 %v6592
  %v6675 = vunpack.c.l.b16 %v6593
  %v6676 = vpack.c.b16 %v6636, %v6635
  %v6677 = vpack.c.b16 %v6638, %v6637
  %v6678 = vpack.c.b16 %v6640, %v6639
  %v6679 = vpack.c.b16 %v6642, %v6641
  %v6680 = vpack.c.b16 %v6644, %v6643
  %v6681 = vpack.c.b16 %v6646, %v6645
  %v6682 = vpack.c.b16 %v6648, %v6647
  %v6683 = vpack.c.b16 %v6650, %v6649
  %v6684 = vpack.c.b16 %v6652, %v6651
  %v6685 = vpack.c.b16 %v6654, %v6653
  %v6686 = vpack.c.b16 %v6656, %v6655
  %v6687 = vpack.c.b16 %v6658, %v6657
  %v6688 = vpack.c.b16 %v6660, %v6659
  %v6689 = vpack.c.b16 %v6662, %v6661
  %v6690 = vpack.c.b16 %v6664, %v6663
  %v6691 = vpack.c.b16 %v6666, %v6665
  %v6692 = vpack.c.b16 %v6668, %v6667
  %v6693 = vpack.c.b16 %v6670, %v6669
  %v6694 = vpack.c.b16 %v6672, %v6671
  %v6695 = vpack.c.b16 %v6674, %v6673
  %v6696 = vpack.c.b16 %v6675, %v6675
  %v6718 = vsel %vm5965, %v5799, 0
  %v6721 = vsel %vm5969, %v6696, 0
  %6723 = vmatprep.subr.bf16.mxu0 0
  %6724 = vmatpush1.bf16.msra.mxu0 %v6676
  %6725 = vmatprep.subr.bf16.mxu0 0
  %6726 = vmatpush1.bf16.msra.mxu0 %v6677
  %6727 = vmatprep.subr.bf16.mxu0 0
  %6728 = vmatpush1.bf16.msra.mxu0 %v6678
  %6729 = vmatprep.subr.bf16.mxu0 0
  %6730 = vmatpush1.bf16.msra.mxu0 %v6679
  %6731 = vmatprep.subr.bf16.mxu0 0
  %6732 = vmatpush1.bf16.msra.mxu0 %v6680
  %6733 = vmatprep.subr.bf16.mxu0 0
  %6734 = vmatpush1.bf16.msra.mxu0 %v6681
  %6735 = vmatprep.subr.bf16.mxu0 0
  %6736 = vmatpush1.bf16.msra.mxu0 %v6682
  %6737 = vmatprep.subr.bf16.mxu0 0
  %6738 = vmatpush1.bf16.msra.mxu0 %v6683
  %6739 = vmatprep.subr.bf16.mxu0 0
  %6740 = vmatpush1.bf16.msra.mxu0 %v6684
  %6741 = vmatprep.subr.bf16.mxu0 0
  %6742 = vmatpush1.bf16.msra.mxu0 %v6685
  %6743 = vmatprep.subr.bf16.mxu0 0
  %6744 = vmatpush1.bf16.msra.mxu0 %v6686
  %6745 = vmatprep.subr.bf16.mxu0 0
  %6746 = vmatpush1.bf16.msra.mxu0 %v6687
  %6747 = vmatprep.subr.bf16.mxu0 0
  %6748 = vmatpush1.bf16.msra.mxu0 %v6688
  %6749 = vmatprep.subr.bf16.mxu0 0
  %6750 = vmatpush1.bf16.msra.mxu0 %v6689
  %6751 = vmatprep.subr.bf16.mxu0 0
  %6752 = vmatpush1.bf16.msra.mxu0 %v6690
  %6753 = vmatprep.subr.bf16.mxu0 0
  %6754 = vmatpush1.bf16.msra.mxu0 %v6691
  %6755 = vmatprep.mubr.bf16.mxu0 %v5798
  %6756 = vmatmul.mubr.bf16.gmra.mrb[0].mxu0 %v5797
  %v6757 = vpop.f32.mrb[0].mxu0
  %v6758 = vadd.f32 0.0, %v6757
  %v6759 = vpop.f32.mrb[0].mxu0
  %v6760 = vpop.f32.mrb[0].mxu0
  %v6761 = vpop.f32.mrb[0].mxu0
  %6762 = vdwg.mxu0
  %6763 = vmatprep.subr.bf16.mxu0 0
  %6764 = vmatpush1.bf16.msra.mxu0 %v6692
  %6765 = vmatprep.subr.bf16.mxu0 0
  %6766 = vmatpush1.bf16.msra.mxu0 %v6693
  %6767 = vmatprep.subr.bf16.mxu0 0
  %6768 = vmatpush1.bf16.msra.mxu0 %v6694
  %6769 = vmatprep.subr.bf16.mxu0 0
  %6770 = vmatpush1.bf16.msra.mxu0 %v6695
  %6771 = vmatprep.subr.bf16.mxu0 0
  %6772 = vmatpush1.bf16.msra.mxu0 %v6721
  %6773 = vmatprep.subr.bf16.mxu0 0
  %6774 = vmatpush1.bf16.msra.mxu0 0
  %6775 = vmatprep.subr.bf16.mxu0 0
  %6776 = vmatpush1.bf16.msra.mxu0 0
  %6777 = vmatprep.subr.bf16.mxu0 0
  %6778 = vmatpush1.bf16.msra.mxu0 0
  %6779 = vmatprep.subr.bf16.mxu0 0
  %6780 = vmatpush1.bf16.msra.mxu0 0
  %6781 = vmatprep.subr.bf16.mxu0 0
  %6782 = vmatpush1.bf16.msra.mxu0 0
  %6783 = vmatprep.subr.bf16.mxu0 0
  %6784 = vmatpush1.bf16.msra.mxu0 0
  %6785 = vmatprep.subr.bf16.mxu0 0
  %6786 = vmatpush1.bf16.msra.mxu0 0
  %6787 = vmatprep.subr.bf16.mxu0 0
  %6788 = vmatpush1.bf16.msra.mxu0 0
  %6789 = vmatprep.subr.bf16.mxu0 0
  %6790 = vmatpush1.bf16.msra.mxu0 0
  %6791 = vmatprep.subr.bf16.mxu0 0
  %6792 = vmatpush1.bf16.msra.mxu0 0
  %6793 = vmatprep.subr.bf16.mxu0 0
  %6794 = vmatpush1.bf16.msra.mxu0 0
  %6795 = vmatprep.mubr.bf16.mxu0 0
  %6796 = vmatmul.mubr.bf16.gmra.mrb[0].mxu0 %v6718
  %v6797 = vpop.f32.mrb[0].mxu0
  %v6798 = vadd.f32 %v6758, %v6797
  %v6799 = vpop.f32.mrb[0].mxu0
  %v6800 = vpop.f32.mrb[0].mxu0
  %v6801 = vpop.f32.mrb[0].mxu0
  %6802 = vdwg.mxu0
  %s6803 = scalar_lea.vmem %s5, 656
  %v6804 = vld [vmem:[%s6803] sm:$0xf]
  %v6805 = vld [vmem:[%s6803 + $0x4] sm:$0xf]
  %v6806 = vld [vmem:[%s6803 + $0x8] sm:$0xf]
  %v6807 = vld [vmem:[%s6803 + $0xc] sm:$0xf]
  %v6808 = vld [vmem:[%s6803 + $0x10] sm:$0xf]
  %v6809 = vld [vmem:[%s6803 + $0x14] sm:$0xf]
  %v6810 = vld [vmem:[%s6803 + $0x18] sm:$0xf]
  %v6811 = vld [vmem:[%s6803 + $0x1c] sm:$0xf]
  %v6812 = vld [vmem:[%s6803 + $0x20] sm:$0xf]
  %v6813 = vld [vmem:[%s6803 + $0x24] sm:$0xf]
  %v6814 = vld [vmem:[%s6803 + $0x28] sm:$0xf]
  %v6815 = vld [vmem:[%s6803 + $0x2c] sm:$0xf]
  %v6816 = vld [vmem:[%s6803 + $0x30] sm:$0xf]
  %v6817 = vld [vmem:[%s6803 + $0x34] sm:$0xf]
  %v6818 = vld [vmem:[%s6803 + $0x38] sm:$0xf]
  %v6819 = vld [vmem:[%s6803 + $0x3c] sm:$0xf]
  %v6820 = vld [vmem:[%s6803 + $0x40] sm:$0xf]
  %v6821 = vld [vmem:[%s6803 + $0x44] sm:$0xf]
  %v6822 = vld [vmem:[%s6803 + $0x48] sm:$0xf]
  %v6823 = vld [vmem:[%s6803 + $0x4c] sm:$0xf]
  %v6824 = vld [vmem:[%s6803 + $0x50] sm:$0xf]
  %v6825 = vld [vmem:[%s6803 + $0x54] sm:$0xf]
  %v6826 = vld [vmem:[%s6803 + $0x58] sm:$0xf]
  %v6827 = vld [vmem:[%s6803 + $0x5c] sm:$0xf]
  %v6828 = vld [vmem:[%s6803 + $0x60] sm:$0xf]
  %v6829 = vld [vmem:[%s6803 + $0x64] sm:$0xf]
  %v6830 = vld [vmem:[%s6803 + $0x68] sm:$0xf]
  %v6831 = vld [vmem:[%s6803 + $0x6c] sm:$0xf]
  %v6832 = vld [vmem:[%s6803 + $0x70] sm:$0xf]
  %v6833 = vld [vmem:[%s6803 + $0x74] sm:$0xf]
  %v6834 = vld [vmem:[%s6803 + $0x78] sm:$0xf]
  %v6835 = vld [vmem:[%s6803 + $0x7c] sm:$0xf]
  %v6836 = vld [vmem:[%s6803 + $0x80] sm:$0xf]
  %v6837 = vld [vmem:[%s6803 + $0x84] sm:$0xf]
  %v6838 = vld [vmem:[%s6803 + $0x88] sm:$0xf]
  %v6839 = vld [vmem:[%s6803 + $0x8c] sm:$0xf]
  %v6840 = vld [vmem:[%s6803 + $0x90] sm:$0xf]
  %v6841 = vld [vmem:[%s6803 + $0x94] sm:$0xf]
  %v6842 = vld [vmem:[%s6803 + $0x98] sm:$0xf]
  %v6843 = vld [vmem:[%s6803 + $0x9c] sm:$0xf]
  %v6844 = vld [vmem:[%s6803 + $0xa0] sm:$0xf]
  %v6886 = vunpack.c.l.b16 %v6804
  %v6887 = vunpack.c.l.b16 %v6805
  %v6888 = vunpack.c.l.b16 %v6806
  %v6889 = vunpack.c.l.b16 %v6807
  %v6890 = vunpack.c.l.b16 %v6808
  %v6891 = vunpack.c.l.b16 %v6809
  %v6892 = vunpack.c.l.b16 %v6810
  %v6893 = vunpack.c.l.b16 %v6811
  %v6894 = vunpack.c.l.b16 %v6812
  %v6895 = vunpack.c.l.b16 %v6813
  %v6896 = vunpack.c.l.b16 %v6814
  %v6897 = vunpack.c.l.b16 %v6815
  %v6898 = vunpack.c.l.b16 %v6816
  %v6899 = vunpack.c.l.b16 %v6817
  %v6900 = vunpack.c.l.b16 %v6818
  %v6901 = vunpack.c.l.b16 %v6819
  %v6902 = vunpack.c.l.b16 %v6820
  %v6903 = vunpack.c.l.b16 %v6821
  %v6904 = vunpack.c.l.b16 %v6822
  %v6905 = vunpack.c.l.b16 %v6823
  %v6906 = vunpack.c.l.b16 %v6824
  %v6907 = vunpack.c.l.b16 %v6825
  %v6908 = vunpack.c.l.b16 %v6826
  %v6909 = vunpack.c.l.b16 %v6827
  %v6910 = vunpack.c.l.b16 %v6828
  %v6911 = vunpack.c.l.b16 %v6829
  %v6912 = vunpack.c.l.b16 %v6830
  %v6913 = vunpack.c.l.b16 %v6831
  %v6914 = vunpack.c.l.b16 %v6832
  %v6915 = vunpack.c.l.b16 %v6833
  %v6916 = vunpack.c.l.b16 %v6834
  %v6917 = vunpack.c.l.b16 %v6835
  %v6918 = vunpack.c.l.b16 %v6836
  %v6919 = vunpack.c.l.b16 %v6837
  %v6920 = vunpack.c.l.b16 %v6838
  %v6921 = vunpack.c.l.b16 %v6839
  %v6922 = vunpack.c.l.b16 %v6840
  %v6923 = vunpack.c.l.b16 %v6841
  %v6924 = vunpack.c.l.b16 %v6842
  %v6925 = vunpack.c.l.b16 %v6843
  %v6926 = vunpack.c.l.b16 %v6844
  %v6927 = vpack.c.b16 %v6887, %v6886
  %v6928 = vpack.c.b16 %v6889, %v6888
  %v6929 = vpack.c.b16 %v6891, %v6890
  %v6930 = vpack.c.b16 %v6893, %v6892
  %v6931 = vpack.c.b16 %v6895, %v6894
  %v6932 = vpack.c.b16 %v6897, %v6896
  %v6933 = vpack.c.b16 %v6899, %v6898
  %v6934 = vpack.c.b16 %v6901, %v6900
  %v6935 = vpack.c.b16 %v6903, %v6902
  %v6936 = vpack.c.b16 %v6905, %v6904
  %v6937 = vpack.c.b16 %v6907, %v6906
  %v6938 = vpack.c.b16 %v6909, %v6908
  %v6939 = vpack.c.b16 %v6911, %v6910
  %v6940 = vpack.c.b16 %v6913, %v6912
  %v6941 = vpack.c.b16 %v6915, %v6914
  %v6942 = vpack.c.b16 %v6917, %v6916
  %v6943 = vpack.c.b16 %v6919, %v6918
  %v6944 = vpack.c.b16 %v6921, %v6920
  %v6945 = vpack.c.b16 %v6923, %v6922
  %v6946 = vpack.c.b16 %v6925, %v6924
  %v6947 = vpack.c.b16 %v6926, %v6926
  %v6969 = vsel %vm5965, %v5800, 0
  %v6972 = vsel %vm5969, %v6947, 0
  %6974 = vmatprep.subr.bf16.mxu0 0
  %6975 = vmatpush1.bf16.msra.mxu0 %v6927
  %6976 = vmatprep.subr.bf16.mxu0 0
  %6977 = vmatpush1.bf16.msra.mxu0 %v6928
  %6978 = vmatprep.subr.bf16.mxu0 0
  %6979 = vmatpush1.bf16.msra.mxu0 %v6929
  %6980 = vmatprep.subr.bf16.mxu0 0
  %6981 = vmatpush1.bf16.msra.mxu0 %v6930
  %6982 = vmatprep.subr.bf16.mxu0 0
  %6983 = vmatpush1.bf16.msra.mxu0 %v6931
  %6984 = vmatprep.subr.bf16.mxu0 0
  %6985 = vmatpush1.bf16.msra.mxu0 %v6932
  %6986 = vmatprep.subr.bf16.mxu0 0
  %6987 = vmatpush1.bf16.msra.mxu0 %v6933
  %6988 = vmatprep.subr.bf16.mxu0 0
  %6989 = vmatpush1.bf16.msra.mxu0 %v6934
  %6990 = vmatprep.subr.bf16.mxu0 0
  %6991 = vmatpush1.bf16.msra.mxu0 %v6935
  %6992 = vmatprep.subr.bf16.mxu0 0
  %6993 = vmatpush1.bf16.msra.mxu0 %v6936
  %6994 = vmatprep.subr.bf16.mxu0 0
  %6995 = vmatpush1.bf16.msra.mxu0 %v6937
  %6996 = vmatprep.subr.bf16.mxu0 0
  %6997 = vmatpush1.bf16.msra.mxu0 %v6938
  %6998 = vmatprep.subr.bf16.mxu0 0
  %6999 = vmatpush1.bf16.msra.mxu0 %v6939
  %7000 = vmatprep.subr.bf16.mxu0 0
  %7001 = vmatpush1.bf16.msra.mxu0 %v6940
  %7002 = vmatprep.subr.bf16.mxu0 0
  %7003 = vmatpush1.bf16.msra.mxu0 %v6941
  %7004 = vmatprep.subr.bf16.mxu0 0
  %7005 = vmatpush1.bf16.msra.mxu0 %v6942
  %7006 = vmatprep.mubr.bf16.mxu0 %v5799
  %7007 = vmatmul.mubr.bf16.gmra.mrb[0].mxu0 %v5798
  %v7008 = vpop.f32.mrb[0].mxu0
  %v7009 = vadd.f32 0.0, %v7008
  %v7010 = vpop.f32.mrb[0].mxu0
  %v7011 = vpop.f32.mrb[0].mxu0
  %v7012 = vpop.f32.mrb[0].mxu0
  %7013 = vdwg.mxu0
  %7014 = vmatprep.subr.bf16.mxu0 0
  %7015 = vmatpush1.bf16.msra.mxu0 %v6943
  %7016 = vmatprep.subr.bf16.mxu0 0
  %7017 = vmatpush1.bf16.msra.mxu0 %v6944
  %7018 = vmatprep.subr.bf16.mxu0 0
  %7019 = vmatpush1.bf16.msra.mxu0 %v6945
  %7020 = vmatprep.subr.bf16.mxu0 0
  %7021 = vmatpush1.bf16.msra.mxu0 %v6946
  %7022 = vmatprep.subr.bf16.mxu0 0
  %7023 = vmatpush1.bf16.msra.mxu0 %v6972
  %7024 = vmatprep.subr.bf16.mxu0 0
  %7025 = vmatpush1.bf16.msra.mxu0 0
  %7026 = vmatprep.subr.bf16.mxu0 0
  %7027 = vmatpush1.bf16.msra.mxu0 0
  %7028 = vmatprep.subr.bf16.mxu0 0
  %7029 = vmatpush1.bf16.msra.mxu0 0
  %7030 = vmatprep.subr.bf16.mxu0 0
  %7031 = vmatpush1.bf16.msra.mxu0 0
  %7032 = vmatprep.subr.bf16.mxu0 0
  %7033 = vmatpush1.bf16.msra.mxu0 0
  %7034 = vmatprep.subr.bf16.mxu0 0
  %7035 = vmatpush1.bf16.msra.mxu0 0
  %7036 = vmatprep.subr.bf16.mxu0 0
  %7037 = vmatpush1.bf16.msra.mxu0 0
  %7038 = vmatprep.subr.bf16.mxu0 0
  %7039 = vmatpush1.bf16.msra.mxu0 0
  %7040 = vmatprep.subr.bf16.mxu0 0
  %7041 = vmatpush1.bf16.msra.mxu0 0
  %7042 = vmatprep.subr.bf16.mxu0 0
  %7043 = vmatpush1.bf16.msra.mxu0 0
  %7044 = vmatprep.subr.bf16.mxu0 0
  %7045 = vmatpush1.bf16.msra.mxu0 0
  %7046 = vmatprep.mubr.bf16.mxu0 0
  %7047 = vmatmul.mubr.bf16.gmra.mrb[0].mxu0 %v6969
  %v7048 = vpop.f32.mrb[0].mxu0
  %v7049 = vadd.f32 %v7009, %v7048
  %v7050 = vpop.f32.mrb[0].mxu0
  %v7051 = vpop.f32.mrb[0].mxu0
  %v7052 = vpop.f32.mrb[0].mxu0
  %7053 = vdwg.mxu0
  %s7054 = scalar_lea.vmem %s5, 820
  %v7055 = vld [vmem:[%s7054] sm:$0xf]
  %v7056 = vld [vmem:[%s7054 + $0x4] sm:$0xf]
  %v7057 = vld [vmem:[%s7054 + $0x8] sm:$0xf]
  %v7058 = vld [vmem:[%s7054 + $0xc] sm:$0xf]
  %v7059 = vld [vmem:[%s7054 + $0x10] sm:$0xf]
  %v7060 = vld [vmem:[%s7054 + $0x14] sm:$0xf]
  %v7061 = vld [vmem:[%s7054 + $0x18] sm:$0xf]
  %v7062 = vld [vmem:[%s7054 + $0x1c] sm:$0xf]
  %v7063 = vld [vmem:[%s7054 + $0x20] sm:$0xf]
  %v7064 = vld [vmem:[%s7054 + $0x24] sm:$0xf]
  %v7065 = vld [vmem:[%s7054 + $0x28] sm:$0xf]
  %v7066 = vld [vmem:[%s7054 + $0x2c] sm:$0xf]
  %v7067 = vld [vmem:[%s7054 + $0x30] sm:$0xf]
  %v7068 = vld [vmem:[%s7054 + $0x34] sm:$0xf]
  %v7069 = vld [vmem:[%s7054 + $0x38] sm:$0xf]
  %v7070 = vld [vmem:[%s7054 + $0x3c] sm:$0xf]
  %v7071 = vld [vmem:[%s7054 + $0x40] sm:$0xf]
  %v7072 = vld [vmem:[%s7054 + $0x44] sm:$0xf]
  %v7073 = vld [vmem:[%s7054 + $0x48] sm:$0xf]
  %v7074 = vld [vmem:[%s7054 + $0x4c] sm:$0xf]
  %v7075 = vld [vmem:[%s7054 + $0x50] sm:$0xf]
  %v7076 = vld [vmem:[%s7054 + $0x54] sm:$0xf]
  %v7077 = vld [vmem:[%s7054 + $0x58] sm:$0xf]
  %v7078 = vld [vmem:[%s7054 + $0x5c] sm:$0xf]
  %v7079 = vld [vmem:[%s7054 + $0x60] sm:$0xf]
  %v7080 = vld [vmem:[%s7054 + $0x64] sm:$0xf]
  %v7081 = vld [vmem:[%s7054 + $0x68] sm:$0xf]
  %v7082 = vld [vmem:[%s7054 + $0x6c] sm:$0xf]
  %v7083 = vld [vmem:[%s7054 + $0x70] sm:$0xf]
  %v7084 = vld [vmem:[%s7054 + $0x74] sm:$0xf]
  %v7085 = vld [vmem:[%s7054 + $0x78] sm:$0xf]
  %v7086 = vld [vmem:[%s7054 + $0x7c] sm:$0xf]
  %v7087 = vld [vmem:[%s7054 + $0x80] sm:$0xf]
  %v7088 = vld [vmem:[%s7054 + $0x84] sm:$0xf]
  %v7089 = vld [vmem:[%s7054 + $0x88] sm:$0xf]
  %v7090 = vld [vmem:[%s7054 + $0x8c] sm:$0xf]
  %v7091 = vld [vmem:[%s7054 + $0x90] sm:$0xf]
  %v7092 = vld [vmem:[%s7054 + $0x94] sm:$0xf]
  %v7093 = vld [vmem:[%s7054 + $0x98] sm:$0xf]
  %v7094 = vld [vmem:[%s7054 + $0x9c] sm:$0xf]
  %v7095 = vld [vmem:[%s7054 + $0xa0] sm:$0xf]
  %7099 = vrot.lane.b32.xlu0 %v5798, 72
  %v7100 = vpop.permute.xlu0 %7099
  %7101 = vrot.lane.b32.xlu0 %v5799, 72
  %v7102 = vpop.permute.xlu0 %7101
  %7103 = vrot.lane.b32.xlu0 %v5800, 72
  %v7104 = vpop.permute.xlu0 %7103
  %vm7105 = vcmask 588800
  %v7106 = vsel %vm7105, %v7100, %v7102
  %v7107 = vsel %vm7105, %v7102, %v7104
  %v7151 = vunpack.c.l.b16 %v7055
  %v7152 = vunpack.c.l.b16 %v7056
  %v7153 = vunpack.c.l.b16 %v7057
  %v7154 = vunpack.c.l.b16 %v7058
  %v7155 = vunpack.c.l.b16 %v7059
  %v7156 = vunpack.c.l.b16 %v7060
  %v7157 = vunpack.c.l.b16 %v7061
  %v7158 = vunpack.c.l.b16 %v7062
  %v7159 = vunpack.c.l.b16 %v7063
  %v7160 = vunpack.c.l.b16 %v7064
  %v7161 = vunpack.c.l.b16 %v7065
  %v7162 = vunpack.c.l.b16 %v7066
  %v7163 = vunpack.c.l.b16 %v7067
  %v7164 = vunpack.c.l.b16 %v7068
  %v7165 = vunpack.c.l.b16 %v7069
  %v7166 = vunpack.c.l.b16 %v7070
  %v7167 = vunpack.c.l.b16 %v7071
  %v7168 = vunpack.c.l.b16 %v7072
  %v7169 = vunpack.c.l.b16 %v7073
  %v7170 = vunpack.c.l.b16 %v7074
  %v7171 = vunpack.c.l.b16 %v7075
  %v7172 = vunpack.c.l.b16 %v7076
  %v7173 = vunpack.c.l.b16 %v7077
  %v7174 = vunpack.c.l.b16 %v7078
  %v7175 = vunpack.c.l.b16 %v7079
  %v7176 = vunpack.c.l.b16 %v7080
  %v7177 = vunpack.c.l.b16 %v7081
  %v7178 = vunpack.c.l.b16 %v7082
  %v7179 = vunpack.c.l.b16 %v7083
  %v7180 = vunpack.c.l.b16 %v7084
  %v7181 = vunpack.c.l.b16 %v7085
  %v7182 = vunpack.c.l.b16 %v7086
  %v7183 = vunpack.c.l.b16 %v7087
  %v7184 = vunpack.c.l.b16 %v7088
  %v7185 = vunpack.c.l.b16 %v7089
  %v7186 = vunpack.c.l.b16 %v7090
  %v7187 = vunpack.c.l.b16 %v7091
  %v7188 = vunpack.c.l.b16 %v7092
  %v7189 = vunpack.c.l.b16 %v7093
  %v7190 = vunpack.c.l.b16 %v7094
  %v7191 = vunpack.c.l.b16 %v7095
  %v7192 = vpack.c.b16 %v7152, %v7151
  %v7193 = vpack.c.b16 %v7154, %v7153
  %v7194 = vpack.c.b16 %v7156, %v7155
  %v7195 = vpack.c.b16 %v7158, %v7157
  %v7196 = vpack.c.b16 %v7160, %v7159
  %v7197 = vpack.c.b16 %v7162, %v7161
  %v7198 = vpack.c.b16 %v7164, %v7163
  %v7199 = vpack.c.b16 %v7166, %v7165
  %v7200 = vpack.c.b16 %v7168, %v7167
  %v7201 = vpack.c.b16 %v7170, %v7169
  %v7202 = vpack.c.b16 %v7172, %v7171
  %v7203 = vpack.c.b16 %v7174, %v7173
  %v7204 = vpack.c.b16 %v7176, %v7175
  %v7205 = vpack.c.b16 %v7178, %v7177
  %v7206 = vpack.c.b16 %v7180, %v7179
  %v7207 = vpack.c.b16 %v7182, %v7181
  %v7208 = vpack.c.b16 %v7184, %v7183
  %v7209 = vpack.c.b16 %v7186, %v7185
  %v7210 = vpack.c.b16 %v7188, %v7187
  %v7211 = vpack.c.b16 %v7190, %v7189
  %v7212 = vpack.c.b16 %v7191, %v7191
  %v7234 = vsel %vm5965, %v7104, 0
  %v7237 = vsel %vm5969, %v7212, 0
  %7239 = vmatprep.subr.bf16.mxu0 0
  %7240 = vmatpush1.bf16.msra.mxu0 %v7192
  %7241 = vmatprep.subr.bf16.mxu0 0
  %7242 = vmatpush1.bf16.msra.mxu0 %v7193
  %7243 = vmatprep.subr.bf16.mxu0 0
  %7244 = vmatpush1.bf16.msra.mxu0 %v7194
  %7245 = vmatprep.subr.bf16.mxu0 0
  %7246 = vmatpush1.bf16.msra.mxu0 %v7195
  %7247 = vmatprep.subr.bf16.mxu0 0
  %7248 = vmatpush1.bf16.msra.mxu0 %v7196
  %7249 = vmatprep.subr.bf16.mxu0 0
  %7250 = vmatpush1.bf16.msra.mxu0 %v7197
  %7251 = vmatprep.subr.bf16.mxu0 0
  %7252 = vmatpush1.bf16.msra.mxu0 %v7198
  %7253 = vmatprep.subr.bf16.mxu0 0
  %7254 = vmatpush1.bf16.msra.mxu0 %v7199
  %7255 = vmatprep.subr.bf16.mxu0 0
  %7256 = vmatpush1.bf16.msra.mxu0 %v7200
  %7257 = vmatprep.subr.bf16.mxu0 0
  %7258 = vmatpush1.bf16.msra.mxu0 %v7201
  %7259 = vmatprep.subr.bf16.mxu0 0
  %7260 = vmatpush1.bf16.msra.mxu0 %v7202
  %7261 = vmatprep.subr.bf16.mxu0 0
  %7262 = vmatpush1.bf16.msra.mxu0 %v7203
  %7263 = vmatprep.subr.bf16.mxu0 0
  %7264 = vmatpush1.bf16.msra.mxu0 %v7204
  %7265 = vmatprep.subr.bf16.mxu0 0
  %7266 = vmatpush1.bf16.msra.mxu0 %v7205
  %7267 = vmatprep.subr.bf16.mxu0 0
  %7268 = vmatpush1.bf16.msra.mxu0 %v7206
  %7269 = vmatprep.subr.bf16.mxu0 0
  %7270 = vmatpush1.bf16.msra.mxu0 %v7207
  %7271 = vmatprep.mubr.bf16.mxu0 %v7107
  %7272 = vmatmul.mubr.bf16.gmra.mrb[0].mxu0 %v7106
  %v7273 = vpop.f32.mrb[0].mxu0
  %v7274 = vadd.f32 0.0, %v7273
  %v7275 = vpop.f32.mrb[0].mxu0
  %v7276 = vpop.f32.mrb[0].mxu0
  %v7277 = vpop.f32.mrb[0].mxu0
  %7278 = vdwg.mxu0
  %7279 = vmatprep.subr.bf16.mxu0 0
  %7280 = vmatpush1.bf16.msra.mxu0 %v7208
  %7281 = vmatprep.subr.bf16.mxu0 0
  %7282 = vmatpush1.bf16.msra.mxu0 %v7209
  %7283 = vmatprep.subr.bf16.mxu0 0
  %7284 = vmatpush1.bf16.msra.mxu0 %v7210
  %7285 = vmatprep.subr.bf16.mxu0 0
  %7286 = vmatpush1.bf16.msra.mxu0 %v7211
  %7287 = vmatprep.subr.bf16.mxu0 0
  %7288 = vmatpush1.bf16.msra.mxu0 %v7237
  %7289 = vmatprep.subr.bf16.mxu0 0
  %7290 = vmatpush1.bf16.msra.mxu0 0
  %7291 = vmatprep.subr.bf16.mxu0 0
  %7292 = vmatpush1.bf16.msra.mxu0 0
  %7293 = vmatprep.subr.bf16.mxu0 0
  %7294 = vmatpush1.bf16.msra.mxu0 0
  %7295 = vmatprep.subr.bf16.mxu0 0
  %7296 = vmatpush1.bf16.msra.mxu0 0
  %7297 = vmatprep.subr.bf16.mxu0 0
  %7298 = vmatpush1.bf16.msra.mxu0 0
  %7299 = vmatprep.subr.bf16.mxu0 0
  %7300 = vmatpush1.bf16.msra.mxu0 0
  %7301 = vmatprep.subr.bf16.mxu0 0
  %7302 = vmatpush1.bf16.msra.mxu0 0
  %7303 = vmatprep.subr.bf16.mxu0 0
  %7304 = vmatpush1.bf16.msra.mxu0 0
  %7305 = vmatprep.subr.bf16.mxu0 0
  %7306 = vmatpush1.bf16.msra.mxu0 0
  %7307 = vmatprep.subr.bf16.mxu0 0
  %7308 = vmatpush1.bf16.msra.mxu0 0
  %7309 = vmatprep.subr.bf16.mxu0 0
  %7310 = vmatpush1.bf16.msra.mxu0 0
  %7311 = vmatprep.mubr.bf16.mxu0 0
  %7312 = vmatmul.mubr.bf16.gmra.mrb[0].mxu0 %v7234
  %v7313 = vpop.f32.mrb[0].mxu0
  %v7314 = vadd.f32 %v7274, %v7313
  %v7315 = vpop.f32.mrb[0].mxu0
  %v7316 = vpop.f32.mrb[0].mxu0
  %v7317 = vpop.f32.mrb[0].mxu0
  %7318 = vdwg.mxu0
  %v7319 = vld [vmem:[%s6] sm:$0x3f]
  %v7321 = vlaneseq
  %v7322 = vshrl.u32 %v7321, 7
  %v7323 = vsub.s32 0, %v7322
  %v7324 = vrot.slane %v7319, %v7323
  %v7325 = vlaneseq
  %v7326 = vshrl.u32 %v7325, 7
  %v7327 = vsub.s32 1, %v7326
  %v7328 = vrot.slane %v7319, %v7327
  %v7329 = vlaneseq
  %v7330 = vshrl.u32 %v7329, 7
  %v7331 = vsub.s32 2, %v7330
  %v7332 = vrot.slane %v7319, %v7331
  %v7333 = vlaneseq
  %v7334 = vshrl.u32 %v7333, 7
  %v7335 = vsub.s32 3, %v7334
  %v7336 = vrot.slane %v7319, %v7335
  %v7337 = vlaneseq
  %v7338 = vshrl.u32 %v7337, 7
  %v7339 = vsub.s32 4, %v7338
  %v7340 = vrot.slane %v7319, %v7339
  %v7341 = vlaneseq
  %v7342 = vshrl.u32 %v7341, 7
  %v7343 = vsub.s32 5, %v7342
  %v7344 = vrot.slane %v7319, %v7343
  %v7351 = vadd.f32 %v6048, %v7324
  %v7352 = vadd.f32 %v6296, %v7328
  %v7353 = vadd.f32 %v6547, %v7332
  %v7354 = vadd.f32 %v6798, %v7336
  %v7355 = vadd.f32 %v7049, %v7340
  %v7356 = vadd.f32 %v7314, %v7344
  %v7357 = vmul.f32 %v7351, 0.01
  %v7358 = vmul.f32 %v7352, 0.01
  %v7359 = vmul.f32 %v7353, 0.01
  %v7360 = vmul.f32 %v7354, 0.01
  %v7361 = vmul.f32 %v7355, 0.01
  %v7362 = vmul.f32 %v7356, 0.01
  %v7363 = vmax.f32 %v7351, %v7357
  %v7364 = vmax.f32 %v7352, %v7358
  %v7365 = vmax.f32 %v7353, %v7359
  %v7366 = vmax.f32 %v7354, %v7360
  %v7367 = vmax.f32 %v7355, %v7361
  %v7368 = vmax.f32 %v7356, %v7362
  %v7369 = vpack.c.bf16 %v7363, %v7363
  %v7370 = vpack.c.bf16 %v7364, %v7364
  %v7371 = vpack.c.bf16 %v7365, %v7365
  %v7372 = vpack.c.bf16 %v7366, %v7366
  %v7373 = vpack.c.bf16 %v7367, %v7367
  %v7374 = vpack.c.bf16 %v7368, %v7368
  %v7375 = vld [vmem:[%s7] sm:$0xff]
  %v7376 = vld [vmem:[%s7 + $0x8] sm:$0xff]
  %v7377 = vld [vmem:[%s7 + $0x10] sm:$0xff]
  %v7378 = vld [vmem:[%s7 + $0x18] sm:$0xff]
  %v7379 = vld [vmem:[%s7 + $0x20] sm:$0xff]
  %v7380 = vld [vmem:[%s7 + $0x28] sm:$0xff]
  %v7381 = vld [vmem:[%s7 + $0x30] sm:$0xff]
  %v7382 = vld [vmem:[%s7 + $0x38] sm:$0xff]
  %v7383 = vld [vmem:[%s7 + $0x40] sm:$0xff]
  %v7384 = vld [vmem:[%s7 + $0x48] sm:$0xff]
  %v7385 = vld [vmem:[%s7 + $0x50] sm:$0xff]
  %v7386 = vld [vmem:[%s7 + $0x58] sm:$0xff]
  %v7387 = vld [vmem:[%s7 + $0x60] sm:$0xff]
  %v7388 = vld [vmem:[%s7 + $0x68] sm:$0xff]
  %v7389 = vld [vmem:[%s7 + $0x70] sm:$0xff]
  %v7390 = vld [vmem:[%s7 + $0x78] sm:$0xff]
  %v7391 = vld [vmem:[%s7 + $0x80] sm:$0xff]
  %v7392 = vld [vmem:[%s7 + $0x88] sm:$0xff]
  %v7393 = vld [vmem:[%s7 + $0x90] sm:$0xff]
  %v7394 = vld [vmem:[%s7 + $0x98] sm:$0xff]
  %v7395 = vld [vmem:[%s7 + $0xa0] sm:$0xff]
  %v7396 = vld [vmem:[%s7 + $0xa8] sm:$0xff]
  %v7397 = vld [vmem:[%s7 + $0xb0] sm:$0xff]
  %v7398 = vld [vmem:[%s7 + $0xb8] sm:$0xff]
  %v7399 = vld [vmem:[%s7 + $0xc0] sm:$0xff]
  %v7400 = vld [vmem:[%s7 + $0xc8] sm:$0xff]
  %v7401 = vld [vmem:[%s7 + $0xd0] sm:$0xff]
  %v7402 = vld [vmem:[%s7 + $0xd8] sm:$0xff]
  %v7403 = vld [vmem:[%s7 + $0xe0] sm:$0xff]
  %v7404 = vld [vmem:[%s7 + $0xe8] sm:$0xff]
  %v7405 = vld [vmem:[%s7 + $0xf0] sm:$0xff]
  %v7406 = vld [vmem:[%s7 + $0xf8] sm:$0xff]
  %v7407 = vld [vmem:[%s7 + $0x100] sm:$0xff]
  %v7408 = vld [vmem:[%s7 + $0x108] sm:$0xff]
  %v7409 = vld [vmem:[%s7 + $0x110] sm:$0xff]
  %v7410 = vld [vmem:[%s7 + $0x118] sm:$0xff]
  %v7411 = vld [vmem:[%s7 + $0x120] sm:$0xff]
  %v7412 = vld [vmem:[%s7 + $0x128] sm:$0xff]
  %v7413 = vld [vmem:[%s7 + $0x130] sm:$0xff]
  %v7414 = vld [vmem:[%s7 + $0x138] sm:$0xff]
  %v7415 = vld [vmem:[%s7 + $0x140] sm:$0xff]
  %v7416 = vld [vmem:[%s7 + $0x148] sm:$0xff]
  %v7417 = vld [vmem:[%s7 + $0x150] sm:$0xff]
  %v7418 = vld [vmem:[%s7 + $0x158] sm:$0xff]
  %v7419 = vld [vmem:[%s7 + $0x160] sm:$0xff]
  %v7420 = vld [vmem:[%s7 + $0x168] sm:$0xff]
  %v7421 = vld [vmem:[%s7 + $0x170] sm:$0xff]
  %v7422 = vld [vmem:[%s7 + $0x178] sm:$0xff]
  %v7423 = vld [vmem:[%s7 + $0x180] sm:$0xff]
  %v7424 = vld [vmem:[%s7 + $0x188] sm:$0xff]
  %v7425 = vld [vmem:[%s7 + $0x190] sm:$0xff]
  %v7426 = vld [vmem:[%s7 + $0x198] sm:$0xff]
  %v7427 = vld [vmem:[%s7 + $0x1a0] sm:$0xff]
  %v7428 = vld [vmem:[%s7 + $0x1a8] sm:$0xff]
  %v7429 = vld [vmem:[%s7 + $0x1b0] sm:$0xff]
  %v7430 = vld [vmem:[%s7 + $0x1b8] sm:$0xff]
  %v7431 = vld [vmem:[%s7 + $0x1c0] sm:$0xff]
  %v7432 = vld [vmem:[%s7 + $0x1c8] sm:$0xff]
  %v7433 = vld [vmem:[%s7 + $0x1d0] sm:$0xff]
  %v7434 = vld [vmem:[%s7 + $0x1d8] sm:$0xff]
  %v7435 = vld [vmem:[%s7 + $0x1e0] sm:$0xff]
  %v7436 = vld [vmem:[%s7 + $0x1e8] sm:$0xff]
  %v7437 = vld [vmem:[%s7 + $0x1f0] sm:$0xff]
  %v7438 = vld [vmem:[%s7 + $0x1f8] sm:$0xff]
  %v7439 = vld [vmem:[%s7 + $0x200] sm:$0xff]
  %v7440 = vld [vmem:[%s7 + $0x208] sm:$0xff]
  %v7441 = vld [vmem:[%s7 + $0x210] sm:$0xff]
  %v7442 = vld [vmem:[%s7 + $0x218] sm:$0xff]
  %v7443 = vld [vmem:[%s7 + $0x220] sm:$0xff]
  %v7444 = vld [vmem:[%s7 + $0x228] sm:$0xff]
  %v7445 = vld [vmem:[%s7 + $0x230] sm:$0xff]
  %v7446 = vld [vmem:[%s7 + $0x238] sm:$0xff]
  %v7447 = vld [vmem:[%s7 + $0x240] sm:$0xff]
  %v7448 = vld [vmem:[%s7 + $0x248] sm:$0xff]
  %v7449 = vld [vmem:[%s7 + $0x250] sm:$0xff]
  %v7450 = vld [vmem:[%s7 + $0x258] sm:$0xff]
  %v7451 = vld [vmem:[%s7 + $0x260] sm:$0xff]
  %v7452 = vld [vmem:[%s7 + $0x268] sm:$0xff]
  %v7453 = vld [vmem:[%s7 + $0x270] sm:$0xff]
  %v7454 = vld [vmem:[%s7 + $0x278] sm:$0xff]
  %v7455 = vld [vmem:[%s7 + $0x280] sm:$0xff]
  %v7456 = vld [vmem:[%s7 + $0x288] sm:$0xff]
  %v7457 = vld [vmem:[%s7 + $0x290] sm:$0xff]
  %v7458 = vld [vmem:[%s7 + $0x298] sm:$0xff]
  %v7459 = vld [vmem:[%s7 + $0x2a0] sm:$0xff]
  %v7460 = vld [vmem:[%s7 + $0x2a8] sm:$0xff]
  %v7461 = vld [vmem:[%s7 + $0x2b0] sm:$0xff]
  %v7462 = vld [vmem:[%s7 + $0x2b8] sm:$0xff]
  %v7463 = vld [vmem:[%s7 + $0x2c0] sm:$0xff]
  %v7464 = vld [vmem:[%s7 + $0x2c8] sm:$0xff]
  %v7465 = vld [vmem:[%s7 + $0x2d0] sm:$0xff]
  %v7466 = vld [vmem:[%s7 + $0x2d8] sm:$0xff]
  %v7467 = vld [vmem:[%s7 + $0x2e0] sm:$0xff]
  %v7468 = vld [vmem:[%s7 + $0x2e8] sm:$0xff]
  %v7469 = vld [vmem:[%s7 + $0x2f0] sm:$0xff]
  %v7470 = vld [vmem:[%s7 + $0x2f8] sm:$0xff]
  %v7471 = vld [vmem:[%s7 + $0x300] sm:$0xff]
  %v7472 = vld [vmem:[%s7 + $0x308] sm:$0xff]
  %v7473 = vld [vmem:[%s7 + $0x310] sm:$0xff]
  %v7474 = vld [vmem:[%s7 + $0x318] sm:$0xff]
  %v7475 = vld [vmem:[%s7 + $0x320] sm:$0xff]
  %v7476 = vld [vmem:[%s7 + $0x328] sm:$0xff]
  %v7477 = vld [vmem:[%s7 + $0x330] sm:$0xff]
  %v7478 = vld [vmem:[%s7 + $0x338] sm:$0xff]
  %v7479 = vld [vmem:[%s7 + $0x340] sm:$0xff]
  %v7480 = vld [vmem:[%s7 + $0x348] sm:$0xff]
  %v7481 = vld [vmem:[%s7 + $0x350] sm:$0xff]
  %v7482 = vld [vmem:[%s7 + $0x358] sm:$0xff]
  %v7483 = vld [vmem:[%s7 + $0x360] sm:$0xff]
  %v7484 = vld [vmem:[%s7 + $0x368] sm:$0xff]
  %v7485 = vld [vmem:[%s7 + $0x370] sm:$0xff]
  %v7486 = vld [vmem:[%s7 + $0x378] sm:$0xff]
  %v7487 = vld [vmem:[%s7 + $0x380] sm:$0xff]
  %v7488 = vld [vmem:[%s7 + $0x388] sm:$0xff]
  %v7489 = vld [vmem:[%s7 + $0x390] sm:$0xff]
  %v7490 = vld [vmem:[%s7 + $0x398] sm:$0xff]
  %v7491 = vld [vmem:[%s7 + $0x3a0] sm:$0xff]
  %v7492 = vld [vmem:[%s7 + $0x3a8] sm:$0xff]
  %v7493 = vld [vmem:[%s7 + $0x3b0] sm:$0xff]
  %v7494 = vld [vmem:[%s7 + $0x3b8] sm:$0xff]
  %v7495 = vld [vmem:[%s7 + $0x3c0] sm:$0xff]
  %v7496 = vld [vmem:[%s7 + $0x3c8] sm:$0xff]
  %v7497 = vld [vmem:[%s7 + $0x3d0] sm:$0xff]
  %v7498 = vld [vmem:[%s7 + $0x3d8] sm:$0xff]
  %v7499 = vld [vmem:[%s7 + $0x3e0] sm:$0xff]
  %v7500 = vld [vmem:[%s7 + $0x3e8] sm:$0xff]
  %v7501 = vld [vmem:[%s7 + $0x3f0] sm:$0xff]
  %v7502 = vld [vmem:[%s7 + $0x3f8] sm:$0xff]
  %v7503 = vld [vmem:[%s7 + $0x400] sm:$0xff]
  %v7504 = vld [vmem:[%s7 + $0x408] sm:$0xff]
  %v7505 = vld [vmem:[%s7 + $0x410] sm:$0xff]
  %v7506 = vld [vmem:[%s7 + $0x418] sm:$0xff]
  %v7507 = vld [vmem:[%s7 + $0x420] sm:$0xff]
  %v7508 = vld [vmem:[%s7 + $0x428] sm:$0xff]
  %v7509 = vld [vmem:[%s7 + $0x430] sm:$0xff]
  %v7510 = vld [vmem:[%s7 + $0x438] sm:$0xff]
  %v7511 = vld [vmem:[%s7 + $0x440] sm:$0xff]
  %v7512 = vld [vmem:[%s7 + $0x448] sm:$0xff]
  %v7513 = vld [vmem:[%s7 + $0x450] sm:$0xff]
  %v7514 = vld [vmem:[%s7 + $0x458] sm:$0xff]
  %v7515 = vld [vmem:[%s7 + $0x460] sm:$0xff]
  %v7516 = vld [vmem:[%s7 + $0x468] sm:$0xff]
  %v7517 = vld [vmem:[%s7 + $0x470] sm:$0xff]
  %v7518 = vld [vmem:[%s7 + $0x478] sm:$0xff]
  %v7519 = vld [vmem:[%s7 + $0x480] sm:$0xff]
  %v7520 = vld [vmem:[%s7 + $0x488] sm:$0xff]
  %v7521 = vld [vmem:[%s7 + $0x490] sm:$0xff]
  %v7522 = vld [vmem:[%s7 + $0x498] sm:$0xff]
  %v7523 = vld [vmem:[%s7 + $0x4a0] sm:$0xff]
  %v7524 = vld [vmem:[%s7 + $0x4a8] sm:$0xff]
  %v7525 = vld [vmem:[%s7 + $0x4b0] sm:$0xff]
  %v7526 = vld [vmem:[%s7 + $0x4b8] sm:$0xff]
  %v7527 = vld [vmem:[%s7 + $0x4c0] sm:$0xff]
  %v7528 = vld [vmem:[%s7 + $0x4c8] sm:$0xff]
  %v7529 = vld [vmem:[%s7 + $0x4d0] sm:$0xff]
  %v7530 = vld [vmem:[%s7 + $0x4d8] sm:$0xff]
  %v7531 = vld [vmem:[%s7 + $0x4e0] sm:$0xff]
  %v7532 = vld [vmem:[%s7 + $0x4e8] sm:$0xff]
  %v7533 = vld [vmem:[%s7 + $0x4f0] sm:$0xff]
  %v7534 = vld [vmem:[%s7 + $0x4f8] sm:$0xff]
  %v7535 = vld [vmem:[%s7 + $0x500] sm:$0xff]
  %v7536 = vld [vmem:[%s7 + $0x508] sm:$0xff]
  %v7537 = vld [vmem:[%s7 + $0x510] sm:$0xff]
  %v7538 = vld [vmem:[%s7 + $0x518] sm:$0xff]
  %v7539 = vld [vmem:[%s7 + $0x520] sm:$0xff]
  %v7540 = vld [vmem:[%s7 + $0x528] sm:$0xff]
  %v7541 = vld [vmem:[%s7 + $0x530] sm:$0xff]
  %v7542 = vld [vmem:[%s7 + $0x538] sm:$0xff]
  %v7543 = vld [vmem:[%s7 + $0x540] sm:$0xff]
  %v7544 = vld [vmem:[%s7 + $0x548] sm:$0xff]
  %v7545 = vld [vmem:[%s7 + $0x550] sm:$0xff]
  %v7546 = vld [vmem:[%s7 + $0x558] sm:$0xff]
  %v7547 = vld [vmem:[%s7 + $0x560] sm:$0xff]
  %v7548 = vld [vmem:[%s7 + $0x568] sm:$0xff]
  %v7549 = vld [vmem:[%s7 + $0x570] sm:$0xff]
  %v7550 = vld [vmem:[%s7 + $0x578] sm:$0xff]
  %v7551 = vld [vmem:[%s7 + $0x580] sm:$0xff]
  %v7552 = vld [vmem:[%s7 + $0x588] sm:$0xff]
  %v7553 = vld [vmem:[%s7 + $0x590] sm:$0xff]
  %v7554 = vld [vmem:[%s7 + $0x598] sm:$0xff]
  %v7555 = vld [vmem:[%s7 + $0x5a0] sm:$0xff]
  %v7556 = vld [vmem:[%s7 + $0x5a8] sm:$0xff]
  %v7557 = vld [vmem:[%s7 + $0x5b0] sm:$0xff]
  %v7558 = vld [vmem:[%s7 + $0x5b8] sm:$0xff]
  %v7559 = vld [vmem:[%s7 + $0x5c0] sm:$0xff]
  %v7560 = vld [vmem:[%s7 + $0x5c8] sm:$0xff]
  %v7561 = vld [vmem:[%s7 + $0x5d0] sm:$0xff]
  %v7562 = vld [vmem:[%s7 + $0x5d8] sm:$0xff]
  %v7563 = vld [vmem:[%s7 + $0x5e0] sm:$0xff]
  %v7564 = vld [vmem:[%s7 + $0x5e8] sm:$0xff]
  %v7565 = vld [vmem:[%s7 + $0x5f0] sm:$0xff]
  %v7566 = vld [vmem:[%s7 + $0x5f8] sm:$0xff]
  %v7567 = vld [vmem:[%s8] sm:$0xf]
  %v7569 = vlaneseq
  %v7570 = vshrl.u32 %v7569, 7
  %v7571 = vsub.s32 0, %v7570
  %v7572 = vrot.slane %v7567, %v7571
  %v7573 = vlaneseq
  %v7574 = vshrl.u32 %v7573, 7
  %v7575 = vsub.s32 1, %v7574
  %v7576 = vrot.slane %v7567, %v7575
  %v7577 = vlaneseq
  %v7578 = vshrl.u32 %v7577, 7
  %v7579 = vsub.s32 2, %v7578
  %v7580 = vrot.slane %v7567, %v7579
  %v7581 = vlaneseq
  %v7582 = vshrl.u32 %v7581, 7
  %v7583 = vsub.s32 3, %v7582
  %v7584 = vrot.slane %v7567, %v7583
  %v7781 = vunpack.c.l.b16 %v7375
  %v7782 = vunpack.c.h.b16 %v7375
  %v7783 = vunpack.c.l.b16 %v7376
  %v7784 = vunpack.c.h.b16 %v7376
  %v7785 = vunpack.c.l.b16 %v7377
  %v7786 = vunpack.c.h.b16 %v7377
  %v7787 = vunpack.c.l.b16 %v7378
  %v7788 = vunpack.c.h.b16 %v7378
  %v7789 = vunpack.c.l.b16 %v7379
  %v7790 = vunpack.c.h.b16 %v7379
  %v7791 = vunpack.c.l.b16 %v7380
  %v7792 = vunpack.c.h.b16 %v7380
  %v7793 = vunpack.c.l.b16 %v7381
  %v7794 = vunpack.c.h.b16 %v7381
  %v7795 = vunpack.c.l.b16 %v7382
  %v7796 = vunpack.c.h.b16 %v7382
  %v7797 = vunpack.c.l.b16 %v7383
  %v7798 = vunpack.c.h.b16 %v7383
  %v7799 = vunpack.c.l.b16 %v7384
  %v7800 = vunpack.c.h.b16 %v7384
  %v7801 = vunpack.c.l.b16 %v7385
  %v7802 = vunpack.c.h.b16 %v7385
  %v7803 = vunpack.c.l.b16 %v7386
  %v7804 = vunpack.c.h.b16 %v7386
  %v7805 = vunpack.c.l.b16 %v7387
  %v7806 = vunpack.c.h.b16 %v7387
  %v7807 = vunpack.c.l.b16 %v7388
  %v7808 = vunpack.c.h.b16 %v7388
  %v7809 = vunpack.c.l.b16 %v7389
  %v7810 = vunpack.c.h.b16 %v7389
  %v7811 = vunpack.c.l.b16 %v7390
  %v7812 = vunpack.c.h.b16 %v7390
  %v7813 = vunpack.c.l.b16 %v7391
  %v7814 = vunpack.c.h.b16 %v7391
  %v7815 = vunpack.c.l.b16 %v7392
  %v7816 = vunpack.c.h.b16 %v7392
  %v7817 = vunpack.c.l.b16 %v7393
  %v7818 = vunpack.c.h.b16 %v7393
  %v7819 = vunpack.c.l.b16 %v7394
  %v7820 = vunpack.c.h.b16 %v7394
  %v7821 = vunpack.c.l.b16 %v7395
  %v7822 = vunpack.c.h.b16 %v7395
  %v7823 = vunpack.c.l.b16 %v7396
  %v7824 = vunpack.c.h.b16 %v7396
  %v7825 = vunpack.c.l.b16 %v7397
  %v7826 = vunpack.c.h.b16 %v7397
  %v7827 = vunpack.c.l.b16 %v7398
  %v7828 = vunpack.c.h.b16 %v7398
  %v7829 = vunpack.c.l.b16 %v7399
  %v7830 = vunpack.c.h.b16 %v7399
  %v7831 = vunpack.c.l.b16 %v7400
  %v7832 = vunpack.c.h.b16 %v7400
  %v7833 = vunpack.c.l.b16 %v7401
  %v7834 = vunpack.c.h.b16 %v7401
  %v7835 = vunpack.c.l.b16 %v7402
  %v7836 = vunpack.c.h.b16 %v7402
  %v7837 = vunpack.c.l.b16 %v7403
  %v7838 = vunpack.c.h.b16 %v7403
  %v7839 = vunpack.c.l.b16 %v7404
  %v7840 = vunpack.c.h.b16 %v7404
  %v7841 = vunpack.c.l.b16 %v7405
  %v7842 = vunpack.c.h.b16 %v7405
  %v7843 = vunpack.c.l.b16 %v7406
  %v7844 = vunpack.c.h.b16 %v7406
  %v7845 = vunpack.c.l.b16 %v7407
  %v7846 = vunpack.c.h.b16 %v7407
  %v7847 = vunpack.c.l.b16 %v7408
  %v7848 = vunpack.c.h.b16 %v7408
  %v7849 = vunpack.c.l.b16 %v7409
  %v7850 = vunpack.c.h.b16 %v7409
  %v7851 = vunpack.c.l.b16 %v7410
  %v7852 = vunpack.c.h.b16 %v7410
  %v7853 = vunpack.c.l.b16 %v7411
  %v7854 = vunpack.c.h.b16 %v7411
  %v7855 = vunpack.c.l.b16 %v7412
  %v7856 = vunpack.c.h.b16 %v7412
  %v7857 = vunpack.c.l.b16 %v7413
  %v7858 = vunpack.c.h.b16 %v7413
  %v7859 = vunpack.c.l.b16 %v7414
  %v7860 = vunpack.c.h.b16 %v7414
  %v7861 = vunpack.c.l.b16 %v7415
  %v7862 = vunpack.c.h.b16 %v7415
  %v7863 = vunpack.c.l.b16 %v7416
  %v7864 = vunpack.c.h.b16 %v7416
  %v7865 = vunpack.c.l.b16 %v7417
  %v7866 = vunpack.c.h.b16 %v7417
  %v7867 = vunpack.c.l.b16 %v7418
  %v7868 = vunpack.c.h.b16 %v7418
  %v7869 = vunpack.c.l.b16 %v7419
  %v7870 = vunpack.c.h.b16 %v7419
  %v7871 = vunpack.c.l.b16 %v7420
  %v7872 = vunpack.c.h.b16 %v7420
  %v7873 = vunpack.c.l.b16 %v7421
  %v7874 = vunpack.c.h.b16 %v7421
  %v7875 = vunpack.c.l.b16 %v7422
  %v7876 = vunpack.c.h.b16 %v7422
  %v7877 = vunpack.c.l.b16 %v7423
  %v7878 = vunpack.c.h.b16 %v7423
  %v7879 = vunpack.c.l.b16 %v7424
  %v7880 = vunpack.c.h.b16 %v7424
  %v7881 = vunpack.c.l.b16 %v7425
  %v7882 = vunpack.c.h.b16 %v7425
  %v7883 = vunpack.c.l.b16 %v7426
  %v7884 = vunpack.c.h.b16 %v7426
  %v7885 = vunpack.c.l.b16 %v7427
  %v7886 = vunpack.c.h.b16 %v7427
  %v7887 = vunpack.c.l.b16 %v7428
  %v7888 = vunpack.c.h.b16 %v7428
  %v7889 = vunpack.c.l.b16 %v7429
  %v7890 = vunpack.c.h.b16 %v7429
  %v7891 = vunpack.c.l.b16 %v7430
  %v7892 = vunpack.c.h.b16 %v7430
  %v7893 = vunpack.c.l.b16 %v7431
  %v7894 = vunpack.c.h.b16 %v7431
  %v7895 = vunpack.c.l.b16 %v7432
  %v7896 = vunpack.c.h.b16 %v7432
  %v7897 = vunpack.c.l.b16 %v7433
  %v7898 = vunpack.c.h.b16 %v7433
  %v7899 = vunpack.c.l.b16 %v7434
  %v7900 = vunpack.c.h.b16 %v7434
  %v7901 = vunpack.c.l.b16 %v7435
  %v7902 = vunpack.c.h.b16 %v7435
  %v7903 = vunpack.c.l.b16 %v7436
  %v7904 = vunpack.c.h.b16 %v7436
  %v7905 = vunpack.c.l.b16 %v7437
  %v7906 = vunpack.c.h.b16 %v7437
  %v7907 = vunpack.c.l.b16 %v7438
  %v7908 = vunpack.c.h.b16 %v7438
  %v7909 = vunpack.c.l.b16 %v7439
  %v7910 = vunpack.c.h.b16 %v7439
  %v7911 = vunpack.c.l.b16 %v7440
  %v7912 = vunpack.c.h.b16 %v7440
  %v7913 = vunpack.c.l.b16 %v7441
  %v7914 = vunpack.c.h.b16 %v7441
  %v7915 = vunpack.c.l.b16 %v7442
  %v7916 = vunpack.c.h.b16 %v7442
  %v7917 = vunpack.c.l.b16 %v7443
  %v7918 = vunpack.c.h.b16 %v7443
  %v7919 = vunpack.c.l.b16 %v7444
  %v7920 = vunpack.c.h.b16 %v7444
  %v7921 = vunpack.c.l.b16 %v7445
  %v7922 = vunpack.c.h.b16 %v7445
  %v7923 = vunpack.c.l.b16 %v7446
  %v7924 = vunpack.c.h.b16 %v7446
  %v7925 = vunpack.c.l.b16 %v7447
  %v7926 = vunpack.c.h.b16 %v7447
  %v7927 = vunpack.c.l.b16 %v7448
  %v7928 = vunpack.c.h.b16 %v7448
  %v7929 = vunpack.c.l.b16 %v7449
  %v7930 = vunpack.c.h.b16 %v7449
  %v7931 = vunpack.c.l.b16 %v7450
  %v7932 = vunpack.c.h.b16 %v7450
  %v7933 = vunpack.c.l.b16 %v7451
  %v7934 = vunpack.c.h.b16 %v7451
  %v7935 = vunpack.c.l.b16 %v7452
  %v7936 = vunpack.c.h.b16 %v7452
  %v7937 = vunpack.c.l.b16 %v7453
  %v7938 = vunpack.c.h.b16 %v7453
  %v7939 = vunpack.c.l.b16 %v7454
  %v7940 = vunpack.c.h.b16 %v7454
  %v7941 = vunpack.c.l.b16 %v7455
  %v7942 = vunpack.c.h.b16 %v7455
  %v7943 = vunpack.c.l.b16 %v7456
  %v7944 = vunpack.c.h.b16 %v7456
  %v7945 = vunpack.c.l.b16 %v7457
  %v7946 = vunpack.c.h.b16 %v7457
  %v7947 = vunpack.c.l.b16 %v7458
  %v7948 = vunpack.c.h.b16 %v7458
  %v7949 = vunpack.c.l.b16 %v7459
  %v7950 = vunpack.c.h.b16 %v7459
  %v7951 = vunpack.c.l.b16 %v7460
  %v7952 = vunpack.c.h.b16 %v7460
  %v7953 = vunpack.c.l.b16 %v7461
  %v7954 = vunpack.c.h.b16 %v7461
  %v7955 = vunpack.c.l.b16 %v7462
  %v7956 = vunpack.c.h.b16 %v7462
  %v7957 = vunpack.c.l.b16 %v7463
  %v7958 = vunpack.c.h.b16 %v7463
  %v7959 = vunpack.c.l.b16 %v7464
  %v7960 = vunpack.c.h.b16 %v7464
  %v7961 = vunpack.c.l.b16 %v7465
  %v7962 = vunpack.c.h.b16 %v7465
  %v7963 = vunpack.c.l.b16 %v7466
  %v7964 = vunpack.c.h.b16 %v7466
  %v7965 = vunpack.c.l.b16 %v7467
  %v7966 = vunpack.c.h.b16 %v7467
  %v7967 = vunpack.c.l.b16 %v7468
  %v7968 = vunpack.c.h.b16 %v7468
  %v7969 = vunpack.c.l.b16 %v7469
  %v7970 = vunpack.c.h.b16 %v7469
  %v7971 = vunpack.c.l.b16 %v7470
  %v7972 = vunpack.c.h.b16 %v7470
  %v7973 = vunpack.c.l.b16 %v7471
  %v7974 = vunpack.c.h.b16 %v7471
  %v7975 = vunpack.c.l.b16 %v7472
  %v7976 = vunpack.c.h.b16 %v7472
  %v7977 = vunpack.c.l.b16 %v7473
  %v7978 = vunpack.c.h.b16 %v7473
  %v7979 = vunpack.c.l.b16 %v7474
  %v7980 = vunpack.c.h.b16 %v7474
  %v7981 = vunpack.c.l.b16 %v7475
  %v7982 = vunpack.c.h.b16 %v7475
  %v7983 = vunpack.c.l.b16 %v7476
  %v7984 = vunpack.c.h.b16 %v7476
  %v7985 = vunpack.c.l.b16 %v7477
  %v7986 = vunpack.c.h.b16 %v7477
  %v7987 = vunpack.c.l.b16 %v7478
  %v7988 = vunpack.c.h.b16 %v7478
  %v7989 = vunpack.c.l.b16 %v7479
  %v7990 = vunpack.c.h.b16 %v7479
  %v7991 = vunpack.c.l.b16 %v7480
  %v7992 = vunpack.c.h.b16 %v7480
  %v7993 = vunpack.c.l.b16 %v7481
  %v7994 = vunpack.c.h.b16 %v7481
  %v7995 = vunpack.c.l.b16 %v7482
  %v7996 = vunpack.c.h.b16 %v7482
  %v7997 = vunpack.c.l.b16 %v7483
  %v7998 = vunpack.c.h.b16 %v7483
  %v7999 = vunpack.c.l.b16 %v7484
  %v8000 = vunpack.c.h.b16 %v7484
  %v8001 = vunpack.c.l.b16 %v7485
  %v8002 = vunpack.c.h.b16 %v7485
  %v8003 = vunpack.c.l.b16 %v7486
  %v8004 = vunpack.c.h.b16 %v7486
  %v8005 = vunpack.c.l.b16 %v7487
  %v8006 = vunpack.c.h.b16 %v7487
  %v8007 = vunpack.c.l.b16 %v7488
  %v8008 = vunpack.c.h.b16 %v7488
  %v8009 = vunpack.c.l.b16 %v7489
  %v8010 = vunpack.c.h.b16 %v7489
  %v8011 = vunpack.c.l.b16 %v7490
  %v8012 = vunpack.c.h.b16 %v7490
  %v8013 = vunpack.c.l.b16 %v7491
  %v8014 = vunpack.c.h.b16 %v7491
  %v8015 = vunpack.c.l.b16 %v7492
  %v8016 = vunpack.c.h.b16 %v7492
  %v8017 = vunpack.c.l.b16 %v7493
  %v8018 = vunpack.c.h.b16 %v7493
  %v8019 = vunpack.c.l.b16 %v7494
  %v8020 = vunpack.c.h.b16 %v7494
  %v8021 = vunpack.c.l.b16 %v7495
  %v8022 = vunpack.c.h.b16 %v7495
  %v8023 = vunpack.c.l.b16 %v7496
  %v8024 = vunpack.c.h.b16 %v7496
  %v8025 = vunpack.c.l.b16 %v7497
  %v8026 = vunpack.c.h.b16 %v7497
  %v8027 = vunpack.c.l.b16 %v7498
  %v8028 = vunpack.c.h.b16 %v7498
  %v8029 = vunpack.c.l.b16 %v7499
  %v8030 = vunpack.c.h.b16 %v7499
  %v8031 = vunpack.c.l.b16 %v7500
  %v8032 = vunpack.c.h.b16 %v7500
  %v8033 = vunpack.c.l.b16 %v7501
  %v8034 = vunpack.c.h.b16 %v7501
  %v8035 = vunpack.c.l.b16 %v7502
  %v8036 = vunpack.c.h.b16 %v7502
  %v8037 = vunpack.c.l.b16 %v7503
  %v8038 = vunpack.c.h.b16 %v7503
  %v8039 = vunpack.c.l.b16 %v7504
  %v8040 = vunpack.c.h.b16 %v7504
  %v8041 = vunpack.c.l.b16 %v7505
  %v8042 = vunpack.c.h.b16 %v7505
  %v8043 = vunpack.c.l.b16 %v7506
  %v8044 = vunpack.c.h.b16 %v7506
  %v8045 = vunpack.c.l.b16 %v7507
  %v8046 = vunpack.c.h.b16 %v7507
  %v8047 = vunpack.c.l.b16 %v7508
  %v8048 = vunpack.c.h.b16 %v7508
  %v8049 = vunpack.c.l.b16 %v7509
  %v8050 = vunpack.c.h.b16 %v7509
  %v8051 = vunpack.c.l.b16 %v7510
  %v8052 = vunpack.c.h.b16 %v7510
  %v8053 = vunpack.c.l.b16 %v7511
  %v8054 = vunpack.c.h.b16 %v7511
  %v8055 = vunpack.c.l.b16 %v7512
  %v8056 = vunpack.c.h.b16 %v7512
  %v8057 = vunpack.c.l.b16 %v7513
  %v8058 = vunpack.c.h.b16 %v7513
  %v8059 = vunpack.c.l.b16 %v7514
  %v8060 = vunpack.c.h.b16 %v7514
  %v8061 = vunpack.c.l.b16 %v7515
  %v8062 = vunpack.c.h.b16 %v7515
  %v8063 = vunpack.c.l.b16 %v7516
  %v8064 = vunpack.c.h.b16 %v7516
  %v8065 = vunpack.c.l.b16 %v7517
  %v8066 = vunpack.c.h.b16 %v7517
  %v8067 = vunpack.c.l.b16 %v7518
  %v8068 = vunpack.c.h.b16 %v7518
  %v8069 = vunpack.c.l.b16 %v7519
  %v8070 = vunpack.c.h.b16 %v7519
  %v8071 = vunpack.c.l.b16 %v7520
  %v8072 = vunpack.c.h.b16 %v7520
  %v8073 = vunpack.c.l.b16 %v7521
  %v8074 = vunpack.c.h.b16 %v7521
  %v8075 = vunpack.c.l.b16 %v7522
  %v8076 = vunpack.c.h.b16 %v7522
  %v8077 = vunpack.c.l.b16 %v7523
  %v8078 = vunpack.c.h.b16 %v7523
  %v8079 = vunpack.c.l.b16 %v7524
  %v8080 = vunpack.c.h.b16 %v7524
  %v8081 = vunpack.c.l.b16 %v7525
  %v8082 = vunpack.c.h.b16 %v7525
  %v8083 = vunpack.c.l.b16 %v7526
  %v8084 = vunpack.c.h.b16 %v7526
  %v8085 = vunpack.c.l.b16 %v7527
  %v8086 = vunpack.c.h.b16 %v7527
  %v8087 = vunpack.c.l.b16 %v7528
  %v8088 = vunpack.c.h.b16 %v7528
  %v8089 = vunpack.c.l.b16 %v7529
  %v8090 = vunpack.c.h.b16 %v7529
  %v8091 = vunpack.c.l.b16 %v7530
  %v8092 = vunpack.c.h.b16 %v7530
  %v8093 = vunpack.c.l.b16 %v7531
  %v8094 = vunpack.c.h.b16 %v7531
  %v8095 = vunpack.c.l.b16 %v7532
  %v8096 = vunpack.c.h.b16 %v7532
  %v8097 = vunpack.c.l.b16 %v7533
  %v8098 = vunpack.c.h.b16 %v7533
  %v8099 = vunpack.c.l.b16 %v7534
  %v8100 = vunpack.c.h.b16 %v7534
  %v8101 = vunpack.c.l.b16 %v7535
  %v8102 = vunpack.c.h.b16 %v7535
  %v8103 = vunpack.c.l.b16 %v7536
  %v8104 = vunpack.c.h.b16 %v7536
  %v8105 = vunpack.c.l.b16 %v7537
  %v8106 = vunpack.c.h.b16 %v7537
  %v8107 = vunpack.c.l.b16 %v7538
  %v8108 = vunpack.c.h.b16 %v7538
  %v8109 = vunpack.c.l.b16 %v7539
  %v8110 = vunpack.c.h.b16 %v7539
  %v8111 = vunpack.c.l.b16 %v7540
  %v8112 = vunpack.c.h.b16 %v7540
  %v8113 = vunpack.c.l.b16 %v7541
  %v8114 = vunpack.c.h.b16 %v7541
  %v8115 = vunpack.c.l.b16 %v7542
  %v8116 = vunpack.c.h.b16 %v7542
  %v8117 = vunpack.c.l.b16 %v7543
  %v8118 = vunpack.c.h.b16 %v7543
  %v8119 = vunpack.c.l.b16 %v7544
  %v8120 = vunpack.c.h.b16 %v7544
  %v8121 = vunpack.c.l.b16 %v7545
  %v8122 = vunpack.c.h.b16 %v7545
  %v8123 = vunpack.c.l.b16 %v7546
  %v8124 = vunpack.c.h.b16 %v7546
  %v8125 = vunpack.c.l.b16 %v7547
  %v8126 = vunpack.c.h.b16 %v7547
  %v8127 = vunpack.c.l.b16 %v7548
  %v8128 = vunpack.c.h.b16 %v7548
  %v8129 = vunpack.c.l.b16 %v7549
  %v8130 = vunpack.c.h.b16 %v7549
  %v8131 = vunpack.c.l.b16 %v7550
  %v8132 = vunpack.c.h.b16 %v7550
  %v8133 = vunpack.c.l.b16 %v7551
  %v8134 = vunpack.c.h.b16 %v7551
  %v8135 = vunpack.c.l.b16 %v7552
  %v8136 = vunpack.c.h.b16 %v7552
  %v8137 = vunpack.c.l.b16 %v7553
  %v8138 = vunpack.c.h.b16 %v7553
  %v8139 = vunpack.c.l.b16 %v7554
  %v8140 = vunpack.c.h.b16 %v7554
  %v8141 = vunpack.c.l.b16 %v7555
  %v8142 = vunpack.c.h.b16 %v7555
  %v8143 = vunpack.c.l.b16 %v7556
  %v8144 = vunpack.c.h.b16 %v7556
  %v8145 = vunpack.c.l.b16 %v7557
  %v8146 = vunpack.c.h.b16 %v7557
  %v8147 = vunpack.c.l.b16 %v7558
  %v8148 = vunpack.c.h.b16 %v7558
  %v8149 = vunpack.c.l.b16 %v7559
  %v8150 = vunpack.c.h.b16 %v7559
  %v8151 = vunpack.c.l.b16 %v7560
  %v8152 = vunpack.c.h.b16 %v7560
  %v8153 = vunpack.c.l.b16 %v7561
  %v8154 = vunpack.c.h.b16 %v7561
  %v8155 = vunpack.c.l.b16 %v7562
  %v8156 = vunpack.c.h.b16 %v7562
  %v8157 = vunpack.c.l.b16 %v7563
  %v8158 = vunpack.c.h.b16 %v7563
  %v8159 = vunpack.c.l.b16 %v7564
  %v8160 = vunpack.c.h.b16 %v7564
  %v8161 = vunpack.c.l.b16 %v7565
  %v8162 = vunpack.c.h.b16 %v7565
  %v8163 = vunpack.c.l.b16 %v7566
  %v8164 = vunpack.c.h.b16 %v7566
  %v8165 = vpack.c.b16 %v7785, %v7781
  %v8166 = vpack.c.b16 %v7786, %v7782
  %v8167 = vpack.c.b16 %v7787, %v7783
  %v8168 = vpack.c.b16 %v7788, %v7784
  %v8169 = vpack.c.b16 %v7793, %v7789
  %v8170 = vpack.c.b16 %v7794, %v7790
  %v8171 = vpack.c.b16 %v7795, %v7791
  %v8172 = vpack.c.b16 %v7796, %v7792
  %v8173 = vpack.c.b16 %v7801, %v7797
  %v8174 = vpack.c.b16 %v7802, %v7798
  %v8175 = vpack.c.b16 %v7803, %v7799
  %v8176 = vpack.c.b16 %v7804, %v7800
  %v8177 = vpack.c.b16 %v7809, %v7805
  %v8178 = vpack.c.b16 %v7810, %v7806
  %v8179 = vpack.c.b16 %v7811, %v7807
  %v8180 = vpack.c.b16 %v7812, %v7808
  %v8181 = vpack.c.b16 %v7817, %v7813
  %v8182 = vpack.c.b16 %v7818, %v7814
  %v8183 = vpack.c.b16 %v7819, %v7815
  %v8184 = vpack.c.b16 %v7820, %v7816
  %v8185 = vpack.c.b16 %v7825, %v7821
  %v8186 = vpack.c.b16 %v7826, %v7822
  %v8187 = vpack.c.b16 %v7827, %v7823
  %v8188 = vpack.c.b16 %v7828, %v7824
  %v8189 = vpack.c.b16 %v7833, %v7829
  %v8190 = vpack.c.b16 %v7834, %v7830
  %v8191 = vpack.c.b16 %v7835, %v7831
  %v8192 = vpack.c.b16 %v7836, %v7832
  %v8193 = vpack.c.b16 %v7841, %v7837
  %v8194 = vpack.c.b16 %v7842, %v7838
  %v8195 = vpack.c.b16 %v7843, %v7839
  %v8196 = vpack.c.b16 %v7844, %v7840
  %v8197 = vpack.c.b16 %v7849, %v7845
  %v8198 = vpack.c.b16 %v7850, %v7846
  %v8199 = vpack.c.b16 %v7851, %v7847
  %v8200 = vpack.c.b16 %v7852, %v7848
  %v8201 = vpack.c.b16 %v7857, %v7853
  %v8202 = vpack.c.b16 %v7858, %v7854
  %v8203 = vpack.c.b16 %v7859, %v7855
  %v8204 = vpack.c.b16 %v7860, %v7856
  %v8205 = vpack.c.b16 %v7865, %v7861
  %v8206 = vpack.c.b16 %v7866, %v7862
  %v8207 = vpack.c.b16 %v7867, %v7863
  %v8208 = vpack.c.b16 %v7868, %v7864
  %v8209 = vpack.c.b16 %v7873, %v7869
  %v8210 = vpack.c.b16 %v7874, %v7870
  %v8211 = vpack.c.b16 %v7875, %v7871
  %v8212 = vpack.c.b16 %v7876, %v7872
  %v8213 = vpack.c.b16 %v7881, %v7877
  %v8214 = vpack.c.b16 %v7882, %v7878
  %v8215 = vpack.c.b16 %v7883, %v7879
  %v8216 = vpack.c.b16 %v7884, %v7880
  %v8217 = vpack.c.b16 %v7889, %v7885
  %v8218 = vpack.c.b16 %v7890, %v7886
  %v8219 = vpack.c.b16 %v7891, %v7887
  %v8220 = vpack.c.b16 %v7892, %v7888
  %v8221 = vpack.c.b16 %v7897, %v7893
  %v8222 = vpack.c.b16 %v7898, %v7894
  %v8223 = vpack.c.b16 %v7899, %v7895
  %v8224 = vpack.c.b16 %v7900, %v7896
  %v8225 = vpack.c.b16 %v7905, %v7901
  %v8226 = vpack.c.b16 %v7906, %v7902
  %v8227 = vpack.c.b16 %v7907, %v7903
  %v8228 = vpack.c.b16 %v7908, %v7904
  %v8229 = vpack.c.b16 %v7913, %v7909
  %v8230 = vpack.c.b16 %v7914, %v7910
  %v8231 = vpack.c.b16 %v7915, %v7911
  %v8232 = vpack.c.b16 %v7916, %v7912
  %v8233 = vpack.c.b16 %v7921, %v7917
  %v8234 = vpack.c.b16 %v7922, %v7918
  %v8235 = vpack.c.b16 %v7923, %v7919
  %v8236 = vpack.c.b16 %v7924, %v7920
  %v8237 = vpack.c.b16 %v7929, %v7925
  %v8238 = vpack.c.b16 %v7930, %v7926
  %v8239 = vpack.c.b16 %v7931, %v7927
  %v8240 = vpack.c.b16 %v7932, %v7928
  %v8241 = vpack.c.b16 %v7937, %v7933
  %v8242 = vpack.c.b16 %v7938, %v7934
  %v8243 = vpack.c.b16 %v7939, %v7935
  %v8244 = vpack.c.b16 %v7940, %v7936
  %v8245 = vpack.c.b16 %v7945, %v7941
  %v8246 = vpack.c.b16 %v7946, %v7942
  %v8247 = vpack.c.b16 %v7947, %v7943
  %v8248 = vpack.c.b16 %v7948, %v7944
  %v8249 = vpack.c.b16 %v7953, %v7949
  %v8250 = vpack.c.b16 %v7954, %v7950
  %v8251 = vpack.c.b16 %v7955, %v7951
  %v8252 = vpack.c.b16 %v7956, %v7952
  %v8253 = vpack.c.b16 %v7961, %v7957
  %v8254 = vpack.c.b16 %v7962, %v7958
  %v8255 = vpack.c.b16 %v7963, %v7959
  %v8256 = vpack.c.b16 %v7964, %v7960
  %v8257 = vpack.c.b16 %v7969, %v7965
  %v8258 = vpack.c.b16 %v7970, %v7966
  %v8259 = vpack.c.b16 %v7971, %v7967
  %v8260 = vpack.c.b16 %v7972, %v7968
  %v8261 = vpack.c.b16 %v7977, %v7973
  %v8262 = vpack.c.b16 %v7978, %v7974
  %v8263 = vpack.c.b16 %v7979, %v7975
  %v8264 = vpack.c.b16 %v7980, %v7976
  %v8265 = vpack.c.b16 %v7985, %v7981
  %v8266 = vpack.c.b16 %v7986, %v7982
  %v8267 = vpack.c.b16 %v7987, %v7983
  %v8268 = vpack.c.b16 %v7988, %v7984
  %v8269 = vpack.c.b16 %v7993, %v7989
  %v8270 = vpack.c.b16 %v7994, %v7990
  %v8271 = vpack.c.b16 %v7995, %v7991
  %v8272 = vpack.c.b16 %v7996, %v7992
  %v8273 = vpack.c.b16 %v8001, %v7997
  %v8274 = vpack.c.b16 %v8002, %v7998
  %v8275 = vpack.c.b16 %v8003, %v7999
  %v8276 = vpack.c.b16 %v8004, %v8000
  %v8277 = vpack.c.b16 %v8009, %v8005
  %v8278 = vpack.c.b16 %v8010, %v8006
  %v8279 = vpack.c.b16 %v8011, %v8007
  %v8280 = vpack.c.b16 %v8012, %v8008
  %v8281 = vpack.c.b16 %v8017, %v8013
  %v8282 = vpack.c.b16 %v8018, %v8014
  %v8283 = vpack.c.b16 %v8019, %v8015
  %v8284 = vpack.c.b16 %v8020, %v8016
  %v8285 = vpack.c.b16 %v8025, %v8021
  %v8286 = vpack.c.b16 %v8026, %v8022
  %v8287 = vpack.c.b16 %v8027, %v8023
  %v8288 = vpack.c.b16 %v8028, %v8024
  %v8289 = vpack.c.b16 %v8033, %v8029
  %v8290 = vpack.c.b16 %v8034, %v8030
  %v8291 = vpack.c.b16 %v8035, %v8031
  %v8292 = vpack.c.b16 %v8036, %v8032
  %v8293 = vpack.c.b16 %v8041, %v8037
  %v8294 = vpack.c.b16 %v8042, %v8038
  %v8295 = vpack.c.b16 %v8043, %v8039
  %v8296 = vpack.c.b16 %v8044, %v8040
  %v8297 = vpack.c.b16 %v8049, %v8045
  %v8298 = vpack.c.b16 %v8050, %v8046
  %v8299 = vpack.c.b16 %v8051, %v8047
  %v8300 = vpack.c.b16 %v8052, %v8048
  %v8301 = vpack.c.b16 %v8057, %v8053
  %v8302 = vpack.c.b16 %v8058, %v8054
  %v8303 = vpack.c.b16 %v8059, %v8055
  %v8304 = vpack.c.b16 %v8060, %v8056
  %v8305 = vpack.c.b16 %v8065, %v8061
  %v8306 = vpack.c.b16 %v8066, %v8062
  %v8307 = vpack.c.b16 %v8067, %v8063
  %v8308 = vpack.c.b16 %v8068, %v8064
  %v8309 = vpack.c.b16 %v8073, %v8069
  %v8310 = vpack.c.b16 %v8074, %v8070
  %v8311 = vpack.c.b16 %v8075, %v8071
  %v8312 = vpack.c.b16 %v8076, %v8072
  %v8313 = vpack.c.b16 %v8081, %v8077
  %v8314 = vpack.c.b16 %v8082, %v8078
  %v8315 = vpack.c.b16 %v8083, %v8079
  %v8316 = vpack.c.b16 %v8084, %v8080
  %v8317 = vpack.c.b16 %v8089, %v8085
  %v8318 = vpack.c.b16 %v8090, %v8086
  %v8319 = vpack.c.b16 %v8091, %v8087
  %v8320 = vpack.c.b16 %v8092, %v8088
  %v8321 = vpack.c.b16 %v8097, %v8093
  %v8322 = vpack.c.b16 %v8098, %v8094
  %v8323 = vpack.c.b16 %v8099, %v8095
  %v8324 = vpack.c.b16 %v8100, %v8096
  %v8325 = vpack.c.b16 %v8105, %v8101
  %v8326 = vpack.c.b16 %v8106, %v8102
  %v8327 = vpack.c.b16 %v8107, %v8103
  %v8328 = vpack.c.b16 %v8108, %v8104
  %v8329 = vpack.c.b16 %v8113, %v8109
  %v8330 = vpack.c.b16 %v8114, %v8110
  %v8331 = vpack.c.b16 %v8115, %v8111
  %v8332 = vpack.c.b16 %v8116, %v8112
  %v8333 = vpack.c.b16 %v8121, %v8117
  %v8334 = vpack.c.b16 %v8122, %v8118
  %v8335 = vpack.c.b16 %v8123, %v8119
  %v8336 = vpack.c.b16 %v8124, %v8120
  %v8337 = vpack.c.b16 %v8129, %v8125
  %v8338 = vpack.c.b16 %v8130, %v8126
  %v8339 = vpack.c.b16 %v8131, %v8127
  %v8340 = vpack.c.b16 %v8132, %v8128
  %v8341 = vpack.c.b16 %v8137, %v8133
  %v8342 = vpack.c.b16 %v8138, %v8134
  %v8343 = vpack.c.b16 %v8139, %v8135
  %v8344 = vpack.c.b16 %v8140, %v8136
  %v8345 = vpack.c.b16 %v8145, %v8141
  %v8346 = vpack.c.b16 %v8146, %v8142
  %v8347 = vpack.c.b16 %v8147, %v8143
  %v8348 = vpack.c.b16 %v8148, %v8144
  %v8349 = vpack.c.b16 %v8153, %v8149
  %v8350 = vpack.c.b16 %v8154, %v8150
  %v8351 = vpack.c.b16 %v8155, %v8151
  %v8352 = vpack.c.b16 %v8156, %v8152
  %v8353 = vpack.c.b16 %v8161, %v8157
  %v8354 = vpack.c.b16 %v8162, %v8158
  %v8355 = vpack.c.b16 %v8163, %v8159
  %v8356 = vpack.c.b16 %v8164, %v8160
  %8549 = vmatprep.subr.bf16.mxu0 %v8166
  %8550 = vmatpush1.bf16.msra.mxu0 %v8165
  %8551 = vmatprep.subr.bf16.mxu0 %v8170
  %8552 = vmatpush1.bf16.msra.mxu0 %v8169
  %8553 = vmatprep.subr.bf16.mxu0 %v8174
  %8554 = vmatpush1.bf16.msra.mxu0 %v8173
  %8555 = vmatprep.subr.bf16.mxu0 %v8178
  %8556 = vmatpush1.bf16.msra.mxu0 %v8177
  %8557 = vmatprep.subr.bf16.mxu0 %v8182
  %8558 = vmatpush1.bf16.msra.mxu0 %v8181
  %8559 = vmatprep.subr.bf16.mxu0 %v8186
  %8560 = vmatpush1.bf16.msra.mxu0 %v8185
  %8561 = vmatprep.subr.bf16.mxu0 %v8190
  %8562 = vmatpush1.bf16.msra.mxu0 %v8189
  %8563 = vmatprep.subr.bf16.mxu0 %v8194
  %8564 = vmatpush1.bf16.msra.mxu0 %v8193
  %8565 = vmatprep.subr.bf16.mxu0 %v8198
  %8566 = vmatpush1.bf16.msra.mxu0 %v8197
  %8567 = vmatprep.subr.bf16.mxu0 %v8202
  %8568 = vmatpush1.bf16.msra.mxu0 %v8201
  %8569 = vmatprep.subr.bf16.mxu0 %v8206
  %8570 = vmatpush1.bf16.msra.mxu0 %v8205
  %8571 = vmatprep.subr.bf16.mxu0 %v8210
  %8572 = vmatpush1.bf16.msra.mxu0 %v8209
  %8573 = vmatprep.subr.bf16.mxu0 %v8214
  %8574 = vmatpush1.bf16.msra.mxu0 %v8213
  %8575 = vmatprep.subr.bf16.mxu0 %v8218
  %8576 = vmatpush1.bf16.msra.mxu0 %v8217
  %8577 = vmatprep.subr.bf16.mxu0 %v8222
  %8578 = vmatpush1.bf16.msra.mxu0 %v8221
  %8579 = vmatprep.subr.bf16.mxu0 %v8226
  %8580 = vmatpush1.bf16.msra.mxu0 %v8225
  %8581 = vmatprep.mubr.bf16.mxu0 %v7370
  %8582 = vmatmul.mubr.bf16.gmra.mrb[0].mxu0 %v7369
  %v8583 = vpop.f32.mrb[0].mxu0
  %v8584 = vadd.f32 %v7572, %v8583
  %v8585 = vpop.f32.mrb[0].mxu0
  %v8586 = vadd.f32 %v7576, %v8585
  %v8587 = vpop.f32.mrb[0].mxu0
  %v8588 = vpop.f32.mrb[0].mxu0
  %8589 = vdwg.mxu0
  %8590 = vmatprep.subr.bf16.mxu0 %v8230
  %8591 = vmatpush1.bf16.msra.mxu0 %v8229
  %8592 = vmatprep.subr.bf16.mxu0 %v8234
  %8593 = vmatpush1.bf16.msra.mxu0 %v8233
  %8594 = vmatprep.subr.bf16.mxu0 %v8238
  %8595 = vmatpush1.bf16.msra.mxu0 %v8237
  %8596 = vmatprep.subr.bf16.mxu0 %v8242
  %8597 = vmatpush1.bf16.msra.mxu0 %v8241
  %8598 = vmatprep.subr.bf16.mxu0 %v8246
  %8599 = vmatpush1.bf16.msra.mxu0 %v8245
  %8600 = vmatprep.subr.bf16.mxu0 %v8250
  %8601 = vmatpush1.bf16.msra.mxu0 %v8249
  %8602 = vmatprep.subr.bf16.mxu0 %v8254
  %8603 = vmatpush1.bf16.msra.mxu0 %v8253
  %8604 = vmatprep.subr.bf16.mxu0 %v8258
  %8605 = vmatpush1.bf16.msra.mxu0 %v8257
  %8606 = vmatprep.subr.bf16.mxu0 %v8262
  %8607 = vmatpush1.bf16.msra.mxu0 %v8261
  %8608 = vmatprep.subr.bf16.mxu0 %v8266
  %8609 = vmatpush1.bf16.msra.mxu0 %v8265
  %8610 = vmatprep.subr.bf16.mxu0 %v8270
  %8611 = vmatpush1.bf16.msra.mxu0 %v8269
  %8612 = vmatprep.subr.bf16.mxu0 %v8274
  %8613 = vmatpush1.bf16.msra.mxu0 %v8273
  %8614 = vmatprep.subr.bf16.mxu0 %v8278
  %8615 = vmatpush1.bf16.msra.mxu0 %v8277
  %8616 = vmatprep.subr.bf16.mxu0 %v8282
  %8617 = vmatpush1.bf16.msra.mxu0 %v8281
  %8618 = vmatprep.subr.bf16.mxu0 %v8286
  %8619 = vmatpush1.bf16.msra.mxu0 %v8285
  %8620 = vmatprep.subr.bf16.mxu0 %v8290
  %8621 = vmatpush1.bf16.msra.mxu0 %v8289
  %8622 = vmatprep.mubr.bf16.mxu0 %v7372
  %8623 = vmatmul.mubr.bf16.gmra.mrb[0].mxu0 %v7371
  %v8624 = vpop.f32.mrb[0].mxu0
  %v8625 = vadd.f32 %v8584, %v8624
  %v8626 = vpop.f32.mrb[0].mxu0
  %v8627 = vadd.f32 %v8586, %v8626
  %v8628 = vpop.f32.mrb[0].mxu0
  %v8629 = vpop.f32.mrb[0].mxu0
  %8630 = vdwg.mxu0
  %8631 = vmatprep.subr.bf16.mxu0 %v8294
  %8632 = vmatpush1.bf16.msra.mxu0 %v8293
  %8633 = vmatprep.subr.bf16.mxu0 %v8298
  %8634 = vmatpush1.bf16.msra.mxu0 %v8297
  %8635 = vmatprep.subr.bf16.mxu0 %v8302
  %8636 = vmatpush1.bf16.msra.mxu0 %v8301
  %8637 = vmatprep.subr.bf16.mxu0 %v8306
  %8638 = vmatpush1.bf16.msra.mxu0 %v8305
  %8639 = vmatprep.subr.bf16.mxu0 %v8310
  %8640 = vmatpush1.bf16.msra.mxu0 %v8309
  %8641 = vmatprep.subr.bf16.mxu0 %v8314
  %8642 = vmatpush1.bf16.msra.mxu0 %v8313
  %8643 = vmatprep.subr.bf16.mxu0 %v8318
  %8644 = vmatpush1.bf16.msra.mxu0 %v8317
  %8645 = vmatprep.subr.bf16.mxu0 %v8322
  %8646 = vmatpush1.bf16.msra.mxu0 %v8321
  %8647 = vmatprep.subr.bf16.mxu0 %v8326
  %8648 = vmatpush1.bf16.msra.mxu0 %v8325
  %8649 = vmatprep.subr.bf16.mxu0 %v8330
  %8650 = vmatpush1.bf16.msra.mxu0 %v8329
  %8651 = vmatprep.subr.bf16.mxu0 %v8334
  %8652 = vmatpush1.bf16.msra.mxu0 %v8333
  %8653 = vmatprep.subr.bf16.mxu0 %v8338
  %8654 = vmatpush1.bf16.msra.mxu0 %v8337
  %8655 = vmatprep.subr.bf16.mxu0 %v8342
  %8656 = vmatpush1.bf16.msra.mxu0 %v8341
  %8657 = vmatprep.subr.bf16.mxu0 %v8346
  %8658 = vmatpush1.bf16.msra.mxu0 %v8345
  %8659 = vmatprep.subr.bf16.mxu0 %v8350
  %8660 = vmatpush1.bf16.msra.mxu0 %v8349
  %8661 = vmatprep.subr.bf16.mxu0 %v8354
  %8662 = vmatpush1.bf16.msra.mxu0 %v8353
  %8663 = vmatprep.mubr.bf16.mxu0 %v7374
  %8664 = vmatmul.mubr.bf16.gmra.mrb[0].mxu0 %v7373
  %v8665 = vpop.f32.mrb[0].mxu0
  %v8666 = vadd.f32 %v8625, %v8665
  %v8667 = vpop.f32.mrb[0].mxu0
  %v8668 = vadd.f32 %v8627, %v8667
  %v8669 = vpop.f32.mrb[0].mxu0
  %v8670 = vpop.f32.mrb[0].mxu0
  %8671 = vdwg.mxu0
  %8672 = vmatprep.subr.bf16.mxu0 %v8168
  %8673 = vmatpush1.bf16.msra.mxu0 %v8167
  %8674 = vmatprep.subr.bf16.mxu0 %v8172
  %8675 = vmatpush1.bf16.msra.mxu0 %v8171
  %8676 = vmatprep.subr.bf16.mxu0 %v8176
  %8677 = vmatpush1.bf16.msra.mxu0 %v8175
  %8678 = vmatprep.subr.bf16.mxu0 %v8180
  %8679 = vmatpush1.bf16.msra.mxu0 %v8179
  %8680 = vmatprep.subr.bf16.mxu0 %v8184
  %8681 = vmatpush1.bf16.msra.mxu0 %v8183
  %8682 = vmatprep.subr.bf16.mxu0 %v8188
  %8683 = vmatpush1.bf16.msra.mxu0 %v8187
  %8684 = vmatprep.subr.bf16.mxu0 %v8192
  %8685 = vmatpush1.bf16.msra.mxu0 %v8191
  %8686 = vmatprep.subr.bf16.mxu0 %v8196
  %8687 = vmatpush1.bf16.msra.mxu0 %v8195
  %8688 = vmatprep.subr.bf16.mxu0 %v8200
  %8689 = vmatpush1.bf16.msra.mxu0 %v8199
  %8690 = vmatprep.subr.bf16.mxu0 %v8204
  %8691 = vmatpush1.bf16.msra.mxu0 %v8203
  %8692 = vmatprep.subr.bf16.mxu0 %v8208
  %8693 = vmatpush1.bf16.msra.mxu0 %v8207
  %8694 = vmatprep.subr.bf16.mxu0 %v8212
  %8695 = vmatpush1.bf16.msra.mxu0 %v8211
  %8696 = vmatprep.subr.bf16.mxu0 %v8216
  %8697 = vmatpush1.bf16.msra.mxu0 %v8215
  %8698 = vmatprep.subr.bf16.mxu0 %v8220
  %8699 = vmatpush1.bf16.msra.mxu0 %v8219
  %8700 = vmatprep.subr.bf16.mxu0 %v8224
  %8701 = vmatpush1.bf16.msra.mxu0 %v8223
  %8702 = vmatprep.subr.bf16.mxu0 %v8228
  %8703 = vmatpush1.bf16.msra.mxu0 %v8227
  %8704 = vmatprep.mubr.bf16.mxu0 %v7370
  %8705 = vmatmul.mubr.bf16.gmra.mrb[0].mxu0 %v7369
  %v8706 = vpop.f32.mrb[0].mxu0
  %v8707 = vadd.f32 %v7580, %v8706
  %v8708 = vpop.f32.mrb[0].mxu0
  %v8709 = vadd.f32 %v7584, %v8708
  %v8710 = vpop.f32.mrb[0].mxu0
  %v8711 = vpop.f32.mrb[0].mxu0
  %8712 = vdwg.mxu0
  %8713 = vmatprep.subr.bf16.mxu0 %v8232
  %8714 = vmatpush1.bf16.msra.mxu0 %v8231
  %8715 = vmatprep.subr.bf16.mxu0 %v8236
  %8716 = vmatpush1.bf16.msra.mxu0 %v8235
  %8717 = vmatprep.subr.bf16.mxu0 %v8240
  %8718 = vmatpush1.bf16.msra.mxu0 %v8239
  %8719 = vmatprep.subr.bf16.mxu0 %v8244
  %8720 = vmatpush1.bf16.msra.mxu0 %v8243
  %8721 = vmatprep.subr.bf16.mxu0 %v8248
  %8722 = vmatpush1.bf16.msra.mxu0 %v8247
  %8723 = vmatprep.subr.bf16.mxu0 %v8252
  %8724 = vmatpush1.bf16.msra.mxu0 %v8251
  %8725 = vmatprep.subr.bf16.mxu0 %v8256
  %8726 = vmatpush1.bf16.msra.mxu0 %v8255
  %8727 = vmatprep.subr.bf16.mxu0 %v8260
  %8728 = vmatpush1.bf16.msra.mxu0 %v8259
  %8729 = vmatprep.subr.bf16.mxu0 %v8264
  %8730 = vmatpush1.bf16.msra.mxu0 %v8263
  %8731 = vmatprep.subr.bf16.mxu0 %v8268
  %8732 = vmatpush1.bf16.msra.mxu0 %v8267
  %8733 = vmatprep.subr.bf16.mxu0 %v8272
  %8734 = vmatpush1.bf16.msra.mxu0 %v8271
  %8735 = vmatprep.subr.bf16.mxu0 %v8276
  %8736 = vmatpush1.bf16.msra.mxu0 %v8275
  %8737 = vmatprep.subr.bf16.mxu0 %v8280
  %8738 = vmatpush1.bf16.msra.mxu0 %v8279
  %8739 = vmatprep.subr.bf16.mxu0 %v8284
  %8740 = vmatpush1.bf16.msra.mxu0 %v8283
  %8741 = vmatprep.subr.bf16.mxu0 %v8288
  %8742 = vmatpush1.bf16.msra.mxu0 %v8287
  %8743 = vmatprep.subr.bf16.mxu0 %v8292
  %8744 = vmatpush1.bf16.msra.mxu0 %v8291
  %8745 = vmatprep.mubr.bf16.mxu0 %v7372
  %8746 = vmatmul.mubr.bf16.gmra.mrb[0].mxu0 %v7371
  %v8747 = vpop.f32.mrb[0].mxu0
  %v8748 = vadd.f32 %v8707, %v8747
  %v8749 = vpop.f32.mrb[0].mxu0
  %v8750 = vadd.f32 %v8709, %v8749
  %v8751 = vpop.f32.mrb[0].mxu0
  %v8752 = vpop.f32.mrb[0].mxu0
  %8753 = vdwg.mxu0
  %8754 = vmatprep.subr.bf16.mxu0 %v8296
  %8755 = vmatpush1.bf16.msra.mxu0 %v8295
  %8756 = vmatprep.subr.bf16.mxu0 %v8300
  %8757 = vmatpush1.bf16.msra.mxu0 %v8299
  %8758 = vmatprep.subr.bf16.mxu0 %v8304
  %8759 = vmatpush1.bf16.msra.mxu0 %v8303
  %8760 = vmatprep.subr.bf16.mxu0 %v8308
  %8761 = vmatpush1.bf16.msra.mxu0 %v8307
  %8762 = vmatprep.subr.bf16.mxu0 %v8312
  %8763 = vmatpush1.bf16.msra.mxu0 %v8311
  %8764 = vmatprep.subr.bf16.mxu0 %v8316
  %8765 = vmatpush1.bf16.msra.mxu0 %v8315
  %8766 = vmatprep.subr.bf16.mxu0 %v8320
  %8767 = vmatpush1.bf16.msra.mxu0 %v8319
  %8768 = vmatprep.subr.bf16.mxu0 %v8324
  %8769 = vmatpush1.bf16.msra.mxu0 %v8323
  %8770 = vmatprep.subr.bf16.mxu0 %v8328
  %8771 = vmatpush1.bf16.msra.mxu0 %v8327
  %8772 = vmatprep.subr.bf16.mxu0 %v8332
  %8773 = vmatpush1.bf16.msra.mxu0 %v8331
  %8774 = vmatprep.subr.bf16.mxu0 %v8336
  %8775 = vmatpush1.bf16.msra.mxu0 %v8335
  %8776 = vmatprep.subr.bf16.mxu0 %v8340
  %8777 = vmatpush1.bf16.msra.mxu0 %v8339
  %8778 = vmatprep.subr.bf16.mxu0 %v8344
  %8779 = vmatpush1.bf16.msra.mxu0 %v8343
  %8780 = vmatprep.subr.bf16.mxu0 %v8348
  %8781 = vmatpush1.bf16.msra.mxu0 %v8347
  %8782 = vmatprep.subr.bf16.mxu0 %v8352
  %8783 = vmatpush1.bf16.msra.mxu0 %v8351
  %8784 = vmatprep.subr.bf16.mxu0 %v8356
  %8785 = vmatpush1.bf16.msra.mxu0 %v8355
  %8786 = vmatprep.mubr.bf16.mxu0 %v7374
  %8787 = vmatmul.mubr.bf16.gmra.mrb[0].mxu0 %v7373
  %v8788 = vpop.f32.mrb[0].mxu0
  %v8789 = vadd.f32 %v8748, %v8788
  %v8790 = vpop.f32.mrb[0].mxu0
  %v8791 = vadd.f32 %v8750, %v8790
  %v8792 = vpop.f32.mrb[0].mxu0
  %v8793 = vpop.f32.mrb[0].mxu0
  %8794 = vdwg.mxu0
  %v8795 = vmul.f32 %v8666, 0.01
  %v8796 = vmul.f32 %v8668, 0.01
  %v8797 = vmul.f32 %v8789, 0.01
  %v8798 = vmul.f32 %v8791, 0.01
  %v8799 = vmax.f32 %v8666, %v8795
  %v8800 = vmax.f32 %v8668, %v8796
  %v8801 = vmax.f32 %v8789, %v8797
  %v8802 = vmax.f32 %v8791, %v8798
  %v8803 = vpack.c.bf16 %v8799, %v8799
  %v8804 = vpack.c.bf16 %v8800, %v8800
  %v8805 = vpack.c.bf16 %v8801, %v8801
  %v8806 = vpack.c.bf16 %v8802, %v8802
  %v8807 = vld [vmem:[%s9] sm:$0xf]
  %v8808 = vld [vmem:[%s9 + $0x4] sm:$0xf]
  %v8809 = vld [vmem:[%s9 + $0x8] sm:$0xf]
  %v8810 = vld [vmem:[%s9 + $0xc] sm:$0xf]
  %v8811 = vld [vmem:[%s9 + $0x10] sm:$0xf]
  %v8812 = vld [vmem:[%s9 + $0x14] sm:$0xf]
  %v8813 = vld [vmem:[%s9 + $0x18] sm:$0xf]
  %v8814 = vld [vmem:[%s9 + $0x1c] sm:$0xf]
  %v8815 = vld [vmem:[%s9 + $0x20] sm:$0xf]
  %v8816 = vld [vmem:[%s9 + $0x24] sm:$0xf]
  %v8817 = vld [vmem:[%s9 + $0x28] sm:$0xf]
  %v8818 = vld [vmem:[%s9 + $0x2c] sm:$0xf]
  %v8819 = vld [vmem:[%s9 + $0x30] sm:$0xf]
  %v8820 = vld [vmem:[%s9 + $0x34] sm:$0xf]
  %v8821 = vld [vmem:[%s9 + $0x38] sm:$0xf]
  %v8822 = vld [vmem:[%s9 + $0x3c] sm:$0xf]
  %v8823 = vld [vmem:[%s9 + $0x40] sm:$0xf]
  %v8824 = vld [vmem:[%s9 + $0x44] sm:$0xf]
  %v8825 = vld [vmem:[%s9 + $0x48] sm:$0xf]
  %v8826 = vld [vmem:[%s9 + $0x4c] sm:$0xf]
  %v8827 = vld [vmem:[%s9 + $0x50] sm:$0xf]
  %v8828 = vld [vmem:[%s9 + $0x54] sm:$0xf]
  %v8829 = vld [vmem:[%s9 + $0x58] sm:$0xf]
  %v8830 = vld [vmem:[%s9 + $0x5c] sm:$0xf]
  %v8831 = vld [vmem:[%s9 + $0x60] sm:$0xf]
  %v8832 = vld [vmem:[%s9 + $0x64] sm:$0xf]
  %v8833 = vld [vmem:[%s9 + $0x68] sm:$0xf]
  %v8834 = vld [vmem:[%s9 + $0x6c] sm:$0xf]
  %v8835 = vld [vmem:[%s9 + $0x70] sm:$0xf]
  %v8836 = vld [vmem:[%s9 + $0x74] sm:$0xf]
  %v8837 = vld [vmem:[%s9 + $0x78] sm:$0xf]
  %v8838 = vld [vmem:[%s9 + $0x7c] sm:$0xf]
  %v8839 = vld [vmem:[%s9 + $0x80] sm:$0xf]
  %v8840 = vld [vmem:[%s9 + $0x84] sm:$0xf]
  %v8841 = vld [vmem:[%s9 + $0x88] sm:$0xf]
  %v8842 = vld [vmem:[%s9 + $0x8c] sm:$0xf]
  %v8843 = vld [vmem:[%s9 + $0x90] sm:$0xf]
  %v8844 = vld [vmem:[%s9 + $0x94] sm:$0xf]
  %v8845 = vld [vmem:[%s9 + $0x98] sm:$0xf]
  %v8846 = vld [vmem:[%s9 + $0x9c] sm:$0xf]
  %v8847 = vld [vmem:[%s9 + $0xa0] sm:$0xf]
  %v8848 = vld [vmem:[%s9 + $0xa4] sm:$0xf]
  %v8849 = vld [vmem:[%s9 + $0xa8] sm:$0xf]
  %v8850 = vld [vmem:[%s9 + $0xac] sm:$0xf]
  %v8851 = vld [vmem:[%s9 + $0xb0] sm:$0xf]
  %v8852 = vld [vmem:[%s9 + $0xb4] sm:$0xf]
  %v8853 = vld [vmem:[%s9 + $0xb8] sm:$0xf]
  %v8854 = vld [vmem:[%s9 + $0xbc] sm:$0xf]
  %v8855 = vld [vmem:[%s9 + $0xc0] sm:$0xf]
  %v8856 = vld [vmem:[%s9 + $0xc4] sm:$0xf]
  %v8857 = vld [vmem:[%s9 + $0xc8] sm:$0xf]
  %v8858 = vld [vmem:[%s9 + $0xcc] sm:$0xf]
  %v8859 = vld [vmem:[%s9 + $0xd0] sm:$0xf]
  %v8860 = vld [vmem:[%s9 + $0xd4] sm:$0xf]
  %v8861 = vld [vmem:[%s9 + $0xd8] sm:$0xf]
  %v8862 = vld [vmem:[%s9 + $0xdc] sm:$0xf]
  %v8863 = vld [vmem:[%s9 + $0xe0] sm:$0xf]
  %v8864 = vld [vmem:[%s9 + $0xe4] sm:$0xf]
  %v8865 = vld [vmem:[%s9 + $0xe8] sm:$0xf]
  %v8866 = vld [vmem:[%s9 + $0xec] sm:$0xf]
  %v8867 = vld [vmem:[%s9 + $0xf0] sm:$0xf]
  %v8868 = vld [vmem:[%s9 + $0xf4] sm:$0xf]
  %v8869 = vld [vmem:[%s9 + $0xf8] sm:$0xf]
  %v8870 = vld [vmem:[%s9 + $0xfc] sm:$0xf]
  %v8871 = vld [vmem:[%s10] sm:$0x1]
  %v8873 = vlaneseq
  %v8874 = vshrl.u32 %v8873, 7
  %v8875 = vsub.s32 0, %v8874
  %v8876 = vrot.slane %v8871, %v8875
  %v8942 = vunpack.c.l.b16 %v8807
  %v8943 = vunpack.c.l.b16 %v8808
  %v8944 = vunpack.c.l.b16 %v8809
  %v8945 = vunpack.c.l.b16 %v8810
  %v8946 = vunpack.c.l.b16 %v8811
  %v8947 = vunpack.c.l.b16 %v8812
  %v8948 = vunpack.c.l.b16 %v8813
  %v8949 = vunpack.c.l.b16 %v8814
  %v8950 = vunpack.c.l.b16 %v8815
  %v8951 = vunpack.c.l.b16 %v8816
  %v8952 = vunpack.c.l.b16 %v8817
  %v8953 = vunpack.c.l.b16 %v8818
  %v8954 = vunpack.c.l.b16 %v8819
  %v8955 = vunpack.c.l.b16 %v8820
  %v8956 = vunpack.c.l.b16 %v8821
  %v8957 = vunpack.c.l.b16 %v8822
  %v8958 = vunpack.c.l.b16 %v8823
  %v8959 = vunpack.c.l.b16 %v8824
  %v8960 = vunpack.c.l.b16 %v8825
  %v8961 = vunpack.c.l.b16 %v8826
  %v8962 = vunpack.c.l.b16 %v8827
  %v8963 = vunpack.c.l.b16 %v8828
  %v8964 = vunpack.c.l.b16 %v8829
  %v8965 = vunpack.c.l.b16 %v8830
  %v8966 = vunpack.c.l.b16 %v8831
  %v8967 = vunpack.c.l.b16 %v8832
  %v8968 = vunpack.c.l.b16 %v8833
  %v8969 = vunpack.c.l.b16 %v8834
  %v8970 = vunpack.c.l.b16 %v8835
  %v8971 = vunpack.c.l.b16 %v8836
  %v8972 = vunpack.c.l.b16 %v8837
  %v8973 = vunpack.c.l.b16 %v8838
  %v8974 = vunpack.c.l.b16 %v8839
  %v8975 = vunpack.c.l.b16 %v8840
  %v8976 = vunpack.c.l.b16 %v8841
  %v8977 = vunpack.c.l.b16 %v8842
  %v8978 = vunpack.c.l.b16 %v8843
  %v8979 = vunpack.c.l.b16 %v8844
  %v8980 = vunpack.c.l.b16 %v8845
  %v8981 = vunpack.c.l.b16 %v8846
  %v8982 = vunpack.c.l.b16 %v8847
  %v8983 = vunpack.c.l.b16 %v8848
  %v8984 = vunpack.c.l.b16 %v8849
  %v8985 = vunpack.c.l.b16 %v8850
  %v8986 = vunpack.c.l.b16 %v8851
  %v8987 = vunpack.c.l.b16 %v8852
  %v8988 = vunpack.c.l.b16 %v8853
  %v8989 = vunpack.c.l.b16 %v8854
  %v8990 = vunpack.c.l.b16 %v8855
  %v8991 = vunpack.c.l.b16 %v8856
  %v8992 = vunpack.c.l.b16 %v8857
  %v8993 = vunpack.c.l.b16 %v8858
  %v8994 = vunpack.c.l.b16 %v8859
  %v8995 = vunpack.c.l.b16 %v8860
  %v8996 = vunpack.c.l.b16 %v8861
  %v8997 = vunpack.c.l.b16 %v8862
  %v8998 = vunpack.c.l.b16 %v8863
  %v8999 = vunpack.c.l.b16 %v8864
  %v9000 = vunpack.c.l.b16 %v8865
  %v9001 = vunpack.c.l.b16 %v8866
  %v9002 = vunpack.c.l.b16 %v8867
  %v9003 = vunpack.c.l.b16 %v8868
  %v9004 = vunpack.c.l.b16 %v8869
  %v9005 = vunpack.c.l.b16 %v8870
  %v9006 = vpack.c.b16 %v8943, %v8942
  %v9007 = vpack.c.b16 %v8945, %v8944
  %v9008 = vpack.c.b16 %v8947, %v8946
  %v9009 = vpack.c.b16 %v8949, %v8948
  %v9010 = vpack.c.b16 %v8951, %v8950
  %v9011 = vpack.c.b16 %v8953, %v8952
  %v9012 = vpack.c.b16 %v8955, %v8954
  %v9013 = vpack.c.b16 %v8957, %v8956
  %v9014 = vpack.c.b16 %v8959, %v8958
  %v9015 = vpack.c.b16 %v8961, %v8960
  %v9016 = vpack.c.b16 %v8963, %v8962
  %v9017 = vpack.c.b16 %v8965, %v8964
  %v9018 = vpack.c.b16 %v8967, %v8966
  %v9019 = vpack.c.b16 %v8969, %v8968
  %v9020 = vpack.c.b16 %v8971, %v8970
  %v9021 = vpack.c.b16 %v8973, %v8972
  %v9022 = vpack.c.b16 %v8975, %v8974
  %v9023 = vpack.c.b16 %v8977, %v8976
  %v9024 = vpack.c.b16 %v8979, %v8978
  %v9025 = vpack.c.b16 %v8981, %v8980
  %v9026 = vpack.c.b16 %v8983, %v8982
  %v9027 = vpack.c.b16 %v8985, %v8984
  %v9028 = vpack.c.b16 %v8987, %v8986
  %v9029 = vpack.c.b16 %v8989, %v8988
  %v9030 = vpack.c.b16 %v8991, %v8990
  %v9031 = vpack.c.b16 %v8993, %v8992
  %v9032 = vpack.c.b16 %v8995, %v8994
  %v9033 = vpack.c.b16 %v8997, %v8996
  %v9034 = vpack.c.b16 %v8999, %v8998
  %v9035 = vpack.c.b16 %v9001, %v9000
  %v9036 = vpack.c.b16 %v9003, %v9002
  %v9037 = vpack.c.b16 %v9005, %v9004
  %9070 = vmatprep.subr.bf16.mxu0 0
  %9071 = vmatpush1.bf16.msra.mxu0 %v9006
  %9072 = vmatprep.subr.bf16.mxu0 0
  %9073 = vmatpush1.bf16.msra.mxu0 %v9007
  %9074 = vmatprep.subr.bf16.mxu0 0
  %9075 = vmatpush1.bf16.msra.mxu0 %v9008
  %9076 = vmatprep.subr.bf16.mxu0 0
  %9077 = vmatpush1.bf16.msra.mxu0 %v9009
  %9078 = vmatprep.subr.bf16.mxu0 0
  %9079 = vmatpush1.bf16.msra.mxu0 %v9010
  %9080 = vmatprep.subr.bf16.mxu0 0
  %9081 = vmatpush1.bf16.msra.mxu0 %v9011
  %9082 = vmatprep.subr.bf16.mxu0 0
  %9083 = vmatpush1.bf16.msra.mxu0 %v9012
  %9084 = vmatprep.subr.bf16.mxu0 0
  %9085 = vmatpush1.bf16.msra.mxu0 %v9013
  %9086 = vmatprep.subr.bf16.mxu0 0
  %9087 = vmatpush1.bf16.msra.mxu0 %v9014
  %9088 = vmatprep.subr.bf16.mxu0 0
  %9089 = vmatpush1.bf16.msra.mxu0 %v9015
  %9090 = vmatprep.subr.bf16.mxu0 0
  %9091 = vmatpush1.bf16.msra.mxu0 %v9016
  %9092 = vmatprep.subr.bf16.mxu0 0
  %9093 = vmatpush1.bf16.msra.mxu0 %v9017
  %9094 = vmatprep.subr.bf16.mxu0 0
  %9095 = vmatpush1.bf16.msra.mxu0 %v9018
  %9096 = vmatprep.subr.bf16.mxu0 0
  %9097 = vmatpush1.bf16.msra.mxu0 %v9019
  %9098 = vmatprep.subr.bf16.mxu0 0
  %9099 = vmatpush1.bf16.msra.mxu0 %v9020
  %9100 = vmatprep.subr.bf16.mxu0 0
  %9101 = vmatpush1.bf16.msra.mxu0 %v9021
  %9102 = vmatprep.mubr.bf16.mxu0 %v8804
  %9103 = vmatmul.mubr.bf16.gmra.mrb[0].mxu0 %v8803
  %v9104 = vpop.f32.mrb[0].mxu0
  %v9105 = vadd.f32 %v8876, %v9104
  %v9106 = vpop.f32.mrb[0].mxu0
  %v9107 = vpop.f32.mrb[0].mxu0
  %v9108 = vpop.f32.mrb[0].mxu0
  %9109 = vdwg.mxu0
  %9110 = vmatprep.subr.bf16.mxu0 0
  %9111 = vmatpush1.bf16.msra.mxu0 %v9022
  %9112 = vmatprep.subr.bf16.mxu0 0
  %9113 = vmatpush1.bf16.msra.mxu0 %v9023
  %9114 = vmatprep.subr.bf16.mxu0 0
  %9115 = vmatpush1.bf16.msra.mxu0 %v9024
  %9116 = vmatprep.subr.bf16.mxu0 0
  %9117 = vmatpush1.bf16.msra.mxu0 %v9025
  %9118 = vmatprep.subr.bf16.mxu0 0
  %9119 = vmatpush1.bf16.msra.mxu0 %v9026
  %9120 = vmatprep.subr.bf16.mxu0 0
  %9121 = vmatpush1.bf16.msra.mxu0 %v9027
  %9122 = vmatprep.subr.bf16.mxu0 0
  %9123 = vmatpush1.bf16.msra.mxu0 %v9028
  %9124 = vmatprep.subr.bf16.mxu0 0
  %9125 = vmatpush1.bf16.msra.mxu0 %v9029
  %9126 = vmatprep.subr.bf16.mxu0 0
  %9127 = vmatpush1.bf16.msra.mxu0 %v9030
  %9128 = vmatprep.subr.bf16.mxu0 0
  %9129 = vmatpush1.bf16.msra.mxu0 %v9031
  %9130 = vmatprep.subr.bf16.mxu0 0
  %9131 = vmatpush1.bf16.msra.mxu0 %v9032
  %9132 = vmatprep.subr.bf16.mxu0 0
  %9133 = vmatpush1.bf16.msra.mxu0 %v9033
  %9134 = vmatprep.subr.bf16.mxu0 0
  %9135 = vmatpush1.bf16.msra.mxu0 %v9034
  %9136 = vmatprep.subr.bf16.mxu0 0
  %9137 = vmatpush1.bf16.msra.mxu0 %v9035
  %9138 = vmatprep.subr.bf16.mxu0 0
  %9139 = vmatpush1.bf16.msra.mxu0 %v9036
  %9140 = vmatprep.subr.bf16.mxu0 0
  %9141 = vmatpush1.bf16.msra.mxu0 %v9037
  %9142 = vmatprep.mubr.bf16.mxu0 %v8806
  %9143 = vmatmul.mubr.bf16.gmra.mrb[0].mxu0 %v8805
  %v9144 = vpop.f32.mrb[0].mxu0
  %v9145 = vadd.f32 %v9105, %v9144
  %v9146 = vpop.f32.mrb[0].mxu0
  %v9147 = vpop.f32.mrb[0].mxu0
  %v9148 = vpop.f32.mrb[0].mxu0
  %9149 = vdwg.mxu0
  %vm9150 = vcmask 130048
  %9151 = vst.msk [vmem:[%s11] sm:$0xff] %vm9150, %v9145
  // Predicated region
  $region46: #{_encoder_forward_impl.1} parent=0 // pred_check
    _
  $region47: #{_encoder_forward_impl.1} parent=0 // pred_check_branch
    %9153 = sbr.rel (0) target = $region49
  $region48: #{_encoder_forward_impl.1} parent=0 // pred_region
    _
  $region49: #{_encoder_forward_impl.1} parent=0 // pred_fallthru
    _
  // Predicated region
  $region50: #{_encoder_forward_impl.1} parent=0 // pred_check
    _
  $region51: #{_encoder_forward_impl.1} parent=0 // pred_check_branch
    %9155 = sbr.rel (0) target = $region53
  $region52: #{_encoder_forward_impl.1} parent=0 // pred_region
    _
  $region53: #{_encoder_forward_impl.1} parent=0 // pred_fallthru
    _

</llo_original>
